<compile_context>
chip_gen: v5e
topology: v5e:2x2
jax: 0.10.0
libtpu: 0.0.40
codegen_flags: <defaults>
</compile_context>

<pallas_src>
import math

import jax
import jax.numpy as jnp
import numpy as np
from jax import lax
from jax.experimental import pallas as pl
from jax.experimental.pallas import tpu as pltpu

N_ITERS = 25        # module default: training=True -> num_iterations = 25
PROJ_EPS = 1e-8     # epsilon used by margin_projection
TILE_B = 512        # batch lanes per grid step (must be a multiple of 256)


def sinkhorn_mproto_kernel(m_ref,                                        # (4, TB)
                           w1_ref, b1_ref, w2_ref, b2_ref,
                           w3_ref, b3_ref, w4_ref, b4_ref,
                           place_ref, selm_ref, self_ref, vsel_ref,
                           rs_ref, cs_ref, rem_ref, cem_ref, omr_ref, omc_ref,
                           mus_ref, v_ref):
    m_t = m_ref[...]                                                     # (4, TB)
    tb = m_t.shape[1]
    half = tb // 2

    # ---- MLP (batch on lanes): 4 -> 64 -> ReLU -> 64 -> ReLU -> 32 -> ReLU -> 7 ----
    h = jnp.maximum(
        jnp.dot(w1_ref[...], m_t, preferred_element_type=jnp.float32) + b1_ref[...], 0.0)
    h = jnp.maximum(
        jnp.dot(w2_ref[...], h, preferred_element_type=jnp.float32) + b2_ref[...], 0.0)
    h = jnp.maximum(
        jnp.dot(w3_ref[...], h, preferred_element_type=jnp.float32) + b3_ref[...], 0.0)
    pars = jnp.dot(w4_ref[...], h, preferred_element_type=jnp.float32) + b4_ref[...]   # (7, TB)
    e = jnp.exp(pars)                                                    # (7, TB)

    # ---- build flattened muc (9, TB) and projection margins (2, TB) ----
    mu0 = jnp.dot(place_ref[...], e, preferred_element_type=jnp.float32)   # (9, TB)
    m2 = jnp.dot(selm_ref[...], m_t, preferred_element_type=jnp.float32)   # (2, TB): m0, m1
    f2 = jnp.dot(self_ref[...], m_t, preferred_element_type=jnp.float32)   # (2, TB): f0, f1
    v = jnp.dot(vsel_ref[...], e, preferred_element_type=jnp.float32)      # (1, TB): exp(pars[:, -1])

    # loop-invariant constants (hoisted, masks pre-baked into rem/cem)
    rs = rs_ref[...]       # (2, 9)  row-sum aggregator (rows 0,1 over all 3 cols)
    cs = cs_ref[...]       # (2, 9)  col-sum aggregator (cols 0,1 over all 3 rows)
    rem = rem_ref[...]     # (9, 2)  masked row-scale expander (last row -> 0)
    cem = cem_ref[...]     # (9, 2)  masked col-scale expander (last col -> 0)
    omr_b = jnp.broadcast_to(omr_ref[...], (9, half))   # 1.0 where last row (untouched)
    omc_b = jnp.broadcast_to(omc_ref[...], (9, half))   # 1.0 where last col (untouched)

    # split the tile into two independent lane-halves -> two interleavable MXU chains
    mu_a, mu_b = mu0[:, :half], mu0[:, half:]
    m2_a, m2_b = m2[:, :half], m2[:, half:]
    f2_a, f2_b = f2[:, :half], f2[:, half:]

    def _recip(x):
        r = pl.reciprocal(x, approx=True)       # EUP slot, off the VPU critical path
        return r * (2.0 - x * r)                # one Newton step -> ~f32-exact

    def half_step(mu, m2h, f2h):
        row_sums = jnp.dot(rs, mu, preferred_element_type=jnp.float32)        # (2, half)
        row_scale = m2h * _recip(row_sums + PROJ_EPS)
        mu = mu * (jnp.dot(rem, row_scale, preferred_element_type=jnp.float32) + omr_b)
        col_sums = jnp.dot(cs, mu, preferred_element_type=jnp.float32)        # (2, half)
        col_scale = f2h * _recip(col_sums + PROJ_EPS)
        mu = mu * (jnp.dot(cem, col_scale, preferred_element_type=jnp.float32) + omc_b)
        return mu

    def body(_, carry):
        a, b = carry
        return half_step(a, m2_a, f2_a), half_step(b, m2_b, f2_b)

    mu_a, mu_b = lax.fori_loop(0, N_ITERS, body, (mu_a, mu_b), unroll=True)

    mus_ref[...] = jnp.concatenate([mu_a, mu_b], axis=1)                 # (9, TB) lane-dense
    v_ref[...] = v                                                       # (1, TB) lane-dense


def _constants():
    # place (9,7): flat position 3*i+j <- exp(pars[:, src]); column 6 (V) unused.
    place = np.zeros((9, 7), np.float32)
    for src, (i, j) in enumerate([(0, 0), (1, 1), (0, 2), (1, 2), (2, 0), (2, 1)]):
        place[3 * i + j, src] = 1.0
    selm = np.zeros((2, 4), np.float32); selm[0, 0] = 1.0; selm[1, 1] = 1.0   # (m0, m1)
    self_ = np.zeros((2, 4), np.float32); self_[0, 2] = 1.0; self_[1, 3] = 1.0  # (f0, f1)
    vsel = np.zeros((1, 7), np.float32); vsel[0, 6] = 1.0

    rs = np.zeros((2, 9), np.float32)
    cs = np.zeros((2, 9), np.float32)
    rem = np.zeros((9, 2), np.float32)
    cem = np.zeros((9, 2), np.float32)
    omr = np.zeros((9, 1), np.float32)
    omc = np.zeros((9, 1), np.float32)
    for i in range(3):
        for j in range(3):
            k = 3 * i + j
            if i < 2:
                rs[i, k] = 1.0
                rem[k, i] = 1.0
            else:
                omr[k, 0] = 1.0      # last row: multiplier 1.0 (untouched)
            if j < 2:
                cs[j, k] = 1.0
                cem[k, j] = 1.0
            else:
                omc[k, 0] = 1.0      # last col: multiplier 1.0 (untouched)
    return tuple(jnp.asarray(a) for a in
                 (place, selm, self_, vsel, rs, cs, rem, cem, omr, omc))


def _round_up(x, m):
    return ((x + m - 1) // m) * m


def sinkhorn_mproto_forward(margins, params, tile_b=TILE_B):
    """Returns (mus (B,3,3), V (B,)) — the SinkhornMproto forward pass."""
    w1, b1, w2, b2, w3, b3, w4, b4 = params
    B = margins.shape[0]

    tile_b = min(tile_b, _round_up(B, 256))
    assert tile_b % 256 == 0
    Bp = _round_up(B, tile_b)

    # transpose to batch-on-lanes and pad the batch to a whole number of tiles
    m_t = jnp.zeros((4, Bp), jnp.float32).at[:, :B].set(margins.astype(jnp.float32).T)
    wts = (w1.T, b1.reshape(-1, 1), w2.T, b2.reshape(-1, 1),
           w3.T, b3.reshape(-1, 1), w4.T, b4.reshape(-1, 1))
    consts = _constants()

    def batch_spec(rows):
        return pl.BlockSpec((rows, tile_b), lambda i: (0, i))

    def fixed_spec(shape):
        return pl.BlockSpec(shape, lambda i: (0, 0))   # VMEM-resident across grid steps

    in_specs = ([batch_spec(4)]
                + [fixed_spec(a.shape) for a in wts]
                + [fixed_spec(a.shape) for a in consts])

    mus_t, v_t = pl.pallas_call(
        sinkhorn_mproto_kernel,
        grid=(Bp // tile_b,),
        out_shape=(jax.ShapeDtypeStruct((9, Bp), jnp.float32),
                   jax.ShapeDtypeStruct((1, Bp), jnp.float32)),
        in_specs=in_specs,
        out_specs=(batch_spec(9), batch_spec(1)),
        compiler_params=pltpu.CompilerParams(
            dimension_semantics=("parallel",)),   # shard batch tiles across TCs (v7x)
    )(m_t, *wts, *consts)

    mus = mus_t[:, :B].T.reshape(B, 3, 3)
    V = v_t[0, :B]
    return mus, V


# ---------------- pure-JAX reference (for correctness check) ----------------
def reference_forward(margins, params):
    w1, b1, w2, b2, w3, b3, w4, b4 = params
    h = jax.nn.relu(margins @ w1 + b1)
    h = jax.nn.relu(h @ w2 + b2)
    h = jax.nn.relu(h @ w3 + b3)
    pars = h @ w4 + b4
    e = jnp.exp(pars)
    B = margins.shape[0]
    zs = jnp.zeros((B, 1), jnp.float32)
    M = jnp.concatenate([margins[:, 0:2], zs], axis=1)
    F = jnp.concatenate([margins[:, 2:4], zs], axis=1)
    muc = jnp.zeros((B, 3, 3), jnp.float32)
    muc = muc.at[:, 0, 0].set(e[:, 0]).at[:, 1, 1].set(e[:, 1])
    muc = muc.at[:, 0, 2].set(e[:, 2]).at[:, 1, 2].set(e[:, 3])
    muc = muc.at[:, 2, 0].set(e[:, 4]).at[:, 2, 1].set(e[:, 5])
    V = e[:, 6]

    def proj(mu, Mv, Fv):
        def body(_, mu):
            rows = mu[:2]
            rs = rows.sum(axis=1, keepdims=True)
            mu = jnp.concatenate([rows * (Mv[:2, None] / (rs + PROJ_EPS)), mu[2:]], axis=0)
            cols = mu[:, :2]
            cs = cols.sum(axis=0, keepdims=True)
            mu = jnp.concatenate([cols * (Fv[None, :2] / (cs + PROJ_EPS)), mu[:, 2:]], axis=1)
            return mu
        return lax.fori_loop(0, N_ITERS, body, mu)

    mus = jax.vmap(proj)(muc, M, F)
    return mus, V


def _init_linear(key, fan_in, fan_out):
    kw, kb = jax.random.split(key)
    bound = 1.0 / math.sqrt(fan_in)
    w = jax.random.uniform(kw, (fan_in, fan_out), jnp.float32, -bound, bound)
    b = jax.random.uniform(kb, (1, fan_out), jnp.float32, -bound, bound)
    return w, b


if __name__ == "__main__":
    key = jax.random.PRNGKey(0)
    k_m, k1, k2, k3, k4 = jax.random.split(key, 5)

    B = 8                                   # batch of margin vectors
    margins = jax.random.uniform(k_m, (B, 4), jnp.float32, 0.1, 1.0)

    # MLP: ndim=2 -> input_dim=4, hidden [64, 64, 32], output_dim=7
    w1, b1 = _init_linear(k1, 4, 64)
    w2, b2 = _init_linear(k2, 64, 64)
    w3, b3 = _init_linear(k3, 64, 32)
    w4, b4 = _init_linear(k4, 32, 7)
    params = (w1, b1, w2, b2, w3, b3, w4, b4)

    mus, V = sinkhorn_mproto_forward(margins, params)
    jax.block_until_ready((mus, V))

    mus_ref, V_ref = reference_forward(margins, params)
    assert mus.shape == (B, 3, 3) and V.shape == (B,)
    assert bool(jnp.allclose(mus, mus_ref, rtol=1e-3, atol=1e-4))
    assert bool(jnp.allclose(V, V_ref, rtol=1e-3, atol=1e-5))

    print("KERNEL_OK")
</pallas_src>

<mosaic_0001>
module attributes {stable_mosaic.version = 11 : i64} {
  func.func @sinkhorn_mproto_kernel(%arg0: i32, %arg1: memref<4x256xf32, #tpu.memory_space<vmem>>, %arg2: memref<64x4xf32, #tpu.memory_space<vmem>>, %arg3: memref<64x1xf32, #tpu.memory_space<vmem>>, %arg4: memref<64x64xf32, #tpu.memory_space<vmem>>, %arg5: memref<64x1xf32, #tpu.memory_space<vmem>>, %arg6: memref<32x64xf32, #tpu.memory_space<vmem>>, %arg7: memref<32x1xf32, #tpu.memory_space<vmem>>, %arg8: memref<7x32xf32, #tpu.memory_space<vmem>>, %arg9: memref<7x1xf32, #tpu.memory_space<vmem>>, %arg10: memref<9x7xf32, #tpu.memory_space<vmem>>, %arg11: memref<2x4xf32, #tpu.memory_space<vmem>>, %arg12: memref<2x4xf32, #tpu.memory_space<vmem>>, %arg13: memref<1x7xf32, #tpu.memory_space<vmem>>, %arg14: memref<2x9xf32, #tpu.memory_space<vmem>>, %arg15: memref<2x9xf32, #tpu.memory_space<vmem>>, %arg16: memref<9x2xf32, #tpu.memory_space<vmem>>, %arg17: memref<9x2xf32, #tpu.memory_space<vmem>>, %arg18: memref<9x1xf32, #tpu.memory_space<vmem>>, %arg19: memref<9x1xf32, #tpu.memory_space<vmem>>, %arg20: memref<9x256xf32, #tpu.memory_space<vmem>>, %arg21: memref<1x256xf32, #tpu.memory_space<vmem>>) attributes {dimension_semantics = [#tpu.dimension_semantics<parallel>], iteration_bounds = array<i64: 1>, scalar_prefetch = 0 : i64, scratch_operands = 0 : i64, tpu.core_type = #tpu.core_type<tc>, window_params = [{transform_indices = @transform_0, window_bounds = array<i64: 4, 256>}, {pipeline_mode = #tpu.pipeline_mode<synchronous>, transform_indices = @transform_1, window_bounds = array<i64: 64, 4>}, {pipeline_mode = #tpu.pipeline_mode<synchronous>, transform_indices = @transform_2, window_bounds = array<i64: 64, 1>}, {pipeline_mode = #tpu.pipeline_mode<synchronous>, transform_indices = @transform_3, window_bounds = array<i64: 64, 64>}, {pipeline_mode = #tpu.pipeline_mode<synchronous>, transform_indices = @transform_4, window_bounds = array<i64: 64, 1>}, {pipeline_mode = #tpu.pipeline_mode<synchronous>, transform_indices = @transform_5, window_bounds = array<i64: 32, 64>}, {pipeline_mode = #tpu.pipeline_mode<synchronous>, transform_indices = @transform_6, window_bounds = array<i64: 32, 1>}, {pipeline_mode = #tpu.pipeline_mode<synchronous>, transform_indices = @transform_7, window_bounds = array<i64: 7, 32>}, {pipeline_mode = #tpu.pipeline_mode<synchronous>, transform_indices = @transform_8, window_bounds = array<i64: 7, 1>}, {pipeline_mode = #tpu.pipeline_mode<synchronous>, transform_indices = @transform_9, window_bounds = array<i64: 9, 7>}, {pipeline_mode = #tpu.pipeline_mode<synchronous>, transform_indices = @transform_10, window_bounds = array<i64: 2, 4>}, {pipeline_mode = #tpu.pipeline_mode<synchronous>, transform_indices = @transform_11, window_bounds = array<i64: 2, 4>}, {pipeline_mode = #tpu.pipeline_mode<synchronous>, transform_indices = @transform_12, window_bounds = array<i64: 1, 7>}, {pipeline_mode = #tpu.pipeline_mode<synchronous>, transform_indices = @transform_13, window_bounds = array<i64: 2, 9>}, {pipeline_mode = #tpu.pipeline_mode<synchronous>, transform_indices = @transform_14, window_bounds = array<i64: 2, 9>}, {pipeline_mode = #tpu.pipeline_mode<synchronous>, transform_indices = @transform_15, window_bounds = array<i64: 9, 2>}, {pipeline_mode = #tpu.pipeline_mode<synchronous>, transform_indices = @transform_16, window_bounds = array<i64: 9, 2>}, {pipeline_mode = #tpu.pipeline_mode<synchronous>, transform_indices = @transform_17, window_bounds = array<i64: 9, 1>}, {pipeline_mode = #tpu.pipeline_mode<synchronous>, transform_indices = @transform_18, window_bounds = array<i64: 9, 1>}, {transform_indices = @transform_19, window_bounds = array<i64: 9, 256>}, {transform_indices = @transform_20, window_bounds = array<i64: 1, 256>}]} {
    %c0 = arith.constant 0 : index
    %c0_0 = arith.constant 0 : index
    %0 = vector.load %arg1[%c0, %c0_0] : memref<4x256xf32, #tpu.memory_space<vmem>>, vector<4x256xf32>
    %c0_1 = arith.constant 0 : index
    %c0_2 = arith.constant 0 : index
    %1 = vector.load %arg2[%c0_1, %c0_2] : memref<64x4xf32, #tpu.memory_space<vmem>>, vector<64x4xf32>
    %cst = arith.constant dense<0.000000e+00> : vector<64x256xf32>
    %2 = tpu.matmul %1, %0, %cst {dimension_numbers = #tpu.dot_dimension_numbers<[1], [0], [0], [1], [0, 0, 1, 1], [], []>} : vector<64x4xf32>, vector<4x256xf32>, vector<64x256xf32> -> vector<64x256xf32>
    %c0_3 = arith.constant 0 : index
    %c0_4 = arith.constant 0 : index
    %3 = vector.load %arg3[%c0_3, %c0_4] : memref<64x1xf32, #tpu.memory_space<vmem>>, vector<64x1xf32>
    %4 = vector.broadcast %3 : vector<64x1xf32> to vector<64x256xf32>
    %5 = arith.addf %2, %4 : vector<64x256xf32>
    %cst_5 = arith.constant 0.000000e+00 : f32
    %6 = vector.broadcast %cst_5 : f32 to vector<64x256xf32>
    %7 = arith.maximumf %5, %6 : vector<64x256xf32>
    %c0_6 = arith.constant 0 : index
    %c0_7 = arith.constant 0 : index
    %8 = vector.load %arg4[%c0_6, %c0_7] : memref<64x64xf32, #tpu.memory_space<vmem>>, vector<64x64xf32>
    %cst_8 = arith.constant dense<0.000000e+00> : vector<64x256xf32>
    %9 = tpu.matmul %8, %7, %cst_8 {dimension_numbers = #tpu.dot_dimension_numbers<[1], [0], [0], [1], [0, 0, 1, 1], [], []>} : vector<64x64xf32>, vector<64x256xf32>, vector<64x256xf32> -> vector<64x256xf32>
    %c0_9 = arith.constant 0 : index
    %c0_10 = arith.constant 0 : index
    %10 = vector.load %arg5[%c0_9, %c0_10] : memref<64x1xf32, #tpu.memory_space<vmem>>, vector<64x1xf32>
    %11 = vector.broadcast %10 : vector<64x1xf32> to vector<64x256xf32>
    %12 = arith.addf %9, %11 : vector<64x256xf32>
    %cst_11 = arith.constant 0.000000e+00 : f32
    %13 = vector.broadcast %cst_11 : f32 to vector<64x256xf32>
    %14 = arith.maximumf %12, %13 : vector<64x256xf32>
    %c0_12 = arith.constant 0 : index
    %c0_13 = arith.constant 0 : index
    %15 = vector.load %arg6[%c0_12, %c0_13] : memref<32x64xf32, #tpu.memory_space<vmem>>, vector<32x64xf32>
    %cst_14 = arith.constant dense<0.000000e+00> : vector<32x256xf32>
    %16 = tpu.matmul %15, %14, %cst_14 {dimension_numbers = #tpu.dot_dimension_numbers<[1], [0], [0], [1], [0, 0, 1, 1], [], []>} : vector<32x64xf32>, vector<64x256xf32>, vector<32x256xf32> -> vector<32x256xf32>
    %c0_15 = arith.constant 0 : index
    %c0_16 = arith.constant 0 : index
    %17 = vector.load %arg7[%c0_15, %c0_16] : memref<32x1xf32, #tpu.memory_space<vmem>>, vector<32x1xf32>
    %18 = vector.broadcast %17 : vector<32x1xf32> to vector<32x256xf32>
    %19 = arith.addf %16, %18 : vector<32x256xf32>
    %cst_17 = arith.constant 0.000000e+00 : f32
    %20 = vector.broadcast %cst_17 : f32 to vector<32x256xf32>
    %21 = arith.maximumf %19, %20 : vector<32x256xf32>
    %c0_18 = arith.constant 0 : index
    %c0_19 = arith.constant 0 : index
    %22 = vector.load %arg8[%c0_18, %c0_19] : memref<7x32xf32, #tpu.memory_space<vmem>>, vector<7x32xf32>
    %cst_20 = arith.constant dense<0.000000e+00> : vector<7x256xf32>
    %23 = tpu.matmul %22, %21, %cst_20 {dimension_numbers = #tpu.dot_dimension_numbers<[1], [0], [0], [1], [0, 0, 1, 1], [], []>} : vector<7x32xf32>, vector<32x256xf32>, vector<7x256xf32> -> vector<7x256xf32>
    %c0_21 = arith.constant 0 : index
    %c0_22 = arith.constant 0 : index
    %24 = vector.load %arg9[%c0_21, %c0_22] : memref<7x1xf32, #tpu.memory_space<vmem>>, vector<7x1xf32>
    %25 = vector.broadcast %24 : vector<7x1xf32> to vector<7x256xf32>
    %26 = arith.addf %23, %25 : vector<7x256xf32>
    %27 = math.exp %26 : vector<7x256xf32>
    %c0_23 = arith.constant 0 : index
    %c0_24 = arith.constant 0 : index
    %28 = vector.load %arg10[%c0_23, %c0_24] : memref<9x7xf32, #tpu.memory_space<vmem>>, vector<9x7xf32>
    %cst_25 = arith.constant dense<0.000000e+00> : vector<9x256xf32>
    %29 = tpu.matmul %28, %27, %cst_25 {dimension_numbers = #tpu.dot_dimension_numbers<[1], [0], [0], [1], [0, 0, 1, 1], [], []>} : vector<9x7xf32>, vector<7x256xf32>, vector<9x256xf32> -> vector<9x256xf32>
    %c0_26 = arith.constant 0 : index
    %c0_27 = arith.constant 0 : index
    %30 = vector.load %arg11[%c0_26, %c0_27] : memref<2x4xf32, #tpu.memory_space<vmem>>, vector<2x4xf32>
    %cst_28 = arith.constant dense<0.000000e+00> : vector<2x256xf32>
    %31 = tpu.matmul %30, %0, %cst_28 {dimension_numbers = #tpu.dot_dimension_numbers<[1], [0], [0], [1], [0, 0, 1, 1], [], []>} : vector<2x4xf32>, vector<4x256xf32>, vector<2x256xf32> -> vector<2x256xf32>
    %c0_29 = arith.constant 0 : index
    %c0_30 = arith.constant 0 : index
    %32 = vector.load %arg12[%c0_29, %c0_30] : memref<2x4xf32, #tpu.memory_space<vmem>>, vector<2x4xf32>
    %cst_31 = arith.constant dense<0.000000e+00> : vector<2x256xf32>
    %33 = tpu.matmul %32, %0, %cst_31 {dimension_numbers = #tpu.dot_dimension_numbers<[1], [0], [0], [1], [0, 0, 1, 1], [], []>} : vector<2x4xf32>, vector<4x256xf32>, vector<2x256xf32> -> vector<2x256xf32>
    %c0_32 = arith.constant 0 : index
    %c0_33 = arith.constant 0 : index
    %34 = vector.load %arg13[%c0_32, %c0_33] : memref<1x7xf32, #tpu.memory_space<vmem>>, vector<1x7xf32>
    %cst_34 = arith.constant dense<0.000000e+00> : vector<1x256xf32>
    %35 = tpu.matmul %34, %27, %cst_34 {dimension_numbers = #tpu.dot_dimension_numbers<[1], [0], [0], [1], [0, 0, 1, 1], [], []>} : vector<1x7xf32>, vector<7x256xf32>, vector<1x256xf32> -> vector<1x256xf32>
    %c0_35 = arith.constant 0 : index
    %c0_36 = arith.constant 0 : index
    %36 = vector.load %arg14[%c0_35, %c0_36] : memref<2x9xf32, #tpu.memory_space<vmem>>, vector<2x9xf32>
    %c0_37 = arith.constant 0 : index
    %c0_38 = arith.constant 0 : index
    %37 = vector.load %arg15[%c0_37, %c0_38] : memref<2x9xf32, #tpu.memory_space<vmem>>, vector<2x9xf32>
    %c0_39 = arith.constant 0 : index
    %c0_40 = arith.constant 0 : index
    %38 = vector.load %arg16[%c0_39, %c0_40] : memref<9x2xf32, #tpu.memory_space<vmem>>, vector<9x2xf32>
    %c0_41 = arith.constant 0 : index
    %c0_42 = arith.constant 0 : index
    %39 = vector.load %arg17[%c0_41, %c0_42] : memref<9x2xf32, #tpu.memory_space<vmem>>, vector<9x2xf32>
    %c0_43 = arith.constant 0 : index
    %c0_44 = arith.constant 0 : index
    %40 = vector.load %arg18[%c0_43, %c0_44] : memref<9x1xf32, #tpu.memory_space<vmem>>, vector<9x1xf32>
    %41 = vector.shape_cast %40 : vector<9x1xf32> to vector<9x1xf32>
    %42 = vector.broadcast %41 : vector<9x1xf32> to vector<9x128xf32>
    %c0_45 = arith.constant 0 : index
    %c0_46 = arith.constant 0 : index
    %43 = vector.load %arg19[%c0_45, %c0_46] : memref<9x1xf32, #tpu.memory_space<vmem>>, vector<9x1xf32>
    %44 = vector.shape_cast %43 : vector<9x1xf32> to vector<9x1xf32>
    %45 = vector.broadcast %44 : vector<9x1xf32> to vector<9x128xf32>
    %46 = vector.extract_strided_slice %29 {offsets = [0, 0], sizes = [9, 128], strides = [1, 1]} : vector<9x256xf32> to vector<9x128xf32>
    %47 = vector.extract_strided_slice %29 {offsets = [0, 128], sizes = [9, 128], strides = [1, 1]} : vector<9x256xf32> to vector<9x128xf32>
    %48 = vector.extract_strided_slice %31 {offsets = [0, 0], sizes = [2, 128], strides = [1, 1]} : vector<2x256xf32> to vector<2x128xf32>
    %49 = vector.extract_strided_slice %31 {offsets = [0, 128], sizes = [2, 128], strides = [1, 1]} : vector<2x256xf32> to vector<2x128xf32>
    %50 = vector.extract_strided_slice %33 {offsets = [0, 0], sizes = [2, 128], strides = [1, 1]} : vector<2x256xf32> to vector<2x128xf32>
    %51 = vector.extract_strided_slice %33 {offsets = [0, 128], sizes = [2, 128], strides = [1, 1]} : vector<2x256xf32> to vector<2x128xf32>
    %c0_i32 = arith.constant 0 : i32
    %cst_47 = arith.constant dense<0.000000e+00> : vector<2x128xf32>
    %52 = tpu.matmul %36, %46, %cst_47 {dimension_numbers = #tpu.dot_dimension_numbers<[1], [0], [0], [1], [0, 0, 1, 1], [], []>} : vector<2x9xf32>, vector<9x128xf32>, vector<2x128xf32> -> vector<2x128xf32>
    %cst_48 = arith.constant 9.99999993E-9 : f32
    %53 = vector.broadcast %cst_48 : f32 to vector<2x128xf32>
    %54 = arith.addf %52, %53 : vector<2x128xf32>
    %55 = tpu.reciprocal %54 {approx = true} : vector<2x128xf32> -> vector<2x128xf32>
    %56 = arith.mulf %54, %55 : vector<2x128xf32>
    %cst_49 = arith.constant 2.000000e+00 : f32
    %57 = vector.broadcast %cst_49 : f32 to vector<2x128xf32>
    %58 = arith.subf %57, %56 : vector<2x128xf32>
    %59 = arith.mulf %55, %58 : vector<2x128xf32>
    %60 = arith.mulf %48, %59 : vector<2x128xf32>
    %cst_50 = arith.constant dense<0.000000e+00> : vector<9x128xf32>
    %61 = tpu.matmul %38, %60, %cst_50 {dimension_numbers = #tpu.dot_dimension_numbers<[1], [0], [0], [1], [0, 0, 1, 1], [], []>} : vector<9x2xf32>, vector<2x128xf32>, vector<9x128xf32> -> vector<9x128xf32>
    %62 = arith.addf %61, %42 : vector<9x128xf32>
    %63 = arith.mulf %46, %62 : vector<9x128xf32>
    %cst_51 = arith.constant dense<0.000000e+00> : vector<2x128xf32>
    %64 = tpu.matmul %37, %63, %cst_51 {dimension_numbers = #tpu.dot_dimension_numbers<[1], [0], [0], [1], [0, 0, 1, 1], [], []>} : vector<2x9xf32>, vector<9x128xf32>, vector<2x128xf32> -> vector<2x128xf32>
    %cst_52 = arith.constant 9.99999993E-9 : f32
    %65 = vector.broadcast %cst_52 : f32 to vector<2x128xf32>
    %66 = arith.addf %64, %65 : vector<2x128xf32>
    %67 = tpu.reciprocal %66 {approx = true} : vector<2x128xf32> -> vector<2x128xf32>
    %68 = arith.mulf %66, %67 : vector<2x128xf32>
    %cst_53 = arith.constant 2.000000e+00 : f32
    %69 = vector.broadcast %cst_53 : f32 to vector<2x128xf32>
    %70 = arith.subf %69, %68 : vector<2x128xf32>
    %71 = arith.mulf %67, %70 : vector<2x128xf32>
    %72 = arith.mulf %50, %71 : vector<2x128xf32>
    %cst_54 = arith.constant dense<0.000000e+00> : vector<9x128xf32>
    %73 = tpu.matmul %39, %72, %cst_54 {dimension_numbers = #tpu.dot_dimension_numbers<[1], [0], [0], [1], [0, 0, 1, 1], [], []>} : vector<9x2xf32>, vector<2x128xf32>, vector<9x128xf32> -> vector<9x128xf32>
    %74 = arith.addf %73, %45 : vector<9x128xf32>
    %75 = arith.mulf %63, %74 : vector<9x128xf32>
    %cst_55 = arith.constant dense<0.000000e+00> : vector<2x128xf32>
    %76 = tpu.matmul %36, %47, %cst_55 {dimension_numbers = #tpu.dot_dimension_numbers<[1], [0], [0], [1], [0, 0, 1, 1], [], []>} : vector<2x9xf32>, vector<9x128xf32>, vector<2x128xf32> -> vector<2x128xf32>
    %cst_56 = arith.constant 9.99999993E-9 : f32
    %77 = vector.broadcast %cst_56 : f32 to vector<2x128xf32>
    %78 = arith.addf %76, %77 : vector<2x128xf32>
    %79 = tpu.reciprocal %78 {approx = true} : vector<2x128xf32> -> vector<2x128xf32>
    %80 = arith.mulf %78, %79 : vector<2x128xf32>
    %cst_57 = arith.constant 2.000000e+00 : f32
    %81 = vector.broadcast %cst_57 : f32 to vector<2x128xf32>
    %82 = arith.subf %81, %80 : vector<2x128xf32>
    %83 = arith.mulf %79, %82 : vector<2x128xf32>
    %84 = arith.mulf %49, %83 : vector<2x128xf32>
    %cst_58 = arith.constant dense<0.000000e+00> : vector<9x128xf32>
    %85 = tpu.matmul %38, %84, %cst_58 {dimension_numbers = #tpu.dot_dimension_numbers<[1], [0], [0], [1], [0, 0, 1, 1], [], []>} : vector<9x2xf32>, vector<2x128xf32>, vector<9x128xf32> -> vector<9x128xf32>
    %86 = arith.addf %85, %42 : vector<9x128xf32>
    %87 = arith.mulf %47, %86 : vector<9x128xf32>
    %cst_59 = arith.constant dense<0.000000e+00> : vector<2x128xf32>
    %88 = tpu.matmul %37, %87, %cst_59 {dimension_numbers = #tpu.dot_dimension_numbers<[1], [0], [0], [1], [0, 0, 1, 1], [], []>} : vector<2x9xf32>, vector<9x128xf32>, vector<2x128xf32> -> vector<2x128xf32>
    %cst_60 = arith.constant 9.99999993E-9 : f32
    %89 = vector.broadcast %cst_60 : f32 to vector<2x128xf32>
    %90 = arith.addf %88, %89 : vector<2x128xf32>
    %91 = tpu.reciprocal %90 {approx = true} : vector<2x128xf32> -> vector<2x128xf32>
    %92 = arith.mulf %90, %91 : vector<2x128xf32>
    %cst_61 = arith.constant 2.000000e+00 : f32
    %93 = vector.broadcast %cst_61 : f32 to vector<2x128xf32>
    %94 = arith.subf %93, %92 : vector<2x128xf32>
    %95 = arith.mulf %91, %94 : vector<2x128xf32>
    %96 = arith.mulf %51, %95 : vector<2x128xf32>
    %cst_62 = arith.constant dense<0.000000e+00> : vector<9x128xf32>
    %97 = tpu.matmul %39, %96, %cst_62 {dimension_numbers = #tpu.dot_dimension_numbers<[1], [0], [0], [1], [0, 0, 1, 1], [], []>} : vector<9x2xf32>, vector<2x128xf32>, vector<9x128xf32> -> vector<9x128xf32>
    %98 = arith.addf %97, %45 : vector<9x128xf32>
    %99 = arith.mulf %87, %98 : vector<9x128xf32>
    %c1_i32 = arith.constant 1 : i32
    %cst_63 = arith.constant dense<0.000000e+00> : vector<2x128xf32>
    %100 = tpu.matmul %36, %75, %cst_63 {dimension_numbers = #tpu.dot_dimension_numbers<[1], [0], [0], [1], [0, 0, 1, 1], [], []>} : vector<2x9xf32>, vector<9x128xf32>, vector<2x128xf32> -> vector<2x128xf32>
    %cst_64 = arith.constant 9.99999993E-9 : f32
    %101 = vector.broadcast %cst_64 : f32 to vector<2x128xf32>
    %102 = arith.addf %100, %101 : vector<2x128xf32>
    %103 = tpu.reciprocal %102 {approx = true} : vector<2x128xf32> -> vector<2x128xf32>
    %104 = arith.mulf %102, %103 : vector<2x128xf32>
    %cst_65 = arith.constant 2.000000e+00 : f32
    %105 = vector.broadcast %cst_65 : f32 to vector<2x128xf32>
    %106 = arith.subf %105, %104 : vector<2x128xf32>
    %107 = arith.mulf %103, %106 : vector<2x128xf32>
    %108 = arith.mulf %48, %107 : vector<2x128xf32>
    %cst_66 = arith.constant dense<0.000000e+00> : vector<9x128xf32>
    %109 = tpu.matmul %38, %108, %cst_66 {dimension_numbers = #tpu.dot_dimension_numbers<[1], [0], [0], [1], [0, 0, 1, 1], [], []>} : vector<9x2xf32>, vector<2x128xf32>, vector<9x128xf32> -> vector<9x128xf32>
    %110 = arith.addf %109, %42 : vector<9x128xf32>
    %111 = arith.mulf %75, %110 : vector<9x128xf32>
    %cst_67 = arith.constant dense<0.000000e+00> : vector<2x128xf32>
    %112 = tpu.matmul %37, %111, %cst_67 {dimension_numbers = #tpu.dot_dimension_numbers<[1], [0], [0], [1], [0, 0, 1, 1], [], []>} : vector<2x9xf32>, vector<9x128xf32>, vector<2x128xf32> -> vector<2x128xf32>
    %cst_68 = arith.constant 9.99999993E-9 : f32
    %113 = vector.broadcast %cst_68 : f32 to vector<2x128xf32>
    %114 = arith.addf %112, %113 : vector<2x128xf32>
    %115 = tpu.reciprocal %114 {approx = true} : vector<2x128xf32> -> vector<2x128xf32>
    %116 = arith.mulf %114, %115 : vector<2x128xf32>
    %cst_69 = arith.constant 2.000000e+00 : f32
    %117 = vector.broadcast %cst_69 : f32 to vector<2x128xf32>
    %118 = arith.subf %117, %116 : vector<2x128xf32>
    %119 = arith.mulf %115, %118 : vector<2x128xf32>
    %120 = arith.mulf %50, %119 : vector<2x128xf32>
    %cst_70 = arith.constant dense<0.000000e+00> : vector<9x128xf32>
    %121 = tpu.matmul %39, %120, %cst_70 {dimension_numbers = #tpu.dot_dimension_numbers<[1], [0], [0], [1], [0, 0, 1, 1], [], []>} : vector<9x2xf32>, vector<2x128xf32>, vector<9x128xf32> -> vector<9x128xf32>
    %122 = arith.addf %121, %45 : vector<9x128xf32>
    %123 = arith.mulf %111, %122 : vector<9x128xf32>
    %cst_71 = arith.constant dense<0.000000e+00> : vector<2x128xf32>
    %124 = tpu.matmul %36, %99, %cst_71 {dimension_numbers = #tpu.dot_dimension_numbers<[1], [0], [0], [1], [0, 0, 1, 1], [], []>} : vector<2x9xf32>, vector<9x128xf32>, vector<2x128xf32> -> vector<2x128xf32>
    %cst_72 = arith.constant 9.99999993E-9 : f32
    %125 = vector.broadcast %cst_72 : f32 to vector<2x128xf32>
    %126 = arith.addf %124, %125 : vector<2x128xf32>
    %127 = tpu.reciprocal %126 {approx = true} : vector<2x128xf32> -> vector<2x128xf32>
    %128 = arith.mulf %126, %127 : vector<2x128xf32>
    %cst_73 = arith.constant 2.000000e+00 : f32
    %129 = vector.broadcast %cst_73 : f32 to vector<2x128xf32>
    %130 = arith.subf %129, %128 : vector<2x128xf32>
    %131 = arith.mulf %127, %130 : vector<2x128xf32>
    %132 = arith.mulf %49, %131 : vector<2x128xf32>
    %cst_74 = arith.constant dense<0.000000e+00> : vector<9x128xf32>
    %133 = tpu.matmul %38, %132, %cst_74 {dimension_numbers = #tpu.dot_dimension_numbers<[1], [0], [0], [1], [0, 0, 1, 1], [], []>} : vector<9x2xf32>, vector<2x128xf32>, vector<9x128xf32> -> vector<9x128xf32>
    %134 = arith.addf %133, %42 : vector<9x128xf32>
    %135 = arith.mulf %99, %134 : vector<9x128xf32>
    %cst_75 = arith.constant dense<0.000000e+00> : vector<2x128xf32>
    %136 = tpu.matmul %37, %135, %cst_75 {dimension_numbers = #tpu.dot_dimension_numbers<[1], [0], [0], [1], [0, 0, 1, 1], [], []>} : vector<2x9xf32>, vector<9x128xf32>, vector<2x128xf32> -> vector<2x128xf32>
    %cst_76 = arith.constant 9.99999993E-9 : f32
    %137 = vector.broadcast %cst_76 : f32 to vector<2x128xf32>
    %138 = arith.addf %136, %137 : vector<2x128xf32>
    %139 = tpu.reciprocal %138 {approx = true} : vector<2x128xf32> -> vector<2x128xf32>
    %140 = arith.mulf %138, %139 : vector<2x128xf32>
    %cst_77 = arith.constant 2.000000e+00 : f32
    %141 = vector.broadcast %cst_77 : f32 to vector<2x128xf32>
    %142 = arith.subf %141, %140 : vector<2x128xf32>
    %143 = arith.mulf %139, %142 : vector<2x128xf32>
    %144 = arith.mulf %51, %143 : vector<2x128xf32>
    %cst_78 = arith.constant dense<0.000000e+00> : vector<9x128xf32>
    %145 = tpu.matmul %39, %144, %cst_78 {dimension_numbers = #tpu.dot_dimension_numbers<[1], [0], [0], [1], [0, 0, 1, 1], [], []>} : vector<9x2xf32>, vector<2x128xf32>, vector<9x128xf32> -> vector<9x128xf32>
    %146 = arith.addf %145, %45 : vector<9x128xf32>
    %147 = arith.mulf %135, %146 : vector<9x128xf32>
    %c2_i32 = arith.constant 2 : i32
    %cst_79 = arith.constant dense<0.000000e+00> : vector<2x128xf32>
    %148 = tpu.matmul %36, %123, %cst_79 {dimension_numbers = #tpu.dot_dimension_numbers<[1], [0], [0], [1], [0, 0, 1, 1], [], []>} : vector<2x9xf32>, vector<9x128xf32>, vector<2x128xf32> -> vector<2x128xf32>
    %cst_80 = arith.constant 9.99999993E-9 : f32
    %149 = vector.broadcast %cst_80 : f32 to vector<2x128xf32>
    %150 = arith.addf %148, %149 : vector<2x128xf32>
    %151 = tpu.reciprocal %150 {approx = true} : vector<2x128xf32> -> vector<2x128xf32>
    %152 = arith.mulf %150, %151 : vector<2x128xf32>
    %cst_81 = arith.constant 2.000000e+00 : f32
    %153 = vector.broadcast %cst_81 : f32 to vector<2x128xf32>
    %154 = arith.subf %153, %152 : vector<2x128xf32>
    %155 = arith.mulf %151, %154 : vector<2x128xf32>
    %156 = arith.mulf %48, %155 : vector<2x128xf32>
    %cst_82 = arith.constant dense<0.000000e+00> : vector<9x128xf32>
    %157 = tpu.matmul %38, %156, %cst_82 {dimension_numbers = #tpu.dot_dimension_numbers<[1], [0], [0], [1], [0, 0, 1, 1], [], []>} : vector<9x2xf32>, vector<2x128xf32>, vector<9x128xf32> -> vector<9x128xf32>
    %158 = arith.addf %157, %42 : vector<9x128xf32>
    %159 = arith.mulf %123, %158 : vector<9x128xf32>
    %cst_83 = arith.constant dense<0.000000e+00> : vector<2x128xf32>
    %160 = tpu.matmul %37, %159, %cst_83 {dimension_numbers = #tpu.dot_dimension_numbers<[1], [0], [0], [1], [0, 0, 1, 1], [], []>} : vector<2x9xf32>, vector<9x128xf32>, vector<2x128xf32> -> vector<2x128xf32>
    %cst_84 = arith.constant 9.99999993E-9 : f32
    %161 = vector.broadcast %cst_84 : f32 to vector<2x128xf32>
    %162 = arith.addf %160, %161 : vector<2x128xf32>
    %163 = tpu.reciprocal %162 {approx = true} : vector<2x128xf32> -> vector<2x128xf32>
    %164 = arith.mulf %162, %163 : vector<2x128xf32>
    %cst_85 = arith.constant 2.000000e+00 : f32
    %165 = vector.broadcast %cst_85 : f32 to vector<2x128xf32>
    %166 = arith.subf %165, %164 : vector<2x128xf32>
    %167 = arith.mulf %163, %166 : vector<2x128xf32>
    %168 = arith.mulf %50, %167 : vector<2x128xf32>
    %cst_86 = arith.constant dense<0.000000e+00> : vector<9x128xf32>
    %169 = tpu.matmul %39, %168, %cst_86 {dimension_numbers = #tpu.dot_dimension_numbers<[1], [0], [0], [1], [0, 0, 1, 1], [], []>} : vector<9x2xf32>, vector<2x128xf32>, vector<9x128xf32> -> vector<9x128xf32>
    %170 = arith.addf %169, %45 : vector<9x128xf32>
    %171 = arith.mulf %159, %170 : vector<9x128xf32>
    %cst_87 = arith.constant dense<0.000000e+00> : vector<2x128xf32>
    %172 = tpu.matmul %36, %147, %cst_87 {dimension_numbers = #tpu.dot_dimension_numbers<[1], [0], [0], [1], [0, 0, 1, 1], [], []>} : vector<2x9xf32>, vector<9x128xf32>, vector<2x128xf32> -> vector<2x128xf32>
    %cst_88 = arith.constant 9.99999993E-9 : f32
    %173 = vector.broadcast %cst_88 : f32 to vector<2x128xf32>
    %174 = arith.addf %172, %173 : vector<2x128xf32>
    %175 = tpu.reciprocal %174 {approx = true} : vector<2x128xf32> -> vector<2x128xf32>
    %176 = arith.mulf %174, %175 : vector<2x128xf32>
    %cst_89 = arith.constant 2.000000e+00 : f32
    %177 = vector.broadcast %cst_89 : f32 to vector<2x128xf32>
    %178 = arith.subf %177, %176 : vector<2x128xf32>
    %179 = arith.mulf %175, %178 : vector<2x128xf32>
    %180 = arith.mulf %49, %179 : vector<2x128xf32>
    %cst_90 = arith.constant dense<0.000000e+00> : vector<9x128xf32>
    %181 = tpu.matmul %38, %180, %cst_90 {dimension_numbers = #tpu.dot_dimension_numbers<[1], [0], [0], [1], [0, 0, 1, 1], [], []>} : vector<9x2xf32>, vector<2x128xf32>, vector<9x128xf32> -> vector<9x128xf32>
    %182 = arith.addf %181, %42 : vector<9x128xf32>
    %183 = arith.mulf %147, %182 : vector<9x128xf32>
    %cst_91 = arith.constant dense<0.000000e+00> : vector<2x128xf32>
    %184 = tpu.matmul %37, %183, %cst_91 {dimension_numbers = #tpu.dot_dimension_numbers<[1], [0], [0], [1], [0, 0, 1, 1], [], []>} : vector<2x9xf32>, vector<9x128xf32>, vector<2x128xf32> -> vector<2x128xf32>
    %cst_92 = arith.constant 9.99999993E-9 : f32
    %185 = vector.broadcast %cst_92 : f32 to vector<2x128xf32>
    %186 = arith.addf %184, %185 : vector<2x128xf32>
    %187 = tpu.reciprocal %186 {approx = true} : vector<2x128xf32> -> vector<2x128xf32>
    %188 = arith.mulf %186, %187 : vector<2x128xf32>
    %cst_93 = arith.constant 2.000000e+00 : f32
    %189 = vector.broadcast %cst_93 : f32 to vector<2x128xf32>
    %190 = arith.subf %189, %188 : vector<2x128xf32>
    %191 = arith.mulf %187, %190 : vector<2x128xf32>
    %192 = arith.mulf %51, %191 : vector<2x128xf32>
    %cst_94 = arith.constant dense<0.000000e+00> : vector<9x128xf32>
    %193 = tpu.matmul %39, %192, %cst_94 {dimension_numbers = #tpu.dot_dimension_numbers<[1], [0], [0], [1], [0, 0, 1, 1], [], []>} : vector<9x2xf32>, vector<2x128xf32>, vector<9x128xf32> -> vector<9x128xf32>
    %194 = arith.addf %193, %45 : vector<9x128xf32>
    %195 = arith.mulf %183, %194 : vector<9x128xf32>
    %c3_i32 = arith.constant 3 : i32
    %cst_95 = arith.constant dense<0.000000e+00> : vector<2x128xf32>
    %196 = tpu.matmul %36, %171, %cst_95 {dimension_numbers = #tpu.dot_dimension_numbers<[1], [0], [0], [1], [0, 0, 1, 1], [], []>} : vector<2x9xf32>, vector<9x128xf32>, vector<2x128xf32> -> vector<2x128xf32>
    %cst_96 = arith.constant 9.99999993E-9 : f32
    %197 = vector.broadcast %cst_96 : f32 to vector<2x128xf32>
    %198 = arith.addf %196, %197 : vector<2x128xf32>
    %199 = tpu.reciprocal %198 {approx = true} : vector<2x128xf32> -> vector<2x128xf32>
    %200 = arith.mulf %198, %199 : vector<2x128xf32>
    %cst_97 = arith.constant 2.000000e+00 : f32
    %201 = vector.broadcast %cst_97 : f32 to vector<2x128xf32>
    %202 = arith.subf %201, %200 : vector<2x128xf32>
    %203 = arith.mulf %199, %202 : vector<2x128xf32>
    %204 = arith.mulf %48, %203 : vector<2x128xf32>
    %cst_98 = arith.constant dense<0.000000e+00> : vector<9x128xf32>
    %205 = tpu.matmul %38, %204, %cst_98 {dimension_numbers = #tpu.dot_dimension_numbers<[1], [0], [0], [1], [0, 0, 1, 1], [], []>} : vector<9x2xf32>, vector<2x128xf32>, vector<9x128xf32> -> vector<9x128xf32>
    %206 = arith.addf %205, %42 : vector<9x128xf32>
    %207 = arith.mulf %171, %206 : vector<9x128xf32>
    %cst_99 = arith.constant dense<0.000000e+00> : vector<2x128xf32>
    %208 = tpu.matmul %37, %207, %cst_99 {dimension_numbers = #tpu.dot_dimension_numbers<[1], [0], [0], [1], [0, 0, 1, 1], [], []>} : vector<2x9xf32>, vector<9x128xf32>, vector<2x128xf32> -> vector<2x128xf32>
    %cst_100 = arith.constant 9.99999993E-9 : f32
    %209 = vector.broadcast %cst_100 : f32 to vector<2x128xf32>
    %210 = arith.addf %208, %209 : vector<2x128xf32>
    %211 = tpu.reciprocal %210 {approx = true} : vector<2x128xf32> -> vector<2x128xf32>
    %212 = arith.mulf %210, %211 : vector<2x128xf32>
    %cst_101 = arith.constant 2.000000e+00 : f32
    %213 = vector.broadcast %cst_101 : f32 to vector<2x128xf32>
    %214 = arith.subf %213, %212 : vector<2x128xf32>
    %215 = arith.mulf %211, %214 : vector<2x128xf32>
    %216 = arith.mulf %50, %215 : vector<2x128xf32>
    %cst_102 = arith.constant dense<0.000000e+00> : vector<9x128xf32>
    %217 = tpu.matmul %39, %216, %cst_102 {dimension_numbers = #tpu.dot_dimension_numbers<[1], [0], [0], [1], [0, 0, 1, 1], [], []>} : vector<9x2xf32>, vector<2x128xf32>, vector<9x128xf32> -> vector<9x128xf32>
    %218 = arith.addf %217, %45 : vector<9x128xf32>
    %219 = arith.mulf %207, %218 : vector<9x128xf32>
    %cst_103 = arith.constant dense<0.000000e+00> : vector<2x128xf32>
    %220 = tpu.matmul %36, %195, %cst_103 {dimension_numbers = #tpu.dot_dimension_numbers<[1], [0], [0], [1], [0, 0, 1, 1], [], []>} : vector<2x9xf32>, vector<9x128xf32>, vector<2x128xf32> -> vector<2x128xf32>
    %cst_104 = arith.constant 9.99999993E-9 : f32
    %221 = vector.broadcast %cst_104 : f32 to vector<2x128xf32>
    %222 = arith.addf %220, %221 : vector<2x128xf32>
    %223 = tpu.reciprocal %222 {approx = true} : vector<2x128xf32> -> vector<2x128xf32>
    %224 = arith.mulf %222, %223 : vector<2x128xf32>
    %cst_105 = arith.constant 2.000000e+00 : f32
    %225 = vector.broadcast %cst_105 : f32 to vector<2x128xf32>
    %226 = arith.subf %225, %224 : vector<2x128xf32>
    %227 = arith.mulf %223, %226 : vector<2x128xf32>
    %228 = arith.mulf %49, %227 : vector<2x128xf32>
    %cst_106 = arith.constant dense<0.000000e+00> : vector<9x128xf32>
    %229 = tpu.matmul %38, %228, %cst_106 {dimension_numbers = #tpu.dot_dimension_numbers<[1], [0], [0], [1], [0, 0, 1, 1], [], []>} : vector<9x2xf32>, vector<2x128xf32>, vector<9x128xf32> -> vector<9x128xf32>
    %230 = arith.addf %229, %42 : vector<9x128xf32>
    %231 = arith.mulf %195, %230 : vector<9x128xf32>
    %cst_107 = arith.constant dense<0.000000e+00> : vector<2x128xf32>
    %232 = tpu.matmul %37, %231, %cst_107 {dimension_numbers = #tpu.dot_dimension_numbers<[1], [0], [0], [1], [0, 0, 1, 1], [], []>} : vector<2x9xf32>, vector<9x128xf32>, vector<2x128xf32> -> vector<2x128xf32>
    %cst_108 = arith.constant 9.99999993E-9 : f32
    %233 = vector.broadcast %cst_108 : f32 to vector<2x128xf32>
    %234 = arith.addf %232, %233 : vector<2x128xf32>
    %235 = tpu.reciprocal %234 {approx = true} : vector<2x128xf32> -> vector<2x128xf32>
    %236 = arith.mulf %234, %235 : vector<2x128xf32>
    %cst_109 = arith.constant 2.000000e+00 : f32
    %237 = vector.broadcast %cst_109 : f32 to vector<2x128xf32>
    %238 = arith.subf %237, %236 : vector<2x128xf32>
    %239 = arith.mulf %235, %238 : vector<2x128xf32>
    %240 = arith.mulf %51, %239 : vector<2x128xf32>
    %cst_110 = arith.constant dense<0.000000e+00> : vector<9x128xf32>
    %241 = tpu.matmul %39, %240, %cst_110 {dimension_numbers = #tpu.dot_dimension_numbers<[1], [0], [0], [1], [0, 0, 1, 1], [], []>} : vector<9x2xf32>, vector<2x128xf32>, vector<9x128xf32> -> vector<9x128xf32>
    %242 = arith.addf %241, %45 : vector<9x128xf32>
    %243 = arith.mulf %231, %242 : vector<9x128xf32>
    %c4_i32 = arith.constant 4 : i32
    %cst_111 = arith.constant dense<0.000000e+00> : vector<2x128xf32>
    %244 = tpu.matmul %36, %219, %cst_111 {dimension_numbers = #tpu.dot_dimension_numbers<[1], [0], [0], [1], [0, 0, 1, 1], [], []>} : vector<2x9xf32>, vector<9x128xf32>, vector<2x128xf32> -> vector<2x128xf32>
    %cst_112 = arith.constant 9.99999993E-9 : f32
    %245 = vector.broadcast %cst_112 : f32 to vector<2x128xf32>
    %246 = arith.addf %244, %245 : vector<2x128xf32>
    %247 = tpu.reciprocal %246 {approx = true} : vector<2x128xf32> -> vector<2x128xf32>
    %248 = arith.mulf %246, %247 : vector<2x128xf32>
    %cst_113 = arith.constant 2.000000e+00 : f32
    %249 = vector.broadcast %cst_113 : f32 to vector<2x128xf32>
    %250 = arith.subf %249, %248 : vector<2x128xf32>
    %251 = arith.mulf %247, %250 : vector<2x128xf32>
    %252 = arith.mulf %48, %251 : vector<2x128xf32>
    %cst_114 = arith.constant dense<0.000000e+00> : vector<9x128xf32>
    %253 = tpu.matmul %38, %252, %cst_114 {dimension_numbers = #tpu.dot_dimension_numbers<[1], [0], [0], [1], [0, 0, 1, 1], [], []>} : vector<9x2xf32>, vector<2x128xf32>, vector<9x128xf32> -> vector<9x128xf32>
    %254 = arith.addf %253, %42 : vector<9x128xf32>
    %255 = arith.mulf %219, %254 : vector<9x128xf32>
    %cst_115 = arith.constant dense<0.000000e+00> : vector<2x128xf32>
    %256 = tpu.matmul %37, %255, %cst_115 {dimension_numbers = #tpu.dot_dimension_numbers<[1], [0], [0], [1], [0, 0, 1, 1], [], []>} : vector<2x9xf32>, vector<9x128xf32>, vector<2x128xf32> -> vector<2x128xf32>
    %cst_116 = arith.constant 9.99999993E-9 : f32
    %257 = vector.broadcast %cst_116 : f32 to vector<2x128xf32>
    %258 = arith.addf %256, %257 : vector<2x128xf32>
    %259 = tpu.reciprocal %258 {approx = true} : vector<2x128xf32> -> vector<2x128xf32>
    %260 = arith.mulf %258, %259 : vector<2x128xf32>
    %cst_117 = arith.constant 2.000000e+00 : f32
    %261 = vector.broadcast %cst_117 : f32 to vector<2x128xf32>
    %262 = arith.subf %261, %260 : vector<2x128xf32>
    %263 = arith.mulf %259, %262 : vector<2x128xf32>
    %264 = arith.mulf %50, %263 : vector<2x128xf32>
    %cst_118 = arith.constant dense<0.000000e+00> : vector<9x128xf32>
    %265 = tpu.matmul %39, %264, %cst_118 {dimension_numbers = #tpu.dot_dimension_numbers<[1], [0], [0], [1], [0, 0, 1, 1], [], []>} : vector<9x2xf32>, vector<2x128xf32>, vector<9x128xf32> -> vector<9x128xf32>
    %266 = arith.addf %265, %45 : vector<9x128xf32>
    %267 = arith.mulf %255, %266 : vector<9x128xf32>
    %cst_119 = arith.constant dense<0.000000e+00> : vector<2x128xf32>
    %268 = tpu.matmul %36, %243, %cst_119 {dimension_numbers = #tpu.dot_dimension_numbers<[1], [0], [0], [1], [0, 0, 1, 1], [], []>} : vector<2x9xf32>, vector<9x128xf32>, vector<2x128xf32> -> vector<2x128xf32>
    %cst_120 = arith.constant 9.99999993E-9 : f32
    %269 = vector.broadcast %cst_120 : f32 to vector<2x128xf32>
    %270 = arith.addf %268, %269 : vector<2x128xf32>
    %271 = tpu.reciprocal %270 {approx = true} : vector<2x128xf32> -> vector<2x128xf32>
    %272 = arith.mulf %270, %271 : vector<2x128xf32>
    %cst_121 = arith.constant 2.000000e+00 : f32
    %273 = vector.broadcast %cst_121 : f32 to vector<2x128xf32>
    %274 = arith.subf %273, %272 : vector<2x128xf32>
    %275 = arith.mulf %271, %274 : vector<2x128xf32>
    %276 = arith.mulf %49, %275 : vector<2x128xf32>
    %cst_122 = arith.constant dense<0.000000e+00> : vector<9x128xf32>
    %277 = tpu.matmul %38, %276, %cst_122 {dimension_numbers = #tpu.dot_dimension_numbers<[1], [0], [0], [1], [0, 0, 1, 1], [], []>} : vector<9x2xf32>, vector<2x128xf32>, vector<9x128xf32> -> vector<9x128xf32>
    %278 = arith.addf %277, %42 : vector<9x128xf32>
    %279 = arith.mulf %243, %278 : vector<9x128xf32>
    %cst_123 = arith.constant dense<0.000000e+00> : vector<2x128xf32>
    %280 = tpu.matmul %37, %279, %cst_123 {dimension_numbers = #tpu.dot_dimension_numbers<[1], [0], [0], [1], [0, 0, 1, 1], [], []>} : vector<2x9xf32>, vector<9x128xf32>, vector<2x128xf32> -> vector<2x128xf32>
    %cst_124 = arith.constant 9.99999993E-9 : f32
    %281 = vector.broadcast %cst_124 : f32 to vector<2x128xf32>
    %282 = arith.addf %280, %281 : vector<2x128xf32>
    %283 = tpu.reciprocal %282 {approx = true} : vector<2x128xf32> -> vector<2x128xf32>
    %284 = arith.mulf %282, %283 : vector<2x128xf32>
    %cst_125 = arith.constant 2.000000e+00 : f32
    %285 = vector.broadcast %cst_125 : f32 to vector<2x128xf32>
    %286 = arith.subf %285, %284 : vector<2x128xf32>
    %287 = arith.mulf %283, %286 : vector<2x128xf32>
    %288 = arith.mulf %51, %287 : vector<2x128xf32>
    %cst_126 = arith.constant dense<0.000000e+00> : vector<9x128xf32>
    %289 = tpu.matmul %39, %288, %cst_126 {dimension_numbers = #tpu.dot_dimension_numbers<[1], [0], [0], [1], [0, 0, 1, 1], [], []>} : vector<9x2xf32>, vector<2x128xf32>, vector<9x128xf32> -> vector<9x128xf32>
    %290 = arith.addf %289, %45 : vector<9x128xf32>
    %291 = arith.mulf %279, %290 : vector<9x128xf32>
    %c5_i32 = arith.constant 5 : i32
    %cst_127 = arith.constant dense<0.000000e+00> : vector<2x128xf32>
    %292 = tpu.matmul %36, %267, %cst_127 {dimension_numbers = #tpu.dot_dimension_numbers<[1], [0], [0], [1], [0, 0, 1, 1], [], []>} : vector<2x9xf32>, vector<9x128xf32>, vector<2x128xf32> -> vector<2x128xf32>
    %cst_128 = arith.constant 9.99999993E-9 : f32
    %293 = vector.broadcast %cst_128 : f32 to vector<2x128xf32>
    %294 = arith.addf %292, %293 : vector<2x128xf32>
    %295 = tpu.reciprocal %294 {approx = true} : vector<2x128xf32> -> vector<2x128xf32>
    %296 = arith.mulf %294, %295 : vector<2x128xf32>
    %cst_129 = arith.constant 2.000000e+00 : f32
    %297 = vector.broadcast %cst_129 : f32 to vector<2x128xf32>
    %298 = arith.subf %297, %296 : vector<2x128xf32>
    %299 = arith.mulf %295, %298 : vector<2x128xf32>
    %300 = arith.mulf %48, %299 : vector<2x128xf32>
    %cst_130 = arith.constant dense<0.000000e+00> : vector<9x128xf32>
    %301 = tpu.matmul %38, %300, %cst_130 {dimension_numbers = #tpu.dot_dimension_numbers<[1], [0], [0], [1], [0, 0, 1, 1], [], []>} : vector<9x2xf32>, vector<2x128xf32>, vector<9x128xf32> -> vector<9x128xf32>
    %302 = arith.addf %301, %42 : vector<9x128xf32>
    %303 = arith.mulf %267, %302 : vector<9x128xf32>
    %cst_131 = arith.constant dense<0.000000e+00> : vector<2x128xf32>
    %304 = tpu.matmul %37, %303, %cst_131 {dimension_numbers = #tpu.dot_dimension_numbers<[1], [0], [0], [1], [0, 0, 1, 1], [], []>} : vector<2x9xf32>, vector<9x128xf32>, vector<2x128xf32> -> vector<2x128xf32>
    %cst_132 = arith.constant 9.99999993E-9 : f32
    %305 = vector.broadcast %cst_132 : f32 to vector<2x128xf32>
    %306 = arith.addf %304, %305 : vector<2x128xf32>
    %307 = tpu.reciprocal %306 {approx = true} : vector<2x128xf32> -> vector<2x128xf32>
    %308 = arith.mulf %306, %307 : vector<2x128xf32>
    %cst_133 = arith.constant 2.000000e+00 : f32
    %309 = vector.broadcast %cst_133 : f32 to vector<2x128xf32>
    %310 = arith.subf %309, %308 : vector<2x128xf32>
    %311 = arith.mulf %307, %310 : vector<2x128xf32>
    %312 = arith.mulf %50, %311 : vector<2x128xf32>
    %cst_134 = arith.constant dense<0.000000e+00> : vector<9x128xf32>
    %313 = tpu.matmul %39, %312, %cst_134 {dimension_numbers = #tpu.dot_dimension_numbers<[1], [0], [0], [1], [0, 0, 1, 1], [], []>} : vector<9x2xf32>, vector<2x128xf32>, vector<9x128xf32> -> vector<9x128xf32>
    %314 = arith.addf %313, %45 : vector<9x128xf32>
    %315 = arith.mulf %303, %314 : vector<9x128xf32>
    %cst_135 = arith.constant dense<0.000000e+00> : vector<2x128xf32>
    %316 = tpu.matmul %36, %291, %cst_135 {dimension_numbers = #tpu.dot_dimension_numbers<[1], [0], [0], [1], [0, 0, 1, 1], [], []>} : vector<2x9xf32>, vector<9x128xf32>, vector<2x128xf32> -> vector<2x128xf32>
    %cst_136 = arith.constant 9.99999993E-9 : f32
    %317 = vector.broadcast %cst_136 : f32 to vector<2x128xf32>
    %318 = arith.addf %316, %317 : vector<2x128xf32>
    %319 = tpu.reciprocal %318 {approx = true} : vector<2x128xf32> -> vector<2x128xf32>
    %320 = arith.mulf %318, %319 : vector<2x128xf32>
    %cst_137 = arith.constant 2.000000e+00 : f32
    %321 = vector.broadcast %cst_137 : f32 to vector<2x128xf32>
    %322 = arith.subf %321, %320 : vector<2x128xf32>
    %323 = arith.mulf %319, %322 : vector<2x128xf32>
    %324 = arith.mulf %49, %323 : vector<2x128xf32>
    %cst_138 = arith.constant dense<0.000000e+00> : vector<9x128xf32>
    %325 = tpu.matmul %38, %324, %cst_138 {dimension_numbers = #tpu.dot_dimension_numbers<[1], [0], [0], [1], [0, 0, 1, 1], [], []>} : vector<9x2xf32>, vector<2x128xf32>, vector<9x128xf32> -> vector<9x128xf32>
    %326 = arith.addf %325, %42 : vector<9x128xf32>
    %327 = arith.mulf %291, %326 : vector<9x128xf32>
    %cst_139 = arith.constant dense<0.000000e+00> : vector<2x128xf32>
    %328 = tpu.matmul %37, %327, %cst_139 {dimension_numbers = #tpu.dot_dimension_numbers<[1], [0], [0], [1], [0, 0, 1, 1], [], []>} : vector<2x9xf32>, vector<9x128xf32>, vector<2x128xf32> -> vector<2x128xf32>
    %cst_140 = arith.constant 9.99999993E-9 : f32
    %329 = vector.broadcast %cst_140 : f32 to vector<2x128xf32>
    %330 = arith.addf %328, %329 : vector<2x128xf32>
    %331 = tpu.reciprocal %330 {approx = true} : vector<2x128xf32> -> vector<2x128xf32>
    %332 = arith.mulf %330, %331 : vector<2x128xf32>
    %cst_141 = arith.constant 2.000000e+00 : f32
    %333 = vector.broadcast %cst_141 : f32 to vector<2x128xf32>
    %334 = arith.subf %333, %332 : vector<2x128xf32>
    %335 = arith.mulf %331, %334 : vector<2x128xf32>
    %336 = arith.mulf %51, %335 : vector<2x128xf32>
    %cst_142 = arith.constant dense<0.000000e+00> : vector<9x128xf32>
    %337 = tpu.matmul %39, %336, %cst_142 {dimension_numbers = #tpu.dot_dimension_numbers<[1], [0], [0], [1], [0, 0, 1, 1], [], []>} : vector<9x2xf32>, vector<2x128xf32>, vector<9x128xf32> -> vector<9x128xf32>
    %338 = arith.addf %337, %45 : vector<9x128xf32>
    %339 = arith.mulf %327, %338 : vector<9x128xf32>
    %c6_i32 = arith.constant 6 : i32
    %cst_143 = arith.constant dense<0.000000e+00> : vector<2x128xf32>
    %340 = tpu.matmul %36, %315, %cst_143 {dimension_numbers = #tpu.dot_dimension_numbers<[1], [0], [0], [1], [0, 0, 1, 1], [], []>} : vector<2x9xf32>, vector<9x128xf32>, vector<2x128xf32> -> vector<2x128xf32>
    %cst_144 = arith.constant 9.99999993E-9 : f32
    %341 = vector.broadcast %cst_144 : f32 to vector<2x128xf32>
    %342 = arith.addf %340, %341 : vector<2x128xf32>
    %343 = tpu.reciprocal %342 {approx = true} : vector<2x128xf32> -> vector<2x128xf32>
    %344 = arith.mulf %342, %343 : vector<2x128xf32>
    %cst_145 = arith.constant 2.000000e+00 : f32
    %345 = vector.broadcast %cst_145 : f32 to vector<2x128xf32>
    %346 = arith.subf %345, %344 : vector<2x128xf32>
    %347 = arith.mulf %343, %346 : vector<2x128xf32>
    %348 = arith.mulf %48, %347 : vector<2x128xf32>
    %cst_146 = arith.constant dense<0.000000e+00> : vector<9x128xf32>
    %349 = tpu.matmul %38, %348, %cst_146 {dimension_numbers = #tpu.dot_dimension_numbers<[1], [0], [0], [1], [0, 0, 1, 1], [], []>} : vector<9x2xf32>, vector<2x128xf32>, vector<9x128xf32> -> vector<9x128xf32>
    %350 = arith.addf %349, %42 : vector<9x128xf32>
    %351 = arith.mulf %315, %350 : vector<9x128xf32>
    %cst_147 = arith.constant dense<0.000000e+00> : vector<2x128xf32>
    %352 = tpu.matmul %37, %351, %cst_147 {dimension_numbers = #tpu.dot_dimension_numbers<[1], [0], [0], [1], [0, 0, 1, 1], [], []>} : vector<2x9xf32>, vector<9x128xf32>, vector<2x128xf32> -> vector<2x128xf32>
    %cst_148 = arith.constant 9.99999993E-9 : f32
    %353 = vector.broadcast %cst_148 : f32 to vector<2x128xf32>
    %354 = arith.addf %352, %353 : vector<2x128xf32>
    %355 = tpu.reciprocal %354 {approx = true} : vector<2x128xf32> -> vector<2x128xf32>
    %356 = arith.mulf %354, %355 : vector<2x128xf32>
    %cst_149 = arith.constant 2.000000e+00 : f32
    %357 = vector.broadcast %cst_149 : f32 to vector<2x128xf32>
    %358 = arith.subf %357, %356 : vector<2x128xf32>
    %359 = arith.mulf %355, %358 : vector<2x128xf32>
    %360 = arith.mulf %50, %359 : vector<2x128xf32>
    %cst_150 = arith.constant dense<0.000000e+00> : vector<9x128xf32>
    %361 = tpu.matmul %39, %360, %cst_150 {dimension_numbers = #tpu.dot_dimension_numbers<[1], [0], [0], [1], [0, 0, 1, 1], [], []>} : vector<9x2xf32>, vector<2x128xf32>, vector<9x128xf32> -> vector<9x128xf32>
    %362 = arith.addf %361, %45 : vector<9x128xf32>
    %363 = arith.mulf %351, %362 : vector<9x128xf32>
    %cst_151 = arith.constant dense<0.000000e+00> : vector<2x128xf32>
    %364 = tpu.matmul %36, %339, %cst_151 {dimension_numbers = #tpu.dot_dimension_numbers<[1], [0], [0], [1], [0, 0, 1, 1], [], []>} : vector<2x9xf32>, vector<9x128xf32>, vector<2x128xf32> -> vector<2x128xf32>
    %cst_152 = arith.constant 9.99999993E-9 : f32
    %365 = vector.broadcast %cst_152 : f32 to vector<2x128xf32>
    %366 = arith.addf %364, %365 : vector<2x128xf32>
    %367 = tpu.reciprocal %366 {approx = true} : vector<2x128xf32> -> vector<2x128xf32>
    %368 = arith.mulf %366, %367 : vector<2x128xf32>
    %cst_153 = arith.constant 2.000000e+00 : f32
    %369 = vector.broadcast %cst_153 : f32 to vector<2x128xf32>
    %370 = arith.subf %369, %368 : vector<2x128xf32>
    %371 = arith.mulf %367, %370 : vector<2x128xf32>
    %372 = arith.mulf %49, %371 : vector<2x128xf32>
    %cst_154 = arith.constant dense<0.000000e+00> : vector<9x128xf32>
    %373 = tpu.matmul %38, %372, %cst_154 {dimension_numbers = #tpu.dot_dimension_numbers<[1], [0], [0], [1], [0, 0, 1, 1], [], []>} : vector<9x2xf32>, vector<2x128xf32>, vector<9x128xf32> -> vector<9x128xf32>
    %374 = arith.addf %373, %42 : vector<9x128xf32>
    %375 = arith.mulf %339, %374 : vector<9x128xf32>
    %cst_155 = arith.constant dense<0.000000e+00> : vector<2x128xf32>
    %376 = tpu.matmul %37, %375, %cst_155 {dimension_numbers = #tpu.dot_dimension_numbers<[1], [0], [0], [1], [0, 0, 1, 1], [], []>} : vector<2x9xf32>, vector<9x128xf32>, vector<2x128xf32> -> vector<2x128xf32>
    %cst_156 = arith.constant 9.99999993E-9 : f32
    %377 = vector.broadcast %cst_156 : f32 to vector<2x128xf32>
    %378 = arith.addf %376, %377 : vector<2x128xf32>
    %379 = tpu.reciprocal %378 {approx = true} : vector<2x128xf32> -> vector<2x128xf32>
    %380 = arith.mulf %378, %379 : vector<2x128xf32>
    %cst_157 = arith.constant 2.000000e+00 : f32
    %381 = vector.broadcast %cst_157 : f32 to vector<2x128xf32>
    %382 = arith.subf %381, %380 : vector<2x128xf32>
    %383 = arith.mulf %379, %382 : vector<2x128xf32>
    %384 = arith.mulf %51, %383 : vector<2x128xf32>
    %cst_158 = arith.constant dense<0.000000e+00> : vector<9x128xf32>
    %385 = tpu.matmul %39, %384, %cst_158 {dimension_numbers = #tpu.dot_dimension_numbers<[1], [0], [0], [1], [0, 0, 1, 1], [], []>} : vector<9x2xf32>, vector<2x128xf32>, vector<9x128xf32> -> vector<9x128xf32>
    %386 = arith.addf %385, %45 : vector<9x128xf32>
    %387 = arith.mulf %375, %386 : vector<9x128xf32>
    %c7_i32 = arith.constant 7 : i32
    %cst_159 = arith.constant dense<0.000000e+00> : vector<2x128xf32>
    %388 = tpu.matmul %36, %363, %cst_159 {dimension_numbers = #tpu.dot_dimension_numbers<[1], [0], [0], [1], [0, 0, 1, 1], [], []>} : vector<2x9xf32>, vector<9x128xf32>, vector<2x128xf32> -> vector<2x128xf32>
    %cst_160 = arith.constant 9.99999993E-9 : f32
    %389 = vector.broadcast %cst_160 : f32 to vector<2x128xf32>
    %390 = arith.addf %388, %389 : vector<2x128xf32>
    %391 = tpu.reciprocal %390 {approx = true} : vector<2x128xf32> -> vector<2x128xf32>
    %392 = arith.mulf %390, %391 : vector<2x128xf32>
    %cst_161 = arith.constant 2.000000e+00 : f32
    %393 = vector.broadcast %cst_161 : f32 to vector<2x128xf32>
    %394 = arith.subf %393, %392 : vector<2x128xf32>
    %395 = arith.mulf %391, %394 : vector<2x128xf32>
    %396 = arith.mulf %48, %395 : vector<2x128xf32>
    %cst_162 = arith.constant dense<0.000000e+00> : vector<9x128xf32>
    %397 = tpu.matmul %38, %396, %cst_162 {dimension_numbers = #tpu.dot_dimension_numbers<[1], [0], [0], [1], [0, 0, 1, 1], [], []>} : vector<9x2xf32>, vector<2x128xf32>, vector<9x128xf32> -> vector<9x128xf32>
    %398 = arith.addf %397, %42 : vector<9x128xf32>
    %399 = arith.mulf %363, %398 : vector<9x128xf32>
    %cst_163 = arith.constant dense<0.000000e+00> : vector<2x128xf32>
    %400 = tpu.matmul %37, %399, %cst_163 {dimension_numbers = #tpu.dot_dimension_numbers<[1], [0], [0], [1], [0, 0, 1, 1], [], []>} : vector<2x9xf32>, vector<9x128xf32>, vector<2x128xf32> -> vector<2x128xf32>
    %cst_164 = arith.constant 9.99999993E-9 : f32
    %401 = vector.broadcast %cst_164 : f32 to vector<2x128xf32>
    %402 = arith.addf %400, %401 : vector<2x128xf32>
    %403 = tpu.reciprocal %402 {approx = true} : vector<2x128xf32> -> vector<2x128xf32>
    %404 = arith.mulf %402, %403 : vector<2x128xf32>
    %cst_165 = arith.constant 2.000000e+00 : f32
    %405 = vector.broadcast %cst_165 : f32 to vector<2x128xf32>
    %406 = arith.subf %405, %404 : vector<2x128xf32>
    %407 = arith.mulf %403, %406 : vector<2x128xf32>
    %408 = arith.mulf %50, %407 : vector<2x128xf32>
    %cst_166 = arith.constant dense<0.000000e+00> : vector<9x128xf32>
    %409 = tpu.matmul %39, %408, %cst_166 {dimension_numbers = #tpu.dot_dimension_numbers<[1], [0], [0], [1], [0, 0, 1, 1], [], []>} : vector<9x2xf32>, vector<2x128xf32>, vector<9x128xf32> -> vector<9x128xf32>
    %410 = arith.addf %409, %45 : vector<9x128xf32>
    %411 = arith.mulf %399, %410 : vector<9x128xf32>
    %cst_167 = arith.constant dense<0.000000e+00> : vector<2x128xf32>
    %412 = tpu.matmul %36, %387, %cst_167 {dimension_numbers = #tpu.dot_dimension_numbers<[1], [0], [0], [1], [0, 0, 1, 1], [], []>} : vector<2x9xf32>, vector<9x128xf32>, vector<2x128xf32> -> vector<2x128xf32>
    %cst_168 = arith.constant 9.99999993E-9 : f32
    %413 = vector.broadcast %cst_168 : f32 to vector<2x128xf32>
    %414 = arith.addf %412, %413 : vector<2x128xf32>
    %415 = tpu.reciprocal %414 {approx = true} : vector<2x128xf32> -> vector<2x128xf32>
    %416 = arith.mulf %414, %415 : vector<2x128xf32>
    %cst_169 = arith.constant 2.000000e+00 : f32
    %417 = vector.broadcast %cst_169 : f32 to vector<2x128xf32>
    %418 = arith.subf %417, %416 : vector<2x128xf32>
    %419 = arith.mulf %415, %418 : vector<2x128xf32>
    %420 = arith.mulf %49, %419 : vector<2x128xf32>
    %cst_170 = arith.constant dense<0.000000e+00> : vector<9x128xf32>
    %421 = tpu.matmul %38, %420, %cst_170 {dimension_numbers = #tpu.dot_dimension_numbers<[1], [0], [0], [1], [0, 0, 1, 1], [], []>} : vector<9x2xf32>, vector<2x128xf32>, vector<9x128xf32> -> vector<9x128xf32>
    %422 = arith.addf %421, %42 : vector<9x128xf32>
    %423 = arith.mulf %387, %422 : vector<9x128xf32>
    %cst_171 = arith.constant dense<0.000000e+00> : vector<2x128xf32>
    %424 = tpu.matmul %37, %423, %cst_171 {dimension_numbers = #tpu.dot_dimension_numbers<[1], [0], [0], [1], [0, 0, 1, 1], [], []>} : vector<2x9xf32>, vector<9x128xf32>, vector<2x128xf32> -> vector<2x128xf32>
    %cst_172 = arith.constant 9.99999993E-9 : f32
    %425 = vector.broadcast %cst_172 : f32 to vector<2x128xf32>
    %426 = arith.addf %424, %425 : vector<2x128xf32>
    %427 = tpu.reciprocal %426 {approx = true} : vector<2x128xf32> -> vector<2x128xf32>
    %428 = arith.mulf %426, %427 : vector<2x128xf32>
    %cst_173 = arith.constant 2.000000e+00 : f32
    %429 = vector.broadcast %cst_173 : f32 to vector<2x128xf32>
    %430 = arith.subf %429, %428 : vector<2x128xf32>
    %431 = arith.mulf %427, %430 : vector<2x128xf32>
    %432 = arith.mulf %51, %431 : vector<2x128xf32>
    %cst_174 = arith.constant dense<0.000000e+00> : vector<9x128xf32>
    %433 = tpu.matmul %39, %432, %cst_174 {dimension_numbers = #tpu.dot_dimension_numbers<[1], [0], [0], [1], [0, 0, 1, 1], [], []>} : vector<9x2xf32>, vector<2x128xf32>, vector<9x128xf32> -> vector<9x128xf32>
    %434 = arith.addf %433, %45 : vector<9x128xf32>
    %435 = arith.mulf %423, %434 : vector<9x128xf32>
    %c8_i32 = arith.constant 8 : i32
    %cst_175 = arith.constant dense<0.000000e+00> : vector<2x128xf32>
    %436 = tpu.matmul %36, %411, %cst_175 {dimension_numbers = #tpu.dot_dimension_numbers<[1], [0], [0], [1], [0, 0, 1, 1], [], []>} : vector<2x9xf32>, vector<9x128xf32>, vector<2x128xf32> -> vector<2x128xf32>
    %cst_176 = arith.constant 9.99999993E-9 : f32
    %437 = vector.broadcast %cst_176 : f32 to vector<2x128xf32>
    %438 = arith.addf %436, %437 : vector<2x128xf32>
    %439 = tpu.reciprocal %438 {approx = true} : vector<2x128xf32> -> vector<2x128xf32>
    %440 = arith.mulf %438, %439 : vector<2x128xf32>
    %cst_177 = arith.constant 2.000000e+00 : f32
    %441 = vector.broadcast %cst_177 : f32 to vector<2x128xf32>
    %442 = arith.subf %441, %440 : vector<2x128xf32>
    %443 = arith.mulf %439, %442 : vector<2x128xf32>
    %444 = arith.mulf %48, %443 : vector<2x128xf32>
    %cst_178 = arith.constant dense<0.000000e+00> : vector<9x128xf32>
    %445 = tpu.matmul %38, %444, %cst_178 {dimension_numbers = #tpu.dot_dimension_numbers<[1], [0], [0], [1], [0, 0, 1, 1], [], []>} : vector<9x2xf32>, vector<2x128xf32>, vector<9x128xf32> -> vector<9x128xf32>
    %446 = arith.addf %445, %42 : vector<9x128xf32>
    %447 = arith.mulf %411, %446 : vector<9x128xf32>
    %cst_179 = arith.constant dense<0.000000e+00> : vector<2x128xf32>
    %448 = tpu.matmul %37, %447, %cst_179 {dimension_numbers = #tpu.dot_dimension_numbers<[1], [0], [0], [1], [0, 0, 1, 1], [], []>} : vector<2x9xf32>, vector<9x128xf32>, vector<2x128xf32> -> vector<2x128xf32>
    %cst_180 = arith.constant 9.99999993E-9 : f32
    %449 = vector.broadcast %cst_180 : f32 to vector<2x128xf32>
    %450 = arith.addf %448, %449 : vector<2x128xf32>
    %451 = tpu.reciprocal %450 {approx = true} : vector<2x128xf32> -> vector<2x128xf32>
    %452 = arith.mulf %450, %451 : vector<2x128xf32>
    %cst_181 = arith.constant 2.000000e+00 : f32
    %453 = vector.broadcast %cst_181 : f32 to vector<2x128xf32>
    %454 = arith.subf %453, %452 : vector<2x128xf32>
    %455 = arith.mulf %451, %454 : vector<2x128xf32>
    %456 = arith.mulf %50, %455 : vector<2x128xf32>
    %cst_182 = arith.constant dense<0.000000e+00> : vector<9x128xf32>
    %457 = tpu.matmul %39, %456, %cst_182 {dimension_numbers = #tpu.dot_dimension_numbers<[1], [0], [0], [1], [0, 0, 1, 1], [], []>} : vector<9x2xf32>, vector<2x128xf32>, vector<9x128xf32> -> vector<9x128xf32>
    %458 = arith.addf %457, %45 : vector<9x128xf32>
    %459 = arith.mulf %447, %458 : vector<9x128xf32>
    %cst_183 = arith.constant dense<0.000000e+00> : vector<2x128xf32>
    %460 = tpu.matmul %36, %435, %cst_183 {dimension_numbers = #tpu.dot_dimension_numbers<[1], [0], [0], [1], [0, 0, 1, 1], [], []>} : vector<2x9xf32>, vector<9x128xf32>, vector<2x128xf32> -> vector<2x128xf32>
    %cst_184 = arith.constant 9.99999993E-9 : f32
    %461 = vector.broadcast %cst_184 : f32 to vector<2x128xf32>
    %462 = arith.addf %460, %461 : vector<2x128xf32>
    %463 = tpu.reciprocal %462 {approx = true} : vector<2x128xf32> -> vector<2x128xf32>
    %464 = arith.mulf %462, %463 : vector<2x128xf32>
    %cst_185 = arith.constant 2.000000e+00 : f32
    %465 = vector.broadcast %cst_185 : f32 to vector<2x128xf32>
    %466 = arith.subf %465, %464 : vector<2x128xf32>
    %467 = arith.mulf %463, %466 : vector<2x128xf32>
    %468 = arith.mulf %49, %467 : vector<2x128xf32>
    %cst_186 = arith.constant dense<0.000000e+00> : vector<9x128xf32>
    %469 = tpu.matmul %38, %468, %cst_186 {dimension_numbers = #tpu.dot_dimension_numbers<[1], [0], [0], [1], [0, 0, 1, 1], [], []>} : vector<9x2xf32>, vector<2x128xf32>, vector<9x128xf32> -> vector<9x128xf32>
    %470 = arith.addf %469, %42 : vector<9x128xf32>
    %471 = arith.mulf %435, %470 : vector<9x128xf32>
    %cst_187 = arith.constant dense<0.000000e+00> : vector<2x128xf32>
    %472 = tpu.matmul %37, %471, %cst_187 {dimension_numbers = #tpu.dot_dimension_numbers<[1], [0], [0], [1], [0, 0, 1, 1], [], []>} : vector<2x9xf32>, vector<9x128xf32>, vector<2x128xf32> -> vector<2x128xf32>
    %cst_188 = arith.constant 9.99999993E-9 : f32
    %473 = vector.broadcast %cst_188 : f32 to vector<2x128xf32>
    %474 = arith.addf %472, %473 : vector<2x128xf32>
    %475 = tpu.reciprocal %474 {approx = true} : vector<2x128xf32> -> vector<2x128xf32>
    %476 = arith.mulf %474, %475 : vector<2x128xf32>
    %cst_189 = arith.constant 2.000000e+00 : f32
    %477 = vector.broadcast %cst_189 : f32 to vector<2x128xf32>
    %478 = arith.subf %477, %476 : vector<2x128xf32>
    %479 = arith.mulf %475, %478 : vector<2x128xf32>
    %480 = arith.mulf %51, %479 : vector<2x128xf32>
    %cst_190 = arith.constant dense<0.000000e+00> : vector<9x128xf32>
    %481 = tpu.matmul %39, %480, %cst_190 {dimension_numbers = #tpu.dot_dimension_numbers<[1], [0], [0], [1], [0, 0, 1, 1], [], []>} : vector<9x2xf32>, vector<2x128xf32>, vector<9x128xf32> -> vector<9x128xf32>
    %482 = arith.addf %481, %45 : vector<9x128xf32>
    %483 = arith.mulf %471, %482 : vector<9x128xf32>
    %c9_i32 = arith.constant 9 : i32
    %cst_191 = arith.constant dense<0.000000e+00> : vector<2x128xf32>
    %484 = tpu.matmul %36, %459, %cst_191 {dimension_numbers = #tpu.dot_dimension_numbers<[1], [0], [0], [1], [0, 0, 1, 1], [], []>} : vector<2x9xf32>, vector<9x128xf32>, vector<2x128xf32> -> vector<2x128xf32>
    %cst_192 = arith.constant 9.99999993E-9 : f32
    %485 = vector.broadcast %cst_192 : f32 to vector<2x128xf32>
    %486 = arith.addf %484, %485 : vector<2x128xf32>
    %487 = tpu.reciprocal %486 {approx = true} : vector<2x128xf32> -> vector<2x128xf32>
    %488 = arith.mulf %486, %487 : vector<2x128xf32>
    %cst_193 = arith.constant 2.000000e+00 : f32
    %489 = vector.broadcast %cst_193 : f32 to vector<2x128xf32>
    %490 = arith.subf %489, %488 : vector<2x128xf32>
    %491 = arith.mulf %487, %490 : vector<2x128xf32>
    %492 = arith.mulf %48, %491 : vector<2x128xf32>
    %cst_194 = arith.constant dense<0.000000e+00> : vector<9x128xf32>
    %493 = tpu.matmul %38, %492, %cst_194 {dimension_numbers = #tpu.dot_dimension_numbers<[1], [0], [0], [1], [0, 0, 1, 1], [], []>} : vector<9x2xf32>, vector<2x128xf32>, vector<9x128xf32> -> vector<9x128xf32>
    %494 = arith.addf %493, %42 : vector<9x128xf32>
    %495 = arith.mulf %459, %494 : vector<9x128xf32>
    %cst_195 = arith.constant dense<0.000000e+00> : vector<2x128xf32>
    %496 = tpu.matmul %37, %495, %cst_195 {dimension_numbers = #tpu.dot_dimension_numbers<[1], [0], [0], [1], [0, 0, 1, 1], [], []>} : vector<2x9xf32>, vector<9x128xf32>, vector<2x128xf32> -> vector<2x128xf32>
    %cst_196 = arith.constant 9.99999993E-9 : f32
    %497 = vector.broadcast %cst_196 : f32 to vector<2x128xf32>
    %498 = arith.addf %496, %497 : vector<2x128xf32>
    %499 = tpu.reciprocal %498 {approx = true} : vector<2x128xf32> -> vector<2x128xf32>
    %500 = arith.mulf %498, %499 : vector<2x128xf32>
    %cst_197 = arith.constant 2.000000e+00 : f32
    %501 = vector.broadcast %cst_197 : f32 to vector<2x128xf32>
    %502 = arith.subf %501, %500 : vector<2x128xf32>
    %503 = arith.mulf %499, %502 : vector<2x128xf32>
    %504 = arith.mulf %50, %503 : vector<2x128xf32>
    %cst_198 = arith.constant dense<0.000000e+00> : vector<9x128xf32>
    %505 = tpu.matmul %39, %504, %cst_198 {dimension_numbers = #tpu.dot_dimension_numbers<[1], [0], [0], [1], [0, 0, 1, 1], [], []>} : vector<9x2xf32>, vector<2x128xf32>, vector<9x128xf32> -> vector<9x128xf32>
    %506 = arith.addf %505, %45 : vector<9x128xf32>
    %507 = arith.mulf %495, %506 : vector<9x128xf32>
    %cst_199 = arith.constant dense<0.000000e+00> : vector<2x128xf32>
    %508 = tpu.matmul %36, %483, %cst_199 {dimension_numbers = #tpu.dot_dimension_numbers<[1], [0], [0], [1], [0, 0, 1, 1], [], []>} : vector<2x9xf32>, vector<9x128xf32>, vector<2x128xf32> -> vector<2x128xf32>
    %cst_200 = arith.constant 9.99999993E-9 : f32
    %509 = vector.broadcast %cst_200 : f32 to vector<2x128xf32>
    %510 = arith.addf %508, %509 : vector<2x128xf32>
    %511 = tpu.reciprocal %510 {approx = true} : vector<2x128xf32> -> vector<2x128xf32>
    %512 = arith.mulf %510, %511 : vector<2x128xf32>
    %cst_201 = arith.constant 2.000000e+00 : f32
    %513 = vector.broadcast %cst_201 : f32 to vector<2x128xf32>
    %514 = arith.subf %513, %512 : vector<2x128xf32>
    %515 = arith.mulf %511, %514 : vector<2x128xf32>
    %516 = arith.mulf %49, %515 : vector<2x128xf32>
    %cst_202 = arith.constant dense<0.000000e+00> : vector<9x128xf32>
    %517 = tpu.matmul %38, %516, %cst_202 {dimension_numbers = #tpu.dot_dimension_numbers<[1], [0], [0], [1], [0, 0, 1, 1], [], []>} : vector<9x2xf32>, vector<2x128xf32>, vector<9x128xf32> -> vector<9x128xf32>
    %518 = arith.addf %517, %42 : vector<9x128xf32>
    %519 = arith.mulf %483, %518 : vector<9x128xf32>
    %cst_203 = arith.constant dense<0.000000e+00> : vector<2x128xf32>
    %520 = tpu.matmul %37, %519, %cst_203 {dimension_numbers = #tpu.dot_dimension_numbers<[1], [0], [0], [1], [0, 0, 1, 1], [], []>} : vector<2x9xf32>, vector<9x128xf32>, vector<2x128xf32> -> vector<2x128xf32>
    %cst_204 = arith.constant 9.99999993E-9 : f32
    %521 = vector.broadcast %cst_204 : f32 to vector<2x128xf32>
    %522 = arith.addf %520, %521 : vector<2x128xf32>
    %523 = tpu.reciprocal %522 {approx = true} : vector<2x128xf32> -> vector<2x128xf32>
    %524 = arith.mulf %522, %523 : vector<2x128xf32>
    %cst_205 = arith.constant 2.000000e+00 : f32
    %525 = vector.broadcast %cst_205 : f32 to vector<2x128xf32>
    %526 = arith.subf %525, %524 : vector<2x128xf32>
    %527 = arith.mulf %523, %526 : vector<2x128xf32>
    %528 = arith.mulf %51, %527 : vector<2x128xf32>
    %cst_206 = arith.constant dense<0.000000e+00> : vector<9x128xf32>
    %529 = tpu.matmul %39, %528, %cst_206 {dimension_numbers = #tpu.dot_dimension_numbers<[1], [0], [0], [1], [0, 0, 1, 1], [], []>} : vector<9x2xf32>, vector<2x128xf32>, vector<9x128xf32> -> vector<9x128xf32>
    %530 = arith.addf %529, %45 : vector<9x128xf32>
    %531 = arith.mulf %519, %530 : vector<9x128xf32>
    %c10_i32 = arith.constant 10 : i32
    %cst_207 = arith.constant dense<0.000000e+00> : vector<2x128xf32>
    %532 = tpu.matmul %36, %507, %cst_207 {dimension_numbers = #tpu.dot_dimension_numbers<[1], [0], [0], [1], [0, 0, 1, 1], [], []>} : vector<2x9xf32>, vector<9x128xf32>, vector<2x128xf32> -> vector<2x128xf32>
    %cst_208 = arith.constant 9.99999993E-9 : f32
    %533 = vector.broadcast %cst_208 : f32 to vector<2x128xf32>
    %534 = arith.addf %532, %533 : vector<2x128xf32>
    %535 = tpu.reciprocal %534 {approx = true} : vector<2x128xf32> -> vector<2x128xf32>
    %536 = arith.mulf %534, %535 : vector<2x128xf32>
    %cst_209 = arith.constant 2.000000e+00 : f32
    %537 = vector.broadcast %cst_209 : f32 to vector<2x128xf32>
    %538 = arith.subf %537, %536 : vector<2x128xf32>
    %539 = arith.mulf %535, %538 : vector<2x128xf32>
    %540 = arith.mulf %48, %539 : vector<2x128xf32>
    %cst_210 = arith.constant dense<0.000000e+00> : vector<9x128xf32>
    %541 = tpu.matmul %38, %540, %cst_210 {dimension_numbers = #tpu.dot_dimension_numbers<[1], [0], [0], [1], [0, 0, 1, 1], [], []>} : vector<9x2xf32>, vector<2x128xf32>, vector<9x128xf32> -> vector<9x128xf32>
    %542 = arith.addf %541, %42 : vector<9x128xf32>
    %543 = arith.mulf %507, %542 : vector<9x128xf32>
    %cst_211 = arith.constant dense<0.000000e+00> : vector<2x128xf32>
    %544 = tpu.matmul %37, %543, %cst_211 {dimension_numbers = #tpu.dot_dimension_numbers<[1], [0], [0], [1], [0, 0, 1, 1], [], []>} : vector<2x9xf32>, vector<9x128xf32>, vector<2x128xf32> -> vector<2x128xf32>
    %cst_212 = arith.constant 9.99999993E-9 : f32
    %545 = vector.broadcast %cst_212 : f32 to vector<2x128xf32>
    %546 = arith.addf %544, %545 : vector<2x128xf32>
    %547 = tpu.reciprocal %546 {approx = true} : vector<2x128xf32> -> vector<2x128xf32>
    %548 = arith.mulf %546, %547 : vector<2x128xf32>
    %cst_213 = arith.constant 2.000000e+00 : f32
    %549 = vector.broadcast %cst_213 : f32 to vector<2x128xf32>
    %550 = arith.subf %549, %548 : vector<2x128xf32>
    %551 = arith.mulf %547, %550 : vector<2x128xf32>
    %552 = arith.mulf %50, %551 : vector<2x128xf32>
    %cst_214 = arith.constant dense<0.000000e+00> : vector<9x128xf32>
    %553 = tpu.matmul %39, %552, %cst_214 {dimension_numbers = #tpu.dot_dimension_numbers<[1], [0], [0], [1], [0, 0, 1, 1], [], []>} : vector<9x2xf32>, vector<2x128xf32>, vector<9x128xf32> -> vector<9x128xf32>
    %554 = arith.addf %553, %45 : vector<9x128xf32>
    %555 = arith.mulf %543, %554 : vector<9x128xf32>
    %cst_215 = arith.constant dense<0.000000e+00> : vector<2x128xf32>
    %556 = tpu.matmul %36, %531, %cst_215 {dimension_numbers = #tpu.dot_dimension_numbers<[1], [0], [0], [1], [0, 0, 1, 1], [], []>} : vector<2x9xf32>, vector<9x128xf32>, vector<2x128xf32> -> vector<2x128xf32>
    %cst_216 = arith.constant 9.99999993E-9 : f32
    %557 = vector.broadcast %cst_216 : f32 to vector<2x128xf32>
    %558 = arith.addf %556, %557 : vector<2x128xf32>
    %559 = tpu.reciprocal %558 {approx = true} : vector<2x128xf32> -> vector<2x128xf32>
    %560 = arith.mulf %558, %559 : vector<2x128xf32>
    %cst_217 = arith.constant 2.000000e+00 : f32
    %561 = vector.broadcast %cst_217 : f32 to vector<2x128xf32>
    %562 = arith.subf %561, %560 : vector<2x128xf32>
    %563 = arith.mulf %559, %562 : vector<2x128xf32>
    %564 = arith.mulf %49, %563 : vector<2x128xf32>
    %cst_218 = arith.constant dense<0.000000e+00> : vector<9x128xf32>
    %565 = tpu.matmul %38, %564, %cst_218 {dimension_numbers = #tpu.dot_dimension_numbers<[1], [0], [0], [1], [0, 0, 1, 1], [], []>} : vector<9x2xf32>, vector<2x128xf32>, vector<9x128xf32> -> vector<9x128xf32>
    %566 = arith.addf %565, %42 : vector<9x128xf32>
    %567 = arith.mulf %531, %566 : vector<9x128xf32>
    %cst_219 = arith.constant dense<0.000000e+00> : vector<2x128xf32>
    %568 = tpu.matmul %37, %567, %cst_219 {dimension_numbers = #tpu.dot_dimension_numbers<[1], [0], [0], [1], [0, 0, 1, 1], [], []>} : vector<2x9xf32>, vector<9x128xf32>, vector<2x128xf32> -> vector<2x128xf32>
    %cst_220 = arith.constant 9.99999993E-9 : f32
    %569 = vector.broadcast %cst_220 : f32 to vector<2x128xf32>
    %570 = arith.addf %568, %569 : vector<2x128xf32>
    %571 = tpu.reciprocal %570 {approx = true} : vector<2x128xf32> -> vector<2x128xf32>
    %572 = arith.mulf %570, %571 : vector<2x128xf32>
    %cst_221 = arith.constant 2.000000e+00 : f32
    %573 = vector.broadcast %cst_221 : f32 to vector<2x128xf32>
    %574 = arith.subf %573, %572 : vector<2x128xf32>
    %575 = arith.mulf %571, %574 : vector<2x128xf32>
    %576 = arith.mulf %51, %575 : vector<2x128xf32>
    %cst_222 = arith.constant dense<0.000000e+00> : vector<9x128xf32>
    %577 = tpu.matmul %39, %576, %cst_222 {dimension_numbers = #tpu.dot_dimension_numbers<[1], [0], [0], [1], [0, 0, 1, 1], [], []>} : vector<9x2xf32>, vector<2x128xf32>, vector<9x128xf32> -> vector<9x128xf32>
    %578 = arith.addf %577, %45 : vector<9x128xf32>
    %579 = arith.mulf %567, %578 : vector<9x128xf32>
    %c11_i32 = arith.constant 11 : i32
    %cst_223 = arith.constant dense<0.000000e+00> : vector<2x128xf32>
    %580 = tpu.matmul %36, %555, %cst_223 {dimension_numbers = #tpu.dot_dimension_numbers<[1], [0], [0], [1], [0, 0, 1, 1], [], []>} : vector<2x9xf32>, vector<9x128xf32>, vector<2x128xf32> -> vector<2x128xf32>
    %cst_224 = arith.constant 9.99999993E-9 : f32
    %581 = vector.broadcast %cst_224 : f32 to vector<2x128xf32>
    %582 = arith.addf %580, %581 : vector<2x128xf32>
    %583 = tpu.reciprocal %582 {approx = true} : vector<2x128xf32> -> vector<2x128xf32>
    %584 = arith.mulf %582, %583 : vector<2x128xf32>
    %cst_225 = arith.constant 2.000000e+00 : f32
    %585 = vector.broadcast %cst_225 : f32 to vector<2x128xf32>
    %586 = arith.subf %585, %584 : vector<2x128xf32>
    %587 = arith.mulf %583, %586 : vector<2x128xf32>
    %588 = arith.mulf %48, %587 : vector<2x128xf32>
    %cst_226 = arith.constant dense<0.000000e+00> : vector<9x128xf32>
    %589 = tpu.matmul %38, %588, %cst_226 {dimension_numbers = #tpu.dot_dimension_numbers<[1], [0], [0], [1], [0, 0, 1, 1], [], []>} : vector<9x2xf32>, vector<2x128xf32>, vector<9x128xf32> -> vector<9x128xf32>
    %590 = arith.addf %589, %42 : vector<9x128xf32>
    %591 = arith.mulf %555, %590 : vector<9x128xf32>
    %cst_227 = arith.constant dense<0.000000e+00> : vector<2x128xf32>
    %592 = tpu.matmul %37, %591, %cst_227 {dimension_numbers = #tpu.dot_dimension_numbers<[1], [0], [0], [1], [0, 0, 1, 1], [], []>} : vector<2x9xf32>, vector<9x128xf32>, vector<2x128xf32> -> vector<2x128xf32>
    %cst_228 = arith.constant 9.99999993E-9 : f32
    %593 = vector.broadcast %cst_228 : f32 to vector<2x128xf32>
    %594 = arith.addf %592, %593 : vector<2x128xf32>
    %595 = tpu.reciprocal %594 {approx = true} : vector<2x128xf32> -> vector<2x128xf32>
    %596 = arith.mulf %594, %595 : vector<2x128xf32>
    %cst_229 = arith.constant 2.000000e+00 : f32
    %597 = vector.broadcast %cst_229 : f32 to vector<2x128xf32>
    %598 = arith.subf %597, %596 : vector<2x128xf32>
    %599 = arith.mulf %595, %598 : vector<2x128xf32>
    %600 = arith.mulf %50, %599 : vector<2x128xf32>
    %cst_230 = arith.constant dense<0.000000e+00> : vector<9x128xf32>
    %601 = tpu.matmul %39, %600, %cst_230 {dimension_numbers = #tpu.dot_dimension_numbers<[1], [0], [0], [1], [0, 0, 1, 1], [], []>} : vector<9x2xf32>, vector<2x128xf32>, vector<9x128xf32> -> vector<9x128xf32>
    %602 = arith.addf %601, %45 : vector<9x128xf32>
    %603 = arith.mulf %591, %602 : vector<9x128xf32>
    %cst_231 = arith.constant dense<0.000000e+00> : vector<2x128xf32>
    %604 = tpu.matmul %36, %579, %cst_231 {dimension_numbers = #tpu.dot_dimension_numbers<[1], [0], [0], [1], [0, 0, 1, 1], [], []>} : vector<2x9xf32>, vector<9x128xf32>, vector<2x128xf32> -> vector<2x128xf32>
    %cst_232 = arith.constant 9.99999993E-9 : f32
    %605 = vector.broadcast %cst_232 : f32 to vector<2x128xf32>
    %606 = arith.addf %604, %605 : vector<2x128xf32>
    %607 = tpu.reciprocal %606 {approx = true} : vector<2x128xf32> -> vector<2x128xf32>
    %608 = arith.mulf %606, %607 : vector<2x128xf32>
    %cst_233 = arith.constant 2.000000e+00 : f32
    %609 = vector.broadcast %cst_233 : f32 to vector<2x128xf32>
    %610 = arith.subf %609, %608 : vector<2x128xf32>
    %611 = arith.mulf %607, %610 : vector<2x128xf32>
    %612 = arith.mulf %49, %611 : vector<2x128xf32>
    %cst_234 = arith.constant dense<0.000000e+00> : vector<9x128xf32>
    %613 = tpu.matmul %38, %612, %cst_234 {dimension_numbers = #tpu.dot_dimension_numbers<[1], [0], [0], [1], [0, 0, 1, 1], [], []>} : vector<9x2xf32>, vector<2x128xf32>, vector<9x128xf32> -> vector<9x128xf32>
    %614 = arith.addf %613, %42 : vector<9x128xf32>
    %615 = arith.mulf %579, %614 : vector<9x128xf32>
    %cst_235 = arith.constant dense<0.000000e+00> : vector<2x128xf32>
    %616 = tpu.matmul %37, %615, %cst_235 {dimension_numbers = #tpu.dot_dimension_numbers<[1], [0], [0], [1], [0, 0, 1, 1], [], []>} : vector<2x9xf32>, vector<9x128xf32>, vector<2x128xf32> -> vector<2x128xf32>
    %cst_236 = arith.constant 9.99999993E-9 : f32
    %617 = vector.broadcast %cst_236 : f32 to vector<2x128xf32>
    %618 = arith.addf %616, %617 : vector<2x128xf32>
    %619 = tpu.reciprocal %618 {approx = true} : vector<2x128xf32> -> vector<2x128xf32>
    %620 = arith.mulf %618, %619 : vector<2x128xf32>
    %cst_237 = arith.constant 2.000000e+00 : f32
    %621 = vector.broadcast %cst_237 : f32 to vector<2x128xf32>
    %622 = arith.subf %621, %620 : vector<2x128xf32>
    %623 = arith.mulf %619, %622 : vector<2x128xf32>
    %624 = arith.mulf %51, %623 : vector<2x128xf32>
    %cst_238 = arith.constant dense<0.000000e+00> : vector<9x128xf32>
    %625 = tpu.matmul %39, %624, %cst_238 {dimension_numbers = #tpu.dot_dimension_numbers<[1], [0], [0], [1], [0, 0, 1, 1], [], []>} : vector<9x2xf32>, vector<2x128xf32>, vector<9x128xf32> -> vector<9x128xf32>
    %626 = arith.addf %625, %45 : vector<9x128xf32>
    %627 = arith.mulf %615, %626 : vector<9x128xf32>
    %c12_i32 = arith.constant 12 : i32
    %cst_239 = arith.constant dense<0.000000e+00> : vector<2x128xf32>
    %628 = tpu.matmul %36, %603, %cst_239 {dimension_numbers = #tpu.dot_dimension_numbers<[1], [0], [0], [1], [0, 0, 1, 1], [], []>} : vector<2x9xf32>, vector<9x128xf32>, vector<2x128xf32> -> vector<2x128xf32>
    %cst_240 = arith.constant 9.99999993E-9 : f32
    %629 = vector.broadcast %cst_240 : f32 to vector<2x128xf32>
    %630 = arith.addf %628, %629 : vector<2x128xf32>
    %631 = tpu.reciprocal %630 {approx = true} : vector<2x128xf32> -> vector<2x128xf32>
    %632 = arith.mulf %630, %631 : vector<2x128xf32>
    %cst_241 = arith.constant 2.000000e+00 : f32
    %633 = vector.broadcast %cst_241 : f32 to vector<2x128xf32>
    %634 = arith.subf %633, %632 : vector<2x128xf32>
    %635 = arith.mulf %631, %634 : vector<2x128xf32>
    %636 = arith.mulf %48, %635 : vector<2x128xf32>
    %cst_242 = arith.constant dense<0.000000e+00> : vector<9x128xf32>
    %637 = tpu.matmul %38, %636, %cst_242 {dimension_numbers = #tpu.dot_dimension_numbers<[1], [0], [0], [1], [0, 0, 1, 1], [], []>} : vector<9x2xf32>, vector<2x128xf32>, vector<9x128xf32> -> vector<9x128xf32>
    %638 = arith.addf %637, %42 : vector<9x128xf32>
    %639 = arith.mulf %603, %638 : vector<9x128xf32>
    %cst_243 = arith.constant dense<0.000000e+00> : vector<2x128xf32>
    %640 = tpu.matmul %37, %639, %cst_243 {dimension_numbers = #tpu.dot_dimension_numbers<[1], [0], [0], [1], [0, 0, 1, 1], [], []>} : vector<2x9xf32>, vector<9x128xf32>, vector<2x128xf32> -> vector<2x128xf32>
    %cst_244 = arith.constant 9.99999993E-9 : f32
    %641 = vector.broadcast %cst_244 : f32 to vector<2x128xf32>
    %642 = arith.addf %640, %641 : vector<2x128xf32>
    %643 = tpu.reciprocal %642 {approx = true} : vector<2x128xf32> -> vector<2x128xf32>
    %644 = arith.mulf %642, %643 : vector<2x128xf32>
    %cst_245 = arith.constant 2.000000e+00 : f32
    %645 = vector.broadcast %cst_245 : f32 to vector<2x128xf32>
    %646 = arith.subf %645, %644 : vector<2x128xf32>
    %647 = arith.mulf %643, %646 : vector<2x128xf32>
    %648 = arith.mulf %50, %647 : vector<2x128xf32>
    %cst_246 = arith.constant dense<0.000000e+00> : vector<9x128xf32>
    %649 = tpu.matmul %39, %648, %cst_246 {dimension_numbers = #tpu.dot_dimension_numbers<[1], [0], [0], [1], [0, 0, 1, 1], [], []>} : vector<9x2xf32>, vector<2x128xf32>, vector<9x128xf32> -> vector<9x128xf32>
    %650 = arith.addf %649, %45 : vector<9x128xf32>
    %651 = arith.mulf %639, %650 : vector<9x128xf32>
    %cst_247 = arith.constant dense<0.000000e+00> : vector<2x128xf32>
    %652 = tpu.matmul %36, %627, %cst_247 {dimension_numbers = #tpu.dot_dimension_numbers<[1], [0], [0], [1], [0, 0, 1, 1], [], []>} : vector<2x9xf32>, vector<9x128xf32>, vector<2x128xf32> -> vector<2x128xf32>
    %cst_248 = arith.constant 9.99999993E-9 : f32
    %653 = vector.broadcast %cst_248 : f32 to vector<2x128xf32>
    %654 = arith.addf %652, %653 : vector<2x128xf32>
    %655 = tpu.reciprocal %654 {approx = true} : vector<2x128xf32> -> vector<2x128xf32>
    %656 = arith.mulf %654, %655 : vector<2x128xf32>
    %cst_249 = arith.constant 2.000000e+00 : f32
    %657 = vector.broadcast %cst_249 : f32 to vector<2x128xf32>
    %658 = arith.subf %657, %656 : vector<2x128xf32>
    %659 = arith.mulf %655, %658 : vector<2x128xf32>
    %660 = arith.mulf %49, %659 : vector<2x128xf32>
    %cst_250 = arith.constant dense<0.000000e+00> : vector<9x128xf32>
    %661 = tpu.matmul %38, %660, %cst_250 {dimension_numbers = #tpu.dot_dimension_numbers<[1], [0], [0], [1], [0, 0, 1, 1], [], []>} : vector<9x2xf32>, vector<2x128xf32>, vector<9x128xf32> -> vector<9x128xf32>
    %662 = arith.addf %661, %42 : vector<9x128xf32>
    %663 = arith.mulf %627, %662 : vector<9x128xf32>
    %cst_251 = arith.constant dense<0.000000e+00> : vector<2x128xf32>
    %664 = tpu.matmul %37, %663, %cst_251 {dimension_numbers = #tpu.dot_dimension_numbers<[1], [0], [0], [1], [0, 0, 1, 1], [], []>} : vector<2x9xf32>, vector<9x128xf32>, vector<2x128xf32> -> vector<2x128xf32>
    %cst_252 = arith.constant 9.99999993E-9 : f32
    %665 = vector.broadcast %cst_252 : f32 to vector<2x128xf32>
    %666 = arith.addf %664, %665 : vector<2x128xf32>
    %667 = tpu.reciprocal %666 {approx = true} : vector<2x128xf32> -> vector<2x128xf32>
    %668 = arith.mulf %666, %667 : vector<2x128xf32>
    %cst_253 = arith.constant 2.000000e+00 : f32
    %669 = vector.broadcast %cst_253 : f32 to vector<2x128xf32>
    %670 = arith.subf %669, %668 : vector<2x128xf32>
    %671 = arith.mulf %667, %670 : vector<2x128xf32>
    %672 = arith.mulf %51, %671 : vector<2x128xf32>
    %cst_254 = arith.constant dense<0.000000e+00> : vector<9x128xf32>
    %673 = tpu.matmul %39, %672, %cst_254 {dimension_numbers = #tpu.dot_dimension_numbers<[1], [0], [0], [1], [0, 0, 1, 1], [], []>} : vector<9x2xf32>, vector<2x128xf32>, vector<9x128xf32> -> vector<9x128xf32>
    %674 = arith.addf %673, %45 : vector<9x128xf32>
    %675 = arith.mulf %663, %674 : vector<9x128xf32>
    %c13_i32 = arith.constant 13 : i32
    %cst_255 = arith.constant dense<0.000000e+00> : vector<2x128xf32>
    %676 = tpu.matmul %36, %651, %cst_255 {dimension_numbers = #tpu.dot_dimension_numbers<[1], [0], [0], [1], [0, 0, 1, 1], [], []>} : vector<2x9xf32>, vector<9x128xf32>, vector<2x128xf32> -> vector<2x128xf32>
    %cst_256 = arith.constant 9.99999993E-9 : f32
    %677 = vector.broadcast %cst_256 : f32 to vector<2x128xf32>
    %678 = arith.addf %676, %677 : vector<2x128xf32>
    %679 = tpu.reciprocal %678 {approx = true} : vector<2x128xf32> -> vector<2x128xf32>
    %680 = arith.mulf %678, %679 : vector<2x128xf32>
    %cst_257 = arith.constant 2.000000e+00 : f32
    %681 = vector.broadcast %cst_257 : f32 to vector<2x128xf32>
    %682 = arith.subf %681, %680 : vector<2x128xf32>
    %683 = arith.mulf %679, %682 : vector<2x128xf32>
    %684 = arith.mulf %48, %683 : vector<2x128xf32>
    %cst_258 = arith.constant dense<0.000000e+00> : vector<9x128xf32>
    %685 = tpu.matmul %38, %684, %cst_258 {dimension_numbers = #tpu.dot_dimension_numbers<[1], [0], [0], [1], [0, 0, 1, 1], [], []>} : vector<9x2xf32>, vector<2x128xf32>, vector<9x128xf32> -> vector<9x128xf32>
    %686 = arith.addf %685, %42 : vector<9x128xf32>
    %687 = arith.mulf %651, %686 : vector<9x128xf32>
    %cst_259 = arith.constant dense<0.000000e+00> : vector<2x128xf32>
    %688 = tpu.matmul %37, %687, %cst_259 {dimension_numbers = #tpu.dot_dimension_numbers<[1], [0], [0], [1], [0, 0, 1, 1], [], []>} : vector<2x9xf32>, vector<9x128xf32>, vector<2x128xf32> -> vector<2x128xf32>
    %cst_260 = arith.constant 9.99999993E-9 : f32
    %689 = vector.broadcast %cst_260 : f32 to vector<2x128xf32>
    %690 = arith.addf %688, %689 : vector<2x128xf32>
    %691 = tpu.reciprocal %690 {approx = true} : vector<2x128xf32> -> vector<2x128xf32>
    %692 = arith.mulf %690, %691 : vector<2x128xf32>
    %cst_261 = arith.constant 2.000000e+00 : f32
    %693 = vector.broadcast %cst_261 : f32 to vector<2x128xf32>
    %694 = arith.subf %693, %692 : vector<2x128xf32>
    %695 = arith.mulf %691, %694 : vector<2x128xf32>
    %696 = arith.mulf %50, %695 : vector<2x128xf32>
    %cst_262 = arith.constant dense<0.000000e+00> : vector<9x128xf32>
    %697 = tpu.matmul %39, %696, %cst_262 {dimension_numbers = #tpu.dot_dimension_numbers<[1], [0], [0], [1], [0, 0, 1, 1], [], []>} : vector<9x2xf32>, vector<2x128xf32>, vector<9x128xf32> -> vector<9x128xf32>
    %698 = arith.addf %697, %45 : vector<9x128xf32>
    %699 = arith.mulf %687, %698 : vector<9x128xf32>
    %cst_263 = arith.constant dense<0.000000e+00> : vector<2x128xf32>
    %700 = tpu.matmul %36, %675, %cst_263 {dimension_numbers = #tpu.dot_dimension_numbers<[1], [0], [0], [1], [0, 0, 1, 1], [], []>} : vector<2x9xf32>, vector<9x128xf32>, vector<2x128xf32> -> vector<2x128xf32>
    %cst_264 = arith.constant 9.99999993E-9 : f32
    %701 = vector.broadcast %cst_264 : f32 to vector<2x128xf32>
    %702 = arith.addf %700, %701 : vector<2x128xf32>
    %703 = tpu.reciprocal %702 {approx = true} : vector<2x128xf32> -> vector<2x128xf32>
    %704 = arith.mulf %702, %703 : vector<2x128xf32>
    %cst_265 = arith.constant 2.000000e+00 : f32
    %705 = vector.broadcast %cst_265 : f32 to vector<2x128xf32>
    %706 = arith.subf %705, %704 : vector<2x128xf32>
    %707 = arith.mulf %703, %706 : vector<2x128xf32>
    %708 = arith.mulf %49, %707 : vector<2x128xf32>
    %cst_266 = arith.constant dense<0.000000e+00> : vector<9x128xf32>
    %709 = tpu.matmul %38, %708, %cst_266 {dimension_numbers = #tpu.dot_dimension_numbers<[1], [0], [0], [1], [0, 0, 1, 1], [], []>} : vector<9x2xf32>, vector<2x128xf32>, vector<9x128xf32> -> vector<9x128xf32>
    %710 = arith.addf %709, %42 : vector<9x128xf32>
    %711 = arith.mulf %675, %710 : vector<9x128xf32>
    %cst_267 = arith.constant dense<0.000000e+00> : vector<2x128xf32>
    %712 = tpu.matmul %37, %711, %cst_267 {dimension_numbers = #tpu.dot_dimension_numbers<[1], [0], [0], [1], [0, 0, 1, 1], [], []>} : vector<2x9xf32>, vector<9x128xf32>, vector<2x128xf32> -> vector<2x128xf32>
    %cst_268 = arith.constant 9.99999993E-9 : f32
    %713 = vector.broadcast %cst_268 : f32 to vector<2x128xf32>
    %714 = arith.addf %712, %713 : vector<2x128xf32>
    %715 = tpu.reciprocal %714 {approx = true} : vector<2x128xf32> -> vector<2x128xf32>
    %716 = arith.mulf %714, %715 : vector<2x128xf32>
    %cst_269 = arith.constant 2.000000e+00 : f32
    %717 = vector.broadcast %cst_269 : f32 to vector<2x128xf32>
    %718 = arith.subf %717, %716 : vector<2x128xf32>
    %719 = arith.mulf %715, %718 : vector<2x128xf32>
    %720 = arith.mulf %51, %719 : vector<2x128xf32>
    %cst_270 = arith.constant dense<0.000000e+00> : vector<9x128xf32>
    %721 = tpu.matmul %39, %720, %cst_270 {dimension_numbers = #tpu.dot_dimension_numbers<[1], [0], [0], [1], [0, 0, 1, 1], [], []>} : vector<9x2xf32>, vector<2x128xf32>, vector<9x128xf32> -> vector<9x128xf32>
    %722 = arith.addf %721, %45 : vector<9x128xf32>
    %723 = arith.mulf %711, %722 : vector<9x128xf32>
    %c14_i32 = arith.constant 14 : i32
    %cst_271 = arith.constant dense<0.000000e+00> : vector<2x128xf32>
    %724 = tpu.matmul %36, %699, %cst_271 {dimension_numbers = #tpu.dot_dimension_numbers<[1], [0], [0], [1], [0, 0, 1, 1], [], []>} : vector<2x9xf32>, vector<9x128xf32>, vector<2x128xf32> -> vector<2x128xf32>
    %cst_272 = arith.constant 9.99999993E-9 : f32
    %725 = vector.broadcast %cst_272 : f32 to vector<2x128xf32>
    %726 = arith.addf %724, %725 : vector<2x128xf32>
    %727 = tpu.reciprocal %726 {approx = true} : vector<2x128xf32> -> vector<2x128xf32>
    %728 = arith.mulf %726, %727 : vector<2x128xf32>
    %cst_273 = arith.constant 2.000000e+00 : f32
    %729 = vector.broadcast %cst_273 : f32 to vector<2x128xf32>
    %730 = arith.subf %729, %728 : vector<2x128xf32>
    %731 = arith.mulf %727, %730 : vector<2x128xf32>
    %732 = arith.mulf %48, %731 : vector<2x128xf32>
    %cst_274 = arith.constant dense<0.000000e+00> : vector<9x128xf32>
    %733 = tpu.matmul %38, %732, %cst_274 {dimension_numbers = #tpu.dot_dimension_numbers<[1], [0], [0], [1], [0, 0, 1, 1], [], []>} : vector<9x2xf32>, vector<2x128xf32>, vector<9x128xf32> -> vector<9x128xf32>
    %734 = arith.addf %733, %42 : vector<9x128xf32>
    %735 = arith.mulf %699, %734 : vector<9x128xf32>
    %cst_275 = arith.constant dense<0.000000e+00> : vector<2x128xf32>
    %736 = tpu.matmul %37, %735, %cst_275 {dimension_numbers = #tpu.dot_dimension_numbers<[1], [0], [0], [1], [0, 0, 1, 1], [], []>} : vector<2x9xf32>, vector<9x128xf32>, vector<2x128xf32> -> vector<2x128xf32>
    %cst_276 = arith.constant 9.99999993E-9 : f32
    %737 = vector.broadcast %cst_276 : f32 to vector<2x128xf32>
    %738 = arith.addf %736, %737 : vector<2x128xf32>
    %739 = tpu.reciprocal %738 {approx = true} : vector<2x128xf32> -> vector<2x128xf32>
    %740 = arith.mulf %738, %739 : vector<2x128xf32>
    %cst_277 = arith.constant 2.000000e+00 : f32
    %741 = vector.broadcast %cst_277 : f32 to vector<2x128xf32>
    %742 = arith.subf %741, %740 : vector<2x128xf32>
    %743 = arith.mulf %739, %742 : vector<2x128xf32>
    %744 = arith.mulf %50, %743 : vector<2x128xf32>
    %cst_278 = arith.constant dense<0.000000e+00> : vector<9x128xf32>
    %745 = tpu.matmul %39, %744, %cst_278 {dimension_numbers = #tpu.dot_dimension_numbers<[1], [0], [0], [1], [0, 0, 1, 1], [], []>} : vector<9x2xf32>, vector<2x128xf32>, vector<9x128xf32> -> vector<9x128xf32>
    %746 = arith.addf %745, %45 : vector<9x128xf32>
    %747 = arith.mulf %735, %746 : vector<9x128xf32>
    %cst_279 = arith.constant dense<0.000000e+00> : vector<2x128xf32>
    %748 = tpu.matmul %36, %723, %cst_279 {dimension_numbers = #tpu.dot_dimension_numbers<[1], [0], [0], [1], [0, 0, 1, 1], [], []>} : vector<2x9xf32>, vector<9x128xf32>, vector<2x128xf32> -> vector<2x128xf32>
    %cst_280 = arith.constant 9.99999993E-9 : f32
    %749 = vector.broadcast %cst_280 : f32 to vector<2x128xf32>
    %750 = arith.addf %748, %749 : vector<2x128xf32>
    %751 = tpu.reciprocal %750 {approx = true} : vector<2x128xf32> -> vector<2x128xf32>
    %752 = arith.mulf %750, %751 : vector<2x128xf32>
    %cst_281 = arith.constant 2.000000e+00 : f32
    %753 = vector.broadcast %cst_281 : f32 to vector<2x128xf32>
    %754 = arith.subf %753, %752 : vector<2x128xf32>
    %755 = arith.mulf %751, %754 : vector<2x128xf32>
    %756 = arith.mulf %49, %755 : vector<2x128xf32>
    %cst_282 = arith.constant dense<0.000000e+00> : vector<9x128xf32>
    %757 = tpu.matmul %38, %756, %cst_282 {dimension_numbers = #tpu.dot_dimension_numbers<[1], [0], [0], [1], [0, 0, 1, 1], [], []>} : vector<9x2xf32>, vector<2x128xf32>, vector<9x128xf32> -> vector<9x128xf32>
    %758 = arith.addf %757, %42 : vector<9x128xf32>
    %759 = arith.mulf %723, %758 : vector<9x128xf32>
    %cst_283 = arith.constant dense<0.000000e+00> : vector<2x128xf32>
    %760 = tpu.matmul %37, %759, %cst_283 {dimension_numbers = #tpu.dot_dimension_numbers<[1], [0], [0], [1], [0, 0, 1, 1], [], []>} : vector<2x9xf32>, vector<9x128xf32>, vector<2x128xf32> -> vector<2x128xf32>
    %cst_284 = arith.constant 9.99999993E-9 : f32
    %761 = vector.broadcast %cst_284 : f32 to vector<2x128xf32>
    %762 = arith.addf %760, %761 : vector<2x128xf32>
    %763 = tpu.reciprocal %762 {approx = true} : vector<2x128xf32> -> vector<2x128xf32>
    %764 = arith.mulf %762, %763 : vector<2x128xf32>
    %cst_285 = arith.constant 2.000000e+00 : f32
    %765 = vector.broadcast %cst_285 : f32 to vector<2x128xf32>
    %766 = arith.subf %765, %764 : vector<2x128xf32>
    %767 = arith.mulf %763, %766 : vector<2x128xf32>
    %768 = arith.mulf %51, %767 : vector<2x128xf32>
    %cst_286 = arith.constant dense<0.000000e+00> : vector<9x128xf32>
    %769 = tpu.matmul %39, %768, %cst_286 {dimension_numbers = #tpu.dot_dimension_numbers<[1], [0], [0], [1], [0, 0, 1, 1], [], []>} : vector<9x2xf32>, vector<2x128xf32>, vector<9x128xf32> -> vector<9x128xf32>
    %770 = arith.addf %769, %45 : vector<9x128xf32>
    %771 = arith.mulf %759, %770 : vector<9x128xf32>
    %c15_i32 = arith.constant 15 : i32
    %cst_287 = arith.constant dense<0.000000e+00> : vector<2x128xf32>
    %772 = tpu.matmul %36, %747, %cst_287 {dimension_numbers = #tpu.dot_dimension_numbers<[1], [0], [0], [1], [0, 0, 1, 1], [], []>} : vector<2x9xf32>, vector<9x128xf32>, vector<2x128xf32> -> vector<2x128xf32>
    %cst_288 = arith.constant 9.99999993E-9 : f32
    %773 = vector.broadcast %cst_288 : f32 to vector<2x128xf32>
    %774 = arith.addf %772, %773 : vector<2x128xf32>
    %775 = tpu.reciprocal %774 {approx = true} : vector<2x128xf32> -> vector<2x128xf32>
    %776 = arith.mulf %774, %775 : vector<2x128xf32>
    %cst_289 = arith.constant 2.000000e+00 : f32
    %777 = vector.broadcast %cst_289 : f32 to vector<2x128xf32>
    %778 = arith.subf %777, %776 : vector<2x128xf32>
    %779 = arith.mulf %775, %778 : vector<2x128xf32>
    %780 = arith.mulf %48, %779 : vector<2x128xf32>
    %cst_290 = arith.constant dense<0.000000e+00> : vector<9x128xf32>
    %781 = tpu.matmul %38, %780, %cst_290 {dimension_numbers = #tpu.dot_dimension_numbers<[1], [0], [0], [1], [0, 0, 1, 1], [], []>} : vector<9x2xf32>, vector<2x128xf32>, vector<9x128xf32> -> vector<9x128xf32>
    %782 = arith.addf %781, %42 : vector<9x128xf32>
    %783 = arith.mulf %747, %782 : vector<9x128xf32>
    %cst_291 = arith.constant dense<0.000000e+00> : vector<2x128xf32>
    %784 = tpu.matmul %37, %783, %cst_291 {dimension_numbers = #tpu.dot_dimension_numbers<[1], [0], [0], [1], [0, 0, 1, 1], [], []>} : vector<2x9xf32>, vector<9x128xf32>, vector<2x128xf32> -> vector<2x128xf32>
    %cst_292 = arith.constant 9.99999993E-9 : f32
    %785 = vector.broadcast %cst_292 : f32 to vector<2x128xf32>
    %786 = arith.addf %784, %785 : vector<2x128xf32>
    %787 = tpu.reciprocal %786 {approx = true} : vector<2x128xf32> -> vector<2x128xf32>
    %788 = arith.mulf %786, %787 : vector<2x128xf32>
    %cst_293 = arith.constant 2.000000e+00 : f32
    %789 = vector.broadcast %cst_293 : f32 to vector<2x128xf32>
    %790 = arith.subf %789, %788 : vector<2x128xf32>
    %791 = arith.mulf %787, %790 : vector<2x128xf32>
    %792 = arith.mulf %50, %791 : vector<2x128xf32>
    %cst_294 = arith.constant dense<0.000000e+00> : vector<9x128xf32>
    %793 = tpu.matmul %39, %792, %cst_294 {dimension_numbers = #tpu.dot_dimension_numbers<[1], [0], [0], [1], [0, 0, 1, 1], [], []>} : vector<9x2xf32>, vector<2x128xf32>, vector<9x128xf32> -> vector<9x128xf32>
    %794 = arith.addf %793, %45 : vector<9x128xf32>
    %795 = arith.mulf %783, %794 : vector<9x128xf32>
    %cst_295 = arith.constant dense<0.000000e+00> : vector<2x128xf32>
    %796 = tpu.matmul %36, %771, %cst_295 {dimension_numbers = #tpu.dot_dimension_numbers<[1], [0], [0], [1], [0, 0, 1, 1], [], []>} : vector<2x9xf32>, vector<9x128xf32>, vector<2x128xf32> -> vector<2x128xf32>
    %cst_296 = arith.constant 9.99999993E-9 : f32
    %797 = vector.broadcast %cst_296 : f32 to vector<2x128xf32>
    %798 = arith.addf %796, %797 : vector<2x128xf32>
    %799 = tpu.reciprocal %798 {approx = true} : vector<2x128xf32> -> vector<2x128xf32>
    %800 = arith.mulf %798, %799 : vector<2x128xf32>
    %cst_297 = arith.constant 2.000000e+00 : f32
    %801 = vector.broadcast %cst_297 : f32 to vector<2x128xf32>
    %802 = arith.subf %801, %800 : vector<2x128xf32>
    %803 = arith.mulf %799, %802 : vector<2x128xf32>
    %804 = arith.mulf %49, %803 : vector<2x128xf32>
    %cst_298 = arith.constant dense<0.000000e+00> : vector<9x128xf32>
    %805 = tpu.matmul %38, %804, %cst_298 {dimension_numbers = #tpu.dot_dimension_numbers<[1], [0], [0], [1], [0, 0, 1, 1], [], []>} : vector<9x2xf32>, vector<2x128xf32>, vector<9x128xf32> -> vector<9x128xf32>
    %806 = arith.addf %805, %42 : vector<9x128xf32>
    %807 = arith.mulf %771, %806 : vector<9x128xf32>
    %cst_299 = arith.constant dense<0.000000e+00> : vector<2x128xf32>
    %808 = tpu.matmul %37, %807, %cst_299 {dimension_numbers = #tpu.dot_dimension_numbers<[1], [0], [0], [1], [0, 0, 1, 1], [], []>} : vector<2x9xf32>, vector<9x128xf32>, vector<2x128xf32> -> vector<2x128xf32>
    %cst_300 = arith.constant 9.99999993E-9 : f32
    %809 = vector.broadcast %cst_300 : f32 to vector<2x128xf32>
    %810 = arith.addf %808, %809 : vector<2x128xf32>
    %811 = tpu.reciprocal %810 {approx = true} : vector<2x128xf32> -> vector<2x128xf32>
    %812 = arith.mulf %810, %811 : vector<2x128xf32>
    %cst_301 = arith.constant 2.000000e+00 : f32
    %813 = vector.broadcast %cst_301 : f32 to vector<2x128xf32>
    %814 = arith.subf %813, %812 : vector<2x128xf32>
    %815 = arith.mulf %811, %814 : vector<2x128xf32>
    %816 = arith.mulf %51, %815 : vector<2x128xf32>
    %cst_302 = arith.constant dense<0.000000e+00> : vector<9x128xf32>
    %817 = tpu.matmul %39, %816, %cst_302 {dimension_numbers = #tpu.dot_dimension_numbers<[1], [0], [0], [1], [0, 0, 1, 1], [], []>} : vector<9x2xf32>, vector<2x128xf32>, vector<9x128xf32> -> vector<9x128xf32>
    %818 = arith.addf %817, %45 : vector<9x128xf32>
    %819 = arith.mulf %807, %818 : vector<9x128xf32>
    %c16_i32 = arith.constant 16 : i32
    %cst_303 = arith.constant dense<0.000000e+00> : vector<2x128xf32>
    %820 = tpu.matmul %36, %795, %cst_303 {dimension_numbers = #tpu.dot_dimension_numbers<[1], [0], [0], [1], [0, 0, 1, 1], [], []>} : vector<2x9xf32>, vector<9x128xf32>, vector<2x128xf32> -> vector<2x128xf32>
    %cst_304 = arith.constant 9.99999993E-9 : f32
    %821 = vector.broadcast %cst_304 : f32 to vector<2x128xf32>
    %822 = arith.addf %820, %821 : vector<2x128xf32>
    %823 = tpu.reciprocal %822 {approx = true} : vector<2x128xf32> -> vector<2x128xf32>
    %824 = arith.mulf %822, %823 : vector<2x128xf32>
    %cst_305 = arith.constant 2.000000e+00 : f32
    %825 = vector.broadcast %cst_305 : f32 to vector<2x128xf32>
    %826 = arith.subf %825, %824 : vector<2x128xf32>
    %827 = arith.mulf %823, %826 : vector<2x128xf32>
    %828 = arith.mulf %48, %827 : vector<2x128xf32>
    %cst_306 = arith.constant dense<0.000000e+00> : vector<9x128xf32>
    %829 = tpu.matmul %38, %828, %cst_306 {dimension_numbers = #tpu.dot_dimension_numbers<[1], [0], [0], [1], [0, 0, 1, 1], [], []>} : vector<9x2xf32>, vector<2x128xf32>, vector<9x128xf32> -> vector<9x128xf32>
    %830 = arith.addf %829, %42 : vector<9x128xf32>
    %831 = arith.mulf %795, %830 : vector<9x128xf32>
    %cst_307 = arith.constant dense<0.000000e+00> : vector<2x128xf32>
    %832 = tpu.matmul %37, %831, %cst_307 {dimension_numbers = #tpu.dot_dimension_numbers<[1], [0], [0], [1], [0, 0, 1, 1], [], []>} : vector<2x9xf32>, vector<9x128xf32>, vector<2x128xf32> -> vector<2x128xf32>
    %cst_308 = arith.constant 9.99999993E-9 : f32
    %833 = vector.broadcast %cst_308 : f32 to vector<2x128xf32>
    %834 = arith.addf %832, %833 : vector<2x128xf32>
    %835 = tpu.reciprocal %834 {approx = true} : vector<2x128xf32> -> vector<2x128xf32>
    %836 = arith.mulf %834, %835 : vector<2x128xf32>
    %cst_309 = arith.constant 2.000000e+00 : f32
    %837 = vector.broadcast %cst_309 : f32 to vector<2x128xf32>
    %838 = arith.subf %837, %836 : vector<2x128xf32>
    %839 = arith.mulf %835, %838 : vector<2x128xf32>
    %840 = arith.mulf %50, %839 : vector<2x128xf32>
    %cst_310 = arith.constant dense<0.000000e+00> : vector<9x128xf32>
    %841 = tpu.matmul %39, %840, %cst_310 {dimension_numbers = #tpu.dot_dimension_numbers<[1], [0], [0], [1], [0, 0, 1, 1], [], []>} : vector<9x2xf32>, vector<2x128xf32>, vector<9x128xf32> -> vector<9x128xf32>
    %842 = arith.addf %841, %45 : vector<9x128xf32>
    %843 = arith.mulf %831, %842 : vector<9x128xf32>
    %cst_311 = arith.constant dense<0.000000e+00> : vector<2x128xf32>
    %844 = tpu.matmul %36, %819, %cst_311 {dimension_numbers = #tpu.dot_dimension_numbers<[1], [0], [0], [1], [0, 0, 1, 1], [], []>} : vector<2x9xf32>, vector<9x128xf32>, vector<2x128xf32> -> vector<2x128xf32>
    %cst_312 = arith.constant 9.99999993E-9 : f32
    %845 = vector.broadcast %cst_312 : f32 to vector<2x128xf32>
    %846 = arith.addf %844, %845 : vector<2x128xf32>
    %847 = tpu.reciprocal %846 {approx = true} : vector<2x128xf32> -> vector<2x128xf32>
    %848 = arith.mulf %846, %847 : vector<2x128xf32>
    %cst_313 = arith.constant 2.000000e+00 : f32
    %849 = vector.broadcast %cst_313 : f32 to vector<2x128xf32>
    %850 = arith.subf %849, %848 : vector<2x128xf32>
    %851 = arith.mulf %847, %850 : vector<2x128xf32>
    %852 = arith.mulf %49, %851 : vector<2x128xf32>
    %cst_314 = arith.constant dense<0.000000e+00> : vector<9x128xf32>
    %853 = tpu.matmul %38, %852, %cst_314 {dimension_numbers = #tpu.dot_dimension_numbers<[1], [0], [0], [1], [0, 0, 1, 1], [], []>} : vector<9x2xf32>, vector<2x128xf32>, vector<9x128xf32> -> vector<9x128xf32>
    %854 = arith.addf %853, %42 : vector<9x128xf32>
    %855 = arith.mulf %819, %854 : vector<9x128xf32>
    %cst_315 = arith.constant dense<0.000000e+00> : vector<2x128xf32>
    %856 = tpu.matmul %37, %855, %cst_315 {dimension_numbers = #tpu.dot_dimension_numbers<[1], [0], [0], [1], [0, 0, 1, 1], [], []>} : vector<2x9xf32>, vector<9x128xf32>, vector<2x128xf32> -> vector<2x128xf32>
    %cst_316 = arith.constant 9.99999993E-9 : f32
    %857 = vector.broadcast %cst_316 : f32 to vector<2x128xf32>
    %858 = arith.addf %856, %857 : vector<2x128xf32>
    %859 = tpu.reciprocal %858 {approx = true} : vector<2x128xf32> -> vector<2x128xf32>
    %860 = arith.mulf %858, %859 : vector<2x128xf32>
    %cst_317 = arith.constant 2.000000e+00 : f32
    %861 = vector.broadcast %cst_317 : f32 to vector<2x128xf32>
    %862 = arith.subf %861, %860 : vector<2x128xf32>
    %863 = arith.mulf %859, %862 : vector<2x128xf32>
    %864 = arith.mulf %51, %863 : vector<2x128xf32>
    %cst_318 = arith.constant dense<0.000000e+00> : vector<9x128xf32>
    %865 = tpu.matmul %39, %864, %cst_318 {dimension_numbers = #tpu.dot_dimension_numbers<[1], [0], [0], [1], [0, 0, 1, 1], [], []>} : vector<9x2xf32>, vector<2x128xf32>, vector<9x128xf32> -> vector<9x128xf32>
    %866 = arith.addf %865, %45 : vector<9x128xf32>
    %867 = arith.mulf %855, %866 : vector<9x128xf32>
    %c17_i32 = arith.constant 17 : i32
    %cst_319 = arith.constant dense<0.000000e+00> : vector<2x128xf32>
    %868 = tpu.matmul %36, %843, %cst_319 {dimension_numbers = #tpu.dot_dimension_numbers<[1], [0], [0], [1], [0, 0, 1, 1], [], []>} : vector<2x9xf32>, vector<9x128xf32>, vector<2x128xf32> -> vector<2x128xf32>
    %cst_320 = arith.constant 9.99999993E-9 : f32
    %869 = vector.broadcast %cst_320 : f32 to vector<2x128xf32>
    %870 = arith.addf %868, %869 : vector<2x128xf32>
    %871 = tpu.reciprocal %870 {approx = true} : vector<2x128xf32> -> vector<2x128xf32>
    %872 = arith.mulf %870, %871 : vector<2x128xf32>
    %cst_321 = arith.constant 2.000000e+00 : f32
    %873 = vector.broadcast %cst_321 : f32 to vector<2x128xf32>
    %874 = arith.subf %873, %872 : vector<2x128xf32>
    %875 = arith.mulf %871, %874 : vector<2x128xf32>
    %876 = arith.mulf %48, %875 : vector<2x128xf32>
    %cst_322 = arith.constant dense<0.000000e+00> : vector<9x128xf32>
    %877 = tpu.matmul %38, %876, %cst_322 {dimension_numbers = #tpu.dot_dimension_numbers<[1], [0], [0], [1], [0, 0, 1, 1], [], []>} : vector<9x2xf32>, vector<2x128xf32>, vector<9x128xf32> -> vector<9x128xf32>
    %878 = arith.addf %877, %42 : vector<9x128xf32>
    %879 = arith.mulf %843, %878 : vector<9x128xf32>
    %cst_323 = arith.constant dense<0.000000e+00> : vector<2x128xf32>
    %880 = tpu.matmul %37, %879, %cst_323 {dimension_numbers = #tpu.dot_dimension_numbers<[1], [0], [0], [1], [0, 0, 1, 1], [], []>} : vector<2x9xf32>, vector<9x128xf32>, vector<2x128xf32> -> vector<2x128xf32>
    %cst_324 = arith.constant 9.99999993E-9 : f32
    %881 = vector.broadcast %cst_324 : f32 to vector<2x128xf32>
    %882 = arith.addf %880, %881 : vector<2x128xf32>
    %883 = tpu.reciprocal %882 {approx = true} : vector<2x128xf32> -> vector<2x128xf32>
    %884 = arith.mulf %882, %883 : vector<2x128xf32>
    %cst_325 = arith.constant 2.000000e+00 : f32
    %885 = vector.broadcast %cst_325 : f32 to vector<2x128xf32>
    %886 = arith.subf %885, %884 : vector<2x128xf32>
    %887 = arith.mulf %883, %886 : vector<2x128xf32>
    %888 = arith.mulf %50, %887 : vector<2x128xf32>
    %cst_326 = arith.constant dense<0.000000e+00> : vector<9x128xf32>
    %889 = tpu.matmul %39, %888, %cst_326 {dimension_numbers = #tpu.dot_dimension_numbers<[1], [0], [0], [1], [0, 0, 1, 1], [], []>} : vector<9x2xf32>, vector<2x128xf32>, vector<9x128xf32> -> vector<9x128xf32>
    %890 = arith.addf %889, %45 : vector<9x128xf32>
    %891 = arith.mulf %879, %890 : vector<9x128xf32>
    %cst_327 = arith.constant dense<0.000000e+00> : vector<2x128xf32>
    %892 = tpu.matmul %36, %867, %cst_327 {dimension_numbers = #tpu.dot_dimension_numbers<[1], [0], [0], [1], [0, 0, 1, 1], [], []>} : vector<2x9xf32>, vector<9x128xf32>, vector<2x128xf32> -> vector<2x128xf32>
    %cst_328 = arith.constant 9.99999993E-9 : f32
    %893 = vector.broadcast %cst_328 : f32 to vector<2x128xf32>
    %894 = arith.addf %892, %893 : vector<2x128xf32>
    %895 = tpu.reciprocal %894 {approx = true} : vector<2x128xf32> -> vector<2x128xf32>
    %896 = arith.mulf %894, %895 : vector<2x128xf32>
    %cst_329 = arith.constant 2.000000e+00 : f32
    %897 = vector.broadcast %cst_329 : f32 to vector<2x128xf32>
    %898 = arith.subf %897, %896 : vector<2x128xf32>
    %899 = arith.mulf %895, %898 : vector<2x128xf32>
    %900 = arith.mulf %49, %899 : vector<2x128xf32>
    %cst_330 = arith.constant dense<0.000000e+00> : vector<9x128xf32>
    %901 = tpu.matmul %38, %900, %cst_330 {dimension_numbers = #tpu.dot_dimension_numbers<[1], [0], [0], [1], [0, 0, 1, 1], [], []>} : vector<9x2xf32>, vector<2x128xf32>, vector<9x128xf32> -> vector<9x128xf32>
    %902 = arith.addf %901, %42 : vector<9x128xf32>
    %903 = arith.mulf %867, %902 : vector<9x128xf32>
    %cst_331 = arith.constant dense<0.000000e+00> : vector<2x128xf32>
    %904 = tpu.matmul %37, %903, %cst_331 {dimension_numbers = #tpu.dot_dimension_numbers<[1], [0], [0], [1], [0, 0, 1, 1], [], []>} : vector<2x9xf32>, vector<9x128xf32>, vector<2x128xf32> -> vector<2x128xf32>
    %cst_332 = arith.constant 9.99999993E-9 : f32
    %905 = vector.broadcast %cst_332 : f32 to vector<2x128xf32>
    %906 = arith.addf %904, %905 : vector<2x128xf32>
    %907 = tpu.reciprocal %906 {approx = true} : vector<2x128xf32> -> vector<2x128xf32>
    %908 = arith.mulf %906, %907 : vector<2x128xf32>
    %cst_333 = arith.constant 2.000000e+00 : f32
    %909 = vector.broadcast %cst_333 : f32 to vector<2x128xf32>
    %910 = arith.subf %909, %908 : vector<2x128xf32>
    %911 = arith.mulf %907, %910 : vector<2x128xf32>
    %912 = arith.mulf %51, %911 : vector<2x128xf32>
    %cst_334 = arith.constant dense<0.000000e+00> : vector<9x128xf32>
    %913 = tpu.matmul %39, %912, %cst_334 {dimension_numbers = #tpu.dot_dimension_numbers<[1], [0], [0], [1], [0, 0, 1, 1], [], []>} : vector<9x2xf32>, vector<2x128xf32>, vector<9x128xf32> -> vector<9x128xf32>
    %914 = arith.addf %913, %45 : vector<9x128xf32>
    %915 = arith.mulf %903, %914 : vector<9x128xf32>
    %c18_i32 = arith.constant 18 : i32
    %cst_335 = arith.constant dense<0.000000e+00> : vector<2x128xf32>
    %916 = tpu.matmul %36, %891, %cst_335 {dimension_numbers = #tpu.dot_dimension_numbers<[1], [0], [0], [1], [0, 0, 1, 1], [], []>} : vector<2x9xf32>, vector<9x128xf32>, vector<2x128xf32> -> vector<2x128xf32>
    %cst_336 = arith.constant 9.99999993E-9 : f32
    %917 = vector.broadcast %cst_336 : f32 to vector<2x128xf32>
    %918 = arith.addf %916, %917 : vector<2x128xf32>
    %919 = tpu.reciprocal %918 {approx = true} : vector<2x128xf32> -> vector<2x128xf32>
    %920 = arith.mulf %918, %919 : vector<2x128xf32>
    %cst_337 = arith.constant 2.000000e+00 : f32
    %921 = vector.broadcast %cst_337 : f32 to vector<2x128xf32>
    %922 = arith.subf %921, %920 : vector<2x128xf32>
    %923 = arith.mulf %919, %922 : vector<2x128xf32>
    %924 = arith.mulf %48, %923 : vector<2x128xf32>
    %cst_338 = arith.constant dense<0.000000e+00> : vector<9x128xf32>
    %925 = tpu.matmul %38, %924, %cst_338 {dimension_numbers = #tpu.dot_dimension_numbers<[1], [0], [0], [1], [0, 0, 1, 1], [], []>} : vector<9x2xf32>, vector<2x128xf32>, vector<9x128xf32> -> vector<9x128xf32>
    %926 = arith.addf %925, %42 : vector<9x128xf32>
    %927 = arith.mulf %891, %926 : vector<9x128xf32>
    %cst_339 = arith.constant dense<0.000000e+00> : vector<2x128xf32>
    %928 = tpu.matmul %37, %927, %cst_339 {dimension_numbers = #tpu.dot_dimension_numbers<[1], [0], [0], [1], [0, 0, 1, 1], [], []>} : vector<2x9xf32>, vector<9x128xf32>, vector<2x128xf32> -> vector<2x128xf32>
    %cst_340 = arith.constant 9.99999993E-9 : f32
    %929 = vector.broadcast %cst_340 : f32 to vector<2x128xf32>
    %930 = arith.addf %928, %929 : vector<2x128xf32>
    %931 = tpu.reciprocal %930 {approx = true} : vector<2x128xf32> -> vector<2x128xf32>
    %932 = arith.mulf %930, %931 : vector<2x128xf32>
    %cst_341 = arith.constant 2.000000e+00 : f32
    %933 = vector.broadcast %cst_341 : f32 to vector<2x128xf32>
    %934 = arith.subf %933, %932 : vector<2x128xf32>
    %935 = arith.mulf %931, %934 : vector<2x128xf32>
    %936 = arith.mulf %50, %935 : vector<2x128xf32>
    %cst_342 = arith.constant dense<0.000000e+00> : vector<9x128xf32>
    %937 = tpu.matmul %39, %936, %cst_342 {dimension_numbers = #tpu.dot_dimension_numbers<[1], [0], [0], [1], [0, 0, 1, 1], [], []>} : vector<9x2xf32>, vector<2x128xf32>, vector<9x128xf32> -> vector<9x128xf32>
    %938 = arith.addf %937, %45 : vector<9x128xf32>
    %939 = arith.mulf %927, %938 : vector<9x128xf32>
    %cst_343 = arith.constant dense<0.000000e+00> : vector<2x128xf32>
    %940 = tpu.matmul %36, %915, %cst_343 {dimension_numbers = #tpu.dot_dimension_numbers<[1], [0], [0], [1], [0, 0, 1, 1], [], []>} : vector<2x9xf32>, vector<9x128xf32>, vector<2x128xf32> -> vector<2x128xf32>
    %cst_344 = arith.constant 9.99999993E-9 : f32
    %941 = vector.broadcast %cst_344 : f32 to vector<2x128xf32>
    %942 = arith.addf %940, %941 : vector<2x128xf32>
    %943 = tpu.reciprocal %942 {approx = true} : vector<2x128xf32> -> vector<2x128xf32>
    %944 = arith.mulf %942, %943 : vector<2x128xf32>
    %cst_345 = arith.constant 2.000000e+00 : f32
    %945 = vector.broadcast %cst_345 : f32 to vector<2x128xf32>
    %946 = arith.subf %945, %944 : vector<2x128xf32>
    %947 = arith.mulf %943, %946 : vector<2x128xf32>
    %948 = arith.mulf %49, %947 : vector<2x128xf32>
    %cst_346 = arith.constant dense<0.000000e+00> : vector<9x128xf32>
    %949 = tpu.matmul %38, %948, %cst_346 {dimension_numbers = #tpu.dot_dimension_numbers<[1], [0], [0], [1], [0, 0, 1, 1], [], []>} : vector<9x2xf32>, vector<2x128xf32>, vector<9x128xf32> -> vector<9x128xf32>
    %950 = arith.addf %949, %42 : vector<9x128xf32>
    %951 = arith.mulf %915, %950 : vector<9x128xf32>
    %cst_347 = arith.constant dense<0.000000e+00> : vector<2x128xf32>
    %952 = tpu.matmul %37, %951, %cst_347 {dimension_numbers = #tpu.dot_dimension_numbers<[1], [0], [0], [1], [0, 0, 1, 1], [], []>} : vector<2x9xf32>, vector<9x128xf32>, vector<2x128xf32> -> vector<2x128xf32>
    %cst_348 = arith.constant 9.99999993E-9 : f32
    %953 = vector.broadcast %cst_348 : f32 to vector<2x128xf32>
    %954 = arith.addf %952, %953 : vector<2x128xf32>
    %955 = tpu.reciprocal %954 {approx = true} : vector<2x128xf32> -> vector<2x128xf32>
    %956 = arith.mulf %954, %955 : vector<2x128xf32>
    %cst_349 = arith.constant 2.000000e+00 : f32
    %957 = vector.broadcast %cst_349 : f32 to vector<2x128xf32>
    %958 = arith.subf %957, %956 : vector<2x128xf32>
    %959 = arith.mulf %955, %958 : vector<2x128xf32>
    %960 = arith.mulf %51, %959 : vector<2x128xf32>
    %cst_350 = arith.constant dense<0.000000e+00> : vector<9x128xf32>
    %961 = tpu.matmul %39, %960, %cst_350 {dimension_numbers = #tpu.dot_dimension_numbers<[1], [0], [0], [1], [0, 0, 1, 1], [], []>} : vector<9x2xf32>, vector<2x128xf32>, vector<9x128xf32> -> vector<9x128xf32>
    %962 = arith.addf %961, %45 : vector<9x128xf32>
    %963 = arith.mulf %951, %962 : vector<9x128xf32>
    %c19_i32 = arith.constant 19 : i32
    %cst_351 = arith.constant dense<0.000000e+00> : vector<2x128xf32>
    %964 = tpu.matmul %36, %939, %cst_351 {dimension_numbers = #tpu.dot_dimension_numbers<[1], [0], [0], [1], [0, 0, 1, 1], [], []>} : vector<2x9xf32>, vector<9x128xf32>, vector<2x128xf32> -> vector<2x128xf32>
    %cst_352 = arith.constant 9.99999993E-9 : f32
    %965 = vector.broadcast %cst_352 : f32 to vector<2x128xf32>
    %966 = arith.addf %964, %965 : vector<2x128xf32>
    %967 = tpu.reciprocal %966 {approx = true} : vector<2x128xf32> -> vector<2x128xf32>
    %968 = arith.mulf %966, %967 : vector<2x128xf32>
    %cst_353 = arith.constant 2.000000e+00 : f32
    %969 = vector.broadcast %cst_353 : f32 to vector<2x128xf32>
    %970 = arith.subf %969, %968 : vector<2x128xf32>
    %971 = arith.mulf %967, %970 : vector<2x128xf32>
    %972 = arith.mulf %48, %971 : vector<2x128xf32>
    %cst_354 = arith.constant dense<0.000000e+00> : vector<9x128xf32>
    %973 = tpu.matmul %38, %972, %cst_354 {dimension_numbers = #tpu.dot_dimension_numbers<[1], [0], [0], [1], [0, 0, 1, 1], [], []>} : vector<9x2xf32>, vector<2x128xf32>, vector<9x128xf32> -> vector<9x128xf32>
    %974 = arith.addf %973, %42 : vector<9x128xf32>
    %975 = arith.mulf %939, %974 : vector<9x128xf32>
    %cst_355 = arith.constant dense<0.000000e+00> : vector<2x128xf32>
    %976 = tpu.matmul %37, %975, %cst_355 {dimension_numbers = #tpu.dot_dimension_numbers<[1], [0], [0], [1], [0, 0, 1, 1], [], []>} : vector<2x9xf32>, vector<9x128xf32>, vector<2x128xf32> -> vector<2x128xf32>
    %cst_356 = arith.constant 9.99999993E-9 : f32
    %977 = vector.broadcast %cst_356 : f32 to vector<2x128xf32>
    %978 = arith.addf %976, %977 : vector<2x128xf32>
    %979 = tpu.reciprocal %978 {approx = true} : vector<2x128xf32> -> vector<2x128xf32>
    %980 = arith.mulf %978, %979 : vector<2x128xf32>
    %cst_357 = arith.constant 2.000000e+00 : f32
    %981 = vector.broadcast %cst_357 : f32 to vector<2x128xf32>
    %982 = arith.subf %981, %980 : vector<2x128xf32>
    %983 = arith.mulf %979, %982 : vector<2x128xf32>
    %984 = arith.mulf %50, %983 : vector<2x128xf32>
    %cst_358 = arith.constant dense<0.000000e+00> : vector<9x128xf32>
    %985 = tpu.matmul %39, %984, %cst_358 {dimension_numbers = #tpu.dot_dimension_numbers<[1], [0], [0], [1], [0, 0, 1, 1], [], []>} : vector<9x2xf32>, vector<2x128xf32>, vector<9x128xf32> -> vector<9x128xf32>
    %986 = arith.addf %985, %45 : vector<9x128xf32>
    %987 = arith.mulf %975, %986 : vector<9x128xf32>
    %cst_359 = arith.constant dense<0.000000e+00> : vector<2x128xf32>
    %988 = tpu.matmul %36, %963, %cst_359 {dimension_numbers = #tpu.dot_dimension_numbers<[1], [0], [0], [1], [0, 0, 1, 1], [], []>} : vector<2x9xf32>, vector<9x128xf32>, vector<2x128xf32> -> vector<2x128xf32>
    %cst_360 = arith.constant 9.99999993E-9 : f32
    %989 = vector.broadcast %cst_360 : f32 to vector<2x128xf32>
    %990 = arith.addf %988, %989 : vector<2x128xf32>
    %991 = tpu.reciprocal %990 {approx = true} : vector<2x128xf32> -> vector<2x128xf32>
    %992 = arith.mulf %990, %991 : vector<2x128xf32>
    %cst_361 = arith.constant 2.000000e+00 : f32
    %993 = vector.broadcast %cst_361 : f32 to vector<2x128xf32>
    %994 = arith.subf %993, %992 : vector<2x128xf32>
    %995 = arith.mulf %991, %994 : vector<2x128xf32>
    %996 = arith.mulf %49, %995 : vector<2x128xf32>
    %cst_362 = arith.constant dense<0.000000e+00> : vector<9x128xf32>
    %997 = tpu.matmul %38, %996, %cst_362 {dimension_numbers = #tpu.dot_dimension_numbers<[1], [0], [0], [1], [0, 0, 1, 1], [], []>} : vector<9x2xf32>, vector<2x128xf32>, vector<9x128xf32> -> vector<9x128xf32>
    %998 = arith.addf %997, %42 : vector<9x128xf32>
    %999 = arith.mulf %963, %998 : vector<9x128xf32>
    %cst_363 = arith.constant dense<0.000000e+00> : vector<2x128xf32>
    %1000 = tpu.matmul %37, %999, %cst_363 {dimension_numbers = #tpu.dot_dimension_numbers<[1], [0], [0], [1], [0, 0, 1, 1], [], []>} : vector<2x9xf32>, vector<9x128xf32>, vector<2x128xf32> -> vector<2x128xf32>
    %cst_364 = arith.constant 9.99999993E-9 : f32
    %1001 = vector.broadcast %cst_364 : f32 to vector<2x128xf32>
    %1002 = arith.addf %1000, %1001 : vector<2x128xf32>
    %1003 = tpu.reciprocal %1002 {approx = true} : vector<2x128xf32> -> vector<2x128xf32>
    %1004 = arith.mulf %1002, %1003 : vector<2x128xf32>
    %cst_365 = arith.constant 2.000000e+00 : f32
    %1005 = vector.broadcast %cst_365 : f32 to vector<2x128xf32>
    %1006 = arith.subf %1005, %1004 : vector<2x128xf32>
    %1007 = arith.mulf %1003, %1006 : vector<2x128xf32>
    %1008 = arith.mulf %51, %1007 : vector<2x128xf32>
    %cst_366 = arith.constant dense<0.000000e+00> : vector<9x128xf32>
    %1009 = tpu.matmul %39, %1008, %cst_366 {dimension_numbers = #tpu.dot_dimension_numbers<[1], [0], [0], [1], [0, 0, 1, 1], [], []>} : vector<9x2xf32>, vector<2x128xf32>, vector<9x128xf32> -> vector<9x128xf32>
    %1010 = arith.addf %1009, %45 : vector<9x128xf32>
    %1011 = arith.mulf %999, %1010 : vector<9x128xf32>
    %c20_i32 = arith.constant 20 : i32
    %cst_367 = arith.constant dense<0.000000e+00> : vector<2x128xf32>
    %1012 = tpu.matmul %36, %987, %cst_367 {dimension_numbers = #tpu.dot_dimension_numbers<[1], [0], [0], [1], [0, 0, 1, 1], [], []>} : vector<2x9xf32>, vector<9x128xf32>, vector<2x128xf32> -> vector<2x128xf32>
    %cst_368 = arith.constant 9.99999993E-9 : f32
    %1013 = vector.broadcast %cst_368 : f32 to vector<2x128xf32>
    %1014 = arith.addf %1012, %1013 : vector<2x128xf32>
    %1015 = tpu.reciprocal %1014 {approx = true} : vector<2x128xf32> -> vector<2x128xf32>
    %1016 = arith.mulf %1014, %1015 : vector<2x128xf32>
    %cst_369 = arith.constant 2.000000e+00 : f32
    %1017 = vector.broadcast %cst_369 : f32 to vector<2x128xf32>
    %1018 = arith.subf %1017, %1016 : vector<2x128xf32>
    %1019 = arith.mulf %1015, %1018 : vector<2x128xf32>
    %1020 = arith.mulf %48, %1019 : vector<2x128xf32>
    %cst_370 = arith.constant dense<0.000000e+00> : vector<9x128xf32>
    %1021 = tpu.matmul %38, %1020, %cst_370 {dimension_numbers = #tpu.dot_dimension_numbers<[1], [0], [0], [1], [0, 0, 1, 1], [], []>} : vector<9x2xf32>, vector<2x128xf32>, vector<9x128xf32> -> vector<9x128xf32>
    %1022 = arith.addf %1021, %42 : vector<9x128xf32>
    %1023 = arith.mulf %987, %1022 : vector<9x128xf32>
    %cst_371 = arith.constant dense<0.000000e+00> : vector<2x128xf32>
    %1024 = tpu.matmul %37, %1023, %cst_371 {dimension_numbers = #tpu.dot_dimension_numbers<[1], [0], [0], [1], [0, 0, 1, 1], [], []>} : vector<2x9xf32>, vector<9x128xf32>, vector<2x128xf32> -> vector<2x128xf32>
    %cst_372 = arith.constant 9.99999993E-9 : f32
    %1025 = vector.broadcast %cst_372 : f32 to vector<2x128xf32>
    %1026 = arith.addf %1024, %1025 : vector<2x128xf32>
    %1027 = tpu.reciprocal %1026 {approx = true} : vector<2x128xf32> -> vector<2x128xf32>
    %1028 = arith.mulf %1026, %1027 : vector<2x128xf32>
    %cst_373 = arith.constant 2.000000e+00 : f32
    %1029 = vector.broadcast %cst_373 : f32 to vector<2x128xf32>
    %1030 = arith.subf %1029, %1028 : vector<2x128xf32>
    %1031 = arith.mulf %1027, %1030 : vector<2x128xf32>
    %1032 = arith.mulf %50, %1031 : vector<2x128xf32>
    %cst_374 = arith.constant dense<0.000000e+00> : vector<9x128xf32>
    %1033 = tpu.matmul %39, %1032, %cst_374 {dimension_numbers = #tpu.dot_dimension_numbers<[1], [0], [0], [1], [0, 0, 1, 1], [], []>} : vector<9x2xf32>, vector<2x128xf32>, vector<9x128xf32> -> vector<9x128xf32>
    %1034 = arith.addf %1033, %45 : vector<9x128xf32>
    %1035 = arith.mulf %1023, %1034 : vector<9x128xf32>
    %cst_375 = arith.constant dense<0.000000e+00> : vector<2x128xf32>
    %1036 = tpu.matmul %36, %1011, %cst_375 {dimension_numbers = #tpu.dot_dimension_numbers<[1], [0], [0], [1], [0, 0, 1, 1], [], []>} : vector<2x9xf32>, vector<9x128xf32>, vector<2x128xf32> -> vector<2x128xf32>
    %cst_376 = arith.constant 9.99999993E-9 : f32
    %1037 = vector.broadcast %cst_376 : f32 to vector<2x128xf32>
    %1038 = arith.addf %1036, %1037 : vector<2x128xf32>
    %1039 = tpu.reciprocal %1038 {approx = true} : vector<2x128xf32> -> vector<2x128xf32>
    %1040 = arith.mulf %1038, %1039 : vector<2x128xf32>
    %cst_377 = arith.constant 2.000000e+00 : f32
    %1041 = vector.broadcast %cst_377 : f32 to vector<2x128xf32>
    %1042 = arith.subf %1041, %1040 : vector<2x128xf32>
    %1043 = arith.mulf %1039, %1042 : vector<2x128xf32>
    %1044 = arith.mulf %49, %1043 : vector<2x128xf32>
    %cst_378 = arith.constant dense<0.000000e+00> : vector<9x128xf32>
    %1045 = tpu.matmul %38, %1044, %cst_378 {dimension_numbers = #tpu.dot_dimension_numbers<[1], [0], [0], [1], [0, 0, 1, 1], [], []>} : vector<9x2xf32>, vector<2x128xf32>, vector<9x128xf32> -> vector<9x128xf32>
    %1046 = arith.addf %1045, %42 : vector<9x128xf32>
    %1047 = arith.mulf %1011, %1046 : vector<9x128xf32>
    %cst_379 = arith.constant dense<0.000000e+00> : vector<2x128xf32>
    %1048 = tpu.matmul %37, %1047, %cst_379 {dimension_numbers = #tpu.dot_dimension_numbers<[1], [0], [0], [1], [0, 0, 1, 1], [], []>} : vector<2x9xf32>, vector<9x128xf32>, vector<2x128xf32> -> vector<2x128xf32>
    %cst_380 = arith.constant 9.99999993E-9 : f32
    %1049 = vector.broadcast %cst_380 : f32 to vector<2x128xf32>
    %1050 = arith.addf %1048, %1049 : vector<2x128xf32>
    %1051 = tpu.reciprocal %1050 {approx = true} : vector<2x128xf32> -> vector<2x128xf32>
    %1052 = arith.mulf %1050, %1051 : vector<2x128xf32>
    %cst_381 = arith.constant 2.000000e+00 : f32
    %1053 = vector.broadcast %cst_381 : f32 to vector<2x128xf32>
    %1054 = arith.subf %1053, %1052 : vector<2x128xf32>
    %1055 = arith.mulf %1051, %1054 : vector<2x128xf32>
    %1056 = arith.mulf %51, %1055 : vector<2x128xf32>
    %cst_382 = arith.constant dense<0.000000e+00> : vector<9x128xf32>
    %1057 = tpu.matmul %39, %1056, %cst_382 {dimension_numbers = #tpu.dot_dimension_numbers<[1], [0], [0], [1], [0, 0, 1, 1], [], []>} : vector<9x2xf32>, vector<2x128xf32>, vector<9x128xf32> -> vector<9x128xf32>
    %1058 = arith.addf %1057, %45 : vector<9x128xf32>
    %1059 = arith.mulf %1047, %1058 : vector<9x128xf32>
    %c21_i32 = arith.constant 21 : i32
    %cst_383 = arith.constant dense<0.000000e+00> : vector<2x128xf32>
    %1060 = tpu.matmul %36, %1035, %cst_383 {dimension_numbers = #tpu.dot_dimension_numbers<[1], [0], [0], [1], [0, 0, 1, 1], [], []>} : vector<2x9xf32>, vector<9x128xf32>, vector<2x128xf32> -> vector<2x128xf32>
    %cst_384 = arith.constant 9.99999993E-9 : f32
    %1061 = vector.broadcast %cst_384 : f32 to vector<2x128xf32>
    %1062 = arith.addf %1060, %1061 : vector<2x128xf32>
    %1063 = tpu.reciprocal %1062 {approx = true} : vector<2x128xf32> -> vector<2x128xf32>
    %1064 = arith.mulf %1062, %1063 : vector<2x128xf32>
    %cst_385 = arith.constant 2.000000e+00 : f32
    %1065 = vector.broadcast %cst_385 : f32 to vector<2x128xf32>
    %1066 = arith.subf %1065, %1064 : vector<2x128xf32>
    %1067 = arith.mulf %1063, %1066 : vector<2x128xf32>
    %1068 = arith.mulf %48, %1067 : vector<2x128xf32>
    %cst_386 = arith.constant dense<0.000000e+00> : vector<9x128xf32>
    %1069 = tpu.matmul %38, %1068, %cst_386 {dimension_numbers = #tpu.dot_dimension_numbers<[1], [0], [0], [1], [0, 0, 1, 1], [], []>} : vector<9x2xf32>, vector<2x128xf32>, vector<9x128xf32> -> vector<9x128xf32>
    %1070 = arith.addf %1069, %42 : vector<9x128xf32>
    %1071 = arith.mulf %1035, %1070 : vector<9x128xf32>
    %cst_387 = arith.constant dense<0.000000e+00> : vector<2x128xf32>
    %1072 = tpu.matmul %37, %1071, %cst_387 {dimension_numbers = #tpu.dot_dimension_numbers<[1], [0], [0], [1], [0, 0, 1, 1], [], []>} : vector<2x9xf32>, vector<9x128xf32>, vector<2x128xf32> -> vector<2x128xf32>
    %cst_388 = arith.constant 9.99999993E-9 : f32
    %1073 = vector.broadcast %cst_388 : f32 to vector<2x128xf32>
    %1074 = arith.addf %1072, %1073 : vector<2x128xf32>
    %1075 = tpu.reciprocal %1074 {approx = true} : vector<2x128xf32> -> vector<2x128xf32>
    %1076 = arith.mulf %1074, %1075 : vector<2x128xf32>
    %cst_389 = arith.constant 2.000000e+00 : f32
    %1077 = vector.broadcast %cst_389 : f32 to vector<2x128xf32>
    %1078 = arith.subf %1077, %1076 : vector<2x128xf32>
    %1079 = arith.mulf %1075, %1078 : vector<2x128xf32>
    %1080 = arith.mulf %50, %1079 : vector<2x128xf32>
    %cst_390 = arith.constant dense<0.000000e+00> : vector<9x128xf32>
    %1081 = tpu.matmul %39, %1080, %cst_390 {dimension_numbers = #tpu.dot_dimension_numbers<[1], [0], [0], [1], [0, 0, 1, 1], [], []>} : vector<9x2xf32>, vector<2x128xf32>, vector<9x128xf32> -> vector<9x128xf32>
    %1082 = arith.addf %1081, %45 : vector<9x128xf32>
    %1083 = arith.mulf %1071, %1082 : vector<9x128xf32>
    %cst_391 = arith.constant dense<0.000000e+00> : vector<2x128xf32>
    %1084 = tpu.matmul %36, %1059, %cst_391 {dimension_numbers = #tpu.dot_dimension_numbers<[1], [0], [0], [1], [0, 0, 1, 1], [], []>} : vector<2x9xf32>, vector<9x128xf32>, vector<2x128xf32> -> vector<2x128xf32>
    %cst_392 = arith.constant 9.99999993E-9 : f32
    %1085 = vector.broadcast %cst_392 : f32 to vector<2x128xf32>
    %1086 = arith.addf %1084, %1085 : vector<2x128xf32>
    %1087 = tpu.reciprocal %1086 {approx = true} : vector<2x128xf32> -> vector<2x128xf32>
    %1088 = arith.mulf %1086, %1087 : vector<2x128xf32>
    %cst_393 = arith.constant 2.000000e+00 : f32
    %1089 = vector.broadcast %cst_393 : f32 to vector<2x128xf32>
    %1090 = arith.subf %1089, %1088 : vector<2x128xf32>
    %1091 = arith.mulf %1087, %1090 : vector<2x128xf32>
    %1092 = arith.mulf %49, %1091 : vector<2x128xf32>
    %cst_394 = arith.constant dense<0.000000e+00> : vector<9x128xf32>
    %1093 = tpu.matmul %38, %1092, %cst_394 {dimension_numbers = #tpu.dot_dimension_numbers<[1], [0], [0], [1], [0, 0, 1, 1], [], []>} : vector<9x2xf32>, vector<2x128xf32>, vector<9x128xf32> -> vector<9x128xf32>
    %1094 = arith.addf %1093, %42 : vector<9x128xf32>
    %1095 = arith.mulf %1059, %1094 : vector<9x128xf32>
    %cst_395 = arith.constant dense<0.000000e+00> : vector<2x128xf32>
    %1096 = tpu.matmul %37, %1095, %cst_395 {dimension_numbers = #tpu.dot_dimension_numbers<[1], [0], [0], [1], [0, 0, 1, 1], [], []>} : vector<2x9xf32>, vector<9x128xf32>, vector<2x128xf32> -> vector<2x128xf32>
    %cst_396 = arith.constant 9.99999993E-9 : f32
    %1097 = vector.broadcast %cst_396 : f32 to vector<2x128xf32>
    %1098 = arith.addf %1096, %1097 : vector<2x128xf32>
    %1099 = tpu.reciprocal %1098 {approx = true} : vector<2x128xf32> -> vector<2x128xf32>
    %1100 = arith.mulf %1098, %1099 : vector<2x128xf32>
    %cst_397 = arith.constant 2.000000e+00 : f32
    %1101 = vector.broadcast %cst_397 : f32 to vector<2x128xf32>
    %1102 = arith.subf %1101, %1100 : vector<2x128xf32>
    %1103 = arith.mulf %1099, %1102 : vector<2x128xf32>
    %1104 = arith.mulf %51, %1103 : vector<2x128xf32>
    %cst_398 = arith.constant dense<0.000000e+00> : vector<9x128xf32>
    %1105 = tpu.matmul %39, %1104, %cst_398 {dimension_numbers = #tpu.dot_dimension_numbers<[1], [0], [0], [1], [0, 0, 1, 1], [], []>} : vector<9x2xf32>, vector<2x128xf32>, vector<9x128xf32> -> vector<9x128xf32>
    %1106 = arith.addf %1105, %45 : vector<9x128xf32>
    %1107 = arith.mulf %1095, %1106 : vector<9x128xf32>
    %c22_i32 = arith.constant 22 : i32
    %cst_399 = arith.constant dense<0.000000e+00> : vector<2x128xf32>
    %1108 = tpu.matmul %36, %1083, %cst_399 {dimension_numbers = #tpu.dot_dimension_numbers<[1], [0], [0], [1], [0, 0, 1, 1], [], []>} : vector<2x9xf32>, vector<9x128xf32>, vector<2x128xf32> -> vector<2x128xf32>
    %cst_400 = arith.constant 9.99999993E-9 : f32
    %1109 = vector.broadcast %cst_400 : f32 to vector<2x128xf32>
    %1110 = arith.addf %1108, %1109 : vector<2x128xf32>
    %1111 = tpu.reciprocal %1110 {approx = true} : vector<2x128xf32> -> vector<2x128xf32>
    %1112 = arith.mulf %1110, %1111 : vector<2x128xf32>
    %cst_401 = arith.constant 2.000000e+00 : f32
    %1113 = vector.broadcast %cst_401 : f32 to vector<2x128xf32>
    %1114 = arith.subf %1113, %1112 : vector<2x128xf32>
    %1115 = arith.mulf %1111, %1114 : vector<2x128xf32>
    %1116 = arith.mulf %48, %1115 : vector<2x128xf32>
    %cst_402 = arith.constant dense<0.000000e+00> : vector<9x128xf32>
    %1117 = tpu.matmul %38, %1116, %cst_402 {dimension_numbers = #tpu.dot_dimension_numbers<[1], [0], [0], [1], [0, 0, 1, 1], [], []>} : vector<9x2xf32>, vector<2x128xf32>, vector<9x128xf32> -> vector<9x128xf32>
    %1118 = arith.addf %1117, %42 : vector<9x128xf32>
    %1119 = arith.mulf %1083, %1118 : vector<9x128xf32>
    %cst_403 = arith.constant dense<0.000000e+00> : vector<2x128xf32>
    %1120 = tpu.matmul %37, %1119, %cst_403 {dimension_numbers = #tpu.dot_dimension_numbers<[1], [0], [0], [1], [0, 0, 1, 1], [], []>} : vector<2x9xf32>, vector<9x128xf32>, vector<2x128xf32> -> vector<2x128xf32>
    %cst_404 = arith.constant 9.99999993E-9 : f32
    %1121 = vector.broadcast %cst_404 : f32 to vector<2x128xf32>
    %1122 = arith.addf %1120, %1121 : vector<2x128xf32>
    %1123 = tpu.reciprocal %1122 {approx = true} : vector<2x128xf32> -> vector<2x128xf32>
    %1124 = arith.mulf %1122, %1123 : vector<2x128xf32>
    %cst_405 = arith.constant 2.000000e+00 : f32
    %1125 = vector.broadcast %cst_405 : f32 to vector<2x128xf32>
    %1126 = arith.subf %1125, %1124 : vector<2x128xf32>
    %1127 = arith.mulf %1123, %1126 : vector<2x128xf32>
    %1128 = arith.mulf %50, %1127 : vector<2x128xf32>
    %cst_406 = arith.constant dense<0.000000e+00> : vector<9x128xf32>
    %1129 = tpu.matmul %39, %1128, %cst_406 {dimension_numbers = #tpu.dot_dimension_numbers<[1], [0], [0], [1], [0, 0, 1, 1], [], []>} : vector<9x2xf32>, vector<2x128xf32>, vector<9x128xf32> -> vector<9x128xf32>
    %1130 = arith.addf %1129, %45 : vector<9x128xf32>
    %1131 = arith.mulf %1119, %1130 : vector<9x128xf32>
    %cst_407 = arith.constant dense<0.000000e+00> : vector<2x128xf32>
    %1132 = tpu.matmul %36, %1107, %cst_407 {dimension_numbers = #tpu.dot_dimension_numbers<[1], [0], [0], [1], [0, 0, 1, 1], [], []>} : vector<2x9xf32>, vector<9x128xf32>, vector<2x128xf32> -> vector<2x128xf32>
    %cst_408 = arith.constant 9.99999993E-9 : f32
    %1133 = vector.broadcast %cst_408 : f32 to vector<2x128xf32>
    %1134 = arith.addf %1132, %1133 : vector<2x128xf32>
    %1135 = tpu.reciprocal %1134 {approx = true} : vector<2x128xf32> -> vector<2x128xf32>
    %1136 = arith.mulf %1134, %1135 : vector<2x128xf32>
    %cst_409 = arith.constant 2.000000e+00 : f32
    %1137 = vector.broadcast %cst_409 : f32 to vector<2x128xf32>
    %1138 = arith.subf %1137, %1136 : vector<2x128xf32>
    %1139 = arith.mulf %1135, %1138 : vector<2x128xf32>
    %1140 = arith.mulf %49, %1139 : vector<2x128xf32>
    %cst_410 = arith.constant dense<0.000000e+00> : vector<9x128xf32>
    %1141 = tpu.matmul %38, %1140, %cst_410 {dimension_numbers = #tpu.dot_dimension_numbers<[1], [0], [0], [1], [0, 0, 1, 1], [], []>} : vector<9x2xf32>, vector<2x128xf32>, vector<9x128xf32> -> vector<9x128xf32>
    %1142 = arith.addf %1141, %42 : vector<9x128xf32>
    %1143 = arith.mulf %1107, %1142 : vector<9x128xf32>
    %cst_411 = arith.constant dense<0.000000e+00> : vector<2x128xf32>
    %1144 = tpu.matmul %37, %1143, %cst_411 {dimension_numbers = #tpu.dot_dimension_numbers<[1], [0], [0], [1], [0, 0, 1, 1], [], []>} : vector<2x9xf32>, vector<9x128xf32>, vector<2x128xf32> -> vector<2x128xf32>
    %cst_412 = arith.constant 9.99999993E-9 : f32
    %1145 = vector.broadcast %cst_412 : f32 to vector<2x128xf32>
    %1146 = arith.addf %1144, %1145 : vector<2x128xf32>
    %1147 = tpu.reciprocal %1146 {approx = true} : vector<2x128xf32> -> vector<2x128xf32>
    %1148 = arith.mulf %1146, %1147 : vector<2x128xf32>
    %cst_413 = arith.constant 2.000000e+00 : f32
    %1149 = vector.broadcast %cst_413 : f32 to vector<2x128xf32>
    %1150 = arith.subf %1149, %1148 : vector<2x128xf32>
    %1151 = arith.mulf %1147, %1150 : vector<2x128xf32>
    %1152 = arith.mulf %51, %1151 : vector<2x128xf32>
    %cst_414 = arith.constant dense<0.000000e+00> : vector<9x128xf32>
    %1153 = tpu.matmul %39, %1152, %cst_414 {dimension_numbers = #tpu.dot_dimension_numbers<[1], [0], [0], [1], [0, 0, 1, 1], [], []>} : vector<9x2xf32>, vector<2x128xf32>, vector<9x128xf32> -> vector<9x128xf32>
    %1154 = arith.addf %1153, %45 : vector<9x128xf32>
    %1155 = arith.mulf %1143, %1154 : vector<9x128xf32>
    %c23_i32 = arith.constant 23 : i32
    %cst_415 = arith.constant dense<0.000000e+00> : vector<2x128xf32>
    %1156 = tpu.matmul %36, %1131, %cst_415 {dimension_numbers = #tpu.dot_dimension_numbers<[1], [0], [0], [1], [0, 0, 1, 1], [], []>} : vector<2x9xf32>, vector<9x128xf32>, vector<2x128xf32> -> vector<2x128xf32>
    %cst_416 = arith.constant 9.99999993E-9 : f32
    %1157 = vector.broadcast %cst_416 : f32 to vector<2x128xf32>
    %1158 = arith.addf %1156, %1157 : vector<2x128xf32>
    %1159 = tpu.reciprocal %1158 {approx = true} : vector<2x128xf32> -> vector<2x128xf32>
    %1160 = arith.mulf %1158, %1159 : vector<2x128xf32>
    %cst_417 = arith.constant 2.000000e+00 : f32
    %1161 = vector.broadcast %cst_417 : f32 to vector<2x128xf32>
    %1162 = arith.subf %1161, %1160 : vector<2x128xf32>
    %1163 = arith.mulf %1159, %1162 : vector<2x128xf32>
    %1164 = arith.mulf %48, %1163 : vector<2x128xf32>
    %cst_418 = arith.constant dense<0.000000e+00> : vector<9x128xf32>
    %1165 = tpu.matmul %38, %1164, %cst_418 {dimension_numbers = #tpu.dot_dimension_numbers<[1], [0], [0], [1], [0, 0, 1, 1], [], []>} : vector<9x2xf32>, vector<2x128xf32>, vector<9x128xf32> -> vector<9x128xf32>
    %1166 = arith.addf %1165, %42 : vector<9x128xf32>
    %1167 = arith.mulf %1131, %1166 : vector<9x128xf32>
    %cst_419 = arith.constant dense<0.000000e+00> : vector<2x128xf32>
    %1168 = tpu.matmul %37, %1167, %cst_419 {dimension_numbers = #tpu.dot_dimension_numbers<[1], [0], [0], [1], [0, 0, 1, 1], [], []>} : vector<2x9xf32>, vector<9x128xf32>, vector<2x128xf32> -> vector<2x128xf32>
    %cst_420 = arith.constant 9.99999993E-9 : f32
    %1169 = vector.broadcast %cst_420 : f32 to vector<2x128xf32>
    %1170 = arith.addf %1168, %1169 : vector<2x128xf32>
    %1171 = tpu.reciprocal %1170 {approx = true} : vector<2x128xf32> -> vector<2x128xf32>
    %1172 = arith.mulf %1170, %1171 : vector<2x128xf32>
    %cst_421 = arith.constant 2.000000e+00 : f32
    %1173 = vector.broadcast %cst_421 : f32 to vector<2x128xf32>
    %1174 = arith.subf %1173, %1172 : vector<2x128xf32>
    %1175 = arith.mulf %1171, %1174 : vector<2x128xf32>
    %1176 = arith.mulf %50, %1175 : vector<2x128xf32>
    %cst_422 = arith.constant dense<0.000000e+00> : vector<9x128xf32>
    %1177 = tpu.matmul %39, %1176, %cst_422 {dimension_numbers = #tpu.dot_dimension_numbers<[1], [0], [0], [1], [0, 0, 1, 1], [], []>} : vector<9x2xf32>, vector<2x128xf32>, vector<9x128xf32> -> vector<9x128xf32>
    %1178 = arith.addf %1177, %45 : vector<9x128xf32>
    %1179 = arith.mulf %1167, %1178 : vector<9x128xf32>
    %cst_423 = arith.constant dense<0.000000e+00> : vector<2x128xf32>
    %1180 = tpu.matmul %36, %1155, %cst_423 {dimension_numbers = #tpu.dot_dimension_numbers<[1], [0], [0], [1], [0, 0, 1, 1], [], []>} : vector<2x9xf32>, vector<9x128xf32>, vector<2x128xf32> -> vector<2x128xf32>
    %cst_424 = arith.constant 9.99999993E-9 : f32
    %1181 = vector.broadcast %cst_424 : f32 to vector<2x128xf32>
    %1182 = arith.addf %1180, %1181 : vector<2x128xf32>
    %1183 = tpu.reciprocal %1182 {approx = true} : vector<2x128xf32> -> vector<2x128xf32>
    %1184 = arith.mulf %1182, %1183 : vector<2x128xf32>
    %cst_425 = arith.constant 2.000000e+00 : f32
    %1185 = vector.broadcast %cst_425 : f32 to vector<2x128xf32>
    %1186 = arith.subf %1185, %1184 : vector<2x128xf32>
    %1187 = arith.mulf %1183, %1186 : vector<2x128xf32>
    %1188 = arith.mulf %49, %1187 : vector<2x128xf32>
    %cst_426 = arith.constant dense<0.000000e+00> : vector<9x128xf32>
    %1189 = tpu.matmul %38, %1188, %cst_426 {dimension_numbers = #tpu.dot_dimension_numbers<[1], [0], [0], [1], [0, 0, 1, 1], [], []>} : vector<9x2xf32>, vector<2x128xf32>, vector<9x128xf32> -> vector<9x128xf32>
    %1190 = arith.addf %1189, %42 : vector<9x128xf32>
    %1191 = arith.mulf %1155, %1190 : vector<9x128xf32>
    %cst_427 = arith.constant dense<0.000000e+00> : vector<2x128xf32>
    %1192 = tpu.matmul %37, %1191, %cst_427 {dimension_numbers = #tpu.dot_dimension_numbers<[1], [0], [0], [1], [0, 0, 1, 1], [], []>} : vector<2x9xf32>, vector<9x128xf32>, vector<2x128xf32> -> vector<2x128xf32>
    %cst_428 = arith.constant 9.99999993E-9 : f32
    %1193 = vector.broadcast %cst_428 : f32 to vector<2x128xf32>
    %1194 = arith.addf %1192, %1193 : vector<2x128xf32>
    %1195 = tpu.reciprocal %1194 {approx = true} : vector<2x128xf32> -> vector<2x128xf32>
    %1196 = arith.mulf %1194, %1195 : vector<2x128xf32>
    %cst_429 = arith.constant 2.000000e+00 : f32
    %1197 = vector.broadcast %cst_429 : f32 to vector<2x128xf32>
    %1198 = arith.subf %1197, %1196 : vector<2x128xf32>
    %1199 = arith.mulf %1195, %1198 : vector<2x128xf32>
    %1200 = arith.mulf %51, %1199 : vector<2x128xf32>
    %cst_430 = arith.constant dense<0.000000e+00> : vector<9x128xf32>
    %1201 = tpu.matmul %39, %1200, %cst_430 {dimension_numbers = #tpu.dot_dimension_numbers<[1], [0], [0], [1], [0, 0, 1, 1], [], []>} : vector<9x2xf32>, vector<2x128xf32>, vector<9x128xf32> -> vector<9x128xf32>
    %1202 = arith.addf %1201, %45 : vector<9x128xf32>
    %1203 = arith.mulf %1191, %1202 : vector<9x128xf32>
    %c24_i32 = arith.constant 24 : i32
    %cst_431 = arith.constant dense<0.000000e+00> : vector<2x128xf32>
    %1204 = tpu.matmul %36, %1179, %cst_431 {dimension_numbers = #tpu.dot_dimension_numbers<[1], [0], [0], [1], [0, 0, 1, 1], [], []>} : vector<2x9xf32>, vector<9x128xf32>, vector<2x128xf32> -> vector<2x128xf32>
    %cst_432 = arith.constant 9.99999993E-9 : f32
    %1205 = vector.broadcast %cst_432 : f32 to vector<2x128xf32>
    %1206 = arith.addf %1204, %1205 : vector<2x128xf32>
    %1207 = tpu.reciprocal %1206 {approx = true} : vector<2x128xf32> -> vector<2x128xf32>
    %1208 = arith.mulf %1206, %1207 : vector<2x128xf32>
    %cst_433 = arith.constant 2.000000e+00 : f32
    %1209 = vector.broadcast %cst_433 : f32 to vector<2x128xf32>
    %1210 = arith.subf %1209, %1208 : vector<2x128xf32>
    %1211 = arith.mulf %1207, %1210 : vector<2x128xf32>
    %1212 = arith.mulf %48, %1211 : vector<2x128xf32>
    %cst_434 = arith.constant dense<0.000000e+00> : vector<9x128xf32>
    %1213 = tpu.matmul %38, %1212, %cst_434 {dimension_numbers = #tpu.dot_dimension_numbers<[1], [0], [0], [1], [0, 0, 1, 1], [], []>} : vector<9x2xf32>, vector<2x128xf32>, vector<9x128xf32> -> vector<9x128xf32>
    %1214 = arith.addf %1213, %42 : vector<9x128xf32>
    %1215 = arith.mulf %1179, %1214 : vector<9x128xf32>
    %cst_435 = arith.constant dense<0.000000e+00> : vector<2x128xf32>
    %1216 = tpu.matmul %37, %1215, %cst_435 {dimension_numbers = #tpu.dot_dimension_numbers<[1], [0], [0], [1], [0, 0, 1, 1], [], []>} : vector<2x9xf32>, vector<9x128xf32>, vector<2x128xf32> -> vector<2x128xf32>
    %cst_436 = arith.constant 9.99999993E-9 : f32
    %1217 = vector.broadcast %cst_436 : f32 to vector<2x128xf32>
    %1218 = arith.addf %1216, %1217 : vector<2x128xf32>
    %1219 = tpu.reciprocal %1218 {approx = true} : vector<2x128xf32> -> vector<2x128xf32>
    %1220 = arith.mulf %1218, %1219 : vector<2x128xf32>
    %cst_437 = arith.constant 2.000000e+00 : f32
    %1221 = vector.broadcast %cst_437 : f32 to vector<2x128xf32>
    %1222 = arith.subf %1221, %1220 : vector<2x128xf32>
    %1223 = arith.mulf %1219, %1222 : vector<2x128xf32>
    %1224 = arith.mulf %50, %1223 : vector<2x128xf32>
    %cst_438 = arith.constant dense<0.000000e+00> : vector<9x128xf32>
    %1225 = tpu.matmul %39, %1224, %cst_438 {dimension_numbers = #tpu.dot_dimension_numbers<[1], [0], [0], [1], [0, 0, 1, 1], [], []>} : vector<9x2xf32>, vector<2x128xf32>, vector<9x128xf32> -> vector<9x128xf32>
    %1226 = arith.addf %1225, %45 : vector<9x128xf32>
    %1227 = arith.mulf %1215, %1226 : vector<9x128xf32>
    %cst_439 = arith.constant dense<0.000000e+00> : vector<2x128xf32>
    %1228 = tpu.matmul %36, %1203, %cst_439 {dimension_numbers = #tpu.dot_dimension_numbers<[1], [0], [0], [1], [0, 0, 1, 1], [], []>} : vector<2x9xf32>, vector<9x128xf32>, vector<2x128xf32> -> vector<2x128xf32>
    %cst_440 = arith.constant 9.99999993E-9 : f32
    %1229 = vector.broadcast %cst_440 : f32 to vector<2x128xf32>
    %1230 = arith.addf %1228, %1229 : vector<2x128xf32>
    %1231 = tpu.reciprocal %1230 {approx = true} : vector<2x128xf32> -> vector<2x128xf32>
    %1232 = arith.mulf %1230, %1231 : vector<2x128xf32>
    %cst_441 = arith.constant 2.000000e+00 : f32
    %1233 = vector.broadcast %cst_441 : f32 to vector<2x128xf32>
    %1234 = arith.subf %1233, %1232 : vector<2x128xf32>
    %1235 = arith.mulf %1231, %1234 : vector<2x128xf32>
    %1236 = arith.mulf %49, %1235 : vector<2x128xf32>
    %cst_442 = arith.constant dense<0.000000e+00> : vector<9x128xf32>
    %1237 = tpu.matmul %38, %1236, %cst_442 {dimension_numbers = #tpu.dot_dimension_numbers<[1], [0], [0], [1], [0, 0, 1, 1], [], []>} : vector<9x2xf32>, vector<2x128xf32>, vector<9x128xf32> -> vector<9x128xf32>
    %1238 = arith.addf %1237, %42 : vector<9x128xf32>
    %1239 = arith.mulf %1203, %1238 : vector<9x128xf32>
    %cst_443 = arith.constant dense<0.000000e+00> : vector<2x128xf32>
    %1240 = tpu.matmul %37, %1239, %cst_443 {dimension_numbers = #tpu.dot_dimension_numbers<[1], [0], [0], [1], [0, 0, 1, 1], [], []>} : vector<2x9xf32>, vector<9x128xf32>, vector<2x128xf32> -> vector<2x128xf32>
    %cst_444 = arith.constant 9.99999993E-9 : f32
    %1241 = vector.broadcast %cst_444 : f32 to vector<2x128xf32>
    %1242 = arith.addf %1240, %1241 : vector<2x128xf32>
    %1243 = tpu.reciprocal %1242 {approx = true} : vector<2x128xf32> -> vector<2x128xf32>
    %1244 = arith.mulf %1242, %1243 : vector<2x128xf32>
    %cst_445 = arith.constant 2.000000e+00 : f32
    %1245 = vector.broadcast %cst_445 : f32 to vector<2x128xf32>
    %1246 = arith.subf %1245, %1244 : vector<2x128xf32>
    %1247 = arith.mulf %1243, %1246 : vector<2x128xf32>
    %1248 = arith.mulf %51, %1247 : vector<2x128xf32>
    %cst_446 = arith.constant dense<0.000000e+00> : vector<9x128xf32>
    %1249 = tpu.matmul %39, %1248, %cst_446 {dimension_numbers = #tpu.dot_dimension_numbers<[1], [0], [0], [1], [0, 0, 1, 1], [], []>} : vector<9x2xf32>, vector<2x128xf32>, vector<9x128xf32> -> vector<9x128xf32>
    %1250 = arith.addf %1249, %45 : vector<9x128xf32>
    %1251 = arith.mulf %1239, %1250 : vector<9x128xf32>
    %1252 = tpu.concatenate %1227, %1251 in 1 : vector<9x128xf32>, vector<9x128xf32> -> vector<9x256xf32>
    %c0_447 = arith.constant 0 : index
    %c0_448 = arith.constant 0 : index
    %1253 = vector.load %arg20[%c0_447, %c0_448] : memref<9x256xf32, #tpu.memory_space<vmem>>, vector<9x256xf32>
    tpu.vector_store %arg20[%c0_447, %c0_448], %1252 {strides = array<i32>} : memref<9x256xf32, #tpu.memory_space<vmem>>, vector<9x256xf32>,
    %c0_449 = arith.constant 0 : index
    %c0_450 = arith.constant 0 : index
    %1254 = vector.load %arg21[%c0_449, %c0_450] : memref<1x256xf32, #tpu.memory_space<vmem>>, vector<1x256xf32>
    tpu.vector_store %arg21[%c0_449, %c0_450], %35 {strides = array<i32>} : memref<1x256xf32, #tpu.memory_space<vmem>>, vector<1x256xf32>,
    return
  }
  func.func @transform_0(%arg0: i32) -> (i32, i32) {
    %c0_i32 = arith.constant 0 : i32
    %c0_i32_0 = arith.constant 0 : i32
    return %c0_i32, %arg0 : i32, i32
  }
  func.func @transform_1(%arg0: i32) -> (i32, i32) {
    %c0_i32 = arith.constant 0 : i32
    %c0_i32_0 = arith.constant 0 : i32
    %c0_i32_1 = arith.constant 0 : i32
    return %c0_i32, %c0_i32_0 : i32, i32
  }
  func.func @transform_2(%arg0: i32) -> (i32, i32) {
    %c0_i32 = arith.constant 0 : i32
    %c0_i32_0 = arith.constant 0 : i32
    %c0_i32_1 = arith.constant 0 : i32
    return %c0_i32, %c0_i32_0 : i32, i32
  }
  func.func @transform_3(%arg0: i32) -> (i32, i32) {
    %c0_i32 = arith.constant 0 : i32
    %c0_i32_0 = arith.constant 0 : i32
    %c0_i32_1 = arith.constant 0 : i32
    return %c0_i32, %c0_i32_0 : i32, i32
  }
  func.func @transform_4(%arg0: i32) -> (i32, i32) {
    %c0_i32 = arith.constant 0 : i32
    %c0_i32_0 = arith.constant 0 : i32
    %c0_i32_1 = arith.constant 0 : i32
    return %c0_i32, %c0_i32_0 : i32, i32
  }
  func.func @transform_5(%arg0: i32) -> (i32, i32) {
    %c0_i32 = arith.constant 0 : i32
    %c0_i32_0 = arith.constant 0 : i32
    %c0_i32_1 = arith.constant 0 : i32
    return %c0_i32, %c0_i32_0 : i32, i32
  }
  func.func @transform_6(%arg0: i32) -> (i32, i32) {
    %c0_i32 = arith.constant 0 : i32
    %c0_i32_0 = arith.constant 0 : i32
    %c0_i32_1 = arith.constant 0 : i32
    return %c0_i32, %c0_i32_0 : i32, i32
  }
  func.func @transform_7(%arg0: i32) -> (i32, i32) {
    %c0_i32 = arith.constant 0 : i32
    %c0_i32_0 = arith.constant 0 : i32
    %c0_i32_1 = arith.constant 0 : i32
    return %c0_i32, %c0_i32_0 : i32, i32
  }
  func.func @transform_8(%arg0: i32) -> (i32, i32) {
    %c0_i32 = arith.constant 0 : i32
    %c0_i32_0 = arith.constant 0 : i32
    %c0_i32_1 = arith.constant 0 : i32
    return %c0_i32, %c0_i32_0 : i32, i32
  }
  func.func @transform_9(%arg0: i32) -> (i32, i32) {
    %c0_i32 = arith.constant 0 : i32
    %c0_i32_0 = arith.constant 0 : i32
    %c0_i32_1 = arith.constant 0 : i32
    return %c0_i32, %c0_i32_0 : i32, i32
  }
  func.func @transform_10(%arg0: i32) -> (i32, i32) {
    %c0_i32 = arith.constant 0 : i32
    %c0_i32_0 = arith.constant 0 : i32
    %c0_i32_1 = arith.constant 0 : i32
    return %c0_i32, %c0_i32_0 : i32, i32
  }
  func.func @transform_11(%arg0: i32) -> (i32, i32) {
    %c0_i32 = arith.constant 0 : i32
    %c0_i32_0 = arith.constant 0 : i32
    %c0_i32_1 = arith.constant 0 : i32
    return %c0_i32, %c0_i32_0 : i32, i32
  }
  func.func @transform_12(%arg0: i32) -> (i32, i32) {
    %c0_i32 = arith.constant 0 : i32
    %c0_i32_0 = arith.constant 0 : i32
    %c0_i32_1 = arith.constant 0 : i32
    return %c0_i32, %c0_i32_0 : i32, i32
  }
  func.func @transform_13(%arg0: i32) -> (i32, i32) {
    %c0_i32 = arith.constant 0 : i32
    %c0_i32_0 = arith.constant 0 : i32
    %c0_i32_1 = arith.constant 0 : i32
    return %c0_i32, %c0_i32_0 : i32, i32
  }
  func.func @transform_14(%arg0: i32) -> (i32, i32) {
    %c0_i32 = arith.constant 0 : i32
    %c0_i32_0 = arith.constant 0 : i32
    %c0_i32_1 = arith.constant 0 : i32
    return %c0_i32, %c0_i32_0 : i32, i32
  }
  func.func @transform_15(%arg0: i32) -> (i32, i32) {
    %c0_i32 = arith.constant 0 : i32
    %c0_i32_0 = arith.constant 0 : i32
    %c0_i32_1 = arith.constant 0 : i32
    return %c0_i32, %c0_i32_0 : i32, i32
  }
  func.func @transform_16(%arg0: i32) -> (i32, i32) {
    %c0_i32 = arith.constant 0 : i32
    %c0_i32_0 = arith.constant 0 : i32
    %c0_i32_1 = arith.constant 0 : i32
    return %c0_i32, %c0_i32_0 : i32, i32
  }
  func.func @transform_17(%arg0: i32) -> (i32, i32) {
    %c0_i32 = arith.constant 0 : i32
    %c0_i32_0 = arith.constant 0 : i32
    %c0_i32_1 = arith.constant 0 : i32
    return %c0_i32, %c0_i32_0 : i32, i32
  }
  func.func @transform_18(%arg0: i32) -> (i32, i32) {
    %c0_i32 = arith.constant 0 : i32
    %c0_i32_0 = arith.constant 0 : i32
    %c0_i32_1 = arith.constant 0 : i32
    return %c0_i32, %c0_i32_0 : i32, i32
  }
  func.func @transform_19(%arg0: i32) -> (i32, i32) {
    %c0_i32 = arith.constant 0 : i32
    %c0_i32_0 = arith.constant 0 : i32
    return %c0_i32, %arg0 : i32, i32
  }
  func.func @transform_20(%arg0: i32) -> (i32, i32) {
    %c0_i32 = arith.constant 0 : i32
    %c0_i32_0 = arith.constant 0 : i32
    return %c0_i32, %arg0 : i32, i32
  }
}

</mosaic_0001>

<llo_original>
// kernel: tpu_custom_call.1
$region0: #{tpu_custom_call.1}
  #allocation0 [shape = 'u32[]', space=smem, size = 0x4, offset = 0x4, fixed_abs, tag = 'smem constant byte address 0x4 - core index']
  #allocation1 [shape = 'u32[72,128]{1,0:T(1,128)}', space=vmem, size = 0x9000, scoped, tag = 'internal scratch']
  %s0 = inlined_call_operand.vmem [shape: f32[4,256], index: 0, kind: input, shape index: {}]
  %s1 = inlined_call_operand.vmem [shape: f32[64,4], index: 1, kind: input, shape index: {}]
  %s2 = inlined_call_operand.vmem [shape: f32[64,1], index: 2, kind: input, shape index: {}]
  %s3 = inlined_call_operand.vmem [shape: f32[64,64], index: 3, kind: input, shape index: {}]
  %s4 = inlined_call_operand.vmem [shape: f32[64,1], index: 4, kind: input, shape index: {}]
  %s5 = inlined_call_operand.vmem [shape: f32[32,64], index: 5, kind: input, shape index: {}]
  %s6 = inlined_call_operand.vmem [shape: f32[32,1], index: 6, kind: input, shape index: {}]
  %s7 = inlined_call_operand.vmem [shape: f32[7,32], index: 7, kind: input, shape index: {}]
  %s8 = inlined_call_operand.vmem [shape: f32[7,1], index: 8, kind: input, shape index: {}]
  %s9 = inlined_call_operand.vmem [shape: f32[9,7], index: 9, kind: input, shape index: {}]
  %s10 = inlined_call_operand.vmem [shape: f32[2,4], index: 10, kind: input, shape index: {}]
  %s11 = inlined_call_operand.vmem [shape: f32[2,4], index: 11, kind: input, shape index: {}]
  %s12 = inlined_call_operand.vmem [shape: f32[1,7], index: 12, kind: input, shape index: {}]
  %s13 = inlined_call_operand.vmem [shape: f32[2,9], index: 13, kind: input, shape index: {}]
  %s14 = inlined_call_operand.vmem [shape: f32[2,9], index: 14, kind: input, shape index: {}]
  %s15 = inlined_call_operand.vmem [shape: f32[9,2], index: 15, kind: input, shape index: {}]
  %s16 = inlined_call_operand.vmem [shape: f32[9,2], index: 16, kind: input, shape index: {}]
  %s17 = inlined_call_operand.vmem [shape: f32[9,1], index: 17, kind: input, shape index: {}]
  %s18 = inlined_call_operand.vmem [shape: f32[9,1], index: 18, kind: input, shape index: {}]
  %s19 = inlined_call_operand.hbm [shape: f32[9,256], index: 19, kind: output, shape index: {0}]
  %s20 = inlined_call_operand.hbm [shape: f32[1,256], index: 20, kind: output, shape index: {1}]
  %21 = xla_tuple %s19, %s20
  %s22 = sld [smem:[#allocation0]]
  $region94: #{tpu_custom_call.1} parent=0
    _
  %s24 = ssub.s32 1, %s22
  %s25 = scalar_select 0, %s24, %s22
  $region1: #{tpu_custom_call.1} parent=0
    #allocation2 [shape = 'u8[16384]{0}', space=vmem, size = 0x4000, scoped, tag = 'output window, operand 0, single buffered']
    #allocation3 [shape = 's32[1]{0}', space=sflag, size = 0x4, scoped, tag = 'scoped memory for tpu_custom_call.1']
    #allocation4 [shape = 'u8[1024]{0}', space=vmem, size = 0x400, scoped, tag = 'output window, operand 1, single buffered']
    #allocation5 [shape = 's32[1]{0}', space=sflag, size = 0x4, scoped, tag = 'scoped memory for tpu_custom_call.1']
    %26 = vsyncpa [#allocation3], 0
    %27 = vsyncpa [#allocation5], 0
    // Predicated region
    $region2: #{tpu_custom_call.1} parent=1 // pred_check
      _
    $region3: #{tpu_custom_call.1} parent=1 // pred_check_branch
      %29 = sbr.rel (0) target = $region5
    $region4: #{tpu_custom_call.1} parent=1 // pred_region
      _
    $region5: #{tpu_custom_call.1} parent=1 // pred_fallthru
      _
    // Predicated region
    $region6: #{tpu_custom_call.1} parent=1 // pred_check
      _
    $region7: #{tpu_custom_call.1} parent=1 // pred_check_branch
      %31 = sbr.rel (0) target = $region9
    $region8: #{tpu_custom_call.1} parent=1 // pred_region
      _
    $region9: #{tpu_custom_call.1} parent=1 // pred_fallthru
      _
    // Predicated region
    $region10: #{tpu_custom_call.1} parent=1 // pred_check
      _
    $region11: #{tpu_custom_call.1} parent=1 // pred_check_branch
      %33 = sbr.rel (0) target = $region13
    $region12: #{tpu_custom_call.1} parent=1 // pred_region
      _
    $region13: #{tpu_custom_call.1} parent=1 // pred_fallthru
      _
    // Predicated region
    $region14: #{tpu_custom_call.1} parent=1 // pred_check
      _
    $region15: #{tpu_custom_call.1} parent=1 // pred_check_branch
      %35 = sbr.rel (0) target = $region17
    $region16: #{tpu_custom_call.1} parent=1 // pred_region
      _
    $region17: #{tpu_custom_call.1} parent=1 // pred_fallthru
      _
    // Predicated region
    $region18: #{tpu_custom_call.1} parent=1 // pred_check
      _
    $region19: #{tpu_custom_call.1} parent=1 // pred_check_branch
      %37 = sbr.rel (0) target = $region21
    $region20: #{tpu_custom_call.1} parent=1 // pred_region
      _
    $region21: #{tpu_custom_call.1} parent=1 // pred_fallthru
      _
    // Predicated region
    $region22: #{tpu_custom_call.1} parent=1 // pred_check
      _
    $region23: #{tpu_custom_call.1} parent=1 // pred_check_branch
      %39 = sbr.rel (0) target = $region25
    $region24: #{tpu_custom_call.1} parent=1 // pred_region
      _
    $region25: #{tpu_custom_call.1} parent=1 // pred_fallthru
      _
    // Predicated region
    $region26: #{tpu_custom_call.1} parent=1 // pred_check
      _
    $region27: #{tpu_custom_call.1} parent=1 // pred_check_branch
      %41 = sbr.rel (0) target = $region29
    $region28: #{tpu_custom_call.1} parent=1 // pred_region
      _
    $region29: #{tpu_custom_call.1} parent=1 // pred_fallthru
      _
    // Predicated region
    $region30: #{tpu_custom_call.1} parent=1 // pred_check
      _
    $region31: #{tpu_custom_call.1} parent=1 // pred_check_branch
      %43 = sbr.rel (0) target = $region33
    $region32: #{tpu_custom_call.1} parent=1 // pred_region
      _
    $region33: #{tpu_custom_call.1} parent=1 // pred_fallthru
      _
    // Predicated region
    $region34: #{tpu_custom_call.1} parent=1 // pred_check
      _
    $region35: #{tpu_custom_call.1} parent=1 // pred_check_branch
      %45 = sbr.rel (0) target = $region37
    $region36: #{tpu_custom_call.1} parent=1 // pred_region
      _
    $region37: #{tpu_custom_call.1} parent=1 // pred_fallthru
      _
    // Predicated region
    $region38: #{tpu_custom_call.1} parent=1 // pred_check
      _
    $region39: #{tpu_custom_call.1} parent=1 // pred_check_branch
      %47 = sbr.rel (0) target = $region41
    $region40: #{tpu_custom_call.1} parent=1 // pred_region
      _
    $region41: #{tpu_custom_call.1} parent=1 // pred_fallthru
      _
    // Predicated region
    $region42: #{tpu_custom_call.1} parent=1 // pred_check
      _
    $region43: #{tpu_custom_call.1} parent=1 // pred_check_branch
      %49 = sbr.rel (0) target = $region45
    $region44: #{tpu_custom_call.1} parent=1 // pred_region
      _
    $region45: #{tpu_custom_call.1} parent=1 // pred_fallthru
      _
    // Predicated region
    $region46: #{tpu_custom_call.1} parent=1 // pred_check
      _
    $region47: #{tpu_custom_call.1} parent=1 // pred_check_branch
      %51 = sbr.rel (0) target = $region49
    $region48: #{tpu_custom_call.1} parent=1 // pred_region
      _
    $region49: #{tpu_custom_call.1} parent=1 // pred_fallthru
      _
    // Predicated region
    $region50: #{tpu_custom_call.1} parent=1 // pred_check
      _
    $region51: #{tpu_custom_call.1} parent=1 // pred_check_branch
      %53 = sbr.rel (0) target = $region53
    $region52: #{tpu_custom_call.1} parent=1 // pred_region
      _
    $region53: #{tpu_custom_call.1} parent=1 // pred_fallthru
      _
    // Predicated region
    $region54: #{tpu_custom_call.1} parent=1 // pred_check
      _
    $region55: #{tpu_custom_call.1} parent=1 // pred_check_branch
      %55 = sbr.rel (0) target = $region57
    $region56: #{tpu_custom_call.1} parent=1 // pred_region
      _
    $region57: #{tpu_custom_call.1} parent=1 // pred_fallthru
      _
    // Predicated region
    $region58: #{tpu_custom_call.1} parent=1 // pred_check
      _
    $region59: #{tpu_custom_call.1} parent=1 // pred_check_branch
      %57 = sbr.rel (0) target = $region61
    $region60: #{tpu_custom_call.1} parent=1 // pred_region
      _
    $region61: #{tpu_custom_call.1} parent=1 // pred_fallthru
      _
    // Predicated region
    $region62: #{tpu_custom_call.1} parent=1 // pred_check
      _
    $region63: #{tpu_custom_call.1} parent=1 // pred_check_branch
      %59 = sbr.rel (0) target = $region65
    $region64: #{tpu_custom_call.1} parent=1 // pred_region
      _
    $region65: #{tpu_custom_call.1} parent=1 // pred_fallthru
      _
    // Predicated region
    $region66: #{tpu_custom_call.1} parent=1 // pred_check
      _
    $region67: #{tpu_custom_call.1} parent=1 // pred_check_branch
      %61 = sbr.rel (0) target = $region69
    $region68: #{tpu_custom_call.1} parent=1 // pred_region
      _
    $region69: #{tpu_custom_call.1} parent=1 // pred_fallthru
      _
    // Predicated region
    $region70: #{tpu_custom_call.1} parent=1 // pred_check
      _
    $region71: #{tpu_custom_call.1} parent=1 // pred_check_branch
      %63 = sbr.rel (0) target = $region73
    $region72: #{tpu_custom_call.1} parent=1 // pred_region
      _
    $region73: #{tpu_custom_call.1} parent=1 // pred_fallthru
      _
    // Predicated region
    $region74: #{tpu_custom_call.1} parent=1 // pred_check
      _
    $region75: #{tpu_custom_call.1} parent=1 // pred_check_branch
      %65 = sbr.rel (0) target = $region77
    $region76: #{tpu_custom_call.1} parent=1 // pred_region
      _
    $region77: #{tpu_custom_call.1} parent=1 // pred_fallthru
      _
    %v66 = vld [vmem:[%s0] sm:$0xff]
    %v67 = vld [vmem:[%s1] sm:$0xff]
    %v68 = vld [vmem:[%s1 + $0x8] sm:$0xff]
    %v69 = vld [vmem:[%s1 + $0x10] sm:$0xff]
    %v70 = vld [vmem:[%s1 + $0x18] sm:$0xff]
    %v71 = vld [vmem:[%s1 + $0x20] sm:$0xff]
    %v72 = vld [vmem:[%s1 + $0x28] sm:$0xff]
    %v73 = vld [vmem:[%s1 + $0x30] sm:$0xff]
    %v74 = vld [vmem:[%s1 + $0x38] sm:$0xff]
    %v75 = vld [vmem:[%s2] sm:$0xff]
    %v76 = vld [vmem:[%s2 + $0x8] sm:$0xff]
    %v77 = vld [vmem:[%s2 + $0x10] sm:$0xff]
    %v78 = vld [vmem:[%s2 + $0x18] sm:$0xff]
    %v79 = vld [vmem:[%s2 + $0x20] sm:$0xff]
    %v80 = vld [vmem:[%s2 + $0x28] sm:$0xff]
    %v81 = vld [vmem:[%s2 + $0x30] sm:$0xff]
    %v82 = vld [vmem:[%s2 + $0x38] sm:$0xff]
    %84 = vset.pattern.permute.xlu0 0
    %85 = vperm.xlu0 %84, %v75
    %v86 = vpop.permute.xlu0 %85
    %89 = vset.pattern.permute.xlu0 0
    %90 = vperm.xlu0 %89, %v76
    %v91 = vpop.permute.xlu0 %90
    %94 = vset.pattern.permute.xlu0 0
    %95 = vperm.xlu0 %94, %v77
    %v96 = vpop.permute.xlu0 %95
    %99 = vset.pattern.permute.xlu0 0
    %100 = vperm.xlu0 %99, %v78
    %v101 = vpop.permute.xlu0 %100
    %104 = vset.pattern.permute.xlu0 0
    %105 = vperm.xlu0 %104, %v79
    %v106 = vpop.permute.xlu0 %105
    %109 = vset.pattern.permute.xlu0 0
    %110 = vperm.xlu0 %109, %v80
    %v111 = vpop.permute.xlu0 %110
    %114 = vset.pattern.permute.xlu0 0
    %115 = vperm.xlu0 %114, %v81
    %v116 = vpop.permute.xlu0 %115
    %119 = vset.pattern.permute.xlu0 0
    %120 = vperm.xlu0 %119, %v82
    %v121 = vpop.permute.xlu0 %120
    %124 = vst [vmem:[#allocation1] ss:$2 sm:$0xff] %v66
    %v125 = vld.sshfl [vmem:[#allocation1] sm:$0xff pattern:$0x75316420]
    %v126 = vld.sshfl [vmem:[#allocation1 + $0x8] sm:$0xff pattern:$0x75316420]
    %vm127 = vcmask 31744
    %v129 = vsel %vm127, %v67, 0
    %v132 = vsel %vm127, %v68, 0
    %v135 = vsel %vm127, %v69, 0
    %v138 = vsel %vm127, %v70, 0
    %v141 = vsel %vm127, %v71, 0
    %v144 = vsel %vm127, %v72, 0
    %v147 = vsel %vm127, %v73, 0
    %v150 = vsel %vm127, %v74, 0
    %vm152 = vcmask 1043456
    %v153 = vsel %vm152, %v125, 0
    %v155 = vsel %vm152, %v126, 0
    %157 = vmatpush.msra.mxu0 0.0
    %158 = vmatpush.msra.mxu0 0.0
    %159 = vmatpush.msra.mxu0 0.0
    %160 = vmatpush.msra.mxu0 0.0
    %161 = vmatpush.msra.mxu0 0.0
    %162 = vmatpush.msra.mxu0 0.0
    %163 = vmatpush.msra.mxu0 0.0
    %164 = vmatpush.msra.mxu0 0.0
    %165 = vmatpush.msra.mxu0 0.0
    %166 = vmatpush.msra.mxu0 0.0
    %167 = vmatpush.msra.mxu0 0.0
    %168 = vmatpush.msra.mxu0 0.0
    %169 = vmatpush.msra.mxu0 0.0
    %170 = vmatpush.msra.mxu0 0.0
    %171 = vmatpush.msra.mxu0 0.0
    %172 = vmatpush.msra.mxu0 %v153
    %173 = vmatmul.f32.gmra.mxu0 %v129
    %v174 = vpop.f32.mrf.mxu0
    %v175 = vadd.f32 %v86, %v174
    %176 = vmatmul.f32.gmra.mxu0 %v132
    %v177 = vpop.f32.mrf.mxu0
    %v178 = vadd.f32 %v91, %v177
    %179 = vmatmul.f32.gmra.mxu0 %v135
    %v180 = vpop.f32.mrf.mxu0
    %v181 = vadd.f32 %v96, %v180
    %182 = vmatmul.f32.gmra.mxu0 %v138
    %v183 = vpop.f32.mrf.mxu0
    %v184 = vadd.f32 %v101, %v183
    %185 = vmatmul.f32.gmra.mxu0 %v141
    %v186 = vpop.f32.mrf.mxu0
    %v187 = vadd.f32 %v106, %v186
    %188 = vmatmul.f32.gmra.mxu0 %v144
    %v189 = vpop.f32.mrf.mxu0
    %v190 = vadd.f32 %v111, %v189
    %191 = vmatmul.f32.gmra.mxu0 %v147
    %v192 = vpop.f32.mrf.mxu0
    %v193 = vadd.f32 %v116, %v192
    %194 = vmatmul.f32.gmra.mxu0 %v150
    %v195 = vpop.f32.mrf.mxu0
    %v196 = vadd.f32 %v121, %v195
    %197 = vdwg.mxu0
    %198 = vmatpush.msra.mxu0 0.0
    %199 = vmatpush.msra.mxu0 0.0
    %200 = vmatpush.msra.mxu0 0.0
    %201 = vmatpush.msra.mxu0 0.0
    %202 = vmatpush.msra.mxu0 0.0
    %203 = vmatpush.msra.mxu0 0.0
    %204 = vmatpush.msra.mxu0 0.0
    %205 = vmatpush.msra.mxu0 0.0
    %206 = vmatpush.msra.mxu0 0.0
    %207 = vmatpush.msra.mxu0 0.0
    %208 = vmatpush.msra.mxu0 0.0
    %209 = vmatpush.msra.mxu0 0.0
    %210 = vmatpush.msra.mxu0 0.0
    %211 = vmatpush.msra.mxu0 0.0
    %212 = vmatpush.msra.mxu0 0.0
    %213 = vmatpush.msra.mxu0 %v155
    %214 = vmatmul.f32.gmra.mxu0 %v129
    %v215 = vpop.f32.mrf.mxu0
    %v216 = vadd.f32 %v86, %v215
    %217 = vmatmul.f32.gmra.mxu0 %v132
    %v218 = vpop.f32.mrf.mxu0
    %v219 = vadd.f32 %v91, %v218
    %220 = vmatmul.f32.gmra.mxu0 %v135
    %v221 = vpop.f32.mrf.mxu0
    %v222 = vadd.f32 %v96, %v221
    %223 = vmatmul.f32.gmra.mxu0 %v138
    %v224 = vpop.f32.mrf.mxu0
    %v225 = vadd.f32 %v101, %v224
    %226 = vmatmul.f32.gmra.mxu0 %v141
    %v227 = vpop.f32.mrf.mxu0
    %v228 = vadd.f32 %v106, %v227
    %229 = vmatmul.f32.gmra.mxu0 %v144
    %v230 = vpop.f32.mrf.mxu0
    %v231 = vadd.f32 %v111, %v230
    %232 = vmatmul.f32.gmra.mxu0 %v147
    %v233 = vpop.f32.mrf.mxu0
    %v234 = vadd.f32 %v116, %v233
    %235 = vmatmul.f32.gmra.mxu0 %v150
    %v236 = vpop.f32.mrf.mxu0
    %v237 = vadd.f32 %v121, %v236
    %238 = vdwg.mxu0
    %v239 = vmax.f32 %v175, 0.0
    %v240 = vmax.f32 %v216, 0.0
    %v241 = vmax.f32 %v178, 0.0
    %v242 = vmax.f32 %v219, 0.0
    %v243 = vmax.f32 %v181, 0.0
    %v244 = vmax.f32 %v222, 0.0
    %v245 = vmax.f32 %v184, 0.0
    %v246 = vmax.f32 %v225, 0.0
    %v247 = vmax.f32 %v187, 0.0
    %v248 = vmax.f32 %v228, 0.0
    %v249 = vmax.f32 %v190, 0.0
    %v250 = vmax.f32 %v231, 0.0
    %v251 = vmax.f32 %v193, 0.0
    %v252 = vmax.f32 %v234, 0.0
    %v253 = vmax.f32 %v196, 0.0
    %v254 = vmax.f32 %v237, 0.0
    %v255 = vld [vmem:[%s3] sm:$0xff]
    %v256 = vld [vmem:[%s3 + $0x8] sm:$0xff]
    %v257 = vld [vmem:[%s3 + $0x10] sm:$0xff]
    %v258 = vld [vmem:[%s3 + $0x18] sm:$0xff]
    %v259 = vld [vmem:[%s3 + $0x20] sm:$0xff]
    %v260 = vld [vmem:[%s3 + $0x28] sm:$0xff]
    %v261 = vld [vmem:[%s3 + $0x30] sm:$0xff]
    %v262 = vld [vmem:[%s3 + $0x38] sm:$0xff]
    %v263 = vld [vmem:[%s4] sm:$0xff]
    %v264 = vld [vmem:[%s4 + $0x8] sm:$0xff]
    %v265 = vld [vmem:[%s4 + $0x10] sm:$0xff]
    %v266 = vld [vmem:[%s4 + $0x18] sm:$0xff]
    %v267 = vld [vmem:[%s4 + $0x20] sm:$0xff]
    %v268 = vld [vmem:[%s4 + $0x28] sm:$0xff]
    %v269 = vld [vmem:[%s4 + $0x30] sm:$0xff]
    %v270 = vld [vmem:[%s4 + $0x38] sm:$0xff]
    %272 = vset.pattern.permute.xlu0 0
    %273 = vperm.xlu0 %272, %v263
    %v274 = vpop.permute.xlu0 %273
    %277 = vset.pattern.permute.xlu0 0
    %278 = vperm.xlu0 %277, %v264
    %v279 = vpop.permute.xlu0 %278
    %282 = vset.pattern.permute.xlu0 0
    %283 = vperm.xlu0 %282, %v265
    %v284 = vpop.permute.xlu0 %283
    %287 = vset.pattern.permute.xlu0 0
    %288 = vperm.xlu0 %287, %v266
    %v289 = vpop.permute.xlu0 %288
    %292 = vset.pattern.permute.xlu0 0
    %293 = vperm.xlu0 %292, %v267
    %v294 = vpop.permute.xlu0 %293
    %297 = vset.pattern.permute.xlu0 0
    %298 = vperm.xlu0 %297, %v268
    %v299 = vpop.permute.xlu0 %298
    %302 = vset.pattern.permute.xlu0 0
    %303 = vperm.xlu0 %302, %v269
    %v304 = vpop.permute.xlu0 %303
    %307 = vset.pattern.permute.xlu0 0
    %308 = vperm.xlu0 %307, %v270
    %v309 = vpop.permute.xlu0 %308
    %vm311 = vcmask 523264
    %v313 = vsel %vm311, %v255, 0
    %v316 = vsel %vm311, %v256, 0
    %v319 = vsel %vm311, %v257, 0
    %v322 = vsel %vm311, %v258, 0
    %v325 = vsel %vm311, %v259, 0
    %v328 = vsel %vm311, %v260, 0
    %v331 = vsel %vm311, %v261, 0
    %v334 = vsel %vm311, %v262, 0
    %336 = vmatpush.msra.mxu0 0.0
    %337 = vmatpush.msra.mxu0 0.0
    %338 = vmatpush.msra.mxu0 0.0
    %339 = vmatpush.msra.mxu0 0.0
    %340 = vmatpush.msra.mxu0 0.0
    %341 = vmatpush.msra.mxu0 0.0
    %342 = vmatpush.msra.mxu0 0.0
    %343 = vmatpush.msra.mxu0 0.0
    %344 = vmatpush.msra.mxu0 %v253
    %345 = vmatpush.msra.mxu0 %v251
    %346 = vmatpush.msra.mxu0 %v249
    %347 = vmatpush.msra.mxu0 %v247
    %348 = vmatpush.msra.mxu0 %v245
    %349 = vmatpush.msra.mxu0 %v243
    %350 = vmatpush.msra.mxu0 %v241
    %351 = vmatpush.msra.mxu0 %v239
    %352 = vmatmul.f32.gmra.mxu0 %v313
    %v353 = vpop.f32.mrf.mxu0
    %v354 = vadd.f32 %v274, %v353
    %355 = vmatmul.f32.gmra.mxu0 %v316
    %v356 = vpop.f32.mrf.mxu0
    %v357 = vadd.f32 %v279, %v356
    %358 = vmatmul.f32.gmra.mxu0 %v319
    %v359 = vpop.f32.mrf.mxu0
    %v360 = vadd.f32 %v284, %v359
    %361 = vmatmul.f32.gmra.mxu0 %v322
    %v362 = vpop.f32.mrf.mxu0
    %v363 = vadd.f32 %v289, %v362
    %364 = vmatmul.f32.gmra.mxu0 %v325
    %v365 = vpop.f32.mrf.mxu0
    %v366 = vadd.f32 %v294, %v365
    %367 = vmatmul.f32.gmra.mxu0 %v328
    %v368 = vpop.f32.mrf.mxu0
    %v369 = vadd.f32 %v299, %v368
    %370 = vmatmul.f32.gmra.mxu0 %v331
    %v371 = vpop.f32.mrf.mxu0
    %v372 = vadd.f32 %v304, %v371
    %373 = vmatmul.f32.gmra.mxu0 %v334
    %v374 = vpop.f32.mrf.mxu0
    %v375 = vadd.f32 %v309, %v374
    %376 = vdwg.mxu0
    %377 = vmatpush.msra.mxu0 0.0
    %378 = vmatpush.msra.mxu0 0.0
    %379 = vmatpush.msra.mxu0 0.0
    %380 = vmatpush.msra.mxu0 0.0
    %381 = vmatpush.msra.mxu0 0.0
    %382 = vmatpush.msra.mxu0 0.0
    %383 = vmatpush.msra.mxu0 0.0
    %384 = vmatpush.msra.mxu0 0.0
    %385 = vmatpush.msra.mxu0 %v254
    %386 = vmatpush.msra.mxu0 %v252
    %387 = vmatpush.msra.mxu0 %v250
    %388 = vmatpush.msra.mxu0 %v248
    %389 = vmatpush.msra.mxu0 %v246
    %390 = vmatpush.msra.mxu0 %v244
    %391 = vmatpush.msra.mxu0 %v242
    %392 = vmatpush.msra.mxu0 %v240
    %393 = vmatmul.f32.gmra.mxu0 %v313
    %v394 = vpop.f32.mrf.mxu0
    %v395 = vadd.f32 %v274, %v394
    %396 = vmatmul.f32.gmra.mxu0 %v316
    %v397 = vpop.f32.mrf.mxu0
    %v398 = vadd.f32 %v279, %v397
    %399 = vmatmul.f32.gmra.mxu0 %v319
    %v400 = vpop.f32.mrf.mxu0
    %v401 = vadd.f32 %v284, %v400
    %402 = vmatmul.f32.gmra.mxu0 %v322
    %v403 = vpop.f32.mrf.mxu0
    %v404 = vadd.f32 %v289, %v403
    %405 = vmatmul.f32.gmra.mxu0 %v325
    %v406 = vpop.f32.mrf.mxu0
    %v407 = vadd.f32 %v294, %v406
    %408 = vmatmul.f32.gmra.mxu0 %v328
    %v409 = vpop.f32.mrf.mxu0
    %v410 = vadd.f32 %v299, %v409
    %411 = vmatmul.f32.gmra.mxu0 %v331
    %v412 = vpop.f32.mrf.mxu0
    %v413 = vadd.f32 %v304, %v412
    %414 = vmatmul.f32.gmra.mxu0 %v334
    %v415 = vpop.f32.mrf.mxu0
    %v416 = vadd.f32 %v309, %v415
    %417 = vdwg.mxu0
    %v418 = vmax.f32 %v354, 0.0
    %v419 = vmax.f32 %v395, 0.0
    %v420 = vmax.f32 %v357, 0.0
    %v421 = vmax.f32 %v398, 0.0
    %v422 = vmax.f32 %v360, 0.0
    %v423 = vmax.f32 %v401, 0.0
    %v424 = vmax.f32 %v363, 0.0
    %v425 = vmax.f32 %v404, 0.0
    %v426 = vmax.f32 %v366, 0.0
    %v427 = vmax.f32 %v407, 0.0
    %v428 = vmax.f32 %v369, 0.0
    %v429 = vmax.f32 %v410, 0.0
    %v430 = vmax.f32 %v372, 0.0
    %v431 = vmax.f32 %v413, 0.0
    %v432 = vmax.f32 %v375, 0.0
    %v433 = vmax.f32 %v416, 0.0
    %v434 = vld [vmem:[%s5] sm:$0xff]
    %v435 = vld [vmem:[%s5 + $0x8] sm:$0xff]
    %v436 = vld [vmem:[%s5 + $0x10] sm:$0xff]
    %v437 = vld [vmem:[%s5 + $0x18] sm:$0xff]
    %v438 = vld [vmem:[%s6] sm:$0xff]
    %v439 = vld [vmem:[%s6 + $0x8] sm:$0xff]
    %v440 = vld [vmem:[%s6 + $0x10] sm:$0xff]
    %v441 = vld [vmem:[%s6 + $0x18] sm:$0xff]
    %443 = vset.pattern.permute.xlu0 0
    %444 = vperm.xlu0 %443, %v438
    %v445 = vpop.permute.xlu0 %444
    %448 = vset.pattern.permute.xlu0 0
    %449 = vperm.xlu0 %448, %v439
    %v450 = vpop.permute.xlu0 %449
    %453 = vset.pattern.permute.xlu0 0
    %454 = vperm.xlu0 %453, %v440
    %v455 = vpop.permute.xlu0 %454
    %458 = vset.pattern.permute.xlu0 0
    %459 = vperm.xlu0 %458, %v441
    %v460 = vpop.permute.xlu0 %459
    %v463 = vsel %vm311, %v434, 0
    %v466 = vsel %vm311, %v435, 0
    %v469 = vsel %vm311, %v436, 0
    %v472 = vsel %vm311, %v437, 0
    %474 = vmatpush.msra.mxu0 0.0
    %475 = vmatpush.msra.mxu0 0.0
    %476 = vmatpush.msra.mxu0 0.0
    %477 = vmatpush.msra.mxu0 0.0
    %478 = vmatpush.msra.mxu0 0.0
    %479 = vmatpush.msra.mxu0 0.0
    %480 = vmatpush.msra.mxu0 0.0
    %481 = vmatpush.msra.mxu0 0.0
    %482 = vmatpush.msra.mxu0 %v432
    %483 = vmatpush.msra.mxu0 %v430
    %484 = vmatpush.msra.mxu0 %v428
    %485 = vmatpush.msra.mxu0 %v426
    %486 = vmatpush.msra.mxu0 %v424
    %487 = vmatpush.msra.mxu0 %v422
    %488 = vmatpush.msra.mxu0 %v420
    %489 = vmatpush.msra.mxu0 %v418
    %490 = vmatmul.f32.gmra.mxu0 %v463
    %v491 = vpop.f32.mrf.mxu0
    %v492 = vadd.f32 %v445, %v491
    %493 = vmatmul.f32.gmra.mxu0 %v466
    %v494 = vpop.f32.mrf.mxu0
    %v495 = vadd.f32 %v450, %v494
    %496 = vmatmul.f32.gmra.mxu0 %v469
    %v497 = vpop.f32.mrf.mxu0
    %v498 = vadd.f32 %v455, %v497
    %499 = vmatmul.f32.gmra.mxu0 %v472
    %v500 = vpop.f32.mrf.mxu0
    %v501 = vadd.f32 %v460, %v500
    %502 = vdwg.mxu0
    %503 = vmatpush.msra.mxu0 0.0
    %504 = vmatpush.msra.mxu0 0.0
    %505 = vmatpush.msra.mxu0 0.0
    %506 = vmatpush.msra.mxu0 0.0
    %507 = vmatpush.msra.mxu0 0.0
    %508 = vmatpush.msra.mxu0 0.0
    %509 = vmatpush.msra.mxu0 0.0
    %510 = vmatpush.msra.mxu0 0.0
    %511 = vmatpush.msra.mxu0 %v433
    %512 = vmatpush.msra.mxu0 %v431
    %513 = vmatpush.msra.mxu0 %v429
    %514 = vmatpush.msra.mxu0 %v427
    %515 = vmatpush.msra.mxu0 %v425
    %516 = vmatpush.msra.mxu0 %v423
    %517 = vmatpush.msra.mxu0 %v421
    %518 = vmatpush.msra.mxu0 %v419
    %519 = vmatmul.f32.gmra.mxu0 %v463
    %v520 = vpop.f32.mrf.mxu0
    %v521 = vadd.f32 %v445, %v520
    %522 = vmatmul.f32.gmra.mxu0 %v466
    %v523 = vpop.f32.mrf.mxu0
    %v524 = vadd.f32 %v450, %v523
    %525 = vmatmul.f32.gmra.mxu0 %v469
    %v526 = vpop.f32.mrf.mxu0
    %v527 = vadd.f32 %v455, %v526
    %528 = vmatmul.f32.gmra.mxu0 %v472
    %v529 = vpop.f32.mrf.mxu0
    %v530 = vadd.f32 %v460, %v529
    %531 = vdwg.mxu0
    %v532 = vmax.f32 %v492, 0.0
    %v533 = vmax.f32 %v521, 0.0
    %v534 = vmax.f32 %v495, 0.0
    %v535 = vmax.f32 %v524, 0.0
    %v536 = vmax.f32 %v498, 0.0
    %v537 = vmax.f32 %v527, 0.0
    %v538 = vmax.f32 %v501, 0.0
    %v539 = vmax.f32 %v530, 0.0
    %v540 = vld [vmem:[%s7] sm:$0x7f]
    %v541 = vld [vmem:[%s8] sm:$0x7f]
    %543 = vset.pattern.permute.xlu0 0
    %544 = vperm.xlu0 %543, %v541
    %v545 = vpop.permute.xlu0 %544
    %vm547 = vcmask 261120
    %v549 = vsel %vm547, %v540, 0
    %551 = vmatpush.msra.mxu0 0.0
    %552 = vmatpush.msra.mxu0 0.0
    %553 = vmatpush.msra.mxu0 0.0
    %554 = vmatpush.msra.mxu0 0.0
    %555 = vmatpush.msra.mxu0 0.0
    %556 = vmatpush.msra.mxu0 0.0
    %557 = vmatpush.msra.mxu0 0.0
    %558 = vmatpush.msra.mxu0 0.0
    %559 = vmatpush.msra.mxu0 0.0
    %560 = vmatpush.msra.mxu0 0.0
    %561 = vmatpush.msra.mxu0 0.0
    %562 = vmatpush.msra.mxu0 0.0
    %563 = vmatpush.msra.mxu0 %v538
    %564 = vmatpush.msra.mxu0 %v536
    %565 = vmatpush.msra.mxu0 %v534
    %566 = vmatpush.msra.mxu0 %v532
    %567 = vmatmul.f32.gmra.mxu0 %v549
    %v568 = vpop.f32.mrf.mxu0
    %v569 = vadd.f32 %v545, %v568
    %570 = vdwg.mxu0
    %571 = vmatpush.msra.mxu0 0.0
    %572 = vmatpush.msra.mxu0 0.0
    %573 = vmatpush.msra.mxu0 0.0
    %574 = vmatpush.msra.mxu0 0.0
    %575 = vmatpush.msra.mxu0 0.0
    %576 = vmatpush.msra.mxu0 0.0
    %577 = vmatpush.msra.mxu0 0.0
    %578 = vmatpush.msra.mxu0 0.0
    %579 = vmatpush.msra.mxu0 0.0
    %580 = vmatpush.msra.mxu0 0.0
    %581 = vmatpush.msra.mxu0 0.0
    %582 = vmatpush.msra.mxu0 0.0
    %583 = vmatpush.msra.mxu0 %v539
    %584 = vmatpush.msra.mxu0 %v537
    %585 = vmatpush.msra.mxu0 %v535
    %586 = vmatpush.msra.mxu0 %v533
    %587 = vmatmul.f32.gmra.mxu0 %v549
    %v588 = vpop.f32.mrf.mxu0
    %v589 = vadd.f32 %v545, %v588
    %590 = vdwg.mxu0
    %v591 = vmul.f32 %v569, 1.442695
    %v592 = vpow.pop %v591
    %v593 = vmul.f32 %v589, 1.442695
    %v594 = vpow.pop %v593
    %v595 = vld [vmem:[%s9] sm:$0xff]
    %v596 = vld [vmem:[%s9 + $0x8] sm:$0x1]
    %vm597 = vcmask 56320
    %v599 = vsel %vm597, %v595, 0
    %v602 = vsel %vm597, %v596, 0
    %vm604 = vcmask 1046528
    %v606 = vsel %vm604, %v592, 0
    %v609 = vsel %vm604, %v594, 0
    %611 = vmatpush.msra.mxu0 0.0
    %612 = vmatpush.msra.mxu0 0.0
    %613 = vmatpush.msra.mxu0 0.0
    %614 = vmatpush.msra.mxu0 0.0
    %615 = vmatpush.msra.mxu0 0.0
    %616 = vmatpush.msra.mxu0 0.0
    %617 = vmatpush.msra.mxu0 0.0
    %618 = vmatpush.msra.mxu0 0.0
    %619 = vmatpush.msra.mxu0 0.0
    %620 = vmatpush.msra.mxu0 0.0
    %621 = vmatpush.msra.mxu0 0.0
    %622 = vmatpush.msra.mxu0 0.0
    %623 = vmatpush.msra.mxu0 0.0
    %624 = vmatpush.msra.mxu0 0.0
    %625 = vmatpush.msra.mxu0 0.0
    %626 = vmatpush.msra.mxu0 %v606
    %627 = vmatmul.f32.gmra.mxu0 %v599
    %v628 = vpop.f32.mrf.mxu0
    %v629 = vadd.f32 0.0, %v628
    %630 = vmatmul.f32.gmra.mxu0 %v602
    %v631 = vpop.f32.mrf.mxu0
    %v632 = vadd.f32 0.0, %v631
    %633 = vdwg.mxu0
    %634 = vmatpush.msra.mxu0 0.0
    %635 = vmatpush.msra.mxu0 0.0
    %636 = vmatpush.msra.mxu0 0.0
    %637 = vmatpush.msra.mxu0 0.0
    %638 = vmatpush.msra.mxu0 0.0
    %639 = vmatpush.msra.mxu0 0.0
    %640 = vmatpush.msra.mxu0 0.0
    %641 = vmatpush.msra.mxu0 0.0
    %642 = vmatpush.msra.mxu0 0.0
    %643 = vmatpush.msra.mxu0 0.0
    %644 = vmatpush.msra.mxu0 0.0
    %645 = vmatpush.msra.mxu0 0.0
    %646 = vmatpush.msra.mxu0 0.0
    %647 = vmatpush.msra.mxu0 0.0
    %648 = vmatpush.msra.mxu0 0.0
    %649 = vmatpush.msra.mxu0 %v609
    %650 = vmatmul.f32.gmra.mxu0 %v599
    %v651 = vpop.f32.mrf.mxu0
    %v652 = vadd.f32 0.0, %v651
    %653 = vmatmul.f32.gmra.mxu0 %v602
    %v654 = vpop.f32.mrf.mxu0
    %v655 = vadd.f32 0.0, %v654
    %656 = vdwg.mxu0
    %v657 = vld [vmem:[%s10] sm:$0x3]
    %658 = vst [vmem:[#allocation1] ss:$2 sm:$0xff] %v66
    %v659 = vld.sshfl [vmem:[#allocation1] sm:$0xff pattern:$0x75316420]
    %v660 = vld.sshfl [vmem:[#allocation1 + $0x8] sm:$0xff pattern:$0x75316420]
    %v662 = vsel %vm127, %v657, 0
    %v664 = vsel %vm152, %v659, 0
    %v666 = vsel %vm152, %v660, 0
    %668 = vmatpush.msra.mxu0 0.0
    %669 = vmatpush.msra.mxu0 0.0
    %670 = vmatpush.msra.mxu0 0.0
    %671 = vmatpush.msra.mxu0 0.0
    %672 = vmatpush.msra.mxu0 0.0
    %673 = vmatpush.msra.mxu0 0.0
    %674 = vmatpush.msra.mxu0 0.0
    %675 = vmatpush.msra.mxu0 0.0
    %676 = vmatpush.msra.mxu0 0.0
    %677 = vmatpush.msra.mxu0 0.0
    %678 = vmatpush.msra.mxu0 0.0
    %679 = vmatpush.msra.mxu0 0.0
    %680 = vmatpush.msra.mxu0 0.0
    %681 = vmatpush.msra.mxu0 0.0
    %682 = vmatpush.msra.mxu0 0.0
    %683 = vmatpush.msra.mxu0 %v664
    %684 = vmatmul.f32.gmra.mxu0 %v662
    %v685 = vpop.f32.mrf.mxu0
    %v686 = vadd.f32 0.0, %v685
    %687 = vdwg.mxu0
    %688 = vmatpush.msra.mxu0 0.0
    %689 = vmatpush.msra.mxu0 0.0
    %690 = vmatpush.msra.mxu0 0.0
    %691 = vmatpush.msra.mxu0 0.0
    %692 = vmatpush.msra.mxu0 0.0
    %693 = vmatpush.msra.mxu0 0.0
    %694 = vmatpush.msra.mxu0 0.0
    %695 = vmatpush.msra.mxu0 0.0
    %696 = vmatpush.msra.mxu0 0.0
    %697 = vmatpush.msra.mxu0 0.0
    %698 = vmatpush.msra.mxu0 0.0
    %699 = vmatpush.msra.mxu0 0.0
    %700 = vmatpush.msra.mxu0 0.0
    %701 = vmatpush.msra.mxu0 0.0
    %702 = vmatpush.msra.mxu0 0.0
    %703 = vmatpush.msra.mxu0 %v666
    %704 = vmatmul.f32.gmra.mxu0 %v662
    %v705 = vpop.f32.mrf.mxu0
    %v706 = vadd.f32 0.0, %v705
    %707 = vdwg.mxu0
    %v708 = vld [vmem:[%s11] sm:$0x3]
    %709 = vst [vmem:[#allocation1] ss:$2 sm:$0xff] %v66
    %v710 = vld.sshfl [vmem:[#allocation1] sm:$0xff pattern:$0x75316420]
    %v711 = vld.sshfl [vmem:[#allocation1 + $0x8] sm:$0xff pattern:$0x75316420]
    %v713 = vsel %vm127, %v708, 0
    %v715 = vsel %vm152, %v710, 0
    %v717 = vsel %vm152, %v711, 0
    %719 = vmatpush.msra.mxu0 0.0
    %720 = vmatpush.msra.mxu0 0.0
    %721 = vmatpush.msra.mxu0 0.0
    %722 = vmatpush.msra.mxu0 0.0
    %723 = vmatpush.msra.mxu0 0.0
    %724 = vmatpush.msra.mxu0 0.0
    %725 = vmatpush.msra.mxu0 0.0
    %726 = vmatpush.msra.mxu0 0.0
    %727 = vmatpush.msra.mxu0 0.0
    %728 = vmatpush.msra.mxu0 0.0
    %729 = vmatpush.msra.mxu0 0.0
    %730 = vmatpush.msra.mxu0 0.0
    %731 = vmatpush.msra.mxu0 0.0
    %732 = vmatpush.msra.mxu0 0.0
    %733 = vmatpush.msra.mxu0 0.0
    %734 = vmatpush.msra.mxu0 %v715
    %735 = vmatmul.f32.gmra.mxu0 %v713
    %v736 = vpop.f32.mrf.mxu0
    %v737 = vadd.f32 0.0, %v736
    %738 = vdwg.mxu0
    %739 = vmatpush.msra.mxu0 0.0
    %740 = vmatpush.msra.mxu0 0.0
    %741 = vmatpush.msra.mxu0 0.0
    %742 = vmatpush.msra.mxu0 0.0
    %743 = vmatpush.msra.mxu0 0.0
    %744 = vmatpush.msra.mxu0 0.0
    %745 = vmatpush.msra.mxu0 0.0
    %746 = vmatpush.msra.mxu0 0.0
    %747 = vmatpush.msra.mxu0 0.0
    %748 = vmatpush.msra.mxu0 0.0
    %749 = vmatpush.msra.mxu0 0.0
    %750 = vmatpush.msra.mxu0 0.0
    %751 = vmatpush.msra.mxu0 0.0
    %752 = vmatpush.msra.mxu0 0.0
    %753 = vmatpush.msra.mxu0 0.0
    %754 = vmatpush.msra.mxu0 %v717
    %755 = vmatmul.f32.gmra.mxu0 %v713
    %v756 = vpop.f32.mrf.mxu0
    %v757 = vadd.f32 0.0, %v756
    %758 = vdwg.mxu0
    %v759 = vld [vmem:[%s12] sm:$0x1]
    %v761 = vsel %vm597, %v759, 0
    %763 = vmatpush.msra.mxu0 0.0
    %764 = vmatpush.msra.mxu0 0.0
    %765 = vmatpush.msra.mxu0 0.0
    %766 = vmatpush.msra.mxu0 0.0
    %767 = vmatpush.msra.mxu0 0.0
    %768 = vmatpush.msra.mxu0 0.0
    %769 = vmatpush.msra.mxu0 0.0
    %770 = vmatpush.msra.mxu0 0.0
    %771 = vmatpush.msra.mxu0 0.0
    %772 = vmatpush.msra.mxu0 0.0
    %773 = vmatpush.msra.mxu0 0.0
    %774 = vmatpush.msra.mxu0 0.0
    %775 = vmatpush.msra.mxu0 0.0
    %776 = vmatpush.msra.mxu0 0.0
    %777 = vmatpush.msra.mxu0 0.0
    %778 = vmatpush.msra.mxu0 %v606
    %779 = vmatmul.f32.gmra.mxu0 %v761
    %v780 = vpop.f32.mrf.mxu0
    %v781 = vadd.f32 0.0, %v780
    %782 = vdwg.mxu0
    %783 = vmatpush.msra.mxu0 0.0
    %784 = vmatpush.msra.mxu0 0.0
    %785 = vmatpush.msra.mxu0 0.0
    %786 = vmatpush.msra.mxu0 0.0
    %787 = vmatpush.msra.mxu0 0.0
    %788 = vmatpush.msra.mxu0 0.0
    %789 = vmatpush.msra.mxu0 0.0
    %790 = vmatpush.msra.mxu0 0.0
    %791 = vmatpush.msra.mxu0 0.0
    %792 = vmatpush.msra.mxu0 0.0
    %793 = vmatpush.msra.mxu0 0.0
    %794 = vmatpush.msra.mxu0 0.0
    %795 = vmatpush.msra.mxu0 0.0
    %796 = vmatpush.msra.mxu0 0.0
    %797 = vmatpush.msra.mxu0 0.0
    %798 = vmatpush.msra.mxu0 %v609
    %799 = vmatmul.f32.gmra.mxu0 %v761
    %v800 = vpop.f32.mrf.mxu0
    %v801 = vadd.f32 0.0, %v800
    %802 = vdwg.mxu0
    %v803 = vld [vmem:[%s13] sm:$0x3]
    %v804 = vld [vmem:[%s14] sm:$0x3]
    %v805 = vld [vmem:[%s15] sm:$0xff]
    %v806 = vld [vmem:[%s15 + $0x8] sm:$0x1]
    %v807 = vld [vmem:[%s16] sm:$0xff]
    %v808 = vld [vmem:[%s16 + $0x8] sm:$0x1]
    %v809 = vld [vmem:[%s17] sm:$0xff]
    %v810 = vld [vmem:[%s17 + $0x8] sm:$0x1]
    %812 = vset.pattern.permute.xlu0 0
    %813 = vperm.xlu0 %812, %v809
    %v814 = vpop.permute.xlu0 %813
    %817 = vset.pattern.permute.xlu0 0
    %818 = vperm.xlu0 %817, %v810
    %v819 = vpop.permute.xlu0 %818
    %v821 = vld [vmem:[%s18] sm:$0xff]
    %v822 = vld [vmem:[%s18 + $0x8] sm:$0x1]
    %824 = vset.pattern.permute.xlu0 0
    %825 = vperm.xlu0 %824, %v821
    %v826 = vpop.permute.xlu0 %825
    %829 = vset.pattern.permute.xlu0 0
    %830 = vperm.xlu0 %829, %v822
    %v831 = vpop.permute.xlu0 %830
    %vm833 = vcmask 72704
    %v835 = vsel %vm833, %v803, 0
    %vm837 = vcmask 1040384
    %v839 = vsel %vm837, %v632, 0
    %841 = vmatpush.msra.mxu0 0.0
    %842 = vmatpush.msra.mxu0 0.0
    %843 = vmatpush.msra.mxu0 0.0
    %844 = vmatpush.msra.mxu0 0.0
    %845 = vmatpush.msra.mxu0 0.0
    %846 = vmatpush.msra.mxu0 0.0
    %847 = vmatpush.msra.mxu0 0.0
    %848 = vmatpush.msra.mxu0 0.0
    %849 = vmatpush.msra.mxu0 0.0
    %850 = vmatpush.msra.mxu0 0.0
    %851 = vmatpush.msra.mxu0 0.0
    %852 = vmatpush.msra.mxu0 0.0
    %853 = vmatpush.msra.mxu0 0.0
    %854 = vmatpush.msra.mxu0 0.0
    %855 = vmatpush.msra.mxu0 %v839
    %856 = vmatpush.msra.mxu0 %v629
    %857 = vmatmul.f32.gmra.mxu0 %v835
    %v858 = vpop.f32.mrf.mxu0
    %v859 = vadd.f32 1e-08, %v858
    %860 = vdwg.mxu0
    %v861 = vrcp.pop %v859
    %v862 = vmul.f32 %v859, %v861
    %v863 = vsub.f32 2.0, %v862
    %v864 = vmul.f32 %v861, %v863
    %v865 = vmul.f32 %v686, %v864
    %vm866 = vcmask 15360
    %v868 = vsel %vm866, %v805, 0
    %v871 = vsel %vm866, %v806, 0
    %vm873 = vcmask 1041408
    %v875 = vsel %vm873, %v865, 0
    %877 = vmatpush.msra.mxu0 0.0
    %878 = vmatpush.msra.mxu0 0.0
    %879 = vmatpush.msra.mxu0 0.0
    %880 = vmatpush.msra.mxu0 0.0
    %881 = vmatpush.msra.mxu0 0.0
    %882 = vmatpush.msra.mxu0 0.0
    %883 = vmatpush.msra.mxu0 0.0
    %884 = vmatpush.msra.mxu0 0.0
    %885 = vmatpush.msra.mxu0 0.0
    %886 = vmatpush.msra.mxu0 0.0
    %887 = vmatpush.msra.mxu0 0.0
    %888 = vmatpush.msra.mxu0 0.0
    %889 = vmatpush.msra.mxu0 0.0
    %890 = vmatpush.msra.mxu0 0.0
    %891 = vmatpush.msra.mxu0 0.0
    %892 = vmatpush.msra.mxu0 %v875
    %893 = vmatmul.f32.gmra.mxu0 %v868
    %v894 = vpop.f32.mrf.mxu0
    %v895 = vadd.f32 %v814, %v894
    %896 = vmatmul.f32.gmra.mxu0 %v871
    %v897 = vpop.f32.mrf.mxu0
    %v898 = vadd.f32 %v819, %v897
    %899 = vdwg.mxu0
    %v900 = vmul.f32 %v629, %v895
    %v901 = vmul.f32 %v632, %v898
    %v903 = vsel %vm833, %v804, 0
    %v906 = vsel %vm837, %v901, 0
    %908 = vmatpush.msra.mxu0 0.0
    %909 = vmatpush.msra.mxu0 0.0
    %910 = vmatpush.msra.mxu0 0.0
    %911 = vmatpush.msra.mxu0 0.0
    %912 = vmatpush.msra.mxu0 0.0
    %913 = vmatpush.msra.mxu0 0.0
    %914 = vmatpush.msra.mxu0 0.0
    %915 = vmatpush.msra.mxu0 0.0
    %916 = vmatpush.msra.mxu0 0.0
    %917 = vmatpush.msra.mxu0 0.0
    %918 = vmatpush.msra.mxu0 0.0
    %919 = vmatpush.msra.mxu0 0.0
    %920 = vmatpush.msra.mxu0 0.0
    %921 = vmatpush.msra.mxu0 0.0
    %922 = vmatpush.msra.mxu0 %v906
    %923 = vmatpush.msra.mxu0 %v900
    %924 = vmatmul.f32.gmra.mxu0 %v903
    %v925 = vpop.f32.mrf.mxu0
    %v926 = vadd.f32 1e-08, %v925
    %927 = vdwg.mxu0
    %v928 = vrcp.pop %v926
    %v929 = vmul.f32 %v926, %v928
    %v930 = vsub.f32 2.0, %v929
    %v931 = vmul.f32 %v928, %v930
    %v932 = vmul.f32 %v737, %v931
    %v934 = vsel %vm866, %v807, 0
    %v937 = vsel %vm866, %v808, 0
    %v940 = vsel %vm873, %v932, 0
    %942 = vmatpush.msra.mxu0 0.0
    %943 = vmatpush.msra.mxu0 0.0
    %944 = vmatpush.msra.mxu0 0.0
    %945 = vmatpush.msra.mxu0 0.0
    %946 = vmatpush.msra.mxu0 0.0
    %947 = vmatpush.msra.mxu0 0.0
    %948 = vmatpush.msra.mxu0 0.0
    %949 = vmatpush.msra.mxu0 0.0
    %950 = vmatpush.msra.mxu0 0.0
    %951 = vmatpush.msra.mxu0 0.0
    %952 = vmatpush.msra.mxu0 0.0
    %953 = vmatpush.msra.mxu0 0.0
    %954 = vmatpush.msra.mxu0 0.0
    %955 = vmatpush.msra.mxu0 0.0
    %956 = vmatpush.msra.mxu0 0.0
    %957 = vmatpush.msra.mxu0 %v940
    %958 = vmatmul.f32.gmra.mxu0 %v934
    %v959 = vpop.f32.mrf.mxu0
    %v960 = vadd.f32 %v826, %v959
    %961 = vmatmul.f32.gmra.mxu0 %v937
    %v962 = vpop.f32.mrf.mxu0
    %v963 = vadd.f32 %v831, %v962
    %964 = vdwg.mxu0
    %v965 = vmul.f32 %v900, %v960
    %v966 = vmul.f32 %v901, %v963
    %v968 = vsel %vm837, %v655, 0
    %970 = vmatpush.msra.mxu0 0.0
    %971 = vmatpush.msra.mxu0 0.0
    %972 = vmatpush.msra.mxu0 0.0
    %973 = vmatpush.msra.mxu0 0.0
    %974 = vmatpush.msra.mxu0 0.0
    %975 = vmatpush.msra.mxu0 0.0
    %976 = vmatpush.msra.mxu0 0.0
    %977 = vmatpush.msra.mxu0 0.0
    %978 = vmatpush.msra.mxu0 0.0
    %979 = vmatpush.msra.mxu0 0.0
    %980 = vmatpush.msra.mxu0 0.0
    %981 = vmatpush.msra.mxu0 0.0
    %982 = vmatpush.msra.mxu0 0.0
    %983 = vmatpush.msra.mxu0 0.0
    %984 = vmatpush.msra.mxu0 %v968
    %985 = vmatpush.msra.mxu0 %v652
    %986 = vmatmul.f32.gmra.mxu0 %v835
    %v987 = vpop.f32.mrf.mxu0
    %v988 = vadd.f32 1e-08, %v987
    %989 = vdwg.mxu0
    %v990 = vrcp.pop %v988
    %v991 = vmul.f32 %v988, %v990
    %v992 = vsub.f32 2.0, %v991
    %v993 = vmul.f32 %v990, %v992
    %v994 = vmul.f32 %v706, %v993
    %v996 = vsel %vm873, %v994, 0
    %998 = vmatpush.msra.mxu0 0.0
    %999 = vmatpush.msra.mxu0 0.0
    %1000 = vmatpush.msra.mxu0 0.0
    %1001 = vmatpush.msra.mxu0 0.0
    %1002 = vmatpush.msra.mxu0 0.0
    %1003 = vmatpush.msra.mxu0 0.0
    %1004 = vmatpush.msra.mxu0 0.0
    %1005 = vmatpush.msra.mxu0 0.0
    %1006 = vmatpush.msra.mxu0 0.0
    %1007 = vmatpush.msra.mxu0 0.0
    %1008 = vmatpush.msra.mxu0 0.0
    %1009 = vmatpush.msra.mxu0 0.0
    %1010 = vmatpush.msra.mxu0 0.0
    %1011 = vmatpush.msra.mxu0 0.0
    %1012 = vmatpush.msra.mxu0 0.0
    %1013 = vmatpush.msra.mxu0 %v996
    %1014 = vmatmul.f32.gmra.mxu0 %v868
    %v1015 = vpop.f32.mrf.mxu0
    %v1016 = vadd.f32 %v814, %v1015
    %1017 = vmatmul.f32.gmra.mxu0 %v871
    %v1018 = vpop.f32.mrf.mxu0
    %v1019 = vadd.f32 %v819, %v1018
    %1020 = vdwg.mxu0
    %v1021 = vmul.f32 %v652, %v1016
    %v1022 = vmul.f32 %v655, %v1019
    %v1024 = vsel %vm837, %v1022, 0
    %1026 = vmatpush.msra.mxu0 0.0
    %1027 = vmatpush.msra.mxu0 0.0
    %1028 = vmatpush.msra.mxu0 0.0
    %1029 = vmatpush.msra.mxu0 0.0
    %1030 = vmatpush.msra.mxu0 0.0
    %1031 = vmatpush.msra.mxu0 0.0
    %1032 = vmatpush.msra.mxu0 0.0
    %1033 = vmatpush.msra.mxu0 0.0
    %1034 = vmatpush.msra.mxu0 0.0
    %1035 = vmatpush.msra.mxu0 0.0
    %1036 = vmatpush.msra.mxu0 0.0
    %1037 = vmatpush.msra.mxu0 0.0
    %1038 = vmatpush.msra.mxu0 0.0
    %1039 = vmatpush.msra.mxu0 0.0
    %1040 = vmatpush.msra.mxu0 %v1024
    %1041 = vmatpush.msra.mxu0 %v1021
    %1042 = vmatmul.f32.gmra.mxu0 %v903
    %v1043 = vpop.f32.mrf.mxu0
    %v1044 = vadd.f32 1e-08, %v1043
    %1045 = vdwg.mxu0
    %v1046 = vrcp.pop %v1044
    %v1047 = vmul.f32 %v1044, %v1046
    %v1048 = vsub.f32 2.0, %v1047
    %v1049 = vmul.f32 %v1046, %v1048
    %v1050 = vmul.f32 %v757, %v1049
    %v1052 = vsel %vm873, %v1050, 0
    %1054 = vmatpush.msra.mxu0 0.0
    %1055 = vmatpush.msra.mxu0 0.0
    %1056 = vmatpush.msra.mxu0 0.0
    %1057 = vmatpush.msra.mxu0 0.0
    %1058 = vmatpush.msra.mxu0 0.0
    %1059 = vmatpush.msra.mxu0 0.0
    %1060 = vmatpush.msra.mxu0 0.0
    %1061 = vmatpush.msra.mxu0 0.0
    %1062 = vmatpush.msra.mxu0 0.0
    %1063 = vmatpush.msra.mxu0 0.0
    %1064 = vmatpush.msra.mxu0 0.0
    %1065 = vmatpush.msra.mxu0 0.0
    %1066 = vmatpush.msra.mxu0 0.0
    %1067 = vmatpush.msra.mxu0 0.0
    %1068 = vmatpush.msra.mxu0 0.0
    %1069 = vmatpush.msra.mxu0 %v1052
    %1070 = vmatmul.f32.gmra.mxu0 %v934
    %v1071 = vpop.f32.mrf.mxu0
    %v1072 = vadd.f32 %v826, %v1071
    %1073 = vmatmul.f32.gmra.mxu0 %v937
    %v1074 = vpop.f32.mrf.mxu0
    %v1075 = vadd.f32 %v831, %v1074
    %1076 = vdwg.mxu0
    %v1077 = vmul.f32 %v1021, %v1072
    %v1078 = vmul.f32 %v1022, %v1075
    %v1080 = vsel %vm837, %v966, 0
    %1082 = vmatpush.msra.mxu0 0.0
    %1083 = vmatpush.msra.mxu0 0.0
    %1084 = vmatpush.msra.mxu0 0.0
    %1085 = vmatpush.msra.mxu0 0.0
    %1086 = vmatpush.msra.mxu0 0.0
    %1087 = vmatpush.msra.mxu0 0.0
    %1088 = vmatpush.msra.mxu0 0.0
    %1089 = vmatpush.msra.mxu0 0.0
    %1090 = vmatpush.msra.mxu0 0.0
    %1091 = vmatpush.msra.mxu0 0.0
    %1092 = vmatpush.msra.mxu0 0.0
    %1093 = vmatpush.msra.mxu0 0.0
    %1094 = vmatpush.msra.mxu0 0.0
    %1095 = vmatpush.msra.mxu0 0.0
    %1096 = vmatpush.msra.mxu0 %v1080
    %1097 = vmatpush.msra.mxu0 %v965
    %1098 = vmatmul.f32.gmra.mxu0 %v835
    %v1099 = vpop.f32.mrf.mxu0
    %v1100 = vadd.f32 1e-08, %v1099
    %1101 = vdwg.mxu0
    %v1102 = vrcp.pop %v1100
    %v1103 = vmul.f32 %v1100, %v1102
    %v1104 = vsub.f32 2.0, %v1103
    %v1105 = vmul.f32 %v1102, %v1104
    %v1106 = vmul.f32 %v686, %v1105
    %v1108 = vsel %vm873, %v1106, 0
    %1110 = vmatpush.msra.mxu0 0.0
    %1111 = vmatpush.msra.mxu0 0.0
    %1112 = vmatpush.msra.mxu0 0.0
    %1113 = vmatpush.msra.mxu0 0.0
    %1114 = vmatpush.msra.mxu0 0.0
    %1115 = vmatpush.msra.mxu0 0.0
    %1116 = vmatpush.msra.mxu0 0.0
    %1117 = vmatpush.msra.mxu0 0.0
    %1118 = vmatpush.msra.mxu0 0.0
    %1119 = vmatpush.msra.mxu0 0.0
    %1120 = vmatpush.msra.mxu0 0.0
    %1121 = vmatpush.msra.mxu0 0.0
    %1122 = vmatpush.msra.mxu0 0.0
    %1123 = vmatpush.msra.mxu0 0.0
    %1124 = vmatpush.msra.mxu0 0.0
    %1125 = vmatpush.msra.mxu0 %v1108
    %1126 = vmatmul.f32.gmra.mxu0 %v868
    %v1127 = vpop.f32.mrf.mxu0
    %v1128 = vadd.f32 %v814, %v1127
    %1129 = vmatmul.f32.gmra.mxu0 %v871
    %v1130 = vpop.f32.mrf.mxu0
    %v1131 = vadd.f32 %v819, %v1130
    %1132 = vdwg.mxu0
    %v1133 = vmul.f32 %v965, %v1128
    %v1134 = vmul.f32 %v966, %v1131
    %v1136 = vsel %vm837, %v1134, 0
    %1138 = vmatpush.msra.mxu0 0.0
    %1139 = vmatpush.msra.mxu0 0.0
    %1140 = vmatpush.msra.mxu0 0.0
    %1141 = vmatpush.msra.mxu0 0.0
    %1142 = vmatpush.msra.mxu0 0.0
    %1143 = vmatpush.msra.mxu0 0.0
    %1144 = vmatpush.msra.mxu0 0.0
    %1145 = vmatpush.msra.mxu0 0.0
    %1146 = vmatpush.msra.mxu0 0.0
    %1147 = vmatpush.msra.mxu0 0.0
    %1148 = vmatpush.msra.mxu0 0.0
    %1149 = vmatpush.msra.mxu0 0.0
    %1150 = vmatpush.msra.mxu0 0.0
    %1151 = vmatpush.msra.mxu0 0.0
    %1152 = vmatpush.msra.mxu0 %v1136
    %1153 = vmatpush.msra.mxu0 %v1133
    %1154 = vmatmul.f32.gmra.mxu0 %v903
    %v1155 = vpop.f32.mrf.mxu0
    %v1156 = vadd.f32 1e-08, %v1155
    %1157 = vdwg.mxu0
    %v1158 = vrcp.pop %v1156
    %v1159 = vmul.f32 %v1156, %v1158
    %v1160 = vsub.f32 2.0, %v1159
    %v1161 = vmul.f32 %v1158, %v1160
    %v1162 = vmul.f32 %v737, %v1161
    %v1164 = vsel %vm873, %v1162, 0
    %1166 = vmatpush.msra.mxu0 0.0
    %1167 = vmatpush.msra.mxu0 0.0
    %1168 = vmatpush.msra.mxu0 0.0
    %1169 = vmatpush.msra.mxu0 0.0
    %1170 = vmatpush.msra.mxu0 0.0
    %1171 = vmatpush.msra.mxu0 0.0
    %1172 = vmatpush.msra.mxu0 0.0
    %1173 = vmatpush.msra.mxu0 0.0
    %1174 = vmatpush.msra.mxu0 0.0
    %1175 = vmatpush.msra.mxu0 0.0
    %1176 = vmatpush.msra.mxu0 0.0
    %1177 = vmatpush.msra.mxu0 0.0
    %1178 = vmatpush.msra.mxu0 0.0
    %1179 = vmatpush.msra.mxu0 0.0
    %1180 = vmatpush.msra.mxu0 0.0
    %1181 = vmatpush.msra.mxu0 %v1164
    %1182 = vmatmul.f32.gmra.mxu0 %v934
    %v1183 = vpop.f32.mrf.mxu0
    %v1184 = vadd.f32 %v826, %v1183
    %1185 = vmatmul.f32.gmra.mxu0 %v937
    %v1186 = vpop.f32.mrf.mxu0
    %v1187 = vadd.f32 %v831, %v1186
    %1188 = vdwg.mxu0
    %v1189 = vmul.f32 %v1133, %v1184
    %v1190 = vmul.f32 %v1134, %v1187
    %v1192 = vsel %vm837, %v1078, 0
    %1194 = vmatpush.msra.mxu0 0.0
    %1195 = vmatpush.msra.mxu0 0.0
    %1196 = vmatpush.msra.mxu0 0.0
    %1197 = vmatpush.msra.mxu0 0.0
    %1198 = vmatpush.msra.mxu0 0.0
    %1199 = vmatpush.msra.mxu0 0.0
    %1200 = vmatpush.msra.mxu0 0.0
    %1201 = vmatpush.msra.mxu0 0.0
    %1202 = vmatpush.msra.mxu0 0.0
    %1203 = vmatpush.msra.mxu0 0.0
    %1204 = vmatpush.msra.mxu0 0.0
    %1205 = vmatpush.msra.mxu0 0.0
    %1206 = vmatpush.msra.mxu0 0.0
    %1207 = vmatpush.msra.mxu0 0.0
    %1208 = vmatpush.msra.mxu0 %v1192
    %1209 = vmatpush.msra.mxu0 %v1077
    %1210 = vmatmul.f32.gmra.mxu0 %v835
    %v1211 = vpop.f32.mrf.mxu0
    %v1212 = vadd.f32 1e-08, %v1211
    %1213 = vdwg.mxu0
    %v1214 = vrcp.pop %v1212
    %v1215 = vmul.f32 %v1212, %v1214
    %v1216 = vsub.f32 2.0, %v1215
    %v1217 = vmul.f32 %v1214, %v1216
    %v1218 = vmul.f32 %v706, %v1217
    %v1220 = vsel %vm873, %v1218, 0
    %1222 = vmatpush.msra.mxu0 0.0
    %1223 = vmatpush.msra.mxu0 0.0
    %1224 = vmatpush.msra.mxu0 0.0
    %1225 = vmatpush.msra.mxu0 0.0
    %1226 = vmatpush.msra.mxu0 0.0
    %1227 = vmatpush.msra.mxu0 0.0
    %1228 = vmatpush.msra.mxu0 0.0
    %1229 = vmatpush.msra.mxu0 0.0
    %1230 = vmatpush.msra.mxu0 0.0
    %1231 = vmatpush.msra.mxu0 0.0
    %1232 = vmatpush.msra.mxu0 0.0
    %1233 = vmatpush.msra.mxu0 0.0
    %1234 = vmatpush.msra.mxu0 0.0
    %1235 = vmatpush.msra.mxu0 0.0
    %1236 = vmatpush.msra.mxu0 0.0
    %1237 = vmatpush.msra.mxu0 %v1220
    %1238 = vmatmul.f32.gmra.mxu0 %v868
    %v1239 = vpop.f32.mrf.mxu0
    %v1240 = vadd.f32 %v814, %v1239
    %1241 = vmatmul.f32.gmra.mxu0 %v871
    %v1242 = vpop.f32.mrf.mxu0
    %v1243 = vadd.f32 %v819, %v1242
    %1244 = vdwg.mxu0
    %v1245 = vmul.f32 %v1077, %v1240
    %v1246 = vmul.f32 %v1078, %v1243
    %v1248 = vsel %vm837, %v1246, 0
    %1250 = vmatpush.msra.mxu0 0.0
    %1251 = vmatpush.msra.mxu0 0.0
    %1252 = vmatpush.msra.mxu0 0.0
    %1253 = vmatpush.msra.mxu0 0.0
    %1254 = vmatpush.msra.mxu0 0.0
    %1255 = vmatpush.msra.mxu0 0.0
    %1256 = vmatpush.msra.mxu0 0.0
    %1257 = vmatpush.msra.mxu0 0.0
    %1258 = vmatpush.msra.mxu0 0.0
    %1259 = vmatpush.msra.mxu0 0.0
    %1260 = vmatpush.msra.mxu0 0.0
    %1261 = vmatpush.msra.mxu0 0.0
    %1262 = vmatpush.msra.mxu0 0.0
    %1263 = vmatpush.msra.mxu0 0.0
    %1264 = vmatpush.msra.mxu0 %v1248
    %1265 = vmatpush.msra.mxu0 %v1245
    %1266 = vmatmul.f32.gmra.mxu0 %v903
    %v1267 = vpop.f32.mrf.mxu0
    %v1268 = vadd.f32 1e-08, %v1267
    %1269 = vdwg.mxu0
    %v1270 = vrcp.pop %v1268
    %v1271 = vmul.f32 %v1268, %v1270
    %v1272 = vsub.f32 2.0, %v1271
    %v1273 = vmul.f32 %v1270, %v1272
    %v1274 = vmul.f32 %v757, %v1273
    %v1276 = vsel %vm873, %v1274, 0
    %1278 = vmatpush.msra.mxu0 0.0
    %1279 = vmatpush.msra.mxu0 0.0
    %1280 = vmatpush.msra.mxu0 0.0
    %1281 = vmatpush.msra.mxu0 0.0
    %1282 = vmatpush.msra.mxu0 0.0
    %1283 = vmatpush.msra.mxu0 0.0
    %1284 = vmatpush.msra.mxu0 0.0
    %1285 = vmatpush.msra.mxu0 0.0
    %1286 = vmatpush.msra.mxu0 0.0
    %1287 = vmatpush.msra.mxu0 0.0
    %1288 = vmatpush.msra.mxu0 0.0
    %1289 = vmatpush.msra.mxu0 0.0
    %1290 = vmatpush.msra.mxu0 0.0
    %1291 = vmatpush.msra.mxu0 0.0
    %1292 = vmatpush.msra.mxu0 0.0
    %1293 = vmatpush.msra.mxu0 %v1276
    %1294 = vmatmul.f32.gmra.mxu0 %v934
    %v1295 = vpop.f32.mrf.mxu0
    %v1296 = vadd.f32 %v826, %v1295
    %1297 = vmatmul.f32.gmra.mxu0 %v937
    %v1298 = vpop.f32.mrf.mxu0
    %v1299 = vadd.f32 %v831, %v1298
    %1300 = vdwg.mxu0
    %v1301 = vmul.f32 %v1245, %v1296
    %v1302 = vmul.f32 %v1246, %v1299
    %v1304 = vsel %vm837, %v1190, 0
    %1306 = vmatpush.msra.mxu0 0.0
    %1307 = vmatpush.msra.mxu0 0.0
    %1308 = vmatpush.msra.mxu0 0.0
    %1309 = vmatpush.msra.mxu0 0.0
    %1310 = vmatpush.msra.mxu0 0.0
    %1311 = vmatpush.msra.mxu0 0.0
    %1312 = vmatpush.msra.mxu0 0.0
    %1313 = vmatpush.msra.mxu0 0.0
    %1314 = vmatpush.msra.mxu0 0.0
    %1315 = vmatpush.msra.mxu0 0.0
    %1316 = vmatpush.msra.mxu0 0.0
    %1317 = vmatpush.msra.mxu0 0.0
    %1318 = vmatpush.msra.mxu0 0.0
    %1319 = vmatpush.msra.mxu0 0.0
    %1320 = vmatpush.msra.mxu0 %v1304
    %1321 = vmatpush.msra.mxu0 %v1189
    %1322 = vmatmul.f32.gmra.mxu0 %v835
    %v1323 = vpop.f32.mrf.mxu0
    %v1324 = vadd.f32 1e-08, %v1323
    %1325 = vdwg.mxu0
    %v1326 = vrcp.pop %v1324
    %v1327 = vmul.f32 %v1324, %v1326
    %v1328 = vsub.f32 2.0, %v1327
    %v1329 = vmul.f32 %v1326, %v1328
    %v1330 = vmul.f32 %v686, %v1329
    %v1332 = vsel %vm873, %v1330, 0
    %1334 = vmatpush.msra.mxu0 0.0
    %1335 = vmatpush.msra.mxu0 0.0
    %1336 = vmatpush.msra.mxu0 0.0
    %1337 = vmatpush.msra.mxu0 0.0
    %1338 = vmatpush.msra.mxu0 0.0
    %1339 = vmatpush.msra.mxu0 0.0
    %1340 = vmatpush.msra.mxu0 0.0
    %1341 = vmatpush.msra.mxu0 0.0
    %1342 = vmatpush.msra.mxu0 0.0
    %1343 = vmatpush.msra.mxu0 0.0
    %1344 = vmatpush.msra.mxu0 0.0
    %1345 = vmatpush.msra.mxu0 0.0
    %1346 = vmatpush.msra.mxu0 0.0
    %1347 = vmatpush.msra.mxu0 0.0
    %1348 = vmatpush.msra.mxu0 0.0
    %1349 = vmatpush.msra.mxu0 %v1332
    %1350 = vmatmul.f32.gmra.mxu0 %v868
    %v1351 = vpop.f32.mrf.mxu0
    %v1352 = vadd.f32 %v814, %v1351
    %1353 = vmatmul.f32.gmra.mxu0 %v871
    %v1354 = vpop.f32.mrf.mxu0
    %v1355 = vadd.f32 %v819, %v1354
    %1356 = vdwg.mxu0
    %v1357 = vmul.f32 %v1189, %v1352
    %v1358 = vmul.f32 %v1190, %v1355
    %v1360 = vsel %vm837, %v1358, 0
    %1362 = vmatpush.msra.mxu0 0.0
    %1363 = vmatpush.msra.mxu0 0.0
    %1364 = vmatpush.msra.mxu0 0.0
    %1365 = vmatpush.msra.mxu0 0.0
    %1366 = vmatpush.msra.mxu0 0.0
    %1367 = vmatpush.msra.mxu0 0.0
    %1368 = vmatpush.msra.mxu0 0.0
    %1369 = vmatpush.msra.mxu0 0.0
    %1370 = vmatpush.msra.mxu0 0.0
    %1371 = vmatpush.msra.mxu0 0.0
    %1372 = vmatpush.msra.mxu0 0.0
    %1373 = vmatpush.msra.mxu0 0.0
    %1374 = vmatpush.msra.mxu0 0.0
    %1375 = vmatpush.msra.mxu0 0.0
    %1376 = vmatpush.msra.mxu0 %v1360
    %1377 = vmatpush.msra.mxu0 %v1357
    %1378 = vmatmul.f32.gmra.mxu0 %v903
    %v1379 = vpop.f32.mrf.mxu0
    %v1380 = vadd.f32 1e-08, %v1379
    %1381 = vdwg.mxu0
    %v1382 = vrcp.pop %v1380
    %v1383 = vmul.f32 %v1380, %v1382
    %v1384 = vsub.f32 2.0, %v1383
    %v1385 = vmul.f32 %v1382, %v1384
    %v1386 = vmul.f32 %v737, %v1385
    %v1388 = vsel %vm873, %v1386, 0
    %1390 = vmatpush.msra.mxu0 0.0
    %1391 = vmatpush.msra.mxu0 0.0
    %1392 = vmatpush.msra.mxu0 0.0
    %1393 = vmatpush.msra.mxu0 0.0
    %1394 = vmatpush.msra.mxu0 0.0
    %1395 = vmatpush.msra.mxu0 0.0
    %1396 = vmatpush.msra.mxu0 0.0
    %1397 = vmatpush.msra.mxu0 0.0
    %1398 = vmatpush.msra.mxu0 0.0
    %1399 = vmatpush.msra.mxu0 0.0
    %1400 = vmatpush.msra.mxu0 0.0
    %1401 = vmatpush.msra.mxu0 0.0
    %1402 = vmatpush.msra.mxu0 0.0
    %1403 = vmatpush.msra.mxu0 0.0
    %1404 = vmatpush.msra.mxu0 0.0
    %1405 = vmatpush.msra.mxu0 %v1388
    %1406 = vmatmul.f32.gmra.mxu0 %v934
    %v1407 = vpop.f32.mrf.mxu0
    %v1408 = vadd.f32 %v826, %v1407
    %1409 = vmatmul.f32.gmra.mxu0 %v937
    %v1410 = vpop.f32.mrf.mxu0
    %v1411 = vadd.f32 %v831, %v1410
    %1412 = vdwg.mxu0
    %v1413 = vmul.f32 %v1357, %v1408
    %v1414 = vmul.f32 %v1358, %v1411
    %v1416 = vsel %vm837, %v1302, 0
    %1418 = vmatpush.msra.mxu0 0.0
    %1419 = vmatpush.msra.mxu0 0.0
    %1420 = vmatpush.msra.mxu0 0.0
    %1421 = vmatpush.msra.mxu0 0.0
    %1422 = vmatpush.msra.mxu0 0.0
    %1423 = vmatpush.msra.mxu0 0.0
    %1424 = vmatpush.msra.mxu0 0.0
    %1425 = vmatpush.msra.mxu0 0.0
    %1426 = vmatpush.msra.mxu0 0.0
    %1427 = vmatpush.msra.mxu0 0.0
    %1428 = vmatpush.msra.mxu0 0.0
    %1429 = vmatpush.msra.mxu0 0.0
    %1430 = vmatpush.msra.mxu0 0.0
    %1431 = vmatpush.msra.mxu0 0.0
    %1432 = vmatpush.msra.mxu0 %v1416
    %1433 = vmatpush.msra.mxu0 %v1301
    %1434 = vmatmul.f32.gmra.mxu0 %v835
    %v1435 = vpop.f32.mrf.mxu0
    %v1436 = vadd.f32 1e-08, %v1435
    %1437 = vdwg.mxu0
    %v1438 = vrcp.pop %v1436
    %v1439 = vmul.f32 %v1436, %v1438
    %v1440 = vsub.f32 2.0, %v1439
    %v1441 = vmul.f32 %v1438, %v1440
    %v1442 = vmul.f32 %v706, %v1441
    %v1444 = vsel %vm873, %v1442, 0
    %1446 = vmatpush.msra.mxu0 0.0
    %1447 = vmatpush.msra.mxu0 0.0
    %1448 = vmatpush.msra.mxu0 0.0
    %1449 = vmatpush.msra.mxu0 0.0
    %1450 = vmatpush.msra.mxu0 0.0
    %1451 = vmatpush.msra.mxu0 0.0
    %1452 = vmatpush.msra.mxu0 0.0
    %1453 = vmatpush.msra.mxu0 0.0
    %1454 = vmatpush.msra.mxu0 0.0
    %1455 = vmatpush.msra.mxu0 0.0
    %1456 = vmatpush.msra.mxu0 0.0
    %1457 = vmatpush.msra.mxu0 0.0
    %1458 = vmatpush.msra.mxu0 0.0
    %1459 = vmatpush.msra.mxu0 0.0
    %1460 = vmatpush.msra.mxu0 0.0
    %1461 = vmatpush.msra.mxu0 %v1444
    %1462 = vmatmul.f32.gmra.mxu0 %v868
    %v1463 = vpop.f32.mrf.mxu0
    %v1464 = vadd.f32 %v814, %v1463
    %1465 = vmatmul.f32.gmra.mxu0 %v871
    %v1466 = vpop.f32.mrf.mxu0
    %v1467 = vadd.f32 %v819, %v1466
    %1468 = vdwg.mxu0
    %v1469 = vmul.f32 %v1301, %v1464
    %v1470 = vmul.f32 %v1302, %v1467
    %v1472 = vsel %vm837, %v1470, 0
    %1474 = vmatpush.msra.mxu0 0.0
    %1475 = vmatpush.msra.mxu0 0.0
    %1476 = vmatpush.msra.mxu0 0.0
    %1477 = vmatpush.msra.mxu0 0.0
    %1478 = vmatpush.msra.mxu0 0.0
    %1479 = vmatpush.msra.mxu0 0.0
    %1480 = vmatpush.msra.mxu0 0.0
    %1481 = vmatpush.msra.mxu0 0.0
    %1482 = vmatpush.msra.mxu0 0.0
    %1483 = vmatpush.msra.mxu0 0.0
    %1484 = vmatpush.msra.mxu0 0.0
    %1485 = vmatpush.msra.mxu0 0.0
    %1486 = vmatpush.msra.mxu0 0.0
    %1487 = vmatpush.msra.mxu0 0.0
    %1488 = vmatpush.msra.mxu0 %v1472
    %1489 = vmatpush.msra.mxu0 %v1469
    %1490 = vmatmul.f32.gmra.mxu0 %v903
    %v1491 = vpop.f32.mrf.mxu0
    %v1492 = vadd.f32 1e-08, %v1491
    %1493 = vdwg.mxu0
    %v1494 = vrcp.pop %v1492
    %v1495 = vmul.f32 %v1492, %v1494
    %v1496 = vsub.f32 2.0, %v1495
    %v1497 = vmul.f32 %v1494, %v1496
    %v1498 = vmul.f32 %v757, %v1497
    %v1500 = vsel %vm873, %v1498, 0
    %1502 = vmatpush.msra.mxu0 0.0
    %1503 = vmatpush.msra.mxu0 0.0
    %1504 = vmatpush.msra.mxu0 0.0
    %1505 = vmatpush.msra.mxu0 0.0
    %1506 = vmatpush.msra.mxu0 0.0
    %1507 = vmatpush.msra.mxu0 0.0
    %1508 = vmatpush.msra.mxu0 0.0
    %1509 = vmatpush.msra.mxu0 0.0
    %1510 = vmatpush.msra.mxu0 0.0
    %1511 = vmatpush.msra.mxu0 0.0
    %1512 = vmatpush.msra.mxu0 0.0
    %1513 = vmatpush.msra.mxu0 0.0
    %1514 = vmatpush.msra.mxu0 0.0
    %1515 = vmatpush.msra.mxu0 0.0
    %1516 = vmatpush.msra.mxu0 0.0
    %1517 = vmatpush.msra.mxu0 %v1500
    %1518 = vmatmul.f32.gmra.mxu0 %v934
    %v1519 = vpop.f32.mrf.mxu0
    %v1520 = vadd.f32 %v826, %v1519
    %1521 = vmatmul.f32.gmra.mxu0 %v937
    %v1522 = vpop.f32.mrf.mxu0
    %v1523 = vadd.f32 %v831, %v1522
    %1524 = vdwg.mxu0
    %v1525 = vmul.f32 %v1469, %v1520
    %v1526 = vmul.f32 %v1470, %v1523
    %v1528 = vsel %vm837, %v1414, 0
    %1530 = vmatpush.msra.mxu0 0.0
    %1531 = vmatpush.msra.mxu0 0.0
    %1532 = vmatpush.msra.mxu0 0.0
    %1533 = vmatpush.msra.mxu0 0.0
    %1534 = vmatpush.msra.mxu0 0.0
    %1535 = vmatpush.msra.mxu0 0.0
    %1536 = vmatpush.msra.mxu0 0.0
    %1537 = vmatpush.msra.mxu0 0.0
    %1538 = vmatpush.msra.mxu0 0.0
    %1539 = vmatpush.msra.mxu0 0.0
    %1540 = vmatpush.msra.mxu0 0.0
    %1541 = vmatpush.msra.mxu0 0.0
    %1542 = vmatpush.msra.mxu0 0.0
    %1543 = vmatpush.msra.mxu0 0.0
    %1544 = vmatpush.msra.mxu0 %v1528
    %1545 = vmatpush.msra.mxu0 %v1413
    %1546 = vmatmul.f32.gmra.mxu0 %v835
    %v1547 = vpop.f32.mrf.mxu0
    %v1548 = vadd.f32 1e-08, %v1547
    %1549 = vdwg.mxu0
    %v1550 = vrcp.pop %v1548
    %v1551 = vmul.f32 %v1548, %v1550
    %v1552 = vsub.f32 2.0, %v1551
    %v1553 = vmul.f32 %v1550, %v1552
    %v1554 = vmul.f32 %v686, %v1553
    %v1556 = vsel %vm873, %v1554, 0
    %1558 = vmatpush.msra.mxu0 0.0
    %1559 = vmatpush.msra.mxu0 0.0
    %1560 = vmatpush.msra.mxu0 0.0
    %1561 = vmatpush.msra.mxu0 0.0
    %1562 = vmatpush.msra.mxu0 0.0
    %1563 = vmatpush.msra.mxu0 0.0
    %1564 = vmatpush.msra.mxu0 0.0
    %1565 = vmatpush.msra.mxu0 0.0
    %1566 = vmatpush.msra.mxu0 0.0
    %1567 = vmatpush.msra.mxu0 0.0
    %1568 = vmatpush.msra.mxu0 0.0
    %1569 = vmatpush.msra.mxu0 0.0
    %1570 = vmatpush.msra.mxu0 0.0
    %1571 = vmatpush.msra.mxu0 0.0
    %1572 = vmatpush.msra.mxu0 0.0
    %1573 = vmatpush.msra.mxu0 %v1556
    %1574 = vmatmul.f32.gmra.mxu0 %v868
    %v1575 = vpop.f32.mrf.mxu0
    %v1576 = vadd.f32 %v814, %v1575
    %1577 = vmatmul.f32.gmra.mxu0 %v871
    %v1578 = vpop.f32.mrf.mxu0
    %v1579 = vadd.f32 %v819, %v1578
    %1580 = vdwg.mxu0
    %v1581 = vmul.f32 %v1413, %v1576
    %v1582 = vmul.f32 %v1414, %v1579
    %v1584 = vsel %vm837, %v1582, 0
    %1586 = vmatpush.msra.mxu0 0.0
    %1587 = vmatpush.msra.mxu0 0.0
    %1588 = vmatpush.msra.mxu0 0.0
    %1589 = vmatpush.msra.mxu0 0.0
    %1590 = vmatpush.msra.mxu0 0.0
    %1591 = vmatpush.msra.mxu0 0.0
    %1592 = vmatpush.msra.mxu0 0.0
    %1593 = vmatpush.msra.mxu0 0.0
    %1594 = vmatpush.msra.mxu0 0.0
    %1595 = vmatpush.msra.mxu0 0.0
    %1596 = vmatpush.msra.mxu0 0.0
    %1597 = vmatpush.msra.mxu0 0.0
    %1598 = vmatpush.msra.mxu0 0.0
    %1599 = vmatpush.msra.mxu0 0.0
    %1600 = vmatpush.msra.mxu0 %v1584
    %1601 = vmatpush.msra.mxu0 %v1581
    %1602 = vmatmul.f32.gmra.mxu0 %v903
    %v1603 = vpop.f32.mrf.mxu0
    %v1604 = vadd.f32 1e-08, %v1603
    %1605 = vdwg.mxu0
    %v1606 = vrcp.pop %v1604
    %v1607 = vmul.f32 %v1604, %v1606
    %v1608 = vsub.f32 2.0, %v1607
    %v1609 = vmul.f32 %v1606, %v1608
    %v1610 = vmul.f32 %v737, %v1609
    %v1612 = vsel %vm873, %v1610, 0
    %1614 = vmatpush.msra.mxu0 0.0
    %1615 = vmatpush.msra.mxu0 0.0
    %1616 = vmatpush.msra.mxu0 0.0
    %1617 = vmatpush.msra.mxu0 0.0
    %1618 = vmatpush.msra.mxu0 0.0
    %1619 = vmatpush.msra.mxu0 0.0
    %1620 = vmatpush.msra.mxu0 0.0
    %1621 = vmatpush.msra.mxu0 0.0
    %1622 = vmatpush.msra.mxu0 0.0
    %1623 = vmatpush.msra.mxu0 0.0
    %1624 = vmatpush.msra.mxu0 0.0
    %1625 = vmatpush.msra.mxu0 0.0
    %1626 = vmatpush.msra.mxu0 0.0
    %1627 = vmatpush.msra.mxu0 0.0
    %1628 = vmatpush.msra.mxu0 0.0
    %1629 = vmatpush.msra.mxu0 %v1612
    %1630 = vmatmul.f32.gmra.mxu0 %v934
    %v1631 = vpop.f32.mrf.mxu0
    %v1632 = vadd.f32 %v826, %v1631
    %1633 = vmatmul.f32.gmra.mxu0 %v937
    %v1634 = vpop.f32.mrf.mxu0
    %v1635 = vadd.f32 %v831, %v1634
    %1636 = vdwg.mxu0
    %v1637 = vmul.f32 %v1581, %v1632
    %v1638 = vmul.f32 %v1582, %v1635
    %v1640 = vsel %vm837, %v1526, 0
    %1642 = vmatpush.msra.mxu0 0.0
    %1643 = vmatpush.msra.mxu0 0.0
    %1644 = vmatpush.msra.mxu0 0.0
    %1645 = vmatpush.msra.mxu0 0.0
    %1646 = vmatpush.msra.mxu0 0.0
    %1647 = vmatpush.msra.mxu0 0.0
    %1648 = vmatpush.msra.mxu0 0.0
    %1649 = vmatpush.msra.mxu0 0.0
    %1650 = vmatpush.msra.mxu0 0.0
    %1651 = vmatpush.msra.mxu0 0.0
    %1652 = vmatpush.msra.mxu0 0.0
    %1653 = vmatpush.msra.mxu0 0.0
    %1654 = vmatpush.msra.mxu0 0.0
    %1655 = vmatpush.msra.mxu0 0.0
    %1656 = vmatpush.msra.mxu0 %v1640
    %1657 = vmatpush.msra.mxu0 %v1525
    %1658 = vmatmul.f32.gmra.mxu0 %v835
    %v1659 = vpop.f32.mrf.mxu0
    %v1660 = vadd.f32 1e-08, %v1659
    %1661 = vdwg.mxu0
    %v1662 = vrcp.pop %v1660
    %v1663 = vmul.f32 %v1660, %v1662
    %v1664 = vsub.f32 2.0, %v1663
    %v1665 = vmul.f32 %v1662, %v1664
    %v1666 = vmul.f32 %v706, %v1665
    %v1668 = vsel %vm873, %v1666, 0
    %1670 = vmatpush.msra.mxu0 0.0
    %1671 = vmatpush.msra.mxu0 0.0
    %1672 = vmatpush.msra.mxu0 0.0
    %1673 = vmatpush.msra.mxu0 0.0
    %1674 = vmatpush.msra.mxu0 0.0
    %1675 = vmatpush.msra.mxu0 0.0
    %1676 = vmatpush.msra.mxu0 0.0
    %1677 = vmatpush.msra.mxu0 0.0
    %1678 = vmatpush.msra.mxu0 0.0
    %1679 = vmatpush.msra.mxu0 0.0
    %1680 = vmatpush.msra.mxu0 0.0
    %1681 = vmatpush.msra.mxu0 0.0
    %1682 = vmatpush.msra.mxu0 0.0
    %1683 = vmatpush.msra.mxu0 0.0
    %1684 = vmatpush.msra.mxu0 0.0
    %1685 = vmatpush.msra.mxu0 %v1668
    %1686 = vmatmul.f32.gmra.mxu0 %v868
    %v1687 = vpop.f32.mrf.mxu0
    %v1688 = vadd.f32 %v814, %v1687
    %1689 = vmatmul.f32.gmra.mxu0 %v871
    %v1690 = vpop.f32.mrf.mxu0
    %v1691 = vadd.f32 %v819, %v1690
    %1692 = vdwg.mxu0
    %v1693 = vmul.f32 %v1525, %v1688
    %v1694 = vmul.f32 %v1526, %v1691
    %v1696 = vsel %vm837, %v1694, 0
    %1698 = vmatpush.msra.mxu0 0.0
    %1699 = vmatpush.msra.mxu0 0.0
    %1700 = vmatpush.msra.mxu0 0.0
    %1701 = vmatpush.msra.mxu0 0.0
    %1702 = vmatpush.msra.mxu0 0.0
    %1703 = vmatpush.msra.mxu0 0.0
    %1704 = vmatpush.msra.mxu0 0.0
    %1705 = vmatpush.msra.mxu0 0.0
    %1706 = vmatpush.msra.mxu0 0.0
    %1707 = vmatpush.msra.mxu0 0.0
    %1708 = vmatpush.msra.mxu0 0.0
    %1709 = vmatpush.msra.mxu0 0.0
    %1710 = vmatpush.msra.mxu0 0.0
    %1711 = vmatpush.msra.mxu0 0.0
    %1712 = vmatpush.msra.mxu0 %v1696
    %1713 = vmatpush.msra.mxu0 %v1693
    %1714 = vmatmul.f32.gmra.mxu0 %v903
    %v1715 = vpop.f32.mrf.mxu0
    %v1716 = vadd.f32 1e-08, %v1715
    %1717 = vdwg.mxu0
    %v1718 = vrcp.pop %v1716
    %v1719 = vmul.f32 %v1716, %v1718
    %v1720 = vsub.f32 2.0, %v1719
    %v1721 = vmul.f32 %v1718, %v1720
    %v1722 = vmul.f32 %v757, %v1721
    %v1724 = vsel %vm873, %v1722, 0
    %1726 = vmatpush.msra.mxu0 0.0
    %1727 = vmatpush.msra.mxu0 0.0
    %1728 = vmatpush.msra.mxu0 0.0
    %1729 = vmatpush.msra.mxu0 0.0
    %1730 = vmatpush.msra.mxu0 0.0
    %1731 = vmatpush.msra.mxu0 0.0
    %1732 = vmatpush.msra.mxu0 0.0
    %1733 = vmatpush.msra.mxu0 0.0
    %1734 = vmatpush.msra.mxu0 0.0
    %1735 = vmatpush.msra.mxu0 0.0
    %1736 = vmatpush.msra.mxu0 0.0
    %1737 = vmatpush.msra.mxu0 0.0
    %1738 = vmatpush.msra.mxu0 0.0
    %1739 = vmatpush.msra.mxu0 0.0
    %1740 = vmatpush.msra.mxu0 0.0
    %1741 = vmatpush.msra.mxu0 %v1724
    %1742 = vmatmul.f32.gmra.mxu0 %v934
    %v1743 = vpop.f32.mrf.mxu0
    %v1744 = vadd.f32 %v826, %v1743
    %1745 = vmatmul.f32.gmra.mxu0 %v937
    %v1746 = vpop.f32.mrf.mxu0
    %v1747 = vadd.f32 %v831, %v1746
    %1748 = vdwg.mxu0
    %v1749 = vmul.f32 %v1693, %v1744
    %v1750 = vmul.f32 %v1694, %v1747
    %v1752 = vsel %vm837, %v1638, 0
    %1754 = vmatpush.msra.mxu0 0.0
    %1755 = vmatpush.msra.mxu0 0.0
    %1756 = vmatpush.msra.mxu0 0.0
    %1757 = vmatpush.msra.mxu0 0.0
    %1758 = vmatpush.msra.mxu0 0.0
    %1759 = vmatpush.msra.mxu0 0.0
    %1760 = vmatpush.msra.mxu0 0.0
    %1761 = vmatpush.msra.mxu0 0.0
    %1762 = vmatpush.msra.mxu0 0.0
    %1763 = vmatpush.msra.mxu0 0.0
    %1764 = vmatpush.msra.mxu0 0.0
    %1765 = vmatpush.msra.mxu0 0.0
    %1766 = vmatpush.msra.mxu0 0.0
    %1767 = vmatpush.msra.mxu0 0.0
    %1768 = vmatpush.msra.mxu0 %v1752
    %1769 = vmatpush.msra.mxu0 %v1637
    %1770 = vmatmul.f32.gmra.mxu0 %v835
    %v1771 = vpop.f32.mrf.mxu0
    %v1772 = vadd.f32 1e-08, %v1771
    %1773 = vdwg.mxu0
    %v1774 = vrcp.pop %v1772
    %v1775 = vmul.f32 %v1772, %v1774
    %v1776 = vsub.f32 2.0, %v1775
    %v1777 = vmul.f32 %v1774, %v1776
    %v1778 = vmul.f32 %v686, %v1777
    %v1780 = vsel %vm873, %v1778, 0
    %1782 = vmatpush.msra.mxu0 0.0
    %1783 = vmatpush.msra.mxu0 0.0
    %1784 = vmatpush.msra.mxu0 0.0
    %1785 = vmatpush.msra.mxu0 0.0
    %1786 = vmatpush.msra.mxu0 0.0
    %1787 = vmatpush.msra.mxu0 0.0
    %1788 = vmatpush.msra.mxu0 0.0
    %1789 = vmatpush.msra.mxu0 0.0
    %1790 = vmatpush.msra.mxu0 0.0
    %1791 = vmatpush.msra.mxu0 0.0
    %1792 = vmatpush.msra.mxu0 0.0
    %1793 = vmatpush.msra.mxu0 0.0
    %1794 = vmatpush.msra.mxu0 0.0
    %1795 = vmatpush.msra.mxu0 0.0
    %1796 = vmatpush.msra.mxu0 0.0
    %1797 = vmatpush.msra.mxu0 %v1780
    %1798 = vmatmul.f32.gmra.mxu0 %v868
    %v1799 = vpop.f32.mrf.mxu0
    %v1800 = vadd.f32 %v814, %v1799
    %1801 = vmatmul.f32.gmra.mxu0 %v871
    %v1802 = vpop.f32.mrf.mxu0
    %v1803 = vadd.f32 %v819, %v1802
    %1804 = vdwg.mxu0
    %v1805 = vmul.f32 %v1637, %v1800
    %v1806 = vmul.f32 %v1638, %v1803
    %v1808 = vsel %vm837, %v1806, 0
    %1810 = vmatpush.msra.mxu0 0.0
    %1811 = vmatpush.msra.mxu0 0.0
    %1812 = vmatpush.msra.mxu0 0.0
    %1813 = vmatpush.msra.mxu0 0.0
    %1814 = vmatpush.msra.mxu0 0.0
    %1815 = vmatpush.msra.mxu0 0.0
    %1816 = vmatpush.msra.mxu0 0.0
    %1817 = vmatpush.msra.mxu0 0.0
    %1818 = vmatpush.msra.mxu0 0.0
    %1819 = vmatpush.msra.mxu0 0.0
    %1820 = vmatpush.msra.mxu0 0.0
    %1821 = vmatpush.msra.mxu0 0.0
    %1822 = vmatpush.msra.mxu0 0.0
    %1823 = vmatpush.msra.mxu0 0.0
    %1824 = vmatpush.msra.mxu0 %v1808
    %1825 = vmatpush.msra.mxu0 %v1805
    %1826 = vmatmul.f32.gmra.mxu0 %v903
    %v1827 = vpop.f32.mrf.mxu0
    %v1828 = vadd.f32 1e-08, %v1827
    %1829 = vdwg.mxu0
    %v1830 = vrcp.pop %v1828
    %v1831 = vmul.f32 %v1828, %v1830
    %v1832 = vsub.f32 2.0, %v1831
    %v1833 = vmul.f32 %v1830, %v1832
    %v1834 = vmul.f32 %v737, %v1833
    %v1836 = vsel %vm873, %v1834, 0
    %1838 = vmatpush.msra.mxu0 0.0
    %1839 = vmatpush.msra.mxu0 0.0
    %1840 = vmatpush.msra.mxu0 0.0
    %1841 = vmatpush.msra.mxu0 0.0
    %1842 = vmatpush.msra.mxu0 0.0
    %1843 = vmatpush.msra.mxu0 0.0
    %1844 = vmatpush.msra.mxu0 0.0
    %1845 = vmatpush.msra.mxu0 0.0
    %1846 = vmatpush.msra.mxu0 0.0
    %1847 = vmatpush.msra.mxu0 0.0
    %1848 = vmatpush.msra.mxu0 0.0
    %1849 = vmatpush.msra.mxu0 0.0
    %1850 = vmatpush.msra.mxu0 0.0
    %1851 = vmatpush.msra.mxu0 0.0
    %1852 = vmatpush.msra.mxu0 0.0
    %1853 = vmatpush.msra.mxu0 %v1836
    %1854 = vmatmul.f32.gmra.mxu0 %v934
    %v1855 = vpop.f32.mrf.mxu0
    %v1856 = vadd.f32 %v826, %v1855
    %1857 = vmatmul.f32.gmra.mxu0 %v937
    %v1858 = vpop.f32.mrf.mxu0
    %v1859 = vadd.f32 %v831, %v1858
    %1860 = vdwg.mxu0
    %v1861 = vmul.f32 %v1805, %v1856
    %v1862 = vmul.f32 %v1806, %v1859
    %v1864 = vsel %vm837, %v1750, 0
    %1866 = vmatpush.msra.mxu0 0.0
    %1867 = vmatpush.msra.mxu0 0.0
    %1868 = vmatpush.msra.mxu0 0.0
    %1869 = vmatpush.msra.mxu0 0.0
    %1870 = vmatpush.msra.mxu0 0.0
    %1871 = vmatpush.msra.mxu0 0.0
    %1872 = vmatpush.msra.mxu0 0.0
    %1873 = vmatpush.msra.mxu0 0.0
    %1874 = vmatpush.msra.mxu0 0.0
    %1875 = vmatpush.msra.mxu0 0.0
    %1876 = vmatpush.msra.mxu0 0.0
    %1877 = vmatpush.msra.mxu0 0.0
    %1878 = vmatpush.msra.mxu0 0.0
    %1879 = vmatpush.msra.mxu0 0.0
    %1880 = vmatpush.msra.mxu0 %v1864
    %1881 = vmatpush.msra.mxu0 %v1749
    %1882 = vmatmul.f32.gmra.mxu0 %v835
    %v1883 = vpop.f32.mrf.mxu0
    %v1884 = vadd.f32 1e-08, %v1883
    %1885 = vdwg.mxu0
    %v1886 = vrcp.pop %v1884
    %v1887 = vmul.f32 %v1884, %v1886
    %v1888 = vsub.f32 2.0, %v1887
    %v1889 = vmul.f32 %v1886, %v1888
    %v1890 = vmul.f32 %v706, %v1889
    %v1892 = vsel %vm873, %v1890, 0
    %1894 = vmatpush.msra.mxu0 0.0
    %1895 = vmatpush.msra.mxu0 0.0
    %1896 = vmatpush.msra.mxu0 0.0
    %1897 = vmatpush.msra.mxu0 0.0
    %1898 = vmatpush.msra.mxu0 0.0
    %1899 = vmatpush.msra.mxu0 0.0
    %1900 = vmatpush.msra.mxu0 0.0
    %1901 = vmatpush.msra.mxu0 0.0
    %1902 = vmatpush.msra.mxu0 0.0
    %1903 = vmatpush.msra.mxu0 0.0
    %1904 = vmatpush.msra.mxu0 0.0
    %1905 = vmatpush.msra.mxu0 0.0
    %1906 = vmatpush.msra.mxu0 0.0
    %1907 = vmatpush.msra.mxu0 0.0
    %1908 = vmatpush.msra.mxu0 0.0
    %1909 = vmatpush.msra.mxu0 %v1892
    %1910 = vmatmul.f32.gmra.mxu0 %v868
    %v1911 = vpop.f32.mrf.mxu0
    %v1912 = vadd.f32 %v814, %v1911
    %1913 = vmatmul.f32.gmra.mxu0 %v871
    %v1914 = vpop.f32.mrf.mxu0
    %v1915 = vadd.f32 %v819, %v1914
    %1916 = vdwg.mxu0
    %v1917 = vmul.f32 %v1749, %v1912
    %v1918 = vmul.f32 %v1750, %v1915
    %v1920 = vsel %vm837, %v1918, 0
    %1922 = vmatpush.msra.mxu0 0.0
    %1923 = vmatpush.msra.mxu0 0.0
    %1924 = vmatpush.msra.mxu0 0.0
    %1925 = vmatpush.msra.mxu0 0.0
    %1926 = vmatpush.msra.mxu0 0.0
    %1927 = vmatpush.msra.mxu0 0.0
    %1928 = vmatpush.msra.mxu0 0.0
    %1929 = vmatpush.msra.mxu0 0.0
    %1930 = vmatpush.msra.mxu0 0.0
    %1931 = vmatpush.msra.mxu0 0.0
    %1932 = vmatpush.msra.mxu0 0.0
    %1933 = vmatpush.msra.mxu0 0.0
    %1934 = vmatpush.msra.mxu0 0.0
    %1935 = vmatpush.msra.mxu0 0.0
    %1936 = vmatpush.msra.mxu0 %v1920
    %1937 = vmatpush.msra.mxu0 %v1917
    %1938 = vmatmul.f32.gmra.mxu0 %v903
    %v1939 = vpop.f32.mrf.mxu0
    %v1940 = vadd.f32 1e-08, %v1939
    %1941 = vdwg.mxu0
    %v1942 = vrcp.pop %v1940
    %v1943 = vmul.f32 %v1940, %v1942
    %v1944 = vsub.f32 2.0, %v1943
    %v1945 = vmul.f32 %v1942, %v1944
    %v1946 = vmul.f32 %v757, %v1945
    %v1948 = vsel %vm873, %v1946, 0
    %1950 = vmatpush.msra.mxu0 0.0
    %1951 = vmatpush.msra.mxu0 0.0
    %1952 = vmatpush.msra.mxu0 0.0
    %1953 = vmatpush.msra.mxu0 0.0
    %1954 = vmatpush.msra.mxu0 0.0
    %1955 = vmatpush.msra.mxu0 0.0
    %1956 = vmatpush.msra.mxu0 0.0
    %1957 = vmatpush.msra.mxu0 0.0
    %1958 = vmatpush.msra.mxu0 0.0
    %1959 = vmatpush.msra.mxu0 0.0
    %1960 = vmatpush.msra.mxu0 0.0
    %1961 = vmatpush.msra.mxu0 0.0
    %1962 = vmatpush.msra.mxu0 0.0
    %1963 = vmatpush.msra.mxu0 0.0
    %1964 = vmatpush.msra.mxu0 0.0
    %1965 = vmatpush.msra.mxu0 %v1948
    %1966 = vmatmul.f32.gmra.mxu0 %v934
    %v1967 = vpop.f32.mrf.mxu0
    %v1968 = vadd.f32 %v826, %v1967
    %1969 = vmatmul.f32.gmra.mxu0 %v937
    %v1970 = vpop.f32.mrf.mxu0
    %v1971 = vadd.f32 %v831, %v1970
    %1972 = vdwg.mxu0
    %v1973 = vmul.f32 %v1917, %v1968
    %v1974 = vmul.f32 %v1918, %v1971
    %v1976 = vsel %vm837, %v1862, 0
    %1978 = vmatpush.msra.mxu0 0.0
    %1979 = vmatpush.msra.mxu0 0.0
    %1980 = vmatpush.msra.mxu0 0.0
    %1981 = vmatpush.msra.mxu0 0.0
    %1982 = vmatpush.msra.mxu0 0.0
    %1983 = vmatpush.msra.mxu0 0.0
    %1984 = vmatpush.msra.mxu0 0.0
    %1985 = vmatpush.msra.mxu0 0.0
    %1986 = vmatpush.msra.mxu0 0.0
    %1987 = vmatpush.msra.mxu0 0.0
    %1988 = vmatpush.msra.mxu0 0.0
    %1989 = vmatpush.msra.mxu0 0.0
    %1990 = vmatpush.msra.mxu0 0.0
    %1991 = vmatpush.msra.mxu0 0.0
    %1992 = vmatpush.msra.mxu0 %v1976
    %1993 = vmatpush.msra.mxu0 %v1861
    %1994 = vmatmul.f32.gmra.mxu0 %v835
    %v1995 = vpop.f32.mrf.mxu0
    %v1996 = vadd.f32 1e-08, %v1995
    %1997 = vdwg.mxu0
    %v1998 = vrcp.pop %v1996
    %v1999 = vmul.f32 %v1996, %v1998
    %v2000 = vsub.f32 2.0, %v1999
    %v2001 = vmul.f32 %v1998, %v2000
    %v2002 = vmul.f32 %v686, %v2001
    %v2004 = vsel %vm873, %v2002, 0
    %2006 = vmatpush.msra.mxu0 0.0
    %2007 = vmatpush.msra.mxu0 0.0
    %2008 = vmatpush.msra.mxu0 0.0
    %2009 = vmatpush.msra.mxu0 0.0
    %2010 = vmatpush.msra.mxu0 0.0
    %2011 = vmatpush.msra.mxu0 0.0
    %2012 = vmatpush.msra.mxu0 0.0
    %2013 = vmatpush.msra.mxu0 0.0
    %2014 = vmatpush.msra.mxu0 0.0
    %2015 = vmatpush.msra.mxu0 0.0
    %2016 = vmatpush.msra.mxu0 0.0
    %2017 = vmatpush.msra.mxu0 0.0
    %2018 = vmatpush.msra.mxu0 0.0
    %2019 = vmatpush.msra.mxu0 0.0
    %2020 = vmatpush.msra.mxu0 0.0
    %2021 = vmatpush.msra.mxu0 %v2004
    %2022 = vmatmul.f32.gmra.mxu0 %v868
    %v2023 = vpop.f32.mrf.mxu0
    %v2024 = vadd.f32 %v814, %v2023
    %2025 = vmatmul.f32.gmra.mxu0 %v871
    %v2026 = vpop.f32.mrf.mxu0
    %v2027 = vadd.f32 %v819, %v2026
    %2028 = vdwg.mxu0
    %v2029 = vmul.f32 %v1861, %v2024
    %v2030 = vmul.f32 %v1862, %v2027
    %v2032 = vsel %vm837, %v2030, 0
    %2034 = vmatpush.msra.mxu0 0.0
    %2035 = vmatpush.msra.mxu0 0.0
    %2036 = vmatpush.msra.mxu0 0.0
    %2037 = vmatpush.msra.mxu0 0.0
    %2038 = vmatpush.msra.mxu0 0.0
    %2039 = vmatpush.msra.mxu0 0.0
    %2040 = vmatpush.msra.mxu0 0.0
    %2041 = vmatpush.msra.mxu0 0.0
    %2042 = vmatpush.msra.mxu0 0.0
    %2043 = vmatpush.msra.mxu0 0.0
    %2044 = vmatpush.msra.mxu0 0.0
    %2045 = vmatpush.msra.mxu0 0.0
    %2046 = vmatpush.msra.mxu0 0.0
    %2047 = vmatpush.msra.mxu0 0.0
    %2048 = vmatpush.msra.mxu0 %v2032
    %2049 = vmatpush.msra.mxu0 %v2029
    %2050 = vmatmul.f32.gmra.mxu0 %v903
    %v2051 = vpop.f32.mrf.mxu0
    %v2052 = vadd.f32 1e-08, %v2051
    %2053 = vdwg.mxu0
    %v2054 = vrcp.pop %v2052
    %v2055 = vmul.f32 %v2052, %v2054
    %v2056 = vsub.f32 2.0, %v2055
    %v2057 = vmul.f32 %v2054, %v2056
    %v2058 = vmul.f32 %v737, %v2057
    %v2060 = vsel %vm873, %v2058, 0
    %2062 = vmatpush.msra.mxu0 0.0
    %2063 = vmatpush.msra.mxu0 0.0
    %2064 = vmatpush.msra.mxu0 0.0
    %2065 = vmatpush.msra.mxu0 0.0
    %2066 = vmatpush.msra.mxu0 0.0
    %2067 = vmatpush.msra.mxu0 0.0
    %2068 = vmatpush.msra.mxu0 0.0
    %2069 = vmatpush.msra.mxu0 0.0
    %2070 = vmatpush.msra.mxu0 0.0
    %2071 = vmatpush.msra.mxu0 0.0
    %2072 = vmatpush.msra.mxu0 0.0
    %2073 = vmatpush.msra.mxu0 0.0
    %2074 = vmatpush.msra.mxu0 0.0
    %2075 = vmatpush.msra.mxu0 0.0
    %2076 = vmatpush.msra.mxu0 0.0
    %2077 = vmatpush.msra.mxu0 %v2060
    %2078 = vmatmul.f32.gmra.mxu0 %v934
    %v2079 = vpop.f32.mrf.mxu0
    %v2080 = vadd.f32 %v826, %v2079
    %2081 = vmatmul.f32.gmra.mxu0 %v937
    %v2082 = vpop.f32.mrf.mxu0
    %v2083 = vadd.f32 %v831, %v2082
    %2084 = vdwg.mxu0
    %v2085 = vmul.f32 %v2029, %v2080
    %v2086 = vmul.f32 %v2030, %v2083
    %v2088 = vsel %vm837, %v1974, 0
    %2090 = vmatpush.msra.mxu0 0.0
    %2091 = vmatpush.msra.mxu0 0.0
    %2092 = vmatpush.msra.mxu0 0.0
    %2093 = vmatpush.msra.mxu0 0.0
    %2094 = vmatpush.msra.mxu0 0.0
    %2095 = vmatpush.msra.mxu0 0.0
    %2096 = vmatpush.msra.mxu0 0.0
    %2097 = vmatpush.msra.mxu0 0.0
    %2098 = vmatpush.msra.mxu0 0.0
    %2099 = vmatpush.msra.mxu0 0.0
    %2100 = vmatpush.msra.mxu0 0.0
    %2101 = vmatpush.msra.mxu0 0.0
    %2102 = vmatpush.msra.mxu0 0.0
    %2103 = vmatpush.msra.mxu0 0.0
    %2104 = vmatpush.msra.mxu0 %v2088
    %2105 = vmatpush.msra.mxu0 %v1973
    %2106 = vmatmul.f32.gmra.mxu0 %v835
    %v2107 = vpop.f32.mrf.mxu0
    %v2108 = vadd.f32 1e-08, %v2107
    %2109 = vdwg.mxu0
    %v2110 = vrcp.pop %v2108
    %v2111 = vmul.f32 %v2108, %v2110
    %v2112 = vsub.f32 2.0, %v2111
    %v2113 = vmul.f32 %v2110, %v2112
    %v2114 = vmul.f32 %v706, %v2113
    %v2116 = vsel %vm873, %v2114, 0
    %2118 = vmatpush.msra.mxu0 0.0
    %2119 = vmatpush.msra.mxu0 0.0
    %2120 = vmatpush.msra.mxu0 0.0
    %2121 = vmatpush.msra.mxu0 0.0
    %2122 = vmatpush.msra.mxu0 0.0
    %2123 = vmatpush.msra.mxu0 0.0
    %2124 = vmatpush.msra.mxu0 0.0
    %2125 = vmatpush.msra.mxu0 0.0
    %2126 = vmatpush.msra.mxu0 0.0
    %2127 = vmatpush.msra.mxu0 0.0
    %2128 = vmatpush.msra.mxu0 0.0
    %2129 = vmatpush.msra.mxu0 0.0
    %2130 = vmatpush.msra.mxu0 0.0
    %2131 = vmatpush.msra.mxu0 0.0
    %2132 = vmatpush.msra.mxu0 0.0
    %2133 = vmatpush.msra.mxu0 %v2116
    %2134 = vmatmul.f32.gmra.mxu0 %v868
    %v2135 = vpop.f32.mrf.mxu0
    %v2136 = vadd.f32 %v814, %v2135
    %2137 = vmatmul.f32.gmra.mxu0 %v871
    %v2138 = vpop.f32.mrf.mxu0
    %v2139 = vadd.f32 %v819, %v2138
    %2140 = vdwg.mxu0
    %v2141 = vmul.f32 %v1973, %v2136
    %v2142 = vmul.f32 %v1974, %v2139
    %v2144 = vsel %vm837, %v2142, 0
    %2146 = vmatpush.msra.mxu0 0.0
    %2147 = vmatpush.msra.mxu0 0.0
    %2148 = vmatpush.msra.mxu0 0.0
    %2149 = vmatpush.msra.mxu0 0.0
    %2150 = vmatpush.msra.mxu0 0.0
    %2151 = vmatpush.msra.mxu0 0.0
    %2152 = vmatpush.msra.mxu0 0.0
    %2153 = vmatpush.msra.mxu0 0.0
    %2154 = vmatpush.msra.mxu0 0.0
    %2155 = vmatpush.msra.mxu0 0.0
    %2156 = vmatpush.msra.mxu0 0.0
    %2157 = vmatpush.msra.mxu0 0.0
    %2158 = vmatpush.msra.mxu0 0.0
    %2159 = vmatpush.msra.mxu0 0.0
    %2160 = vmatpush.msra.mxu0 %v2144
    %2161 = vmatpush.msra.mxu0 %v2141
    %2162 = vmatmul.f32.gmra.mxu0 %v903
    %v2163 = vpop.f32.mrf.mxu0
    %v2164 = vadd.f32 1e-08, %v2163
    %2165 = vdwg.mxu0
    %v2166 = vrcp.pop %v2164
    %v2167 = vmul.f32 %v2164, %v2166
    %v2168 = vsub.f32 2.0, %v2167
    %v2169 = vmul.f32 %v2166, %v2168
    %v2170 = vmul.f32 %v757, %v2169
    %v2172 = vsel %vm873, %v2170, 0
    %2174 = vmatpush.msra.mxu0 0.0
    %2175 = vmatpush.msra.mxu0 0.0
    %2176 = vmatpush.msra.mxu0 0.0
    %2177 = vmatpush.msra.mxu0 0.0
    %2178 = vmatpush.msra.mxu0 0.0
    %2179 = vmatpush.msra.mxu0 0.0
    %2180 = vmatpush.msra.mxu0 0.0
    %2181 = vmatpush.msra.mxu0 0.0
    %2182 = vmatpush.msra.mxu0 0.0
    %2183 = vmatpush.msra.mxu0 0.0
    %2184 = vmatpush.msra.mxu0 0.0
    %2185 = vmatpush.msra.mxu0 0.0
    %2186 = vmatpush.msra.mxu0 0.0
    %2187 = vmatpush.msra.mxu0 0.0
    %2188 = vmatpush.msra.mxu0 0.0
    %2189 = vmatpush.msra.mxu0 %v2172
    %2190 = vmatmul.f32.gmra.mxu0 %v934
    %v2191 = vpop.f32.mrf.mxu0
    %v2192 = vadd.f32 %v826, %v2191
    %2193 = vmatmul.f32.gmra.mxu0 %v937
    %v2194 = vpop.f32.mrf.mxu0
    %v2195 = vadd.f32 %v831, %v2194
    %2196 = vdwg.mxu0
    %v2197 = vmul.f32 %v2141, %v2192
    %v2198 = vmul.f32 %v2142, %v2195
    %v2200 = vsel %vm837, %v2086, 0
    %2202 = vmatpush.msra.mxu0 0.0
    %2203 = vmatpush.msra.mxu0 0.0
    %2204 = vmatpush.msra.mxu0 0.0
    %2205 = vmatpush.msra.mxu0 0.0
    %2206 = vmatpush.msra.mxu0 0.0
    %2207 = vmatpush.msra.mxu0 0.0
    %2208 = vmatpush.msra.mxu0 0.0
    %2209 = vmatpush.msra.mxu0 0.0
    %2210 = vmatpush.msra.mxu0 0.0
    %2211 = vmatpush.msra.mxu0 0.0
    %2212 = vmatpush.msra.mxu0 0.0
    %2213 = vmatpush.msra.mxu0 0.0
    %2214 = vmatpush.msra.mxu0 0.0
    %2215 = vmatpush.msra.mxu0 0.0
    %2216 = vmatpush.msra.mxu0 %v2200
    %2217 = vmatpush.msra.mxu0 %v2085
    %2218 = vmatmul.f32.gmra.mxu0 %v835
    %v2219 = vpop.f32.mrf.mxu0
    %v2220 = vadd.f32 1e-08, %v2219
    %2221 = vdwg.mxu0
    %v2222 = vrcp.pop %v2220
    %v2223 = vmul.f32 %v2220, %v2222
    %v2224 = vsub.f32 2.0, %v2223
    %v2225 = vmul.f32 %v2222, %v2224
    %v2226 = vmul.f32 %v686, %v2225
    %v2228 = vsel %vm873, %v2226, 0
    %2230 = vmatpush.msra.mxu0 0.0
    %2231 = vmatpush.msra.mxu0 0.0
    %2232 = vmatpush.msra.mxu0 0.0
    %2233 = vmatpush.msra.mxu0 0.0
    %2234 = vmatpush.msra.mxu0 0.0
    %2235 = vmatpush.msra.mxu0 0.0
    %2236 = vmatpush.msra.mxu0 0.0
    %2237 = vmatpush.msra.mxu0 0.0
    %2238 = vmatpush.msra.mxu0 0.0
    %2239 = vmatpush.msra.mxu0 0.0
    %2240 = vmatpush.msra.mxu0 0.0
    %2241 = vmatpush.msra.mxu0 0.0
    %2242 = vmatpush.msra.mxu0 0.0
    %2243 = vmatpush.msra.mxu0 0.0
    %2244 = vmatpush.msra.mxu0 0.0
    %2245 = vmatpush.msra.mxu0 %v2228
    %2246 = vmatmul.f32.gmra.mxu0 %v868
    %v2247 = vpop.f32.mrf.mxu0
    %v2248 = vadd.f32 %v814, %v2247
    %2249 = vmatmul.f32.gmra.mxu0 %v871
    %v2250 = vpop.f32.mrf.mxu0
    %v2251 = vadd.f32 %v819, %v2250
    %2252 = vdwg.mxu0
    %v2253 = vmul.f32 %v2085, %v2248
    %v2254 = vmul.f32 %v2086, %v2251
    %v2256 = vsel %vm837, %v2254, 0
    %2258 = vmatpush.msra.mxu0 0.0
    %2259 = vmatpush.msra.mxu0 0.0
    %2260 = vmatpush.msra.mxu0 0.0
    %2261 = vmatpush.msra.mxu0 0.0
    %2262 = vmatpush.msra.mxu0 0.0
    %2263 = vmatpush.msra.mxu0 0.0
    %2264 = vmatpush.msra.mxu0 0.0
    %2265 = vmatpush.msra.mxu0 0.0
    %2266 = vmatpush.msra.mxu0 0.0
    %2267 = vmatpush.msra.mxu0 0.0
    %2268 = vmatpush.msra.mxu0 0.0
    %2269 = vmatpush.msra.mxu0 0.0
    %2270 = vmatpush.msra.mxu0 0.0
    %2271 = vmatpush.msra.mxu0 0.0
    %2272 = vmatpush.msra.mxu0 %v2256
    %2273 = vmatpush.msra.mxu0 %v2253
    %2274 = vmatmul.f32.gmra.mxu0 %v903
    %v2275 = vpop.f32.mrf.mxu0
    %v2276 = vadd.f32 1e-08, %v2275
    %2277 = vdwg.mxu0
    %v2278 = vrcp.pop %v2276
    %v2279 = vmul.f32 %v2276, %v2278
    %v2280 = vsub.f32 2.0, %v2279
    %v2281 = vmul.f32 %v2278, %v2280
    %v2282 = vmul.f32 %v737, %v2281
    %v2284 = vsel %vm873, %v2282, 0
    %2286 = vmatpush.msra.mxu0 0.0
    %2287 = vmatpush.msra.mxu0 0.0
    %2288 = vmatpush.msra.mxu0 0.0
    %2289 = vmatpush.msra.mxu0 0.0
    %2290 = vmatpush.msra.mxu0 0.0
    %2291 = vmatpush.msra.mxu0 0.0
    %2292 = vmatpush.msra.mxu0 0.0
    %2293 = vmatpush.msra.mxu0 0.0
    %2294 = vmatpush.msra.mxu0 0.0
    %2295 = vmatpush.msra.mxu0 0.0
    %2296 = vmatpush.msra.mxu0 0.0
    %2297 = vmatpush.msra.mxu0 0.0
    %2298 = vmatpush.msra.mxu0 0.0
    %2299 = vmatpush.msra.mxu0 0.0
    %2300 = vmatpush.msra.mxu0 0.0
    %2301 = vmatpush.msra.mxu0 %v2284
    %2302 = vmatmul.f32.gmra.mxu0 %v934
    %v2303 = vpop.f32.mrf.mxu0
    %v2304 = vadd.f32 %v826, %v2303
    %2305 = vmatmul.f32.gmra.mxu0 %v937
    %v2306 = vpop.f32.mrf.mxu0
    %v2307 = vadd.f32 %v831, %v2306
    %2308 = vdwg.mxu0
    %v2309 = vmul.f32 %v2253, %v2304
    %v2310 = vmul.f32 %v2254, %v2307
    %v2312 = vsel %vm837, %v2198, 0
    %2314 = vmatpush.msra.mxu0 0.0
    %2315 = vmatpush.msra.mxu0 0.0
    %2316 = vmatpush.msra.mxu0 0.0
    %2317 = vmatpush.msra.mxu0 0.0
    %2318 = vmatpush.msra.mxu0 0.0
    %2319 = vmatpush.msra.mxu0 0.0
    %2320 = vmatpush.msra.mxu0 0.0
    %2321 = vmatpush.msra.mxu0 0.0
    %2322 = vmatpush.msra.mxu0 0.0
    %2323 = vmatpush.msra.mxu0 0.0
    %2324 = vmatpush.msra.mxu0 0.0
    %2325 = vmatpush.msra.mxu0 0.0
    %2326 = vmatpush.msra.mxu0 0.0
    %2327 = vmatpush.msra.mxu0 0.0
    %2328 = vmatpush.msra.mxu0 %v2312
    %2329 = vmatpush.msra.mxu0 %v2197
    %2330 = vmatmul.f32.gmra.mxu0 %v835
    %v2331 = vpop.f32.mrf.mxu0
    %v2332 = vadd.f32 1e-08, %v2331
    %2333 = vdwg.mxu0
    %v2334 = vrcp.pop %v2332
    %v2335 = vmul.f32 %v2332, %v2334
    %v2336 = vsub.f32 2.0, %v2335
    %v2337 = vmul.f32 %v2334, %v2336
    %v2338 = vmul.f32 %v706, %v2337
    %v2340 = vsel %vm873, %v2338, 0
    %2342 = vmatpush.msra.mxu0 0.0
    %2343 = vmatpush.msra.mxu0 0.0
    %2344 = vmatpush.msra.mxu0 0.0
    %2345 = vmatpush.msra.mxu0 0.0
    %2346 = vmatpush.msra.mxu0 0.0
    %2347 = vmatpush.msra.mxu0 0.0
    %2348 = vmatpush.msra.mxu0 0.0
    %2349 = vmatpush.msra.mxu0 0.0
    %2350 = vmatpush.msra.mxu0 0.0
    %2351 = vmatpush.msra.mxu0 0.0
    %2352 = vmatpush.msra.mxu0 0.0
    %2353 = vmatpush.msra.mxu0 0.0
    %2354 = vmatpush.msra.mxu0 0.0
    %2355 = vmatpush.msra.mxu0 0.0
    %2356 = vmatpush.msra.mxu0 0.0
    %2357 = vmatpush.msra.mxu0 %v2340
    %2358 = vmatmul.f32.gmra.mxu0 %v868
    %v2359 = vpop.f32.mrf.mxu0
    %v2360 = vadd.f32 %v814, %v2359
    %2361 = vmatmul.f32.gmra.mxu0 %v871
    %v2362 = vpop.f32.mrf.mxu0
    %v2363 = vadd.f32 %v819, %v2362
    %2364 = vdwg.mxu0
    %v2365 = vmul.f32 %v2197, %v2360
    %v2366 = vmul.f32 %v2198, %v2363
    %v2368 = vsel %vm837, %v2366, 0
    %2370 = vmatpush.msra.mxu0 0.0
    %2371 = vmatpush.msra.mxu0 0.0
    %2372 = vmatpush.msra.mxu0 0.0
    %2373 = vmatpush.msra.mxu0 0.0
    %2374 = vmatpush.msra.mxu0 0.0
    %2375 = vmatpush.msra.mxu0 0.0
    %2376 = vmatpush.msra.mxu0 0.0
    %2377 = vmatpush.msra.mxu0 0.0
    %2378 = vmatpush.msra.mxu0 0.0
    %2379 = vmatpush.msra.mxu0 0.0
    %2380 = vmatpush.msra.mxu0 0.0
    %2381 = vmatpush.msra.mxu0 0.0
    %2382 = vmatpush.msra.mxu0 0.0
    %2383 = vmatpush.msra.mxu0 0.0
    %2384 = vmatpush.msra.mxu0 %v2368
    %2385 = vmatpush.msra.mxu0 %v2365
    %2386 = vmatmul.f32.gmra.mxu0 %v903
    %v2387 = vpop.f32.mrf.mxu0
    %v2388 = vadd.f32 1e-08, %v2387
    %2389 = vdwg.mxu0
    %v2390 = vrcp.pop %v2388
    %v2391 = vmul.f32 %v2388, %v2390
    %v2392 = vsub.f32 2.0, %v2391
    %v2393 = vmul.f32 %v2390, %v2392
    %v2394 = vmul.f32 %v757, %v2393
    %v2396 = vsel %vm873, %v2394, 0
    %2398 = vmatpush.msra.mxu0 0.0
    %2399 = vmatpush.msra.mxu0 0.0
    %2400 = vmatpush.msra.mxu0 0.0
    %2401 = vmatpush.msra.mxu0 0.0
    %2402 = vmatpush.msra.mxu0 0.0
    %2403 = vmatpush.msra.mxu0 0.0
    %2404 = vmatpush.msra.mxu0 0.0
    %2405 = vmatpush.msra.mxu0 0.0
    %2406 = vmatpush.msra.mxu0 0.0
    %2407 = vmatpush.msra.mxu0 0.0
    %2408 = vmatpush.msra.mxu0 0.0
    %2409 = vmatpush.msra.mxu0 0.0
    %2410 = vmatpush.msra.mxu0 0.0
    %2411 = vmatpush.msra.mxu0 0.0
    %2412 = vmatpush.msra.mxu0 0.0
    %2413 = vmatpush.msra.mxu0 %v2396
    %2414 = vmatmul.f32.gmra.mxu0 %v934
    %v2415 = vpop.f32.mrf.mxu0
    %v2416 = vadd.f32 %v826, %v2415
    %2417 = vmatmul.f32.gmra.mxu0 %v937
    %v2418 = vpop.f32.mrf.mxu0
    %v2419 = vadd.f32 %v831, %v2418
    %2420 = vdwg.mxu0
    %v2421 = vmul.f32 %v2365, %v2416
    %v2422 = vmul.f32 %v2366, %v2419
    %v2424 = vsel %vm837, %v2310, 0
    %2426 = vmatpush.msra.mxu0 0.0
    %2427 = vmatpush.msra.mxu0 0.0
    %2428 = vmatpush.msra.mxu0 0.0
    %2429 = vmatpush.msra.mxu0 0.0
    %2430 = vmatpush.msra.mxu0 0.0
    %2431 = vmatpush.msra.mxu0 0.0
    %2432 = vmatpush.msra.mxu0 0.0
    %2433 = vmatpush.msra.mxu0 0.0
    %2434 = vmatpush.msra.mxu0 0.0
    %2435 = vmatpush.msra.mxu0 0.0
    %2436 = vmatpush.msra.mxu0 0.0
    %2437 = vmatpush.msra.mxu0 0.0
    %2438 = vmatpush.msra.mxu0 0.0
    %2439 = vmatpush.msra.mxu0 0.0
    %2440 = vmatpush.msra.mxu0 %v2424
    %2441 = vmatpush.msra.mxu0 %v2309
    %2442 = vmatmul.f32.gmra.mxu0 %v835
    %v2443 = vpop.f32.mrf.mxu0
    %v2444 = vadd.f32 1e-08, %v2443
    %2445 = vdwg.mxu0
    %v2446 = vrcp.pop %v2444
    %v2447 = vmul.f32 %v2444, %v2446
    %v2448 = vsub.f32 2.0, %v2447
    %v2449 = vmul.f32 %v2446, %v2448
    %v2450 = vmul.f32 %v686, %v2449
    %v2452 = vsel %vm873, %v2450, 0
    %2454 = vmatpush.msra.mxu0 0.0
    %2455 = vmatpush.msra.mxu0 0.0
    %2456 = vmatpush.msra.mxu0 0.0
    %2457 = vmatpush.msra.mxu0 0.0
    %2458 = vmatpush.msra.mxu0 0.0
    %2459 = vmatpush.msra.mxu0 0.0
    %2460 = vmatpush.msra.mxu0 0.0
    %2461 = vmatpush.msra.mxu0 0.0
    %2462 = vmatpush.msra.mxu0 0.0
    %2463 = vmatpush.msra.mxu0 0.0
    %2464 = vmatpush.msra.mxu0 0.0
    %2465 = vmatpush.msra.mxu0 0.0
    %2466 = vmatpush.msra.mxu0 0.0
    %2467 = vmatpush.msra.mxu0 0.0
    %2468 = vmatpush.msra.mxu0 0.0
    %2469 = vmatpush.msra.mxu0 %v2452
    %2470 = vmatmul.f32.gmra.mxu0 %v868
    %v2471 = vpop.f32.mrf.mxu0
    %v2472 = vadd.f32 %v814, %v2471
    %2473 = vmatmul.f32.gmra.mxu0 %v871
    %v2474 = vpop.f32.mrf.mxu0
    %v2475 = vadd.f32 %v819, %v2474
    %2476 = vdwg.mxu0
    %v2477 = vmul.f32 %v2309, %v2472
    %v2478 = vmul.f32 %v2310, %v2475
    %v2480 = vsel %vm837, %v2478, 0
    %2482 = vmatpush.msra.mxu0 0.0
    %2483 = vmatpush.msra.mxu0 0.0
    %2484 = vmatpush.msra.mxu0 0.0
    %2485 = vmatpush.msra.mxu0 0.0
    %2486 = vmatpush.msra.mxu0 0.0
    %2487 = vmatpush.msra.mxu0 0.0
    %2488 = vmatpush.msra.mxu0 0.0
    %2489 = vmatpush.msra.mxu0 0.0
    %2490 = vmatpush.msra.mxu0 0.0
    %2491 = vmatpush.msra.mxu0 0.0
    %2492 = vmatpush.msra.mxu0 0.0
    %2493 = vmatpush.msra.mxu0 0.0
    %2494 = vmatpush.msra.mxu0 0.0
    %2495 = vmatpush.msra.mxu0 0.0
    %2496 = vmatpush.msra.mxu0 %v2480
    %2497 = vmatpush.msra.mxu0 %v2477
    %2498 = vmatmul.f32.gmra.mxu0 %v903
    %v2499 = vpop.f32.mrf.mxu0
    %v2500 = vadd.f32 1e-08, %v2499
    %2501 = vdwg.mxu0
    %v2502 = vrcp.pop %v2500
    %v2503 = vmul.f32 %v2500, %v2502
    %v2504 = vsub.f32 2.0, %v2503
    %v2505 = vmul.f32 %v2502, %v2504
    %v2506 = vmul.f32 %v737, %v2505
    %v2508 = vsel %vm873, %v2506, 0
    %2510 = vmatpush.msra.mxu0 0.0
    %2511 = vmatpush.msra.mxu0 0.0
    %2512 = vmatpush.msra.mxu0 0.0
    %2513 = vmatpush.msra.mxu0 0.0
    %2514 = vmatpush.msra.mxu0 0.0
    %2515 = vmatpush.msra.mxu0 0.0
    %2516 = vmatpush.msra.mxu0 0.0
    %2517 = vmatpush.msra.mxu0 0.0
    %2518 = vmatpush.msra.mxu0 0.0
    %2519 = vmatpush.msra.mxu0 0.0
    %2520 = vmatpush.msra.mxu0 0.0
    %2521 = vmatpush.msra.mxu0 0.0
    %2522 = vmatpush.msra.mxu0 0.0
    %2523 = vmatpush.msra.mxu0 0.0
    %2524 = vmatpush.msra.mxu0 0.0
    %2525 = vmatpush.msra.mxu0 %v2508
    %2526 = vmatmul.f32.gmra.mxu0 %v934
    %v2527 = vpop.f32.mrf.mxu0
    %v2528 = vadd.f32 %v826, %v2527
    %2529 = vmatmul.f32.gmra.mxu0 %v937
    %v2530 = vpop.f32.mrf.mxu0
    %v2531 = vadd.f32 %v831, %v2530
    %2532 = vdwg.mxu0
    %v2533 = vmul.f32 %v2477, %v2528
    %v2534 = vmul.f32 %v2478, %v2531
    %v2536 = vsel %vm837, %v2422, 0
    %2538 = vmatpush.msra.mxu0 0.0
    %2539 = vmatpush.msra.mxu0 0.0
    %2540 = vmatpush.msra.mxu0 0.0
    %2541 = vmatpush.msra.mxu0 0.0
    %2542 = vmatpush.msra.mxu0 0.0
    %2543 = vmatpush.msra.mxu0 0.0
    %2544 = vmatpush.msra.mxu0 0.0
    %2545 = vmatpush.msra.mxu0 0.0
    %2546 = vmatpush.msra.mxu0 0.0
    %2547 = vmatpush.msra.mxu0 0.0
    %2548 = vmatpush.msra.mxu0 0.0
    %2549 = vmatpush.msra.mxu0 0.0
    %2550 = vmatpush.msra.mxu0 0.0
    %2551 = vmatpush.msra.mxu0 0.0
    %2552 = vmatpush.msra.mxu0 %v2536
    %2553 = vmatpush.msra.mxu0 %v2421
    %2554 = vmatmul.f32.gmra.mxu0 %v835
    %v2555 = vpop.f32.mrf.mxu0
    %v2556 = vadd.f32 1e-08, %v2555
    %2557 = vdwg.mxu0
    %v2558 = vrcp.pop %v2556
    %v2559 = vmul.f32 %v2556, %v2558
    %v2560 = vsub.f32 2.0, %v2559
    %v2561 = vmul.f32 %v2558, %v2560
    %v2562 = vmul.f32 %v706, %v2561
    %v2564 = vsel %vm873, %v2562, 0
    %2566 = vmatpush.msra.mxu0 0.0
    %2567 = vmatpush.msra.mxu0 0.0
    %2568 = vmatpush.msra.mxu0 0.0
    %2569 = vmatpush.msra.mxu0 0.0
    %2570 = vmatpush.msra.mxu0 0.0
    %2571 = vmatpush.msra.mxu0 0.0
    %2572 = vmatpush.msra.mxu0 0.0
    %2573 = vmatpush.msra.mxu0 0.0
    %2574 = vmatpush.msra.mxu0 0.0
    %2575 = vmatpush.msra.mxu0 0.0
    %2576 = vmatpush.msra.mxu0 0.0
    %2577 = vmatpush.msra.mxu0 0.0
    %2578 = vmatpush.msra.mxu0 0.0
    %2579 = vmatpush.msra.mxu0 0.0
    %2580 = vmatpush.msra.mxu0 0.0
    %2581 = vmatpush.msra.mxu0 %v2564
    %2582 = vmatmul.f32.gmra.mxu0 %v868
    %v2583 = vpop.f32.mrf.mxu0
    %v2584 = vadd.f32 %v814, %v2583
    %2585 = vmatmul.f32.gmra.mxu0 %v871
    %v2586 = vpop.f32.mrf.mxu0
    %v2587 = vadd.f32 %v819, %v2586
    %2588 = vdwg.mxu0
    %v2589 = vmul.f32 %v2421, %v2584
    %v2590 = vmul.f32 %v2422, %v2587
    %v2592 = vsel %vm837, %v2590, 0
    %2594 = vmatpush.msra.mxu0 0.0
    %2595 = vmatpush.msra.mxu0 0.0
    %2596 = vmatpush.msra.mxu0 0.0
    %2597 = vmatpush.msra.mxu0 0.0
    %2598 = vmatpush.msra.mxu0 0.0
    %2599 = vmatpush.msra.mxu0 0.0
    %2600 = vmatpush.msra.mxu0 0.0
    %2601 = vmatpush.msra.mxu0 0.0
    %2602 = vmatpush.msra.mxu0 0.0
    %2603 = vmatpush.msra.mxu0 0.0
    %2604 = vmatpush.msra.mxu0 0.0
    %2605 = vmatpush.msra.mxu0 0.0
    %2606 = vmatpush.msra.mxu0 0.0
    %2607 = vmatpush.msra.mxu0 0.0
    %2608 = vmatpush.msra.mxu0 %v2592
    %2609 = vmatpush.msra.mxu0 %v2589
    %2610 = vmatmul.f32.gmra.mxu0 %v903
    %v2611 = vpop.f32.mrf.mxu0
    %v2612 = vadd.f32 1e-08, %v2611
    %2613 = vdwg.mxu0
    %v2614 = vrcp.pop %v2612
    %v2615 = vmul.f32 %v2612, %v2614
    %v2616 = vsub.f32 2.0, %v2615
    %v2617 = vmul.f32 %v2614, %v2616
    %v2618 = vmul.f32 %v757, %v2617
    %v2620 = vsel %vm873, %v2618, 0
    %2622 = vmatpush.msra.mxu0 0.0
    %2623 = vmatpush.msra.mxu0 0.0
    %2624 = vmatpush.msra.mxu0 0.0
    %2625 = vmatpush.msra.mxu0 0.0
    %2626 = vmatpush.msra.mxu0 0.0
    %2627 = vmatpush.msra.mxu0 0.0
    %2628 = vmatpush.msra.mxu0 0.0
    %2629 = vmatpush.msra.mxu0 0.0
    %2630 = vmatpush.msra.mxu0 0.0
    %2631 = vmatpush.msra.mxu0 0.0
    %2632 = vmatpush.msra.mxu0 0.0
    %2633 = vmatpush.msra.mxu0 0.0
    %2634 = vmatpush.msra.mxu0 0.0
    %2635 = vmatpush.msra.mxu0 0.0
    %2636 = vmatpush.msra.mxu0 0.0
    %2637 = vmatpush.msra.mxu0 %v2620
    %2638 = vmatmul.f32.gmra.mxu0 %v934
    %v2639 = vpop.f32.mrf.mxu0
    %v2640 = vadd.f32 %v826, %v2639
    %2641 = vmatmul.f32.gmra.mxu0 %v937
    %v2642 = vpop.f32.mrf.mxu0
    %v2643 = vadd.f32 %v831, %v2642
    %2644 = vdwg.mxu0
    %v2645 = vmul.f32 %v2589, %v2640
    %v2646 = vmul.f32 %v2590, %v2643
    %v2648 = vsel %vm837, %v2534, 0
    %2650 = vmatpush.msra.mxu0 0.0
    %2651 = vmatpush.msra.mxu0 0.0
    %2652 = vmatpush.msra.mxu0 0.0
    %2653 = vmatpush.msra.mxu0 0.0
    %2654 = vmatpush.msra.mxu0 0.0
    %2655 = vmatpush.msra.mxu0 0.0
    %2656 = vmatpush.msra.mxu0 0.0
    %2657 = vmatpush.msra.mxu0 0.0
    %2658 = vmatpush.msra.mxu0 0.0
    %2659 = vmatpush.msra.mxu0 0.0
    %2660 = vmatpush.msra.mxu0 0.0
    %2661 = vmatpush.msra.mxu0 0.0
    %2662 = vmatpush.msra.mxu0 0.0
    %2663 = vmatpush.msra.mxu0 0.0
    %2664 = vmatpush.msra.mxu0 %v2648
    %2665 = vmatpush.msra.mxu0 %v2533
    %2666 = vmatmul.f32.gmra.mxu0 %v835
    %v2667 = vpop.f32.mrf.mxu0
    %v2668 = vadd.f32 1e-08, %v2667
    %2669 = vdwg.mxu0
    %v2670 = vrcp.pop %v2668
    %v2671 = vmul.f32 %v2668, %v2670
    %v2672 = vsub.f32 2.0, %v2671
    %v2673 = vmul.f32 %v2670, %v2672
    %v2674 = vmul.f32 %v686, %v2673
    %v2676 = vsel %vm873, %v2674, 0
    %2678 = vmatpush.msra.mxu0 0.0
    %2679 = vmatpush.msra.mxu0 0.0
    %2680 = vmatpush.msra.mxu0 0.0
    %2681 = vmatpush.msra.mxu0 0.0
    %2682 = vmatpush.msra.mxu0 0.0
    %2683 = vmatpush.msra.mxu0 0.0
    %2684 = vmatpush.msra.mxu0 0.0
    %2685 = vmatpush.msra.mxu0 0.0
    %2686 = vmatpush.msra.mxu0 0.0
    %2687 = vmatpush.msra.mxu0 0.0
    %2688 = vmatpush.msra.mxu0 0.0
    %2689 = vmatpush.msra.mxu0 0.0
    %2690 = vmatpush.msra.mxu0 0.0
    %2691 = vmatpush.msra.mxu0 0.0
    %2692 = vmatpush.msra.mxu0 0.0
    %2693 = vmatpush.msra.mxu0 %v2676
    %2694 = vmatmul.f32.gmra.mxu0 %v868
    %v2695 = vpop.f32.mrf.mxu0
    %v2696 = vadd.f32 %v814, %v2695
    %2697 = vmatmul.f32.gmra.mxu0 %v871
    %v2698 = vpop.f32.mrf.mxu0
    %v2699 = vadd.f32 %v819, %v2698
    %2700 = vdwg.mxu0
    %v2701 = vmul.f32 %v2533, %v2696
    %v2702 = vmul.f32 %v2534, %v2699
    %v2704 = vsel %vm837, %v2702, 0
    %2706 = vmatpush.msra.mxu0 0.0
    %2707 = vmatpush.msra.mxu0 0.0
    %2708 = vmatpush.msra.mxu0 0.0
    %2709 = vmatpush.msra.mxu0 0.0
    %2710 = vmatpush.msra.mxu0 0.0
    %2711 = vmatpush.msra.mxu0 0.0
    %2712 = vmatpush.msra.mxu0 0.0
    %2713 = vmatpush.msra.mxu0 0.0
    %2714 = vmatpush.msra.mxu0 0.0
    %2715 = vmatpush.msra.mxu0 0.0
    %2716 = vmatpush.msra.mxu0 0.0
    %2717 = vmatpush.msra.mxu0 0.0
    %2718 = vmatpush.msra.mxu0 0.0
    %2719 = vmatpush.msra.mxu0 0.0
    %2720 = vmatpush.msra.mxu0 %v2704
    %2721 = vmatpush.msra.mxu0 %v2701
    %2722 = vmatmul.f32.gmra.mxu0 %v903
    %v2723 = vpop.f32.mrf.mxu0
    %v2724 = vadd.f32 1e-08, %v2723
    %2725 = vdwg.mxu0
    %v2726 = vrcp.pop %v2724
    %v2727 = vmul.f32 %v2724, %v2726
    %v2728 = vsub.f32 2.0, %v2727
    %v2729 = vmul.f32 %v2726, %v2728
    %v2730 = vmul.f32 %v737, %v2729
    %v2732 = vsel %vm873, %v2730, 0
    %2734 = vmatpush.msra.mxu0 0.0
    %2735 = vmatpush.msra.mxu0 0.0
    %2736 = vmatpush.msra.mxu0 0.0
    %2737 = vmatpush.msra.mxu0 0.0
    %2738 = vmatpush.msra.mxu0 0.0
    %2739 = vmatpush.msra.mxu0 0.0
    %2740 = vmatpush.msra.mxu0 0.0
    %2741 = vmatpush.msra.mxu0 0.0
    %2742 = vmatpush.msra.mxu0 0.0
    %2743 = vmatpush.msra.mxu0 0.0
    %2744 = vmatpush.msra.mxu0 0.0
    %2745 = vmatpush.msra.mxu0 0.0
    %2746 = vmatpush.msra.mxu0 0.0
    %2747 = vmatpush.msra.mxu0 0.0
    %2748 = vmatpush.msra.mxu0 0.0
    %2749 = vmatpush.msra.mxu0 %v2732
    %2750 = vmatmul.f32.gmra.mxu0 %v934
    %v2751 = vpop.f32.mrf.mxu0
    %v2752 = vadd.f32 %v826, %v2751
    %2753 = vmatmul.f32.gmra.mxu0 %v937
    %v2754 = vpop.f32.mrf.mxu0
    %v2755 = vadd.f32 %v831, %v2754
    %2756 = vdwg.mxu0
    %v2757 = vmul.f32 %v2701, %v2752
    %v2758 = vmul.f32 %v2702, %v2755
    %v2760 = vsel %vm837, %v2646, 0
    %2762 = vmatpush.msra.mxu0 0.0
    %2763 = vmatpush.msra.mxu0 0.0
    %2764 = vmatpush.msra.mxu0 0.0
    %2765 = vmatpush.msra.mxu0 0.0
    %2766 = vmatpush.msra.mxu0 0.0
    %2767 = vmatpush.msra.mxu0 0.0
    %2768 = vmatpush.msra.mxu0 0.0
    %2769 = vmatpush.msra.mxu0 0.0
    %2770 = vmatpush.msra.mxu0 0.0
    %2771 = vmatpush.msra.mxu0 0.0
    %2772 = vmatpush.msra.mxu0 0.0
    %2773 = vmatpush.msra.mxu0 0.0
    %2774 = vmatpush.msra.mxu0 0.0
    %2775 = vmatpush.msra.mxu0 0.0
    %2776 = vmatpush.msra.mxu0 %v2760
    %2777 = vmatpush.msra.mxu0 %v2645
    %2778 = vmatmul.f32.gmra.mxu0 %v835
    %v2779 = vpop.f32.mrf.mxu0
    %v2780 = vadd.f32 1e-08, %v2779
    %2781 = vdwg.mxu0
    %v2782 = vrcp.pop %v2780
    %v2783 = vmul.f32 %v2780, %v2782
    %v2784 = vsub.f32 2.0, %v2783
    %v2785 = vmul.f32 %v2782, %v2784
    %v2786 = vmul.f32 %v706, %v2785
    %v2788 = vsel %vm873, %v2786, 0
    %2790 = vmatpush.msra.mxu0 0.0
    %2791 = vmatpush.msra.mxu0 0.0
    %2792 = vmatpush.msra.mxu0 0.0
    %2793 = vmatpush.msra.mxu0 0.0
    %2794 = vmatpush.msra.mxu0 0.0
    %2795 = vmatpush.msra.mxu0 0.0
    %2796 = vmatpush.msra.mxu0 0.0
    %2797 = vmatpush.msra.mxu0 0.0
    %2798 = vmatpush.msra.mxu0 0.0
    %2799 = vmatpush.msra.mxu0 0.0
    %2800 = vmatpush.msra.mxu0 0.0
    %2801 = vmatpush.msra.mxu0 0.0
    %2802 = vmatpush.msra.mxu0 0.0
    %2803 = vmatpush.msra.mxu0 0.0
    %2804 = vmatpush.msra.mxu0 0.0
    %2805 = vmatpush.msra.mxu0 %v2788
    %2806 = vmatmul.f32.gmra.mxu0 %v868
    %v2807 = vpop.f32.mrf.mxu0
    %v2808 = vadd.f32 %v814, %v2807
    %2809 = vmatmul.f32.gmra.mxu0 %v871
    %v2810 = vpop.f32.mrf.mxu0
    %v2811 = vadd.f32 %v819, %v2810
    %2812 = vdwg.mxu0
    %v2813 = vmul.f32 %v2645, %v2808
    %v2814 = vmul.f32 %v2646, %v2811
    %v2816 = vsel %vm837, %v2814, 0
    %2818 = vmatpush.msra.mxu0 0.0
    %2819 = vmatpush.msra.mxu0 0.0
    %2820 = vmatpush.msra.mxu0 0.0
    %2821 = vmatpush.msra.mxu0 0.0
    %2822 = vmatpush.msra.mxu0 0.0
    %2823 = vmatpush.msra.mxu0 0.0
    %2824 = vmatpush.msra.mxu0 0.0
    %2825 = vmatpush.msra.mxu0 0.0
    %2826 = vmatpush.msra.mxu0 0.0
    %2827 = vmatpush.msra.mxu0 0.0
    %2828 = vmatpush.msra.mxu0 0.0
    %2829 = vmatpush.msra.mxu0 0.0
    %2830 = vmatpush.msra.mxu0 0.0
    %2831 = vmatpush.msra.mxu0 0.0
    %2832 = vmatpush.msra.mxu0 %v2816
    %2833 = vmatpush.msra.mxu0 %v2813
    %2834 = vmatmul.f32.gmra.mxu0 %v903
    %v2835 = vpop.f32.mrf.mxu0
    %v2836 = vadd.f32 1e-08, %v2835
    %2837 = vdwg.mxu0
    %v2838 = vrcp.pop %v2836
    %v2839 = vmul.f32 %v2836, %v2838
    %v2840 = vsub.f32 2.0, %v2839
    %v2841 = vmul.f32 %v2838, %v2840
    %v2842 = vmul.f32 %v757, %v2841
    %v2844 = vsel %vm873, %v2842, 0
    %2846 = vmatpush.msra.mxu0 0.0
    %2847 = vmatpush.msra.mxu0 0.0
    %2848 = vmatpush.msra.mxu0 0.0
    %2849 = vmatpush.msra.mxu0 0.0
    %2850 = vmatpush.msra.mxu0 0.0
    %2851 = vmatpush.msra.mxu0 0.0
    %2852 = vmatpush.msra.mxu0 0.0
    %2853 = vmatpush.msra.mxu0 0.0
    %2854 = vmatpush.msra.mxu0 0.0
    %2855 = vmatpush.msra.mxu0 0.0
    %2856 = vmatpush.msra.mxu0 0.0
    %2857 = vmatpush.msra.mxu0 0.0
    %2858 = vmatpush.msra.mxu0 0.0
    %2859 = vmatpush.msra.mxu0 0.0
    %2860 = vmatpush.msra.mxu0 0.0
    %2861 = vmatpush.msra.mxu0 %v2844
    %2862 = vmatmul.f32.gmra.mxu0 %v934
    %v2863 = vpop.f32.mrf.mxu0
    %v2864 = vadd.f32 %v826, %v2863
    %2865 = vmatmul.f32.gmra.mxu0 %v937
    %v2866 = vpop.f32.mrf.mxu0
    %v2867 = vadd.f32 %v831, %v2866
    %2868 = vdwg.mxu0
    %v2869 = vmul.f32 %v2813, %v2864
    %v2870 = vmul.f32 %v2814, %v2867
    %v2872 = vsel %vm837, %v2758, 0
    %2874 = vmatpush.msra.mxu0 0.0
    %2875 = vmatpush.msra.mxu0 0.0
    %2876 = vmatpush.msra.mxu0 0.0
    %2877 = vmatpush.msra.mxu0 0.0
    %2878 = vmatpush.msra.mxu0 0.0
    %2879 = vmatpush.msra.mxu0 0.0
    %2880 = vmatpush.msra.mxu0 0.0
    %2881 = vmatpush.msra.mxu0 0.0
    %2882 = vmatpush.msra.mxu0 0.0
    %2883 = vmatpush.msra.mxu0 0.0
    %2884 = vmatpush.msra.mxu0 0.0
    %2885 = vmatpush.msra.mxu0 0.0
    %2886 = vmatpush.msra.mxu0 0.0
    %2887 = vmatpush.msra.mxu0 0.0
    %2888 = vmatpush.msra.mxu0 %v2872
    %2889 = vmatpush.msra.mxu0 %v2757
    %2890 = vmatmul.f32.gmra.mxu0 %v835
    %v2891 = vpop.f32.mrf.mxu0
    %v2892 = vadd.f32 1e-08, %v2891
    %2893 = vdwg.mxu0
    %v2894 = vrcp.pop %v2892
    %v2895 = vmul.f32 %v2892, %v2894
    %v2896 = vsub.f32 2.0, %v2895
    %v2897 = vmul.f32 %v2894, %v2896
    %v2898 = vmul.f32 %v686, %v2897
    %v2900 = vsel %vm873, %v2898, 0
    %2902 = vmatpush.msra.mxu0 0.0
    %2903 = vmatpush.msra.mxu0 0.0
    %2904 = vmatpush.msra.mxu0 0.0
    %2905 = vmatpush.msra.mxu0 0.0
    %2906 = vmatpush.msra.mxu0 0.0
    %2907 = vmatpush.msra.mxu0 0.0
    %2908 = vmatpush.msra.mxu0 0.0
    %2909 = vmatpush.msra.mxu0 0.0
    %2910 = vmatpush.msra.mxu0 0.0
    %2911 = vmatpush.msra.mxu0 0.0
    %2912 = vmatpush.msra.mxu0 0.0
    %2913 = vmatpush.msra.mxu0 0.0
    %2914 = vmatpush.msra.mxu0 0.0
    %2915 = vmatpush.msra.mxu0 0.0
    %2916 = vmatpush.msra.mxu0 0.0
    %2917 = vmatpush.msra.mxu0 %v2900
    %2918 = vmatmul.f32.gmra.mxu0 %v868
    %v2919 = vpop.f32.mrf.mxu0
    %v2920 = vadd.f32 %v814, %v2919
    %2921 = vmatmul.f32.gmra.mxu0 %v871
    %v2922 = vpop.f32.mrf.mxu0
    %v2923 = vadd.f32 %v819, %v2922
    %2924 = vdwg.mxu0
    %v2925 = vmul.f32 %v2757, %v2920
    %v2926 = vmul.f32 %v2758, %v2923
    %v2928 = vsel %vm837, %v2926, 0
    %2930 = vmatpush.msra.mxu0 0.0
    %2931 = vmatpush.msra.mxu0 0.0
    %2932 = vmatpush.msra.mxu0 0.0
    %2933 = vmatpush.msra.mxu0 0.0
    %2934 = vmatpush.msra.mxu0 0.0
    %2935 = vmatpush.msra.mxu0 0.0
    %2936 = vmatpush.msra.mxu0 0.0
    %2937 = vmatpush.msra.mxu0 0.0
    %2938 = vmatpush.msra.mxu0 0.0
    %2939 = vmatpush.msra.mxu0 0.0
    %2940 = vmatpush.msra.mxu0 0.0
    %2941 = vmatpush.msra.mxu0 0.0
    %2942 = vmatpush.msra.mxu0 0.0
    %2943 = vmatpush.msra.mxu0 0.0
    %2944 = vmatpush.msra.mxu0 %v2928
    %2945 = vmatpush.msra.mxu0 %v2925
    %2946 = vmatmul.f32.gmra.mxu0 %v903
    %v2947 = vpop.f32.mrf.mxu0
    %v2948 = vadd.f32 1e-08, %v2947
    %2949 = vdwg.mxu0
    %v2950 = vrcp.pop %v2948
    %v2951 = vmul.f32 %v2948, %v2950
    %v2952 = vsub.f32 2.0, %v2951
    %v2953 = vmul.f32 %v2950, %v2952
    %v2954 = vmul.f32 %v737, %v2953
    %v2956 = vsel %vm873, %v2954, 0
    %2958 = vmatpush.msra.mxu0 0.0
    %2959 = vmatpush.msra.mxu0 0.0
    %2960 = vmatpush.msra.mxu0 0.0
    %2961 = vmatpush.msra.mxu0 0.0
    %2962 = vmatpush.msra.mxu0 0.0
    %2963 = vmatpush.msra.mxu0 0.0
    %2964 = vmatpush.msra.mxu0 0.0
    %2965 = vmatpush.msra.mxu0 0.0
    %2966 = vmatpush.msra.mxu0 0.0
    %2967 = vmatpush.msra.mxu0 0.0
    %2968 = vmatpush.msra.mxu0 0.0
    %2969 = vmatpush.msra.mxu0 0.0
    %2970 = vmatpush.msra.mxu0 0.0
    %2971 = vmatpush.msra.mxu0 0.0
    %2972 = vmatpush.msra.mxu0 0.0
    %2973 = vmatpush.msra.mxu0 %v2956
    %2974 = vmatmul.f32.gmra.mxu0 %v934
    %v2975 = vpop.f32.mrf.mxu0
    %v2976 = vadd.f32 %v826, %v2975
    %2977 = vmatmul.f32.gmra.mxu0 %v937
    %v2978 = vpop.f32.mrf.mxu0
    %v2979 = vadd.f32 %v831, %v2978
    %2980 = vdwg.mxu0
    %v2981 = vmul.f32 %v2925, %v2976
    %v2982 = vmul.f32 %v2926, %v2979
    %v2984 = vsel %vm837, %v2870, 0
    %2986 = vmatpush.msra.mxu0 0.0
    %2987 = vmatpush.msra.mxu0 0.0
    %2988 = vmatpush.msra.mxu0 0.0
    %2989 = vmatpush.msra.mxu0 0.0
    %2990 = vmatpush.msra.mxu0 0.0
    %2991 = vmatpush.msra.mxu0 0.0
    %2992 = vmatpush.msra.mxu0 0.0
    %2993 = vmatpush.msra.mxu0 0.0
    %2994 = vmatpush.msra.mxu0 0.0
    %2995 = vmatpush.msra.mxu0 0.0
    %2996 = vmatpush.msra.mxu0 0.0
    %2997 = vmatpush.msra.mxu0 0.0
    %2998 = vmatpush.msra.mxu0 0.0
    %2999 = vmatpush.msra.mxu0 0.0
    %3000 = vmatpush.msra.mxu0 %v2984
    %3001 = vmatpush.msra.mxu0 %v2869
    %3002 = vmatmul.f32.gmra.mxu0 %v835
    %v3003 = vpop.f32.mrf.mxu0
    %v3004 = vadd.f32 1e-08, %v3003
    %3005 = vdwg.mxu0
    %v3006 = vrcp.pop %v3004
    %v3007 = vmul.f32 %v3004, %v3006
    %v3008 = vsub.f32 2.0, %v3007
    %v3009 = vmul.f32 %v3006, %v3008
    %v3010 = vmul.f32 %v706, %v3009
    %v3012 = vsel %vm873, %v3010, 0
    %3014 = vmatpush.msra.mxu0 0.0
    %3015 = vmatpush.msra.mxu0 0.0
    %3016 = vmatpush.msra.mxu0 0.0
    %3017 = vmatpush.msra.mxu0 0.0
    %3018 = vmatpush.msra.mxu0 0.0
    %3019 = vmatpush.msra.mxu0 0.0
    %3020 = vmatpush.msra.mxu0 0.0
    %3021 = vmatpush.msra.mxu0 0.0
    %3022 = vmatpush.msra.mxu0 0.0
    %3023 = vmatpush.msra.mxu0 0.0
    %3024 = vmatpush.msra.mxu0 0.0
    %3025 = vmatpush.msra.mxu0 0.0
    %3026 = vmatpush.msra.mxu0 0.0
    %3027 = vmatpush.msra.mxu0 0.0
    %3028 = vmatpush.msra.mxu0 0.0
    %3029 = vmatpush.msra.mxu0 %v3012
    %3030 = vmatmul.f32.gmra.mxu0 %v868
    %v3031 = vpop.f32.mrf.mxu0
    %v3032 = vadd.f32 %v814, %v3031
    %3033 = vmatmul.f32.gmra.mxu0 %v871
    %v3034 = vpop.f32.mrf.mxu0
    %v3035 = vadd.f32 %v819, %v3034
    %3036 = vdwg.mxu0
    %v3037 = vmul.f32 %v2869, %v3032
    %v3038 = vmul.f32 %v2870, %v3035
    %v3040 = vsel %vm837, %v3038, 0
    %3042 = vmatpush.msra.mxu0 0.0
    %3043 = vmatpush.msra.mxu0 0.0
    %3044 = vmatpush.msra.mxu0 0.0
    %3045 = vmatpush.msra.mxu0 0.0
    %3046 = vmatpush.msra.mxu0 0.0
    %3047 = vmatpush.msra.mxu0 0.0
    %3048 = vmatpush.msra.mxu0 0.0
    %3049 = vmatpush.msra.mxu0 0.0
    %3050 = vmatpush.msra.mxu0 0.0
    %3051 = vmatpush.msra.mxu0 0.0
    %3052 = vmatpush.msra.mxu0 0.0
    %3053 = vmatpush.msra.mxu0 0.0
    %3054 = vmatpush.msra.mxu0 0.0
    %3055 = vmatpush.msra.mxu0 0.0
    %3056 = vmatpush.msra.mxu0 %v3040
    %3057 = vmatpush.msra.mxu0 %v3037
    %3058 = vmatmul.f32.gmra.mxu0 %v903
    %v3059 = vpop.f32.mrf.mxu0
    %v3060 = vadd.f32 1e-08, %v3059
    %3061 = vdwg.mxu0
    %v3062 = vrcp.pop %v3060
    %v3063 = vmul.f32 %v3060, %v3062
    %v3064 = vsub.f32 2.0, %v3063
    %v3065 = vmul.f32 %v3062, %v3064
    %v3066 = vmul.f32 %v757, %v3065
    %v3068 = vsel %vm873, %v3066, 0
    %3070 = vmatpush.msra.mxu0 0.0
    %3071 = vmatpush.msra.mxu0 0.0
    %3072 = vmatpush.msra.mxu0 0.0
    %3073 = vmatpush.msra.mxu0 0.0
    %3074 = vmatpush.msra.mxu0 0.0
    %3075 = vmatpush.msra.mxu0 0.0
    %3076 = vmatpush.msra.mxu0 0.0
    %3077 = vmatpush.msra.mxu0 0.0
    %3078 = vmatpush.msra.mxu0 0.0
    %3079 = vmatpush.msra.mxu0 0.0
    %3080 = vmatpush.msra.mxu0 0.0
    %3081 = vmatpush.msra.mxu0 0.0
    %3082 = vmatpush.msra.mxu0 0.0
    %3083 = vmatpush.msra.mxu0 0.0
    %3084 = vmatpush.msra.mxu0 0.0
    %3085 = vmatpush.msra.mxu0 %v3068
    %3086 = vmatmul.f32.gmra.mxu0 %v934
    %v3087 = vpop.f32.mrf.mxu0
    %v3088 = vadd.f32 %v826, %v3087
    %3089 = vmatmul.f32.gmra.mxu0 %v937
    %v3090 = vpop.f32.mrf.mxu0
    %v3091 = vadd.f32 %v831, %v3090
    %3092 = vdwg.mxu0
    %v3093 = vmul.f32 %v3037, %v3088
    %v3094 = vmul.f32 %v3038, %v3091
    %v3096 = vsel %vm837, %v2982, 0
    %3098 = vmatpush.msra.mxu0 0.0
    %3099 = vmatpush.msra.mxu0 0.0
    %3100 = vmatpush.msra.mxu0 0.0
    %3101 = vmatpush.msra.mxu0 0.0
    %3102 = vmatpush.msra.mxu0 0.0
    %3103 = vmatpush.msra.mxu0 0.0
    %3104 = vmatpush.msra.mxu0 0.0
    %3105 = vmatpush.msra.mxu0 0.0
    %3106 = vmatpush.msra.mxu0 0.0
    %3107 = vmatpush.msra.mxu0 0.0
    %3108 = vmatpush.msra.mxu0 0.0
    %3109 = vmatpush.msra.mxu0 0.0
    %3110 = vmatpush.msra.mxu0 0.0
    %3111 = vmatpush.msra.mxu0 0.0
    %3112 = vmatpush.msra.mxu0 %v3096
    %3113 = vmatpush.msra.mxu0 %v2981
    %3114 = vmatmul.f32.gmra.mxu0 %v835
    %v3115 = vpop.f32.mrf.mxu0
    %v3116 = vadd.f32 1e-08, %v3115
    %3117 = vdwg.mxu0
    %v3118 = vrcp.pop %v3116
    %v3119 = vmul.f32 %v3116, %v3118
    %v3120 = vsub.f32 2.0, %v3119
    %v3121 = vmul.f32 %v3118, %v3120
    %v3122 = vmul.f32 %v686, %v3121
    %v3124 = vsel %vm873, %v3122, 0
    %3126 = vmatpush.msra.mxu0 0.0
    %3127 = vmatpush.msra.mxu0 0.0
    %3128 = vmatpush.msra.mxu0 0.0
    %3129 = vmatpush.msra.mxu0 0.0
    %3130 = vmatpush.msra.mxu0 0.0
    %3131 = vmatpush.msra.mxu0 0.0
    %3132 = vmatpush.msra.mxu0 0.0
    %3133 = vmatpush.msra.mxu0 0.0
    %3134 = vmatpush.msra.mxu0 0.0
    %3135 = vmatpush.msra.mxu0 0.0
    %3136 = vmatpush.msra.mxu0 0.0
    %3137 = vmatpush.msra.mxu0 0.0
    %3138 = vmatpush.msra.mxu0 0.0
    %3139 = vmatpush.msra.mxu0 0.0
    %3140 = vmatpush.msra.mxu0 0.0
    %3141 = vmatpush.msra.mxu0 %v3124
    %3142 = vmatmul.f32.gmra.mxu0 %v868
    %v3143 = vpop.f32.mrf.mxu0
    %v3144 = vadd.f32 %v814, %v3143
    %3145 = vmatmul.f32.gmra.mxu0 %v871
    %v3146 = vpop.f32.mrf.mxu0
    %v3147 = vadd.f32 %v819, %v3146
    %3148 = vdwg.mxu0
    %v3149 = vmul.f32 %v2981, %v3144
    %v3150 = vmul.f32 %v2982, %v3147
    %v3152 = vsel %vm837, %v3150, 0
    %3154 = vmatpush.msra.mxu0 0.0
    %3155 = vmatpush.msra.mxu0 0.0
    %3156 = vmatpush.msra.mxu0 0.0
    %3157 = vmatpush.msra.mxu0 0.0
    %3158 = vmatpush.msra.mxu0 0.0
    %3159 = vmatpush.msra.mxu0 0.0
    %3160 = vmatpush.msra.mxu0 0.0
    %3161 = vmatpush.msra.mxu0 0.0
    %3162 = vmatpush.msra.mxu0 0.0
    %3163 = vmatpush.msra.mxu0 0.0
    %3164 = vmatpush.msra.mxu0 0.0
    %3165 = vmatpush.msra.mxu0 0.0
    %3166 = vmatpush.msra.mxu0 0.0
    %3167 = vmatpush.msra.mxu0 0.0
    %3168 = vmatpush.msra.mxu0 %v3152
    %3169 = vmatpush.msra.mxu0 %v3149
    %3170 = vmatmul.f32.gmra.mxu0 %v903
    %v3171 = vpop.f32.mrf.mxu0
    %v3172 = vadd.f32 1e-08, %v3171
    %3173 = vdwg.mxu0
    %v3174 = vrcp.pop %v3172
    %v3175 = vmul.f32 %v3172, %v3174
    %v3176 = vsub.f32 2.0, %v3175
    %v3177 = vmul.f32 %v3174, %v3176
    %v3178 = vmul.f32 %v737, %v3177
    %v3180 = vsel %vm873, %v3178, 0
    %3182 = vmatpush.msra.mxu0 0.0
    %3183 = vmatpush.msra.mxu0 0.0
    %3184 = vmatpush.msra.mxu0 0.0
    %3185 = vmatpush.msra.mxu0 0.0
    %3186 = vmatpush.msra.mxu0 0.0
    %3187 = vmatpush.msra.mxu0 0.0
    %3188 = vmatpush.msra.mxu0 0.0
    %3189 = vmatpush.msra.mxu0 0.0
    %3190 = vmatpush.msra.mxu0 0.0
    %3191 = vmatpush.msra.mxu0 0.0
    %3192 = vmatpush.msra.mxu0 0.0
    %3193 = vmatpush.msra.mxu0 0.0
    %3194 = vmatpush.msra.mxu0 0.0
    %3195 = vmatpush.msra.mxu0 0.0
    %3196 = vmatpush.msra.mxu0 0.0
    %3197 = vmatpush.msra.mxu0 %v3180
    %3198 = vmatmul.f32.gmra.mxu0 %v934
    %v3199 = vpop.f32.mrf.mxu0
    %v3200 = vadd.f32 %v826, %v3199
    %3201 = vmatmul.f32.gmra.mxu0 %v937
    %v3202 = vpop.f32.mrf.mxu0
    %v3203 = vadd.f32 %v831, %v3202
    %3204 = vdwg.mxu0
    %v3205 = vmul.f32 %v3149, %v3200
    %v3206 = vmul.f32 %v3150, %v3203
    %v3208 = vsel %vm837, %v3094, 0
    %3210 = vmatpush.msra.mxu0 0.0
    %3211 = vmatpush.msra.mxu0 0.0
    %3212 = vmatpush.msra.mxu0 0.0
    %3213 = vmatpush.msra.mxu0 0.0
    %3214 = vmatpush.msra.mxu0 0.0
    %3215 = vmatpush.msra.mxu0 0.0
    %3216 = vmatpush.msra.mxu0 0.0
    %3217 = vmatpush.msra.mxu0 0.0
    %3218 = vmatpush.msra.mxu0 0.0
    %3219 = vmatpush.msra.mxu0 0.0
    %3220 = vmatpush.msra.mxu0 0.0
    %3221 = vmatpush.msra.mxu0 0.0
    %3222 = vmatpush.msra.mxu0 0.0
    %3223 = vmatpush.msra.mxu0 0.0
    %3224 = vmatpush.msra.mxu0 %v3208
    %3225 = vmatpush.msra.mxu0 %v3093
    %3226 = vmatmul.f32.gmra.mxu0 %v835
    %v3227 = vpop.f32.mrf.mxu0
    %v3228 = vadd.f32 1e-08, %v3227
    %3229 = vdwg.mxu0
    %v3230 = vrcp.pop %v3228
    %v3231 = vmul.f32 %v3228, %v3230
    %v3232 = vsub.f32 2.0, %v3231
    %v3233 = vmul.f32 %v3230, %v3232
    %v3234 = vmul.f32 %v706, %v3233
    %v3236 = vsel %vm873, %v3234, 0
    %3238 = vmatpush.msra.mxu0 0.0
    %3239 = vmatpush.msra.mxu0 0.0
    %3240 = vmatpush.msra.mxu0 0.0
    %3241 = vmatpush.msra.mxu0 0.0
    %3242 = vmatpush.msra.mxu0 0.0
    %3243 = vmatpush.msra.mxu0 0.0
    %3244 = vmatpush.msra.mxu0 0.0
    %3245 = vmatpush.msra.mxu0 0.0
    %3246 = vmatpush.msra.mxu0 0.0
    %3247 = vmatpush.msra.mxu0 0.0
    %3248 = vmatpush.msra.mxu0 0.0
    %3249 = vmatpush.msra.mxu0 0.0
    %3250 = vmatpush.msra.mxu0 0.0
    %3251 = vmatpush.msra.mxu0 0.0
    %3252 = vmatpush.msra.mxu0 0.0
    %3253 = vmatpush.msra.mxu0 %v3236
    %3254 = vmatmul.f32.gmra.mxu0 %v868
    %v3255 = vpop.f32.mrf.mxu0
    %v3256 = vadd.f32 %v814, %v3255
    %3257 = vmatmul.f32.gmra.mxu0 %v871
    %v3258 = vpop.f32.mrf.mxu0
    %v3259 = vadd.f32 %v819, %v3258
    %3260 = vdwg.mxu0
    %v3261 = vmul.f32 %v3093, %v3256
    %v3262 = vmul.f32 %v3094, %v3259
    %v3264 = vsel %vm837, %v3262, 0
    %3266 = vmatpush.msra.mxu0 0.0
    %3267 = vmatpush.msra.mxu0 0.0
    %3268 = vmatpush.msra.mxu0 0.0
    %3269 = vmatpush.msra.mxu0 0.0
    %3270 = vmatpush.msra.mxu0 0.0
    %3271 = vmatpush.msra.mxu0 0.0
    %3272 = vmatpush.msra.mxu0 0.0
    %3273 = vmatpush.msra.mxu0 0.0
    %3274 = vmatpush.msra.mxu0 0.0
    %3275 = vmatpush.msra.mxu0 0.0
    %3276 = vmatpush.msra.mxu0 0.0
    %3277 = vmatpush.msra.mxu0 0.0
    %3278 = vmatpush.msra.mxu0 0.0
    %3279 = vmatpush.msra.mxu0 0.0
    %3280 = vmatpush.msra.mxu0 %v3264
    %3281 = vmatpush.msra.mxu0 %v3261
    %3282 = vmatmul.f32.gmra.mxu0 %v903
    %v3283 = vpop.f32.mrf.mxu0
    %v3284 = vadd.f32 1e-08, %v3283
    %3285 = vdwg.mxu0
    %v3286 = vrcp.pop %v3284
    %v3287 = vmul.f32 %v3284, %v3286
    %v3288 = vsub.f32 2.0, %v3287
    %v3289 = vmul.f32 %v3286, %v3288
    %v3290 = vmul.f32 %v757, %v3289
    %v3292 = vsel %vm873, %v3290, 0
    %3294 = vmatpush.msra.mxu0 0.0
    %3295 = vmatpush.msra.mxu0 0.0
    %3296 = vmatpush.msra.mxu0 0.0
    %3297 = vmatpush.msra.mxu0 0.0
    %3298 = vmatpush.msra.mxu0 0.0
    %3299 = vmatpush.msra.mxu0 0.0
    %3300 = vmatpush.msra.mxu0 0.0
    %3301 = vmatpush.msra.mxu0 0.0
    %3302 = vmatpush.msra.mxu0 0.0
    %3303 = vmatpush.msra.mxu0 0.0
    %3304 = vmatpush.msra.mxu0 0.0
    %3305 = vmatpush.msra.mxu0 0.0
    %3306 = vmatpush.msra.mxu0 0.0
    %3307 = vmatpush.msra.mxu0 0.0
    %3308 = vmatpush.msra.mxu0 0.0
    %3309 = vmatpush.msra.mxu0 %v3292
    %3310 = vmatmul.f32.gmra.mxu0 %v934
    %v3311 = vpop.f32.mrf.mxu0
    %v3312 = vadd.f32 %v826, %v3311
    %3313 = vmatmul.f32.gmra.mxu0 %v937
    %v3314 = vpop.f32.mrf.mxu0
    %v3315 = vadd.f32 %v831, %v3314
    %3316 = vdwg.mxu0
    %v3317 = vmul.f32 %v3261, %v3312
    %v3318 = vmul.f32 %v3262, %v3315
    %v3320 = vsel %vm837, %v3206, 0
    %3322 = vmatpush.msra.mxu0 0.0
    %3323 = vmatpush.msra.mxu0 0.0
    %3324 = vmatpush.msra.mxu0 0.0
    %3325 = vmatpush.msra.mxu0 0.0
    %3326 = vmatpush.msra.mxu0 0.0
    %3327 = vmatpush.msra.mxu0 0.0
    %3328 = vmatpush.msra.mxu0 0.0
    %3329 = vmatpush.msra.mxu0 0.0
    %3330 = vmatpush.msra.mxu0 0.0
    %3331 = vmatpush.msra.mxu0 0.0
    %3332 = vmatpush.msra.mxu0 0.0
    %3333 = vmatpush.msra.mxu0 0.0
    %3334 = vmatpush.msra.mxu0 0.0
    %3335 = vmatpush.msra.mxu0 0.0
    %3336 = vmatpush.msra.mxu0 %v3320
    %3337 = vmatpush.msra.mxu0 %v3205
    %3338 = vmatmul.f32.gmra.mxu0 %v835
    %v3339 = vpop.f32.mrf.mxu0
    %v3340 = vadd.f32 1e-08, %v3339
    %3341 = vdwg.mxu0
    %v3342 = vrcp.pop %v3340
    %v3343 = vmul.f32 %v3340, %v3342
    %v3344 = vsub.f32 2.0, %v3343
    %v3345 = vmul.f32 %v3342, %v3344
    %v3346 = vmul.f32 %v686, %v3345
    %v3348 = vsel %vm873, %v3346, 0
    %3350 = vmatpush.msra.mxu0 0.0
    %3351 = vmatpush.msra.mxu0 0.0
    %3352 = vmatpush.msra.mxu0 0.0
    %3353 = vmatpush.msra.mxu0 0.0
    %3354 = vmatpush.msra.mxu0 0.0
    %3355 = vmatpush.msra.mxu0 0.0
    %3356 = vmatpush.msra.mxu0 0.0
    %3357 = vmatpush.msra.mxu0 0.0
    %3358 = vmatpush.msra.mxu0 0.0
    %3359 = vmatpush.msra.mxu0 0.0
    %3360 = vmatpush.msra.mxu0 0.0
    %3361 = vmatpush.msra.mxu0 0.0
    %3362 = vmatpush.msra.mxu0 0.0
    %3363 = vmatpush.msra.mxu0 0.0
    %3364 = vmatpush.msra.mxu0 0.0
    %3365 = vmatpush.msra.mxu0 %v3348
    %3366 = vmatmul.f32.gmra.mxu0 %v868
    %v3367 = vpop.f32.mrf.mxu0
    %v3368 = vadd.f32 %v814, %v3367
    %3369 = vmatmul.f32.gmra.mxu0 %v871
    %v3370 = vpop.f32.mrf.mxu0
    %v3371 = vadd.f32 %v819, %v3370
    %3372 = vdwg.mxu0
    %v3373 = vmul.f32 %v3205, %v3368
    %v3374 = vmul.f32 %v3206, %v3371
    %v3376 = vsel %vm837, %v3374, 0
    %3378 = vmatpush.msra.mxu0 0.0
    %3379 = vmatpush.msra.mxu0 0.0
    %3380 = vmatpush.msra.mxu0 0.0
    %3381 = vmatpush.msra.mxu0 0.0
    %3382 = vmatpush.msra.mxu0 0.0
    %3383 = vmatpush.msra.mxu0 0.0
    %3384 = vmatpush.msra.mxu0 0.0
    %3385 = vmatpush.msra.mxu0 0.0
    %3386 = vmatpush.msra.mxu0 0.0
    %3387 = vmatpush.msra.mxu0 0.0
    %3388 = vmatpush.msra.mxu0 0.0
    %3389 = vmatpush.msra.mxu0 0.0
    %3390 = vmatpush.msra.mxu0 0.0
    %3391 = vmatpush.msra.mxu0 0.0
    %3392 = vmatpush.msra.mxu0 %v3376
    %3393 = vmatpush.msra.mxu0 %v3373
    %3394 = vmatmul.f32.gmra.mxu0 %v903
    %v3395 = vpop.f32.mrf.mxu0
    %v3396 = vadd.f32 1e-08, %v3395
    %3397 = vdwg.mxu0
    %v3398 = vrcp.pop %v3396
    %v3399 = vmul.f32 %v3396, %v3398
    %v3400 = vsub.f32 2.0, %v3399
    %v3401 = vmul.f32 %v3398, %v3400
    %v3402 = vmul.f32 %v737, %v3401
    %v3404 = vsel %vm873, %v3402, 0
    %3406 = vmatpush.msra.mxu0 0.0
    %3407 = vmatpush.msra.mxu0 0.0
    %3408 = vmatpush.msra.mxu0 0.0
    %3409 = vmatpush.msra.mxu0 0.0
    %3410 = vmatpush.msra.mxu0 0.0
    %3411 = vmatpush.msra.mxu0 0.0
    %3412 = vmatpush.msra.mxu0 0.0
    %3413 = vmatpush.msra.mxu0 0.0
    %3414 = vmatpush.msra.mxu0 0.0
    %3415 = vmatpush.msra.mxu0 0.0
    %3416 = vmatpush.msra.mxu0 0.0
    %3417 = vmatpush.msra.mxu0 0.0
    %3418 = vmatpush.msra.mxu0 0.0
    %3419 = vmatpush.msra.mxu0 0.0
    %3420 = vmatpush.msra.mxu0 0.0
    %3421 = vmatpush.msra.mxu0 %v3404
    %3422 = vmatmul.f32.gmra.mxu0 %v934
    %v3423 = vpop.f32.mrf.mxu0
    %v3424 = vadd.f32 %v826, %v3423
    %3425 = vmatmul.f32.gmra.mxu0 %v937
    %v3426 = vpop.f32.mrf.mxu0
    %v3427 = vadd.f32 %v831, %v3426
    %3428 = vdwg.mxu0
    %v3429 = vmul.f32 %v3373, %v3424
    %v3430 = vmul.f32 %v3374, %v3427
    %v3432 = vsel %vm837, %v3318, 0
    %3434 = vmatpush.msra.mxu0 0.0
    %3435 = vmatpush.msra.mxu0 0.0
    %3436 = vmatpush.msra.mxu0 0.0
    %3437 = vmatpush.msra.mxu0 0.0
    %3438 = vmatpush.msra.mxu0 0.0
    %3439 = vmatpush.msra.mxu0 0.0
    %3440 = vmatpush.msra.mxu0 0.0
    %3441 = vmatpush.msra.mxu0 0.0
    %3442 = vmatpush.msra.mxu0 0.0
    %3443 = vmatpush.msra.mxu0 0.0
    %3444 = vmatpush.msra.mxu0 0.0
    %3445 = vmatpush.msra.mxu0 0.0
    %3446 = vmatpush.msra.mxu0 0.0
    %3447 = vmatpush.msra.mxu0 0.0
    %3448 = vmatpush.msra.mxu0 %v3432
    %3449 = vmatpush.msra.mxu0 %v3317
    %3450 = vmatmul.f32.gmra.mxu0 %v835
    %v3451 = vpop.f32.mrf.mxu0
    %v3452 = vadd.f32 1e-08, %v3451
    %3453 = vdwg.mxu0
    %v3454 = vrcp.pop %v3452
    %v3455 = vmul.f32 %v3452, %v3454
    %v3456 = vsub.f32 2.0, %v3455
    %v3457 = vmul.f32 %v3454, %v3456
    %v3458 = vmul.f32 %v706, %v3457
    %v3460 = vsel %vm873, %v3458, 0
    %3462 = vmatpush.msra.mxu0 0.0
    %3463 = vmatpush.msra.mxu0 0.0
    %3464 = vmatpush.msra.mxu0 0.0
    %3465 = vmatpush.msra.mxu0 0.0
    %3466 = vmatpush.msra.mxu0 0.0
    %3467 = vmatpush.msra.mxu0 0.0
    %3468 = vmatpush.msra.mxu0 0.0
    %3469 = vmatpush.msra.mxu0 0.0
    %3470 = vmatpush.msra.mxu0 0.0
    %3471 = vmatpush.msra.mxu0 0.0
    %3472 = vmatpush.msra.mxu0 0.0
    %3473 = vmatpush.msra.mxu0 0.0
    %3474 = vmatpush.msra.mxu0 0.0
    %3475 = vmatpush.msra.mxu0 0.0
    %3476 = vmatpush.msra.mxu0 0.0
    %3477 = vmatpush.msra.mxu0 %v3460
    %3478 = vmatmul.f32.gmra.mxu0 %v868
    %v3479 = vpop.f32.mrf.mxu0
    %v3480 = vadd.f32 %v814, %v3479
    %3481 = vmatmul.f32.gmra.mxu0 %v871
    %v3482 = vpop.f32.mrf.mxu0
    %v3483 = vadd.f32 %v819, %v3482
    %3484 = vdwg.mxu0
    %v3485 = vmul.f32 %v3317, %v3480
    %v3486 = vmul.f32 %v3318, %v3483
    %v3488 = vsel %vm837, %v3486, 0
    %3490 = vmatpush.msra.mxu0 0.0
    %3491 = vmatpush.msra.mxu0 0.0
    %3492 = vmatpush.msra.mxu0 0.0
    %3493 = vmatpush.msra.mxu0 0.0
    %3494 = vmatpush.msra.mxu0 0.0
    %3495 = vmatpush.msra.mxu0 0.0
    %3496 = vmatpush.msra.mxu0 0.0
    %3497 = vmatpush.msra.mxu0 0.0
    %3498 = vmatpush.msra.mxu0 0.0
    %3499 = vmatpush.msra.mxu0 0.0
    %3500 = vmatpush.msra.mxu0 0.0
    %3501 = vmatpush.msra.mxu0 0.0
    %3502 = vmatpush.msra.mxu0 0.0
    %3503 = vmatpush.msra.mxu0 0.0
    %3504 = vmatpush.msra.mxu0 %v3488
    %3505 = vmatpush.msra.mxu0 %v3485
    %3506 = vmatmul.f32.gmra.mxu0 %v903
    %v3507 = vpop.f32.mrf.mxu0
    %v3508 = vadd.f32 1e-08, %v3507
    %3509 = vdwg.mxu0
    %v3510 = vrcp.pop %v3508
    %v3511 = vmul.f32 %v3508, %v3510
    %v3512 = vsub.f32 2.0, %v3511
    %v3513 = vmul.f32 %v3510, %v3512
    %v3514 = vmul.f32 %v757, %v3513
    %v3516 = vsel %vm873, %v3514, 0
    %3518 = vmatpush.msra.mxu0 0.0
    %3519 = vmatpush.msra.mxu0 0.0
    %3520 = vmatpush.msra.mxu0 0.0
    %3521 = vmatpush.msra.mxu0 0.0
    %3522 = vmatpush.msra.mxu0 0.0
    %3523 = vmatpush.msra.mxu0 0.0
    %3524 = vmatpush.msra.mxu0 0.0
    %3525 = vmatpush.msra.mxu0 0.0
    %3526 = vmatpush.msra.mxu0 0.0
    %3527 = vmatpush.msra.mxu0 0.0
    %3528 = vmatpush.msra.mxu0 0.0
    %3529 = vmatpush.msra.mxu0 0.0
    %3530 = vmatpush.msra.mxu0 0.0
    %3531 = vmatpush.msra.mxu0 0.0
    %3532 = vmatpush.msra.mxu0 0.0
    %3533 = vmatpush.msra.mxu0 %v3516
    %3534 = vmatmul.f32.gmra.mxu0 %v934
    %v3535 = vpop.f32.mrf.mxu0
    %v3536 = vadd.f32 %v826, %v3535
    %3537 = vmatmul.f32.gmra.mxu0 %v937
    %v3538 = vpop.f32.mrf.mxu0
    %v3539 = vadd.f32 %v831, %v3538
    %3540 = vdwg.mxu0
    %v3541 = vmul.f32 %v3485, %v3536
    %v3542 = vmul.f32 %v3486, %v3539
    %v3544 = vsel %vm837, %v3430, 0
    %3546 = vmatpush.msra.mxu0 0.0
    %3547 = vmatpush.msra.mxu0 0.0
    %3548 = vmatpush.msra.mxu0 0.0
    %3549 = vmatpush.msra.mxu0 0.0
    %3550 = vmatpush.msra.mxu0 0.0
    %3551 = vmatpush.msra.mxu0 0.0
    %3552 = vmatpush.msra.mxu0 0.0
    %3553 = vmatpush.msra.mxu0 0.0
    %3554 = vmatpush.msra.mxu0 0.0
    %3555 = vmatpush.msra.mxu0 0.0
    %3556 = vmatpush.msra.mxu0 0.0
    %3557 = vmatpush.msra.mxu0 0.0
    %3558 = vmatpush.msra.mxu0 0.0
    %3559 = vmatpush.msra.mxu0 0.0
    %3560 = vmatpush.msra.mxu0 %v3544
    %3561 = vmatpush.msra.mxu0 %v3429
    %3562 = vmatmul.f32.gmra.mxu0 %v835
    %v3563 = vpop.f32.mrf.mxu0
    %v3564 = vadd.f32 1e-08, %v3563
    %3565 = vdwg.mxu0
    %v3566 = vrcp.pop %v3564
    %v3567 = vmul.f32 %v3564, %v3566
    %v3568 = vsub.f32 2.0, %v3567
    %v3569 = vmul.f32 %v3566, %v3568
    %v3570 = vmul.f32 %v686, %v3569
    %v3572 = vsel %vm873, %v3570, 0
    %3574 = vmatpush.msra.mxu0 0.0
    %3575 = vmatpush.msra.mxu0 0.0
    %3576 = vmatpush.msra.mxu0 0.0
    %3577 = vmatpush.msra.mxu0 0.0
    %3578 = vmatpush.msra.mxu0 0.0
    %3579 = vmatpush.msra.mxu0 0.0
    %3580 = vmatpush.msra.mxu0 0.0
    %3581 = vmatpush.msra.mxu0 0.0
    %3582 = vmatpush.msra.mxu0 0.0
    %3583 = vmatpush.msra.mxu0 0.0
    %3584 = vmatpush.msra.mxu0 0.0
    %3585 = vmatpush.msra.mxu0 0.0
    %3586 = vmatpush.msra.mxu0 0.0
    %3587 = vmatpush.msra.mxu0 0.0
    %3588 = vmatpush.msra.mxu0 0.0
    %3589 = vmatpush.msra.mxu0 %v3572
    %3590 = vmatmul.f32.gmra.mxu0 %v868
    %v3591 = vpop.f32.mrf.mxu0
    %v3592 = vadd.f32 %v814, %v3591
    %3593 = vmatmul.f32.gmra.mxu0 %v871
    %v3594 = vpop.f32.mrf.mxu0
    %v3595 = vadd.f32 %v819, %v3594
    %3596 = vdwg.mxu0
    %v3597 = vmul.f32 %v3429, %v3592
    %v3598 = vmul.f32 %v3430, %v3595
    %v3600 = vsel %vm837, %v3598, 0
    %3602 = vmatpush.msra.mxu0 0.0
    %3603 = vmatpush.msra.mxu0 0.0
    %3604 = vmatpush.msra.mxu0 0.0
    %3605 = vmatpush.msra.mxu0 0.0
    %3606 = vmatpush.msra.mxu0 0.0
    %3607 = vmatpush.msra.mxu0 0.0
    %3608 = vmatpush.msra.mxu0 0.0
    %3609 = vmatpush.msra.mxu0 0.0
    %3610 = vmatpush.msra.mxu0 0.0
    %3611 = vmatpush.msra.mxu0 0.0
    %3612 = vmatpush.msra.mxu0 0.0
    %3613 = vmatpush.msra.mxu0 0.0
    %3614 = vmatpush.msra.mxu0 0.0
    %3615 = vmatpush.msra.mxu0 0.0
    %3616 = vmatpush.msra.mxu0 %v3600
    %3617 = vmatpush.msra.mxu0 %v3597
    %3618 = vmatmul.f32.gmra.mxu0 %v903
    %v3619 = vpop.f32.mrf.mxu0
    %v3620 = vadd.f32 1e-08, %v3619
    %3621 = vdwg.mxu0
    %v3622 = vrcp.pop %v3620
    %v3623 = vmul.f32 %v3620, %v3622
    %v3624 = vsub.f32 2.0, %v3623
    %v3625 = vmul.f32 %v3622, %v3624
    %v3626 = vmul.f32 %v737, %v3625
    %v3628 = vsel %vm873, %v3626, 0
    %3630 = vmatpush.msra.mxu0 0.0
    %3631 = vmatpush.msra.mxu0 0.0
    %3632 = vmatpush.msra.mxu0 0.0
    %3633 = vmatpush.msra.mxu0 0.0
    %3634 = vmatpush.msra.mxu0 0.0
    %3635 = vmatpush.msra.mxu0 0.0
    %3636 = vmatpush.msra.mxu0 0.0
    %3637 = vmatpush.msra.mxu0 0.0
    %3638 = vmatpush.msra.mxu0 0.0
    %3639 = vmatpush.msra.mxu0 0.0
    %3640 = vmatpush.msra.mxu0 0.0
    %3641 = vmatpush.msra.mxu0 0.0
    %3642 = vmatpush.msra.mxu0 0.0
    %3643 = vmatpush.msra.mxu0 0.0
    %3644 = vmatpush.msra.mxu0 0.0
    %3645 = vmatpush.msra.mxu0 %v3628
    %3646 = vmatmul.f32.gmra.mxu0 %v934
    %v3647 = vpop.f32.mrf.mxu0
    %v3648 = vadd.f32 %v826, %v3647
    %3649 = vmatmul.f32.gmra.mxu0 %v937
    %v3650 = vpop.f32.mrf.mxu0
    %v3651 = vadd.f32 %v831, %v3650
    %3652 = vdwg.mxu0
    %v3653 = vmul.f32 %v3597, %v3648
    %v3654 = vmul.f32 %v3598, %v3651
    %v3656 = vsel %vm837, %v3542, 0
    %3658 = vmatpush.msra.mxu0 0.0
    %3659 = vmatpush.msra.mxu0 0.0
    %3660 = vmatpush.msra.mxu0 0.0
    %3661 = vmatpush.msra.mxu0 0.0
    %3662 = vmatpush.msra.mxu0 0.0
    %3663 = vmatpush.msra.mxu0 0.0
    %3664 = vmatpush.msra.mxu0 0.0
    %3665 = vmatpush.msra.mxu0 0.0
    %3666 = vmatpush.msra.mxu0 0.0
    %3667 = vmatpush.msra.mxu0 0.0
    %3668 = vmatpush.msra.mxu0 0.0
    %3669 = vmatpush.msra.mxu0 0.0
    %3670 = vmatpush.msra.mxu0 0.0
    %3671 = vmatpush.msra.mxu0 0.0
    %3672 = vmatpush.msra.mxu0 %v3656
    %3673 = vmatpush.msra.mxu0 %v3541
    %3674 = vmatmul.f32.gmra.mxu0 %v835
    %v3675 = vpop.f32.mrf.mxu0
    %v3676 = vadd.f32 1e-08, %v3675
    %3677 = vdwg.mxu0
    %v3678 = vrcp.pop %v3676
    %v3679 = vmul.f32 %v3676, %v3678
    %v3680 = vsub.f32 2.0, %v3679
    %v3681 = vmul.f32 %v3678, %v3680
    %v3682 = vmul.f32 %v706, %v3681
    %v3684 = vsel %vm873, %v3682, 0
    %3686 = vmatpush.msra.mxu0 0.0
    %3687 = vmatpush.msra.mxu0 0.0
    %3688 = vmatpush.msra.mxu0 0.0
    %3689 = vmatpush.msra.mxu0 0.0
    %3690 = vmatpush.msra.mxu0 0.0
    %3691 = vmatpush.msra.mxu0 0.0
    %3692 = vmatpush.msra.mxu0 0.0
    %3693 = vmatpush.msra.mxu0 0.0
    %3694 = vmatpush.msra.mxu0 0.0
    %3695 = vmatpush.msra.mxu0 0.0
    %3696 = vmatpush.msra.mxu0 0.0
    %3697 = vmatpush.msra.mxu0 0.0
    %3698 = vmatpush.msra.mxu0 0.0
    %3699 = vmatpush.msra.mxu0 0.0
    %3700 = vmatpush.msra.mxu0 0.0
    %3701 = vmatpush.msra.mxu0 %v3684
    %3702 = vmatmul.f32.gmra.mxu0 %v868
    %v3703 = vpop.f32.mrf.mxu0
    %v3704 = vadd.f32 %v814, %v3703
    %3705 = vmatmul.f32.gmra.mxu0 %v871
    %v3706 = vpop.f32.mrf.mxu0
    %v3707 = vadd.f32 %v819, %v3706
    %3708 = vdwg.mxu0
    %v3709 = vmul.f32 %v3541, %v3704
    %v3710 = vmul.f32 %v3542, %v3707
    %v3712 = vsel %vm837, %v3710, 0
    %3714 = vmatpush.msra.mxu0 0.0
    %3715 = vmatpush.msra.mxu0 0.0
    %3716 = vmatpush.msra.mxu0 0.0
    %3717 = vmatpush.msra.mxu0 0.0
    %3718 = vmatpush.msra.mxu0 0.0
    %3719 = vmatpush.msra.mxu0 0.0
    %3720 = vmatpush.msra.mxu0 0.0
    %3721 = vmatpush.msra.mxu0 0.0
    %3722 = vmatpush.msra.mxu0 0.0
    %3723 = vmatpush.msra.mxu0 0.0
    %3724 = vmatpush.msra.mxu0 0.0
    %3725 = vmatpush.msra.mxu0 0.0
    %3726 = vmatpush.msra.mxu0 0.0
    %3727 = vmatpush.msra.mxu0 0.0
    %3728 = vmatpush.msra.mxu0 %v3712
    %3729 = vmatpush.msra.mxu0 %v3709
    %3730 = vmatmul.f32.gmra.mxu0 %v903
    %v3731 = vpop.f32.mrf.mxu0
    %v3732 = vadd.f32 1e-08, %v3731
    %3733 = vdwg.mxu0
    %v3734 = vrcp.pop %v3732
    %v3735 = vmul.f32 %v3732, %v3734
    %v3736 = vsub.f32 2.0, %v3735
    %v3737 = vmul.f32 %v3734, %v3736
    %v3738 = vmul.f32 %v757, %v3737
    %v3740 = vsel %vm873, %v3738, 0
    %3742 = vmatpush.msra.mxu0 0.0
    %3743 = vmatpush.msra.mxu0 0.0
    %3744 = vmatpush.msra.mxu0 0.0
    %3745 = vmatpush.msra.mxu0 0.0
    %3746 = vmatpush.msra.mxu0 0.0
    %3747 = vmatpush.msra.mxu0 0.0
    %3748 = vmatpush.msra.mxu0 0.0
    %3749 = vmatpush.msra.mxu0 0.0
    %3750 = vmatpush.msra.mxu0 0.0
    %3751 = vmatpush.msra.mxu0 0.0
    %3752 = vmatpush.msra.mxu0 0.0
    %3753 = vmatpush.msra.mxu0 0.0
    %3754 = vmatpush.msra.mxu0 0.0
    %3755 = vmatpush.msra.mxu0 0.0
    %3756 = vmatpush.msra.mxu0 0.0
    %3757 = vmatpush.msra.mxu0 %v3740
    %3758 = vmatmul.f32.gmra.mxu0 %v934
    %v3759 = vpop.f32.mrf.mxu0
    %v3760 = vadd.f32 %v826, %v3759
    %3761 = vmatmul.f32.gmra.mxu0 %v937
    %v3762 = vpop.f32.mrf.mxu0
    %v3763 = vadd.f32 %v831, %v3762
    %3764 = vdwg.mxu0
    %v3765 = vmul.f32 %v3709, %v3760
    %v3766 = vmul.f32 %v3710, %v3763
    %v3768 = vsel %vm837, %v3654, 0
    %3770 = vmatpush.msra.mxu0 0.0
    %3771 = vmatpush.msra.mxu0 0.0
    %3772 = vmatpush.msra.mxu0 0.0
    %3773 = vmatpush.msra.mxu0 0.0
    %3774 = vmatpush.msra.mxu0 0.0
    %3775 = vmatpush.msra.mxu0 0.0
    %3776 = vmatpush.msra.mxu0 0.0
    %3777 = vmatpush.msra.mxu0 0.0
    %3778 = vmatpush.msra.mxu0 0.0
    %3779 = vmatpush.msra.mxu0 0.0
    %3780 = vmatpush.msra.mxu0 0.0
    %3781 = vmatpush.msra.mxu0 0.0
    %3782 = vmatpush.msra.mxu0 0.0
    %3783 = vmatpush.msra.mxu0 0.0
    %3784 = vmatpush.msra.mxu0 %v3768
    %3785 = vmatpush.msra.mxu0 %v3653
    %3786 = vmatmul.f32.gmra.mxu0 %v835
    %v3787 = vpop.f32.mrf.mxu0
    %v3788 = vadd.f32 1e-08, %v3787
    %3789 = vdwg.mxu0
    %v3790 = vrcp.pop %v3788
    %v3791 = vmul.f32 %v3788, %v3790
    %v3792 = vsub.f32 2.0, %v3791
    %v3793 = vmul.f32 %v3790, %v3792
    %v3794 = vmul.f32 %v686, %v3793
    %v3796 = vsel %vm873, %v3794, 0
    %3798 = vmatpush.msra.mxu0 0.0
    %3799 = vmatpush.msra.mxu0 0.0
    %3800 = vmatpush.msra.mxu0 0.0
    %3801 = vmatpush.msra.mxu0 0.0
    %3802 = vmatpush.msra.mxu0 0.0
    %3803 = vmatpush.msra.mxu0 0.0
    %3804 = vmatpush.msra.mxu0 0.0
    %3805 = vmatpush.msra.mxu0 0.0
    %3806 = vmatpush.msra.mxu0 0.0
    %3807 = vmatpush.msra.mxu0 0.0
    %3808 = vmatpush.msra.mxu0 0.0
    %3809 = vmatpush.msra.mxu0 0.0
    %3810 = vmatpush.msra.mxu0 0.0
    %3811 = vmatpush.msra.mxu0 0.0
    %3812 = vmatpush.msra.mxu0 0.0
    %3813 = vmatpush.msra.mxu0 %v3796
    %3814 = vmatmul.f32.gmra.mxu0 %v868
    %v3815 = vpop.f32.mrf.mxu0
    %v3816 = vadd.f32 %v814, %v3815
    %3817 = vmatmul.f32.gmra.mxu0 %v871
    %v3818 = vpop.f32.mrf.mxu0
    %v3819 = vadd.f32 %v819, %v3818
    %3820 = vdwg.mxu0
    %v3821 = vmul.f32 %v3653, %v3816
    %v3822 = vmul.f32 %v3654, %v3819
    %v3824 = vsel %vm837, %v3822, 0
    %3826 = vmatpush.msra.mxu0 0.0
    %3827 = vmatpush.msra.mxu0 0.0
    %3828 = vmatpush.msra.mxu0 0.0
    %3829 = vmatpush.msra.mxu0 0.0
    %3830 = vmatpush.msra.mxu0 0.0
    %3831 = vmatpush.msra.mxu0 0.0
    %3832 = vmatpush.msra.mxu0 0.0
    %3833 = vmatpush.msra.mxu0 0.0
    %3834 = vmatpush.msra.mxu0 0.0
    %3835 = vmatpush.msra.mxu0 0.0
    %3836 = vmatpush.msra.mxu0 0.0
    %3837 = vmatpush.msra.mxu0 0.0
    %3838 = vmatpush.msra.mxu0 0.0
    %3839 = vmatpush.msra.mxu0 0.0
    %3840 = vmatpush.msra.mxu0 %v3824
    %3841 = vmatpush.msra.mxu0 %v3821
    %3842 = vmatmul.f32.gmra.mxu0 %v903
    %v3843 = vpop.f32.mrf.mxu0
    %v3844 = vadd.f32 1e-08, %v3843
    %3845 = vdwg.mxu0
    %v3846 = vrcp.pop %v3844
    %v3847 = vmul.f32 %v3844, %v3846
    %v3848 = vsub.f32 2.0, %v3847
    %v3849 = vmul.f32 %v3846, %v3848
    %v3850 = vmul.f32 %v737, %v3849
    %v3852 = vsel %vm873, %v3850, 0
    %3854 = vmatpush.msra.mxu0 0.0
    %3855 = vmatpush.msra.mxu0 0.0
    %3856 = vmatpush.msra.mxu0 0.0
    %3857 = vmatpush.msra.mxu0 0.0
    %3858 = vmatpush.msra.mxu0 0.0
    %3859 = vmatpush.msra.mxu0 0.0
    %3860 = vmatpush.msra.mxu0 0.0
    %3861 = vmatpush.msra.mxu0 0.0
    %3862 = vmatpush.msra.mxu0 0.0
    %3863 = vmatpush.msra.mxu0 0.0
    %3864 = vmatpush.msra.mxu0 0.0
    %3865 = vmatpush.msra.mxu0 0.0
    %3866 = vmatpush.msra.mxu0 0.0
    %3867 = vmatpush.msra.mxu0 0.0
    %3868 = vmatpush.msra.mxu0 0.0
    %3869 = vmatpush.msra.mxu0 %v3852
    %3870 = vmatmul.f32.gmra.mxu0 %v934
    %v3871 = vpop.f32.mrf.mxu0
    %v3872 = vadd.f32 %v826, %v3871
    %3873 = vmatmul.f32.gmra.mxu0 %v937
    %v3874 = vpop.f32.mrf.mxu0
    %v3875 = vadd.f32 %v831, %v3874
    %3876 = vdwg.mxu0
    %v3877 = vmul.f32 %v3821, %v3872
    %v3878 = vmul.f32 %v3822, %v3875
    %v3880 = vsel %vm837, %v3766, 0
    %3882 = vmatpush.msra.mxu0 0.0
    %3883 = vmatpush.msra.mxu0 0.0
    %3884 = vmatpush.msra.mxu0 0.0
    %3885 = vmatpush.msra.mxu0 0.0
    %3886 = vmatpush.msra.mxu0 0.0
    %3887 = vmatpush.msra.mxu0 0.0
    %3888 = vmatpush.msra.mxu0 0.0
    %3889 = vmatpush.msra.mxu0 0.0
    %3890 = vmatpush.msra.mxu0 0.0
    %3891 = vmatpush.msra.mxu0 0.0
    %3892 = vmatpush.msra.mxu0 0.0
    %3893 = vmatpush.msra.mxu0 0.0
    %3894 = vmatpush.msra.mxu0 0.0
    %3895 = vmatpush.msra.mxu0 0.0
    %3896 = vmatpush.msra.mxu0 %v3880
    %3897 = vmatpush.msra.mxu0 %v3765
    %3898 = vmatmul.f32.gmra.mxu0 %v835
    %v3899 = vpop.f32.mrf.mxu0
    %v3900 = vadd.f32 1e-08, %v3899
    %3901 = vdwg.mxu0
    %v3902 = vrcp.pop %v3900
    %v3903 = vmul.f32 %v3900, %v3902
    %v3904 = vsub.f32 2.0, %v3903
    %v3905 = vmul.f32 %v3902, %v3904
    %v3906 = vmul.f32 %v706, %v3905
    %v3908 = vsel %vm873, %v3906, 0
    %3910 = vmatpush.msra.mxu0 0.0
    %3911 = vmatpush.msra.mxu0 0.0
    %3912 = vmatpush.msra.mxu0 0.0
    %3913 = vmatpush.msra.mxu0 0.0
    %3914 = vmatpush.msra.mxu0 0.0
    %3915 = vmatpush.msra.mxu0 0.0
    %3916 = vmatpush.msra.mxu0 0.0
    %3917 = vmatpush.msra.mxu0 0.0
    %3918 = vmatpush.msra.mxu0 0.0
    %3919 = vmatpush.msra.mxu0 0.0
    %3920 = vmatpush.msra.mxu0 0.0
    %3921 = vmatpush.msra.mxu0 0.0
    %3922 = vmatpush.msra.mxu0 0.0
    %3923 = vmatpush.msra.mxu0 0.0
    %3924 = vmatpush.msra.mxu0 0.0
    %3925 = vmatpush.msra.mxu0 %v3908
    %3926 = vmatmul.f32.gmra.mxu0 %v868
    %v3927 = vpop.f32.mrf.mxu0
    %v3928 = vadd.f32 %v814, %v3927
    %3929 = vmatmul.f32.gmra.mxu0 %v871
    %v3930 = vpop.f32.mrf.mxu0
    %v3931 = vadd.f32 %v819, %v3930
    %3932 = vdwg.mxu0
    %v3933 = vmul.f32 %v3765, %v3928
    %v3934 = vmul.f32 %v3766, %v3931
    %v3936 = vsel %vm837, %v3934, 0
    %3938 = vmatpush.msra.mxu0 0.0
    %3939 = vmatpush.msra.mxu0 0.0
    %3940 = vmatpush.msra.mxu0 0.0
    %3941 = vmatpush.msra.mxu0 0.0
    %3942 = vmatpush.msra.mxu0 0.0
    %3943 = vmatpush.msra.mxu0 0.0
    %3944 = vmatpush.msra.mxu0 0.0
    %3945 = vmatpush.msra.mxu0 0.0
    %3946 = vmatpush.msra.mxu0 0.0
    %3947 = vmatpush.msra.mxu0 0.0
    %3948 = vmatpush.msra.mxu0 0.0
    %3949 = vmatpush.msra.mxu0 0.0
    %3950 = vmatpush.msra.mxu0 0.0
    %3951 = vmatpush.msra.mxu0 0.0
    %3952 = vmatpush.msra.mxu0 %v3936
    %3953 = vmatpush.msra.mxu0 %v3933
    %3954 = vmatmul.f32.gmra.mxu0 %v903
    %v3955 = vpop.f32.mrf.mxu0
    %v3956 = vadd.f32 1e-08, %v3955
    %3957 = vdwg.mxu0
    %v3958 = vrcp.pop %v3956
    %v3959 = vmul.f32 %v3956, %v3958
    %v3960 = vsub.f32 2.0, %v3959
    %v3961 = vmul.f32 %v3958, %v3960
    %v3962 = vmul.f32 %v757, %v3961
    %v3964 = vsel %vm873, %v3962, 0
    %3966 = vmatpush.msra.mxu0 0.0
    %3967 = vmatpush.msra.mxu0 0.0
    %3968 = vmatpush.msra.mxu0 0.0
    %3969 = vmatpush.msra.mxu0 0.0
    %3970 = vmatpush.msra.mxu0 0.0
    %3971 = vmatpush.msra.mxu0 0.0
    %3972 = vmatpush.msra.mxu0 0.0
    %3973 = vmatpush.msra.mxu0 0.0
    %3974 = vmatpush.msra.mxu0 0.0
    %3975 = vmatpush.msra.mxu0 0.0
    %3976 = vmatpush.msra.mxu0 0.0
    %3977 = vmatpush.msra.mxu0 0.0
    %3978 = vmatpush.msra.mxu0 0.0
    %3979 = vmatpush.msra.mxu0 0.0
    %3980 = vmatpush.msra.mxu0 0.0
    %3981 = vmatpush.msra.mxu0 %v3964
    %3982 = vmatmul.f32.gmra.mxu0 %v934
    %v3983 = vpop.f32.mrf.mxu0
    %v3984 = vadd.f32 %v826, %v3983
    %3985 = vmatmul.f32.gmra.mxu0 %v937
    %v3986 = vpop.f32.mrf.mxu0
    %v3987 = vadd.f32 %v831, %v3986
    %3988 = vdwg.mxu0
    %v3989 = vmul.f32 %v3933, %v3984
    %v3990 = vmul.f32 %v3934, %v3987
    %v3992 = vsel %vm837, %v3878, 0
    %3994 = vmatpush.msra.mxu0 0.0
    %3995 = vmatpush.msra.mxu0 0.0
    %3996 = vmatpush.msra.mxu0 0.0
    %3997 = vmatpush.msra.mxu0 0.0
    %3998 = vmatpush.msra.mxu0 0.0
    %3999 = vmatpush.msra.mxu0 0.0
    %4000 = vmatpush.msra.mxu0 0.0
    %4001 = vmatpush.msra.mxu0 0.0
    %4002 = vmatpush.msra.mxu0 0.0
    %4003 = vmatpush.msra.mxu0 0.0
    %4004 = vmatpush.msra.mxu0 0.0
    %4005 = vmatpush.msra.mxu0 0.0
    %4006 = vmatpush.msra.mxu0 0.0
    %4007 = vmatpush.msra.mxu0 0.0
    %4008 = vmatpush.msra.mxu0 %v3992
    %4009 = vmatpush.msra.mxu0 %v3877
    %4010 = vmatmul.f32.gmra.mxu0 %v835
    %v4011 = vpop.f32.mrf.mxu0
    %v4012 = vadd.f32 1e-08, %v4011
    %4013 = vdwg.mxu0
    %v4014 = vrcp.pop %v4012
    %v4015 = vmul.f32 %v4012, %v4014
    %v4016 = vsub.f32 2.0, %v4015
    %v4017 = vmul.f32 %v4014, %v4016
    %v4018 = vmul.f32 %v686, %v4017
    %v4020 = vsel %vm873, %v4018, 0
    %4022 = vmatpush.msra.mxu0 0.0
    %4023 = vmatpush.msra.mxu0 0.0
    %4024 = vmatpush.msra.mxu0 0.0
    %4025 = vmatpush.msra.mxu0 0.0
    %4026 = vmatpush.msra.mxu0 0.0
    %4027 = vmatpush.msra.mxu0 0.0
    %4028 = vmatpush.msra.mxu0 0.0
    %4029 = vmatpush.msra.mxu0 0.0
    %4030 = vmatpush.msra.mxu0 0.0
    %4031 = vmatpush.msra.mxu0 0.0
    %4032 = vmatpush.msra.mxu0 0.0
    %4033 = vmatpush.msra.mxu0 0.0
    %4034 = vmatpush.msra.mxu0 0.0
    %4035 = vmatpush.msra.mxu0 0.0
    %4036 = vmatpush.msra.mxu0 0.0
    %4037 = vmatpush.msra.mxu0 %v4020
    %4038 = vmatmul.f32.gmra.mxu0 %v868
    %v4039 = vpop.f32.mrf.mxu0
    %v4040 = vadd.f32 %v814, %v4039
    %4041 = vmatmul.f32.gmra.mxu0 %v871
    %v4042 = vpop.f32.mrf.mxu0
    %v4043 = vadd.f32 %v819, %v4042
    %4044 = vdwg.mxu0
    %v4045 = vmul.f32 %v3877, %v4040
    %v4046 = vmul.f32 %v3878, %v4043
    %v4048 = vsel %vm837, %v4046, 0
    %4050 = vmatpush.msra.mxu0 0.0
    %4051 = vmatpush.msra.mxu0 0.0
    %4052 = vmatpush.msra.mxu0 0.0
    %4053 = vmatpush.msra.mxu0 0.0
    %4054 = vmatpush.msra.mxu0 0.0
    %4055 = vmatpush.msra.mxu0 0.0
    %4056 = vmatpush.msra.mxu0 0.0
    %4057 = vmatpush.msra.mxu0 0.0
    %4058 = vmatpush.msra.mxu0 0.0
    %4059 = vmatpush.msra.mxu0 0.0
    %4060 = vmatpush.msra.mxu0 0.0
    %4061 = vmatpush.msra.mxu0 0.0
    %4062 = vmatpush.msra.mxu0 0.0
    %4063 = vmatpush.msra.mxu0 0.0
    %4064 = vmatpush.msra.mxu0 %v4048
    %4065 = vmatpush.msra.mxu0 %v4045
    %4066 = vmatmul.f32.gmra.mxu0 %v903
    %v4067 = vpop.f32.mrf.mxu0
    %v4068 = vadd.f32 1e-08, %v4067
    %4069 = vdwg.mxu0
    %v4070 = vrcp.pop %v4068
    %v4071 = vmul.f32 %v4068, %v4070
    %v4072 = vsub.f32 2.0, %v4071
    %v4073 = vmul.f32 %v4070, %v4072
    %v4074 = vmul.f32 %v737, %v4073
    %v4076 = vsel %vm873, %v4074, 0
    %4078 = vmatpush.msra.mxu0 0.0
    %4079 = vmatpush.msra.mxu0 0.0
    %4080 = vmatpush.msra.mxu0 0.0
    %4081 = vmatpush.msra.mxu0 0.0
    %4082 = vmatpush.msra.mxu0 0.0
    %4083 = vmatpush.msra.mxu0 0.0
    %4084 = vmatpush.msra.mxu0 0.0
    %4085 = vmatpush.msra.mxu0 0.0
    %4086 = vmatpush.msra.mxu0 0.0
    %4087 = vmatpush.msra.mxu0 0.0
    %4088 = vmatpush.msra.mxu0 0.0
    %4089 = vmatpush.msra.mxu0 0.0
    %4090 = vmatpush.msra.mxu0 0.0
    %4091 = vmatpush.msra.mxu0 0.0
    %4092 = vmatpush.msra.mxu0 0.0
    %4093 = vmatpush.msra.mxu0 %v4076
    %4094 = vmatmul.f32.gmra.mxu0 %v934
    %v4095 = vpop.f32.mrf.mxu0
    %v4096 = vadd.f32 %v826, %v4095
    %4097 = vmatmul.f32.gmra.mxu0 %v937
    %v4098 = vpop.f32.mrf.mxu0
    %v4099 = vadd.f32 %v831, %v4098
    %4100 = vdwg.mxu0
    %v4101 = vmul.f32 %v4045, %v4096
    %v4102 = vmul.f32 %v4046, %v4099
    %v4104 = vsel %vm837, %v3990, 0
    %4106 = vmatpush.msra.mxu0 0.0
    %4107 = vmatpush.msra.mxu0 0.0
    %4108 = vmatpush.msra.mxu0 0.0
    %4109 = vmatpush.msra.mxu0 0.0
    %4110 = vmatpush.msra.mxu0 0.0
    %4111 = vmatpush.msra.mxu0 0.0
    %4112 = vmatpush.msra.mxu0 0.0
    %4113 = vmatpush.msra.mxu0 0.0
    %4114 = vmatpush.msra.mxu0 0.0
    %4115 = vmatpush.msra.mxu0 0.0
    %4116 = vmatpush.msra.mxu0 0.0
    %4117 = vmatpush.msra.mxu0 0.0
    %4118 = vmatpush.msra.mxu0 0.0
    %4119 = vmatpush.msra.mxu0 0.0
    %4120 = vmatpush.msra.mxu0 %v4104
    %4121 = vmatpush.msra.mxu0 %v3989
    %4122 = vmatmul.f32.gmra.mxu0 %v835
    %v4123 = vpop.f32.mrf.mxu0
    %v4124 = vadd.f32 1e-08, %v4123
    %4125 = vdwg.mxu0
    %v4126 = vrcp.pop %v4124
    %v4127 = vmul.f32 %v4124, %v4126
    %v4128 = vsub.f32 2.0, %v4127
    %v4129 = vmul.f32 %v4126, %v4128
    %v4130 = vmul.f32 %v706, %v4129
    %v4132 = vsel %vm873, %v4130, 0
    %4134 = vmatpush.msra.mxu0 0.0
    %4135 = vmatpush.msra.mxu0 0.0
    %4136 = vmatpush.msra.mxu0 0.0
    %4137 = vmatpush.msra.mxu0 0.0
    %4138 = vmatpush.msra.mxu0 0.0
    %4139 = vmatpush.msra.mxu0 0.0
    %4140 = vmatpush.msra.mxu0 0.0
    %4141 = vmatpush.msra.mxu0 0.0
    %4142 = vmatpush.msra.mxu0 0.0
    %4143 = vmatpush.msra.mxu0 0.0
    %4144 = vmatpush.msra.mxu0 0.0
    %4145 = vmatpush.msra.mxu0 0.0
    %4146 = vmatpush.msra.mxu0 0.0
    %4147 = vmatpush.msra.mxu0 0.0
    %4148 = vmatpush.msra.mxu0 0.0
    %4149 = vmatpush.msra.mxu0 %v4132
    %4150 = vmatmul.f32.gmra.mxu0 %v868
    %v4151 = vpop.f32.mrf.mxu0
    %v4152 = vadd.f32 %v814, %v4151
    %4153 = vmatmul.f32.gmra.mxu0 %v871
    %v4154 = vpop.f32.mrf.mxu0
    %v4155 = vadd.f32 %v819, %v4154
    %4156 = vdwg.mxu0
    %v4157 = vmul.f32 %v3989, %v4152
    %v4158 = vmul.f32 %v3990, %v4155
    %v4160 = vsel %vm837, %v4158, 0
    %4162 = vmatpush.msra.mxu0 0.0
    %4163 = vmatpush.msra.mxu0 0.0
    %4164 = vmatpush.msra.mxu0 0.0
    %4165 = vmatpush.msra.mxu0 0.0
    %4166 = vmatpush.msra.mxu0 0.0
    %4167 = vmatpush.msra.mxu0 0.0
    %4168 = vmatpush.msra.mxu0 0.0
    %4169 = vmatpush.msra.mxu0 0.0
    %4170 = vmatpush.msra.mxu0 0.0
    %4171 = vmatpush.msra.mxu0 0.0
    %4172 = vmatpush.msra.mxu0 0.0
    %4173 = vmatpush.msra.mxu0 0.0
    %4174 = vmatpush.msra.mxu0 0.0
    %4175 = vmatpush.msra.mxu0 0.0
    %4176 = vmatpush.msra.mxu0 %v4160
    %4177 = vmatpush.msra.mxu0 %v4157
    %4178 = vmatmul.f32.gmra.mxu0 %v903
    %v4179 = vpop.f32.mrf.mxu0
    %v4180 = vadd.f32 1e-08, %v4179
    %4181 = vdwg.mxu0
    %v4182 = vrcp.pop %v4180
    %v4183 = vmul.f32 %v4180, %v4182
    %v4184 = vsub.f32 2.0, %v4183
    %v4185 = vmul.f32 %v4182, %v4184
    %v4186 = vmul.f32 %v757, %v4185
    %v4188 = vsel %vm873, %v4186, 0
    %4190 = vmatpush.msra.mxu0 0.0
    %4191 = vmatpush.msra.mxu0 0.0
    %4192 = vmatpush.msra.mxu0 0.0
    %4193 = vmatpush.msra.mxu0 0.0
    %4194 = vmatpush.msra.mxu0 0.0
    %4195 = vmatpush.msra.mxu0 0.0
    %4196 = vmatpush.msra.mxu0 0.0
    %4197 = vmatpush.msra.mxu0 0.0
    %4198 = vmatpush.msra.mxu0 0.0
    %4199 = vmatpush.msra.mxu0 0.0
    %4200 = vmatpush.msra.mxu0 0.0
    %4201 = vmatpush.msra.mxu0 0.0
    %4202 = vmatpush.msra.mxu0 0.0
    %4203 = vmatpush.msra.mxu0 0.0
    %4204 = vmatpush.msra.mxu0 0.0
    %4205 = vmatpush.msra.mxu0 %v4188
    %4206 = vmatmul.f32.gmra.mxu0 %v934
    %v4207 = vpop.f32.mrf.mxu0
    %v4208 = vadd.f32 %v826, %v4207
    %4209 = vmatmul.f32.gmra.mxu0 %v937
    %v4210 = vpop.f32.mrf.mxu0
    %v4211 = vadd.f32 %v831, %v4210
    %4212 = vdwg.mxu0
    %v4213 = vmul.f32 %v4157, %v4208
    %v4214 = vmul.f32 %v4158, %v4211
    %v4216 = vsel %vm837, %v4102, 0
    %4218 = vmatpush.msra.mxu0 0.0
    %4219 = vmatpush.msra.mxu0 0.0
    %4220 = vmatpush.msra.mxu0 0.0
    %4221 = vmatpush.msra.mxu0 0.0
    %4222 = vmatpush.msra.mxu0 0.0
    %4223 = vmatpush.msra.mxu0 0.0
    %4224 = vmatpush.msra.mxu0 0.0
    %4225 = vmatpush.msra.mxu0 0.0
    %4226 = vmatpush.msra.mxu0 0.0
    %4227 = vmatpush.msra.mxu0 0.0
    %4228 = vmatpush.msra.mxu0 0.0
    %4229 = vmatpush.msra.mxu0 0.0
    %4230 = vmatpush.msra.mxu0 0.0
    %4231 = vmatpush.msra.mxu0 0.0
    %4232 = vmatpush.msra.mxu0 %v4216
    %4233 = vmatpush.msra.mxu0 %v4101
    %4234 = vmatmul.f32.gmra.mxu0 %v835
    %v4235 = vpop.f32.mrf.mxu0
    %v4236 = vadd.f32 1e-08, %v4235
    %4237 = vdwg.mxu0
    %v4238 = vrcp.pop %v4236
    %v4239 = vmul.f32 %v4236, %v4238
    %v4240 = vsub.f32 2.0, %v4239
    %v4241 = vmul.f32 %v4238, %v4240
    %v4242 = vmul.f32 %v686, %v4241
    %v4244 = vsel %vm873, %v4242, 0
    %4246 = vmatpush.msra.mxu0 0.0
    %4247 = vmatpush.msra.mxu0 0.0
    %4248 = vmatpush.msra.mxu0 0.0
    %4249 = vmatpush.msra.mxu0 0.0
    %4250 = vmatpush.msra.mxu0 0.0
    %4251 = vmatpush.msra.mxu0 0.0
    %4252 = vmatpush.msra.mxu0 0.0
    %4253 = vmatpush.msra.mxu0 0.0
    %4254 = vmatpush.msra.mxu0 0.0
    %4255 = vmatpush.msra.mxu0 0.0
    %4256 = vmatpush.msra.mxu0 0.0
    %4257 = vmatpush.msra.mxu0 0.0
    %4258 = vmatpush.msra.mxu0 0.0
    %4259 = vmatpush.msra.mxu0 0.0
    %4260 = vmatpush.msra.mxu0 0.0
    %4261 = vmatpush.msra.mxu0 %v4244
    %4262 = vmatmul.f32.gmra.mxu0 %v868
    %v4263 = vpop.f32.mrf.mxu0
    %v4264 = vadd.f32 %v814, %v4263
    %4265 = vmatmul.f32.gmra.mxu0 %v871
    %v4266 = vpop.f32.mrf.mxu0
    %v4267 = vadd.f32 %v819, %v4266
    %4268 = vdwg.mxu0
    %v4269 = vmul.f32 %v4101, %v4264
    %v4270 = vmul.f32 %v4102, %v4267
    %v4272 = vsel %vm837, %v4270, 0
    %4274 = vmatpush.msra.mxu0 0.0
    %4275 = vmatpush.msra.mxu0 0.0
    %4276 = vmatpush.msra.mxu0 0.0
    %4277 = vmatpush.msra.mxu0 0.0
    %4278 = vmatpush.msra.mxu0 0.0
    %4279 = vmatpush.msra.mxu0 0.0
    %4280 = vmatpush.msra.mxu0 0.0
    %4281 = vmatpush.msra.mxu0 0.0
    %4282 = vmatpush.msra.mxu0 0.0
    %4283 = vmatpush.msra.mxu0 0.0
    %4284 = vmatpush.msra.mxu0 0.0
    %4285 = vmatpush.msra.mxu0 0.0
    %4286 = vmatpush.msra.mxu0 0.0
    %4287 = vmatpush.msra.mxu0 0.0
    %4288 = vmatpush.msra.mxu0 %v4272
    %4289 = vmatpush.msra.mxu0 %v4269
    %4290 = vmatmul.f32.gmra.mxu0 %v903
    %v4291 = vpop.f32.mrf.mxu0
    %v4292 = vadd.f32 1e-08, %v4291
    %4293 = vdwg.mxu0
    %v4294 = vrcp.pop %v4292
    %v4295 = vmul.f32 %v4292, %v4294
    %v4296 = vsub.f32 2.0, %v4295
    %v4297 = vmul.f32 %v4294, %v4296
    %v4298 = vmul.f32 %v737, %v4297
    %v4300 = vsel %vm873, %v4298, 0
    %4302 = vmatpush.msra.mxu0 0.0
    %4303 = vmatpush.msra.mxu0 0.0
    %4304 = vmatpush.msra.mxu0 0.0
    %4305 = vmatpush.msra.mxu0 0.0
    %4306 = vmatpush.msra.mxu0 0.0
    %4307 = vmatpush.msra.mxu0 0.0
    %4308 = vmatpush.msra.mxu0 0.0
    %4309 = vmatpush.msra.mxu0 0.0
    %4310 = vmatpush.msra.mxu0 0.0
    %4311 = vmatpush.msra.mxu0 0.0
    %4312 = vmatpush.msra.mxu0 0.0
    %4313 = vmatpush.msra.mxu0 0.0
    %4314 = vmatpush.msra.mxu0 0.0
    %4315 = vmatpush.msra.mxu0 0.0
    %4316 = vmatpush.msra.mxu0 0.0
    %4317 = vmatpush.msra.mxu0 %v4300
    %4318 = vmatmul.f32.gmra.mxu0 %v934
    %v4319 = vpop.f32.mrf.mxu0
    %v4320 = vadd.f32 %v826, %v4319
    %4321 = vmatmul.f32.gmra.mxu0 %v937
    %v4322 = vpop.f32.mrf.mxu0
    %v4323 = vadd.f32 %v831, %v4322
    %4324 = vdwg.mxu0
    %v4325 = vmul.f32 %v4269, %v4320
    %v4326 = vmul.f32 %v4270, %v4323
    %v4328 = vsel %vm837, %v4214, 0
    %4330 = vmatpush.msra.mxu0 0.0
    %4331 = vmatpush.msra.mxu0 0.0
    %4332 = vmatpush.msra.mxu0 0.0
    %4333 = vmatpush.msra.mxu0 0.0
    %4334 = vmatpush.msra.mxu0 0.0
    %4335 = vmatpush.msra.mxu0 0.0
    %4336 = vmatpush.msra.mxu0 0.0
    %4337 = vmatpush.msra.mxu0 0.0
    %4338 = vmatpush.msra.mxu0 0.0
    %4339 = vmatpush.msra.mxu0 0.0
    %4340 = vmatpush.msra.mxu0 0.0
    %4341 = vmatpush.msra.mxu0 0.0
    %4342 = vmatpush.msra.mxu0 0.0
    %4343 = vmatpush.msra.mxu0 0.0
    %4344 = vmatpush.msra.mxu0 %v4328
    %4345 = vmatpush.msra.mxu0 %v4213
    %4346 = vmatmul.f32.gmra.mxu0 %v835
    %v4347 = vpop.f32.mrf.mxu0
    %v4348 = vadd.f32 1e-08, %v4347
    %4349 = vdwg.mxu0
    %v4350 = vrcp.pop %v4348
    %v4351 = vmul.f32 %v4348, %v4350
    %v4352 = vsub.f32 2.0, %v4351
    %v4353 = vmul.f32 %v4350, %v4352
    %v4354 = vmul.f32 %v706, %v4353
    %v4356 = vsel %vm873, %v4354, 0
    %4358 = vmatpush.msra.mxu0 0.0
    %4359 = vmatpush.msra.mxu0 0.0
    %4360 = vmatpush.msra.mxu0 0.0
    %4361 = vmatpush.msra.mxu0 0.0
    %4362 = vmatpush.msra.mxu0 0.0
    %4363 = vmatpush.msra.mxu0 0.0
    %4364 = vmatpush.msra.mxu0 0.0
    %4365 = vmatpush.msra.mxu0 0.0
    %4366 = vmatpush.msra.mxu0 0.0
    %4367 = vmatpush.msra.mxu0 0.0
    %4368 = vmatpush.msra.mxu0 0.0
    %4369 = vmatpush.msra.mxu0 0.0
    %4370 = vmatpush.msra.mxu0 0.0
    %4371 = vmatpush.msra.mxu0 0.0
    %4372 = vmatpush.msra.mxu0 0.0
    %4373 = vmatpush.msra.mxu0 %v4356
    %4374 = vmatmul.f32.gmra.mxu0 %v868
    %v4375 = vpop.f32.mrf.mxu0
    %v4376 = vadd.f32 %v814, %v4375
    %4377 = vmatmul.f32.gmra.mxu0 %v871
    %v4378 = vpop.f32.mrf.mxu0
    %v4379 = vadd.f32 %v819, %v4378
    %4380 = vdwg.mxu0
    %v4381 = vmul.f32 %v4213, %v4376
    %v4382 = vmul.f32 %v4214, %v4379
    %v4384 = vsel %vm837, %v4382, 0
    %4386 = vmatpush.msra.mxu0 0.0
    %4387 = vmatpush.msra.mxu0 0.0
    %4388 = vmatpush.msra.mxu0 0.0
    %4389 = vmatpush.msra.mxu0 0.0
    %4390 = vmatpush.msra.mxu0 0.0
    %4391 = vmatpush.msra.mxu0 0.0
    %4392 = vmatpush.msra.mxu0 0.0
    %4393 = vmatpush.msra.mxu0 0.0
    %4394 = vmatpush.msra.mxu0 0.0
    %4395 = vmatpush.msra.mxu0 0.0
    %4396 = vmatpush.msra.mxu0 0.0
    %4397 = vmatpush.msra.mxu0 0.0
    %4398 = vmatpush.msra.mxu0 0.0
    %4399 = vmatpush.msra.mxu0 0.0
    %4400 = vmatpush.msra.mxu0 %v4384
    %4401 = vmatpush.msra.mxu0 %v4381
    %4402 = vmatmul.f32.gmra.mxu0 %v903
    %v4403 = vpop.f32.mrf.mxu0
    %v4404 = vadd.f32 1e-08, %v4403
    %4405 = vdwg.mxu0
    %v4406 = vrcp.pop %v4404
    %v4407 = vmul.f32 %v4404, %v4406
    %v4408 = vsub.f32 2.0, %v4407
    %v4409 = vmul.f32 %v4406, %v4408
    %v4410 = vmul.f32 %v757, %v4409
    %v4412 = vsel %vm873, %v4410, 0
    %4414 = vmatpush.msra.mxu0 0.0
    %4415 = vmatpush.msra.mxu0 0.0
    %4416 = vmatpush.msra.mxu0 0.0
    %4417 = vmatpush.msra.mxu0 0.0
    %4418 = vmatpush.msra.mxu0 0.0
    %4419 = vmatpush.msra.mxu0 0.0
    %4420 = vmatpush.msra.mxu0 0.0
    %4421 = vmatpush.msra.mxu0 0.0
    %4422 = vmatpush.msra.mxu0 0.0
    %4423 = vmatpush.msra.mxu0 0.0
    %4424 = vmatpush.msra.mxu0 0.0
    %4425 = vmatpush.msra.mxu0 0.0
    %4426 = vmatpush.msra.mxu0 0.0
    %4427 = vmatpush.msra.mxu0 0.0
    %4428 = vmatpush.msra.mxu0 0.0
    %4429 = vmatpush.msra.mxu0 %v4412
    %4430 = vmatmul.f32.gmra.mxu0 %v934
    %v4431 = vpop.f32.mrf.mxu0
    %v4432 = vadd.f32 %v826, %v4431
    %4433 = vmatmul.f32.gmra.mxu0 %v937
    %v4434 = vpop.f32.mrf.mxu0
    %v4435 = vadd.f32 %v831, %v4434
    %4436 = vdwg.mxu0
    %v4437 = vmul.f32 %v4381, %v4432
    %v4438 = vmul.f32 %v4382, %v4435
    %v4440 = vsel %vm837, %v4326, 0
    %4442 = vmatpush.msra.mxu0 0.0
    %4443 = vmatpush.msra.mxu0 0.0
    %4444 = vmatpush.msra.mxu0 0.0
    %4445 = vmatpush.msra.mxu0 0.0
    %4446 = vmatpush.msra.mxu0 0.0
    %4447 = vmatpush.msra.mxu0 0.0
    %4448 = vmatpush.msra.mxu0 0.0
    %4449 = vmatpush.msra.mxu0 0.0
    %4450 = vmatpush.msra.mxu0 0.0
    %4451 = vmatpush.msra.mxu0 0.0
    %4452 = vmatpush.msra.mxu0 0.0
    %4453 = vmatpush.msra.mxu0 0.0
    %4454 = vmatpush.msra.mxu0 0.0
    %4455 = vmatpush.msra.mxu0 0.0
    %4456 = vmatpush.msra.mxu0 %v4440
    %4457 = vmatpush.msra.mxu0 %v4325
    %4458 = vmatmul.f32.gmra.mxu0 %v835
    %v4459 = vpop.f32.mrf.mxu0
    %v4460 = vadd.f32 1e-08, %v4459
    %4461 = vdwg.mxu0
    %v4462 = vrcp.pop %v4460
    %v4463 = vmul.f32 %v4460, %v4462
    %v4464 = vsub.f32 2.0, %v4463
    %v4465 = vmul.f32 %v4462, %v4464
    %v4466 = vmul.f32 %v686, %v4465
    %v4468 = vsel %vm873, %v4466, 0
    %4470 = vmatpush.msra.mxu0 0.0
    %4471 = vmatpush.msra.mxu0 0.0
    %4472 = vmatpush.msra.mxu0 0.0
    %4473 = vmatpush.msra.mxu0 0.0
    %4474 = vmatpush.msra.mxu0 0.0
    %4475 = vmatpush.msra.mxu0 0.0
    %4476 = vmatpush.msra.mxu0 0.0
    %4477 = vmatpush.msra.mxu0 0.0
    %4478 = vmatpush.msra.mxu0 0.0
    %4479 = vmatpush.msra.mxu0 0.0
    %4480 = vmatpush.msra.mxu0 0.0
    %4481 = vmatpush.msra.mxu0 0.0
    %4482 = vmatpush.msra.mxu0 0.0
    %4483 = vmatpush.msra.mxu0 0.0
    %4484 = vmatpush.msra.mxu0 0.0
    %4485 = vmatpush.msra.mxu0 %v4468
    %4486 = vmatmul.f32.gmra.mxu0 %v868
    %v4487 = vpop.f32.mrf.mxu0
    %v4488 = vadd.f32 %v814, %v4487
    %4489 = vmatmul.f32.gmra.mxu0 %v871
    %v4490 = vpop.f32.mrf.mxu0
    %v4491 = vadd.f32 %v819, %v4490
    %4492 = vdwg.mxu0
    %v4493 = vmul.f32 %v4325, %v4488
    %v4494 = vmul.f32 %v4326, %v4491
    %v4496 = vsel %vm837, %v4494, 0
    %4498 = vmatpush.msra.mxu0 0.0
    %4499 = vmatpush.msra.mxu0 0.0
    %4500 = vmatpush.msra.mxu0 0.0
    %4501 = vmatpush.msra.mxu0 0.0
    %4502 = vmatpush.msra.mxu0 0.0
    %4503 = vmatpush.msra.mxu0 0.0
    %4504 = vmatpush.msra.mxu0 0.0
    %4505 = vmatpush.msra.mxu0 0.0
    %4506 = vmatpush.msra.mxu0 0.0
    %4507 = vmatpush.msra.mxu0 0.0
    %4508 = vmatpush.msra.mxu0 0.0
    %4509 = vmatpush.msra.mxu0 0.0
    %4510 = vmatpush.msra.mxu0 0.0
    %4511 = vmatpush.msra.mxu0 0.0
    %4512 = vmatpush.msra.mxu0 %v4496
    %4513 = vmatpush.msra.mxu0 %v4493
    %4514 = vmatmul.f32.gmra.mxu0 %v903
    %v4515 = vpop.f32.mrf.mxu0
    %v4516 = vadd.f32 1e-08, %v4515
    %4517 = vdwg.mxu0
    %v4518 = vrcp.pop %v4516
    %v4519 = vmul.f32 %v4516, %v4518
    %v4520 = vsub.f32 2.0, %v4519
    %v4521 = vmul.f32 %v4518, %v4520
    %v4522 = vmul.f32 %v737, %v4521
    %v4524 = vsel %vm873, %v4522, 0
    %4526 = vmatpush.msra.mxu0 0.0
    %4527 = vmatpush.msra.mxu0 0.0
    %4528 = vmatpush.msra.mxu0 0.0
    %4529 = vmatpush.msra.mxu0 0.0
    %4530 = vmatpush.msra.mxu0 0.0
    %4531 = vmatpush.msra.mxu0 0.0
    %4532 = vmatpush.msra.mxu0 0.0
    %4533 = vmatpush.msra.mxu0 0.0
    %4534 = vmatpush.msra.mxu0 0.0
    %4535 = vmatpush.msra.mxu0 0.0
    %4536 = vmatpush.msra.mxu0 0.0
    %4537 = vmatpush.msra.mxu0 0.0
    %4538 = vmatpush.msra.mxu0 0.0
    %4539 = vmatpush.msra.mxu0 0.0
    %4540 = vmatpush.msra.mxu0 0.0
    %4541 = vmatpush.msra.mxu0 %v4524
    %4542 = vmatmul.f32.gmra.mxu0 %v934
    %v4543 = vpop.f32.mrf.mxu0
    %v4544 = vadd.f32 %v826, %v4543
    %4545 = vmatmul.f32.gmra.mxu0 %v937
    %v4546 = vpop.f32.mrf.mxu0
    %v4547 = vadd.f32 %v831, %v4546
    %4548 = vdwg.mxu0
    %v4549 = vmul.f32 %v4493, %v4544
    %v4550 = vmul.f32 %v4494, %v4547
    %v4552 = vsel %vm837, %v4438, 0
    %4554 = vmatpush.msra.mxu0 0.0
    %4555 = vmatpush.msra.mxu0 0.0
    %4556 = vmatpush.msra.mxu0 0.0
    %4557 = vmatpush.msra.mxu0 0.0
    %4558 = vmatpush.msra.mxu0 0.0
    %4559 = vmatpush.msra.mxu0 0.0
    %4560 = vmatpush.msra.mxu0 0.0
    %4561 = vmatpush.msra.mxu0 0.0
    %4562 = vmatpush.msra.mxu0 0.0
    %4563 = vmatpush.msra.mxu0 0.0
    %4564 = vmatpush.msra.mxu0 0.0
    %4565 = vmatpush.msra.mxu0 0.0
    %4566 = vmatpush.msra.mxu0 0.0
    %4567 = vmatpush.msra.mxu0 0.0
    %4568 = vmatpush.msra.mxu0 %v4552
    %4569 = vmatpush.msra.mxu0 %v4437
    %4570 = vmatmul.f32.gmra.mxu0 %v835
    %v4571 = vpop.f32.mrf.mxu0
    %v4572 = vadd.f32 1e-08, %v4571
    %4573 = vdwg.mxu0
    %v4574 = vrcp.pop %v4572
    %v4575 = vmul.f32 %v4572, %v4574
    %v4576 = vsub.f32 2.0, %v4575
    %v4577 = vmul.f32 %v4574, %v4576
    %v4578 = vmul.f32 %v706, %v4577
    %v4580 = vsel %vm873, %v4578, 0
    %4582 = vmatpush.msra.mxu0 0.0
    %4583 = vmatpush.msra.mxu0 0.0
    %4584 = vmatpush.msra.mxu0 0.0
    %4585 = vmatpush.msra.mxu0 0.0
    %4586 = vmatpush.msra.mxu0 0.0
    %4587 = vmatpush.msra.mxu0 0.0
    %4588 = vmatpush.msra.mxu0 0.0
    %4589 = vmatpush.msra.mxu0 0.0
    %4590 = vmatpush.msra.mxu0 0.0
    %4591 = vmatpush.msra.mxu0 0.0
    %4592 = vmatpush.msra.mxu0 0.0
    %4593 = vmatpush.msra.mxu0 0.0
    %4594 = vmatpush.msra.mxu0 0.0
    %4595 = vmatpush.msra.mxu0 0.0
    %4596 = vmatpush.msra.mxu0 0.0
    %4597 = vmatpush.msra.mxu0 %v4580
    %4598 = vmatmul.f32.gmra.mxu0 %v868
    %v4599 = vpop.f32.mrf.mxu0
    %v4600 = vadd.f32 %v814, %v4599
    %4601 = vmatmul.f32.gmra.mxu0 %v871
    %v4602 = vpop.f32.mrf.mxu0
    %v4603 = vadd.f32 %v819, %v4602
    %4604 = vdwg.mxu0
    %v4605 = vmul.f32 %v4437, %v4600
    %v4606 = vmul.f32 %v4438, %v4603
    %v4608 = vsel %vm837, %v4606, 0
    %4610 = vmatpush.msra.mxu0 0.0
    %4611 = vmatpush.msra.mxu0 0.0
    %4612 = vmatpush.msra.mxu0 0.0
    %4613 = vmatpush.msra.mxu0 0.0
    %4614 = vmatpush.msra.mxu0 0.0
    %4615 = vmatpush.msra.mxu0 0.0
    %4616 = vmatpush.msra.mxu0 0.0
    %4617 = vmatpush.msra.mxu0 0.0
    %4618 = vmatpush.msra.mxu0 0.0
    %4619 = vmatpush.msra.mxu0 0.0
    %4620 = vmatpush.msra.mxu0 0.0
    %4621 = vmatpush.msra.mxu0 0.0
    %4622 = vmatpush.msra.mxu0 0.0
    %4623 = vmatpush.msra.mxu0 0.0
    %4624 = vmatpush.msra.mxu0 %v4608
    %4625 = vmatpush.msra.mxu0 %v4605
    %4626 = vmatmul.f32.gmra.mxu0 %v903
    %v4627 = vpop.f32.mrf.mxu0
    %v4628 = vadd.f32 1e-08, %v4627
    %4629 = vdwg.mxu0
    %v4630 = vrcp.pop %v4628
    %v4631 = vmul.f32 %v4628, %v4630
    %v4632 = vsub.f32 2.0, %v4631
    %v4633 = vmul.f32 %v4630, %v4632
    %v4634 = vmul.f32 %v757, %v4633
    %v4636 = vsel %vm873, %v4634, 0
    %4638 = vmatpush.msra.mxu0 0.0
    %4639 = vmatpush.msra.mxu0 0.0
    %4640 = vmatpush.msra.mxu0 0.0
    %4641 = vmatpush.msra.mxu0 0.0
    %4642 = vmatpush.msra.mxu0 0.0
    %4643 = vmatpush.msra.mxu0 0.0
    %4644 = vmatpush.msra.mxu0 0.0
    %4645 = vmatpush.msra.mxu0 0.0
    %4646 = vmatpush.msra.mxu0 0.0
    %4647 = vmatpush.msra.mxu0 0.0
    %4648 = vmatpush.msra.mxu0 0.0
    %4649 = vmatpush.msra.mxu0 0.0
    %4650 = vmatpush.msra.mxu0 0.0
    %4651 = vmatpush.msra.mxu0 0.0
    %4652 = vmatpush.msra.mxu0 0.0
    %4653 = vmatpush.msra.mxu0 %v4636
    %4654 = vmatmul.f32.gmra.mxu0 %v934
    %v4655 = vpop.f32.mrf.mxu0
    %v4656 = vadd.f32 %v826, %v4655
    %4657 = vmatmul.f32.gmra.mxu0 %v937
    %v4658 = vpop.f32.mrf.mxu0
    %v4659 = vadd.f32 %v831, %v4658
    %4660 = vdwg.mxu0
    %v4661 = vmul.f32 %v4605, %v4656
    %v4662 = vmul.f32 %v4606, %v4659
    %v4664 = vsel %vm837, %v4550, 0
    %4666 = vmatpush.msra.mxu0 0.0
    %4667 = vmatpush.msra.mxu0 0.0
    %4668 = vmatpush.msra.mxu0 0.0
    %4669 = vmatpush.msra.mxu0 0.0
    %4670 = vmatpush.msra.mxu0 0.0
    %4671 = vmatpush.msra.mxu0 0.0
    %4672 = vmatpush.msra.mxu0 0.0
    %4673 = vmatpush.msra.mxu0 0.0
    %4674 = vmatpush.msra.mxu0 0.0
    %4675 = vmatpush.msra.mxu0 0.0
    %4676 = vmatpush.msra.mxu0 0.0
    %4677 = vmatpush.msra.mxu0 0.0
    %4678 = vmatpush.msra.mxu0 0.0
    %4679 = vmatpush.msra.mxu0 0.0
    %4680 = vmatpush.msra.mxu0 %v4664
    %4681 = vmatpush.msra.mxu0 %v4549
    %4682 = vmatmul.f32.gmra.mxu0 %v835
    %v4683 = vpop.f32.mrf.mxu0
    %v4684 = vadd.f32 1e-08, %v4683
    %4685 = vdwg.mxu0
    %v4686 = vrcp.pop %v4684
    %v4687 = vmul.f32 %v4684, %v4686
    %v4688 = vsub.f32 2.0, %v4687
    %v4689 = vmul.f32 %v4686, %v4688
    %v4690 = vmul.f32 %v686, %v4689
    %v4692 = vsel %vm873, %v4690, 0
    %4694 = vmatpush.msra.mxu0 0.0
    %4695 = vmatpush.msra.mxu0 0.0
    %4696 = vmatpush.msra.mxu0 0.0
    %4697 = vmatpush.msra.mxu0 0.0
    %4698 = vmatpush.msra.mxu0 0.0
    %4699 = vmatpush.msra.mxu0 0.0
    %4700 = vmatpush.msra.mxu0 0.0
    %4701 = vmatpush.msra.mxu0 0.0
    %4702 = vmatpush.msra.mxu0 0.0
    %4703 = vmatpush.msra.mxu0 0.0
    %4704 = vmatpush.msra.mxu0 0.0
    %4705 = vmatpush.msra.mxu0 0.0
    %4706 = vmatpush.msra.mxu0 0.0
    %4707 = vmatpush.msra.mxu0 0.0
    %4708 = vmatpush.msra.mxu0 0.0
    %4709 = vmatpush.msra.mxu0 %v4692
    %4710 = vmatmul.f32.gmra.mxu0 %v868
    %v4711 = vpop.f32.mrf.mxu0
    %v4712 = vadd.f32 %v814, %v4711
    %4713 = vmatmul.f32.gmra.mxu0 %v871
    %v4714 = vpop.f32.mrf.mxu0
    %v4715 = vadd.f32 %v819, %v4714
    %4716 = vdwg.mxu0
    %v4717 = vmul.f32 %v4549, %v4712
    %v4718 = vmul.f32 %v4550, %v4715
    %v4720 = vsel %vm837, %v4718, 0
    %4722 = vmatpush.msra.mxu0 0.0
    %4723 = vmatpush.msra.mxu0 0.0
    %4724 = vmatpush.msra.mxu0 0.0
    %4725 = vmatpush.msra.mxu0 0.0
    %4726 = vmatpush.msra.mxu0 0.0
    %4727 = vmatpush.msra.mxu0 0.0
    %4728 = vmatpush.msra.mxu0 0.0
    %4729 = vmatpush.msra.mxu0 0.0
    %4730 = vmatpush.msra.mxu0 0.0
    %4731 = vmatpush.msra.mxu0 0.0
    %4732 = vmatpush.msra.mxu0 0.0
    %4733 = vmatpush.msra.mxu0 0.0
    %4734 = vmatpush.msra.mxu0 0.0
    %4735 = vmatpush.msra.mxu0 0.0
    %4736 = vmatpush.msra.mxu0 %v4720
    %4737 = vmatpush.msra.mxu0 %v4717
    %4738 = vmatmul.f32.gmra.mxu0 %v903
    %v4739 = vpop.f32.mrf.mxu0
    %v4740 = vadd.f32 1e-08, %v4739
    %4741 = vdwg.mxu0
    %v4742 = vrcp.pop %v4740
    %v4743 = vmul.f32 %v4740, %v4742
    %v4744 = vsub.f32 2.0, %v4743
    %v4745 = vmul.f32 %v4742, %v4744
    %v4746 = vmul.f32 %v737, %v4745
    %v4748 = vsel %vm873, %v4746, 0
    %4750 = vmatpush.msra.mxu0 0.0
    %4751 = vmatpush.msra.mxu0 0.0
    %4752 = vmatpush.msra.mxu0 0.0
    %4753 = vmatpush.msra.mxu0 0.0
    %4754 = vmatpush.msra.mxu0 0.0
    %4755 = vmatpush.msra.mxu0 0.0
    %4756 = vmatpush.msra.mxu0 0.0
    %4757 = vmatpush.msra.mxu0 0.0
    %4758 = vmatpush.msra.mxu0 0.0
    %4759 = vmatpush.msra.mxu0 0.0
    %4760 = vmatpush.msra.mxu0 0.0
    %4761 = vmatpush.msra.mxu0 0.0
    %4762 = vmatpush.msra.mxu0 0.0
    %4763 = vmatpush.msra.mxu0 0.0
    %4764 = vmatpush.msra.mxu0 0.0
    %4765 = vmatpush.msra.mxu0 %v4748
    %4766 = vmatmul.f32.gmra.mxu0 %v934
    %v4767 = vpop.f32.mrf.mxu0
    %v4768 = vadd.f32 %v826, %v4767
    %4769 = vmatmul.f32.gmra.mxu0 %v937
    %v4770 = vpop.f32.mrf.mxu0
    %v4771 = vadd.f32 %v831, %v4770
    %4772 = vdwg.mxu0
    %v4773 = vmul.f32 %v4717, %v4768
    %v4774 = vmul.f32 %v4718, %v4771
    %v4776 = vsel %vm837, %v4662, 0
    %4778 = vmatpush.msra.mxu0 0.0
    %4779 = vmatpush.msra.mxu0 0.0
    %4780 = vmatpush.msra.mxu0 0.0
    %4781 = vmatpush.msra.mxu0 0.0
    %4782 = vmatpush.msra.mxu0 0.0
    %4783 = vmatpush.msra.mxu0 0.0
    %4784 = vmatpush.msra.mxu0 0.0
    %4785 = vmatpush.msra.mxu0 0.0
    %4786 = vmatpush.msra.mxu0 0.0
    %4787 = vmatpush.msra.mxu0 0.0
    %4788 = vmatpush.msra.mxu0 0.0
    %4789 = vmatpush.msra.mxu0 0.0
    %4790 = vmatpush.msra.mxu0 0.0
    %4791 = vmatpush.msra.mxu0 0.0
    %4792 = vmatpush.msra.mxu0 %v4776
    %4793 = vmatpush.msra.mxu0 %v4661
    %4794 = vmatmul.f32.gmra.mxu0 %v835
    %v4795 = vpop.f32.mrf.mxu0
    %v4796 = vadd.f32 1e-08, %v4795
    %4797 = vdwg.mxu0
    %v4798 = vrcp.pop %v4796
    %v4799 = vmul.f32 %v4796, %v4798
    %v4800 = vsub.f32 2.0, %v4799
    %v4801 = vmul.f32 %v4798, %v4800
    %v4802 = vmul.f32 %v706, %v4801
    %v4804 = vsel %vm873, %v4802, 0
    %4806 = vmatpush.msra.mxu0 0.0
    %4807 = vmatpush.msra.mxu0 0.0
    %4808 = vmatpush.msra.mxu0 0.0
    %4809 = vmatpush.msra.mxu0 0.0
    %4810 = vmatpush.msra.mxu0 0.0
    %4811 = vmatpush.msra.mxu0 0.0
    %4812 = vmatpush.msra.mxu0 0.0
    %4813 = vmatpush.msra.mxu0 0.0
    %4814 = vmatpush.msra.mxu0 0.0
    %4815 = vmatpush.msra.mxu0 0.0
    %4816 = vmatpush.msra.mxu0 0.0
    %4817 = vmatpush.msra.mxu0 0.0
    %4818 = vmatpush.msra.mxu0 0.0
    %4819 = vmatpush.msra.mxu0 0.0
    %4820 = vmatpush.msra.mxu0 0.0
    %4821 = vmatpush.msra.mxu0 %v4804
    %4822 = vmatmul.f32.gmra.mxu0 %v868
    %v4823 = vpop.f32.mrf.mxu0
    %v4824 = vadd.f32 %v814, %v4823
    %4825 = vmatmul.f32.gmra.mxu0 %v871
    %v4826 = vpop.f32.mrf.mxu0
    %v4827 = vadd.f32 %v819, %v4826
    %4828 = vdwg.mxu0
    %v4829 = vmul.f32 %v4661, %v4824
    %v4830 = vmul.f32 %v4662, %v4827
    %v4832 = vsel %vm837, %v4830, 0
    %4834 = vmatpush.msra.mxu0 0.0
    %4835 = vmatpush.msra.mxu0 0.0
    %4836 = vmatpush.msra.mxu0 0.0
    %4837 = vmatpush.msra.mxu0 0.0
    %4838 = vmatpush.msra.mxu0 0.0
    %4839 = vmatpush.msra.mxu0 0.0
    %4840 = vmatpush.msra.mxu0 0.0
    %4841 = vmatpush.msra.mxu0 0.0
    %4842 = vmatpush.msra.mxu0 0.0
    %4843 = vmatpush.msra.mxu0 0.0
    %4844 = vmatpush.msra.mxu0 0.0
    %4845 = vmatpush.msra.mxu0 0.0
    %4846 = vmatpush.msra.mxu0 0.0
    %4847 = vmatpush.msra.mxu0 0.0
    %4848 = vmatpush.msra.mxu0 %v4832
    %4849 = vmatpush.msra.mxu0 %v4829
    %4850 = vmatmul.f32.gmra.mxu0 %v903
    %v4851 = vpop.f32.mrf.mxu0
    %v4852 = vadd.f32 1e-08, %v4851
    %4853 = vdwg.mxu0
    %v4854 = vrcp.pop %v4852
    %v4855 = vmul.f32 %v4852, %v4854
    %v4856 = vsub.f32 2.0, %v4855
    %v4857 = vmul.f32 %v4854, %v4856
    %v4858 = vmul.f32 %v757, %v4857
    %v4860 = vsel %vm873, %v4858, 0
    %4862 = vmatpush.msra.mxu0 0.0
    %4863 = vmatpush.msra.mxu0 0.0
    %4864 = vmatpush.msra.mxu0 0.0
    %4865 = vmatpush.msra.mxu0 0.0
    %4866 = vmatpush.msra.mxu0 0.0
    %4867 = vmatpush.msra.mxu0 0.0
    %4868 = vmatpush.msra.mxu0 0.0
    %4869 = vmatpush.msra.mxu0 0.0
    %4870 = vmatpush.msra.mxu0 0.0
    %4871 = vmatpush.msra.mxu0 0.0
    %4872 = vmatpush.msra.mxu0 0.0
    %4873 = vmatpush.msra.mxu0 0.0
    %4874 = vmatpush.msra.mxu0 0.0
    %4875 = vmatpush.msra.mxu0 0.0
    %4876 = vmatpush.msra.mxu0 0.0
    %4877 = vmatpush.msra.mxu0 %v4860
    %4878 = vmatmul.f32.gmra.mxu0 %v934
    %v4879 = vpop.f32.mrf.mxu0
    %v4880 = vadd.f32 %v826, %v4879
    %4881 = vmatmul.f32.gmra.mxu0 %v937
    %v4882 = vpop.f32.mrf.mxu0
    %v4883 = vadd.f32 %v831, %v4882
    %4884 = vdwg.mxu0
    %v4885 = vmul.f32 %v4829, %v4880
    %v4886 = vmul.f32 %v4830, %v4883
    %v4888 = vsel %vm837, %v4774, 0
    %4890 = vmatpush.msra.mxu0 0.0
    %4891 = vmatpush.msra.mxu0 0.0
    %4892 = vmatpush.msra.mxu0 0.0
    %4893 = vmatpush.msra.mxu0 0.0
    %4894 = vmatpush.msra.mxu0 0.0
    %4895 = vmatpush.msra.mxu0 0.0
    %4896 = vmatpush.msra.mxu0 0.0
    %4897 = vmatpush.msra.mxu0 0.0
    %4898 = vmatpush.msra.mxu0 0.0
    %4899 = vmatpush.msra.mxu0 0.0
    %4900 = vmatpush.msra.mxu0 0.0
    %4901 = vmatpush.msra.mxu0 0.0
    %4902 = vmatpush.msra.mxu0 0.0
    %4903 = vmatpush.msra.mxu0 0.0
    %4904 = vmatpush.msra.mxu0 %v4888
    %4905 = vmatpush.msra.mxu0 %v4773
    %4906 = vmatmul.f32.gmra.mxu0 %v835
    %v4907 = vpop.f32.mrf.mxu0
    %v4908 = vadd.f32 1e-08, %v4907
    %4909 = vdwg.mxu0
    %v4910 = vrcp.pop %v4908
    %v4911 = vmul.f32 %v4908, %v4910
    %v4912 = vsub.f32 2.0, %v4911
    %v4913 = vmul.f32 %v4910, %v4912
    %v4914 = vmul.f32 %v686, %v4913
    %v4916 = vsel %vm873, %v4914, 0
    %4918 = vmatpush.msra.mxu0 0.0
    %4919 = vmatpush.msra.mxu0 0.0
    %4920 = vmatpush.msra.mxu0 0.0
    %4921 = vmatpush.msra.mxu0 0.0
    %4922 = vmatpush.msra.mxu0 0.0
    %4923 = vmatpush.msra.mxu0 0.0
    %4924 = vmatpush.msra.mxu0 0.0
    %4925 = vmatpush.msra.mxu0 0.0
    %4926 = vmatpush.msra.mxu0 0.0
    %4927 = vmatpush.msra.mxu0 0.0
    %4928 = vmatpush.msra.mxu0 0.0
    %4929 = vmatpush.msra.mxu0 0.0
    %4930 = vmatpush.msra.mxu0 0.0
    %4931 = vmatpush.msra.mxu0 0.0
    %4932 = vmatpush.msra.mxu0 0.0
    %4933 = vmatpush.msra.mxu0 %v4916
    %4934 = vmatmul.f32.gmra.mxu0 %v868
    %v4935 = vpop.f32.mrf.mxu0
    %v4936 = vadd.f32 %v814, %v4935
    %4937 = vmatmul.f32.gmra.mxu0 %v871
    %v4938 = vpop.f32.mrf.mxu0
    %v4939 = vadd.f32 %v819, %v4938
    %4940 = vdwg.mxu0
    %v4941 = vmul.f32 %v4773, %v4936
    %v4942 = vmul.f32 %v4774, %v4939
    %v4944 = vsel %vm837, %v4942, 0
    %4946 = vmatpush.msra.mxu0 0.0
    %4947 = vmatpush.msra.mxu0 0.0
    %4948 = vmatpush.msra.mxu0 0.0
    %4949 = vmatpush.msra.mxu0 0.0
    %4950 = vmatpush.msra.mxu0 0.0
    %4951 = vmatpush.msra.mxu0 0.0
    %4952 = vmatpush.msra.mxu0 0.0
    %4953 = vmatpush.msra.mxu0 0.0
    %4954 = vmatpush.msra.mxu0 0.0
    %4955 = vmatpush.msra.mxu0 0.0
    %4956 = vmatpush.msra.mxu0 0.0
    %4957 = vmatpush.msra.mxu0 0.0
    %4958 = vmatpush.msra.mxu0 0.0
    %4959 = vmatpush.msra.mxu0 0.0
    %4960 = vmatpush.msra.mxu0 %v4944
    %4961 = vmatpush.msra.mxu0 %v4941
    %4962 = vmatmul.f32.gmra.mxu0 %v903
    %v4963 = vpop.f32.mrf.mxu0
    %v4964 = vadd.f32 1e-08, %v4963
    %4965 = vdwg.mxu0
    %v4966 = vrcp.pop %v4964
    %v4967 = vmul.f32 %v4964, %v4966
    %v4968 = vsub.f32 2.0, %v4967
    %v4969 = vmul.f32 %v4966, %v4968
    %v4970 = vmul.f32 %v737, %v4969
    %v4972 = vsel %vm873, %v4970, 0
    %4974 = vmatpush.msra.mxu0 0.0
    %4975 = vmatpush.msra.mxu0 0.0
    %4976 = vmatpush.msra.mxu0 0.0
    %4977 = vmatpush.msra.mxu0 0.0
    %4978 = vmatpush.msra.mxu0 0.0
    %4979 = vmatpush.msra.mxu0 0.0
    %4980 = vmatpush.msra.mxu0 0.0
    %4981 = vmatpush.msra.mxu0 0.0
    %4982 = vmatpush.msra.mxu0 0.0
    %4983 = vmatpush.msra.mxu0 0.0
    %4984 = vmatpush.msra.mxu0 0.0
    %4985 = vmatpush.msra.mxu0 0.0
    %4986 = vmatpush.msra.mxu0 0.0
    %4987 = vmatpush.msra.mxu0 0.0
    %4988 = vmatpush.msra.mxu0 0.0
    %4989 = vmatpush.msra.mxu0 %v4972
    %4990 = vmatmul.f32.gmra.mxu0 %v934
    %v4991 = vpop.f32.mrf.mxu0
    %v4992 = vadd.f32 %v826, %v4991
    %4993 = vmatmul.f32.gmra.mxu0 %v937
    %v4994 = vpop.f32.mrf.mxu0
    %v4995 = vadd.f32 %v831, %v4994
    %4996 = vdwg.mxu0
    %v4997 = vmul.f32 %v4941, %v4992
    %v4998 = vmul.f32 %v4942, %v4995
    %v5000 = vsel %vm837, %v4886, 0
    %5002 = vmatpush.msra.mxu0 0.0
    %5003 = vmatpush.msra.mxu0 0.0
    %5004 = vmatpush.msra.mxu0 0.0
    %5005 = vmatpush.msra.mxu0 0.0
    %5006 = vmatpush.msra.mxu0 0.0
    %5007 = vmatpush.msra.mxu0 0.0
    %5008 = vmatpush.msra.mxu0 0.0
    %5009 = vmatpush.msra.mxu0 0.0
    %5010 = vmatpush.msra.mxu0 0.0
    %5011 = vmatpush.msra.mxu0 0.0
    %5012 = vmatpush.msra.mxu0 0.0
    %5013 = vmatpush.msra.mxu0 0.0
    %5014 = vmatpush.msra.mxu0 0.0
    %5015 = vmatpush.msra.mxu0 0.0
    %5016 = vmatpush.msra.mxu0 %v5000
    %5017 = vmatpush.msra.mxu0 %v4885
    %5018 = vmatmul.f32.gmra.mxu0 %v835
    %v5019 = vpop.f32.mrf.mxu0
    %v5020 = vadd.f32 1e-08, %v5019
    %5021 = vdwg.mxu0
    %v5022 = vrcp.pop %v5020
    %v5023 = vmul.f32 %v5020, %v5022
    %v5024 = vsub.f32 2.0, %v5023
    %v5025 = vmul.f32 %v5022, %v5024
    %v5026 = vmul.f32 %v706, %v5025
    %v5028 = vsel %vm873, %v5026, 0
    %5030 = vmatpush.msra.mxu0 0.0
    %5031 = vmatpush.msra.mxu0 0.0
    %5032 = vmatpush.msra.mxu0 0.0
    %5033 = vmatpush.msra.mxu0 0.0
    %5034 = vmatpush.msra.mxu0 0.0
    %5035 = vmatpush.msra.mxu0 0.0
    %5036 = vmatpush.msra.mxu0 0.0
    %5037 = vmatpush.msra.mxu0 0.0
    %5038 = vmatpush.msra.mxu0 0.0
    %5039 = vmatpush.msra.mxu0 0.0
    %5040 = vmatpush.msra.mxu0 0.0
    %5041 = vmatpush.msra.mxu0 0.0
    %5042 = vmatpush.msra.mxu0 0.0
    %5043 = vmatpush.msra.mxu0 0.0
    %5044 = vmatpush.msra.mxu0 0.0
    %5045 = vmatpush.msra.mxu0 %v5028
    %5046 = vmatmul.f32.gmra.mxu0 %v868
    %v5047 = vpop.f32.mrf.mxu0
    %v5048 = vadd.f32 %v814, %v5047
    %5049 = vmatmul.f32.gmra.mxu0 %v871
    %v5050 = vpop.f32.mrf.mxu0
    %v5051 = vadd.f32 %v819, %v5050
    %5052 = vdwg.mxu0
    %v5053 = vmul.f32 %v4885, %v5048
    %v5054 = vmul.f32 %v4886, %v5051
    %v5056 = vsel %vm837, %v5054, 0
    %5058 = vmatpush.msra.mxu0 0.0
    %5059 = vmatpush.msra.mxu0 0.0
    %5060 = vmatpush.msra.mxu0 0.0
    %5061 = vmatpush.msra.mxu0 0.0
    %5062 = vmatpush.msra.mxu0 0.0
    %5063 = vmatpush.msra.mxu0 0.0
    %5064 = vmatpush.msra.mxu0 0.0
    %5065 = vmatpush.msra.mxu0 0.0
    %5066 = vmatpush.msra.mxu0 0.0
    %5067 = vmatpush.msra.mxu0 0.0
    %5068 = vmatpush.msra.mxu0 0.0
    %5069 = vmatpush.msra.mxu0 0.0
    %5070 = vmatpush.msra.mxu0 0.0
    %5071 = vmatpush.msra.mxu0 0.0
    %5072 = vmatpush.msra.mxu0 %v5056
    %5073 = vmatpush.msra.mxu0 %v5053
    %5074 = vmatmul.f32.gmra.mxu0 %v903
    %v5075 = vpop.f32.mrf.mxu0
    %v5076 = vadd.f32 1e-08, %v5075
    %5077 = vdwg.mxu0
    %v5078 = vrcp.pop %v5076
    %v5079 = vmul.f32 %v5076, %v5078
    %v5080 = vsub.f32 2.0, %v5079
    %v5081 = vmul.f32 %v5078, %v5080
    %v5082 = vmul.f32 %v757, %v5081
    %v5084 = vsel %vm873, %v5082, 0
    %5086 = vmatpush.msra.mxu0 0.0
    %5087 = vmatpush.msra.mxu0 0.0
    %5088 = vmatpush.msra.mxu0 0.0
    %5089 = vmatpush.msra.mxu0 0.0
    %5090 = vmatpush.msra.mxu0 0.0
    %5091 = vmatpush.msra.mxu0 0.0
    %5092 = vmatpush.msra.mxu0 0.0
    %5093 = vmatpush.msra.mxu0 0.0
    %5094 = vmatpush.msra.mxu0 0.0
    %5095 = vmatpush.msra.mxu0 0.0
    %5096 = vmatpush.msra.mxu0 0.0
    %5097 = vmatpush.msra.mxu0 0.0
    %5098 = vmatpush.msra.mxu0 0.0
    %5099 = vmatpush.msra.mxu0 0.0
    %5100 = vmatpush.msra.mxu0 0.0
    %5101 = vmatpush.msra.mxu0 %v5084
    %5102 = vmatmul.f32.gmra.mxu0 %v934
    %v5103 = vpop.f32.mrf.mxu0
    %v5104 = vadd.f32 %v826, %v5103
    %5105 = vmatmul.f32.gmra.mxu0 %v937
    %v5106 = vpop.f32.mrf.mxu0
    %v5107 = vadd.f32 %v831, %v5106
    %5108 = vdwg.mxu0
    %v5109 = vmul.f32 %v5053, %v5104
    %v5110 = vmul.f32 %v5054, %v5107
    %v5112 = vsel %vm837, %v4998, 0
    %5114 = vmatpush.msra.mxu0 0.0
    %5115 = vmatpush.msra.mxu0 0.0
    %5116 = vmatpush.msra.mxu0 0.0
    %5117 = vmatpush.msra.mxu0 0.0
    %5118 = vmatpush.msra.mxu0 0.0
    %5119 = vmatpush.msra.mxu0 0.0
    %5120 = vmatpush.msra.mxu0 0.0
    %5121 = vmatpush.msra.mxu0 0.0
    %5122 = vmatpush.msra.mxu0 0.0
    %5123 = vmatpush.msra.mxu0 0.0
    %5124 = vmatpush.msra.mxu0 0.0
    %5125 = vmatpush.msra.mxu0 0.0
    %5126 = vmatpush.msra.mxu0 0.0
    %5127 = vmatpush.msra.mxu0 0.0
    %5128 = vmatpush.msra.mxu0 %v5112
    %5129 = vmatpush.msra.mxu0 %v4997
    %5130 = vmatmul.f32.gmra.mxu0 %v835
    %v5131 = vpop.f32.mrf.mxu0
    %v5132 = vadd.f32 1e-08, %v5131
    %5133 = vdwg.mxu0
    %v5134 = vrcp.pop %v5132
    %v5135 = vmul.f32 %v5132, %v5134
    %v5136 = vsub.f32 2.0, %v5135
    %v5137 = vmul.f32 %v5134, %v5136
    %v5138 = vmul.f32 %v686, %v5137
    %v5140 = vsel %vm873, %v5138, 0
    %5142 = vmatpush.msra.mxu0 0.0
    %5143 = vmatpush.msra.mxu0 0.0
    %5144 = vmatpush.msra.mxu0 0.0
    %5145 = vmatpush.msra.mxu0 0.0
    %5146 = vmatpush.msra.mxu0 0.0
    %5147 = vmatpush.msra.mxu0 0.0
    %5148 = vmatpush.msra.mxu0 0.0
    %5149 = vmatpush.msra.mxu0 0.0
    %5150 = vmatpush.msra.mxu0 0.0
    %5151 = vmatpush.msra.mxu0 0.0
    %5152 = vmatpush.msra.mxu0 0.0
    %5153 = vmatpush.msra.mxu0 0.0
    %5154 = vmatpush.msra.mxu0 0.0
    %5155 = vmatpush.msra.mxu0 0.0
    %5156 = vmatpush.msra.mxu0 0.0
    %5157 = vmatpush.msra.mxu0 %v5140
    %5158 = vmatmul.f32.gmra.mxu0 %v868
    %v5159 = vpop.f32.mrf.mxu0
    %v5160 = vadd.f32 %v814, %v5159
    %5161 = vmatmul.f32.gmra.mxu0 %v871
    %v5162 = vpop.f32.mrf.mxu0
    %v5163 = vadd.f32 %v819, %v5162
    %5164 = vdwg.mxu0
    %v5165 = vmul.f32 %v4997, %v5160
    %v5166 = vmul.f32 %v4998, %v5163
    %v5168 = vsel %vm837, %v5166, 0
    %5170 = vmatpush.msra.mxu0 0.0
    %5171 = vmatpush.msra.mxu0 0.0
    %5172 = vmatpush.msra.mxu0 0.0
    %5173 = vmatpush.msra.mxu0 0.0
    %5174 = vmatpush.msra.mxu0 0.0
    %5175 = vmatpush.msra.mxu0 0.0
    %5176 = vmatpush.msra.mxu0 0.0
    %5177 = vmatpush.msra.mxu0 0.0
    %5178 = vmatpush.msra.mxu0 0.0
    %5179 = vmatpush.msra.mxu0 0.0
    %5180 = vmatpush.msra.mxu0 0.0
    %5181 = vmatpush.msra.mxu0 0.0
    %5182 = vmatpush.msra.mxu0 0.0
    %5183 = vmatpush.msra.mxu0 0.0
    %5184 = vmatpush.msra.mxu0 %v5168
    %5185 = vmatpush.msra.mxu0 %v5165
    %5186 = vmatmul.f32.gmra.mxu0 %v903
    %v5187 = vpop.f32.mrf.mxu0
    %v5188 = vadd.f32 1e-08, %v5187
    %5189 = vdwg.mxu0
    %v5190 = vrcp.pop %v5188
    %v5191 = vmul.f32 %v5188, %v5190
    %v5192 = vsub.f32 2.0, %v5191
    %v5193 = vmul.f32 %v5190, %v5192
    %v5194 = vmul.f32 %v737, %v5193
    %v5196 = vsel %vm873, %v5194, 0
    %5198 = vmatpush.msra.mxu0 0.0
    %5199 = vmatpush.msra.mxu0 0.0
    %5200 = vmatpush.msra.mxu0 0.0
    %5201 = vmatpush.msra.mxu0 0.0
    %5202 = vmatpush.msra.mxu0 0.0
    %5203 = vmatpush.msra.mxu0 0.0
    %5204 = vmatpush.msra.mxu0 0.0
    %5205 = vmatpush.msra.mxu0 0.0
    %5206 = vmatpush.msra.mxu0 0.0
    %5207 = vmatpush.msra.mxu0 0.0
    %5208 = vmatpush.msra.mxu0 0.0
    %5209 = vmatpush.msra.mxu0 0.0
    %5210 = vmatpush.msra.mxu0 0.0
    %5211 = vmatpush.msra.mxu0 0.0
    %5212 = vmatpush.msra.mxu0 0.0
    %5213 = vmatpush.msra.mxu0 %v5196
    %5214 = vmatmul.f32.gmra.mxu0 %v934
    %v5215 = vpop.f32.mrf.mxu0
    %v5216 = vadd.f32 %v826, %v5215
    %5217 = vmatmul.f32.gmra.mxu0 %v937
    %v5218 = vpop.f32.mrf.mxu0
    %v5219 = vadd.f32 %v831, %v5218
    %5220 = vdwg.mxu0
    %v5221 = vmul.f32 %v5165, %v5216
    %v5222 = vmul.f32 %v5166, %v5219
    %v5224 = vsel %vm837, %v5110, 0
    %5226 = vmatpush.msra.mxu0 0.0
    %5227 = vmatpush.msra.mxu0 0.0
    %5228 = vmatpush.msra.mxu0 0.0
    %5229 = vmatpush.msra.mxu0 0.0
    %5230 = vmatpush.msra.mxu0 0.0
    %5231 = vmatpush.msra.mxu0 0.0
    %5232 = vmatpush.msra.mxu0 0.0
    %5233 = vmatpush.msra.mxu0 0.0
    %5234 = vmatpush.msra.mxu0 0.0
    %5235 = vmatpush.msra.mxu0 0.0
    %5236 = vmatpush.msra.mxu0 0.0
    %5237 = vmatpush.msra.mxu0 0.0
    %5238 = vmatpush.msra.mxu0 0.0
    %5239 = vmatpush.msra.mxu0 0.0
    %5240 = vmatpush.msra.mxu0 %v5224
    %5241 = vmatpush.msra.mxu0 %v5109
    %5242 = vmatmul.f32.gmra.mxu0 %v835
    %v5243 = vpop.f32.mrf.mxu0
    %v5244 = vadd.f32 1e-08, %v5243
    %5245 = vdwg.mxu0
    %v5246 = vrcp.pop %v5244
    %v5247 = vmul.f32 %v5244, %v5246
    %v5248 = vsub.f32 2.0, %v5247
    %v5249 = vmul.f32 %v5246, %v5248
    %v5250 = vmul.f32 %v706, %v5249
    %v5252 = vsel %vm873, %v5250, 0
    %5254 = vmatpush.msra.mxu0 0.0
    %5255 = vmatpush.msra.mxu0 0.0
    %5256 = vmatpush.msra.mxu0 0.0
    %5257 = vmatpush.msra.mxu0 0.0
    %5258 = vmatpush.msra.mxu0 0.0
    %5259 = vmatpush.msra.mxu0 0.0
    %5260 = vmatpush.msra.mxu0 0.0
    %5261 = vmatpush.msra.mxu0 0.0
    %5262 = vmatpush.msra.mxu0 0.0
    %5263 = vmatpush.msra.mxu0 0.0
    %5264 = vmatpush.msra.mxu0 0.0
    %5265 = vmatpush.msra.mxu0 0.0
    %5266 = vmatpush.msra.mxu0 0.0
    %5267 = vmatpush.msra.mxu0 0.0
    %5268 = vmatpush.msra.mxu0 0.0
    %5269 = vmatpush.msra.mxu0 %v5252
    %5270 = vmatmul.f32.gmra.mxu0 %v868
    %v5271 = vpop.f32.mrf.mxu0
    %v5272 = vadd.f32 %v814, %v5271
    %5273 = vmatmul.f32.gmra.mxu0 %v871
    %v5274 = vpop.f32.mrf.mxu0
    %v5275 = vadd.f32 %v819, %v5274
    %5276 = vdwg.mxu0
    %v5277 = vmul.f32 %v5109, %v5272
    %v5278 = vmul.f32 %v5110, %v5275
    %v5280 = vsel %vm837, %v5278, 0
    %5282 = vmatpush.msra.mxu0 0.0
    %5283 = vmatpush.msra.mxu0 0.0
    %5284 = vmatpush.msra.mxu0 0.0
    %5285 = vmatpush.msra.mxu0 0.0
    %5286 = vmatpush.msra.mxu0 0.0
    %5287 = vmatpush.msra.mxu0 0.0
    %5288 = vmatpush.msra.mxu0 0.0
    %5289 = vmatpush.msra.mxu0 0.0
    %5290 = vmatpush.msra.mxu0 0.0
    %5291 = vmatpush.msra.mxu0 0.0
    %5292 = vmatpush.msra.mxu0 0.0
    %5293 = vmatpush.msra.mxu0 0.0
    %5294 = vmatpush.msra.mxu0 0.0
    %5295 = vmatpush.msra.mxu0 0.0
    %5296 = vmatpush.msra.mxu0 %v5280
    %5297 = vmatpush.msra.mxu0 %v5277
    %5298 = vmatmul.f32.gmra.mxu0 %v903
    %v5299 = vpop.f32.mrf.mxu0
    %v5300 = vadd.f32 1e-08, %v5299
    %5301 = vdwg.mxu0
    %v5302 = vrcp.pop %v5300
    %v5303 = vmul.f32 %v5300, %v5302
    %v5304 = vsub.f32 2.0, %v5303
    %v5305 = vmul.f32 %v5302, %v5304
    %v5306 = vmul.f32 %v757, %v5305
    %v5308 = vsel %vm873, %v5306, 0
    %5310 = vmatpush.msra.mxu0 0.0
    %5311 = vmatpush.msra.mxu0 0.0
    %5312 = vmatpush.msra.mxu0 0.0
    %5313 = vmatpush.msra.mxu0 0.0
    %5314 = vmatpush.msra.mxu0 0.0
    %5315 = vmatpush.msra.mxu0 0.0
    %5316 = vmatpush.msra.mxu0 0.0
    %5317 = vmatpush.msra.mxu0 0.0
    %5318 = vmatpush.msra.mxu0 0.0
    %5319 = vmatpush.msra.mxu0 0.0
    %5320 = vmatpush.msra.mxu0 0.0
    %5321 = vmatpush.msra.mxu0 0.0
    %5322 = vmatpush.msra.mxu0 0.0
    %5323 = vmatpush.msra.mxu0 0.0
    %5324 = vmatpush.msra.mxu0 0.0
    %5325 = vmatpush.msra.mxu0 %v5308
    %5326 = vmatmul.f32.gmra.mxu0 %v934
    %v5327 = vpop.f32.mrf.mxu0
    %v5328 = vadd.f32 %v826, %v5327
    %5329 = vmatmul.f32.gmra.mxu0 %v937
    %v5330 = vpop.f32.mrf.mxu0
    %v5331 = vadd.f32 %v831, %v5330
    %5332 = vdwg.mxu0
    %v5333 = vmul.f32 %v5277, %v5328
    %v5334 = vmul.f32 %v5278, %v5331
    %v5336 = vsel %vm837, %v5222, 0
    %5338 = vmatpush.msra.mxu0 0.0
    %5339 = vmatpush.msra.mxu0 0.0
    %5340 = vmatpush.msra.mxu0 0.0
    %5341 = vmatpush.msra.mxu0 0.0
    %5342 = vmatpush.msra.mxu0 0.0
    %5343 = vmatpush.msra.mxu0 0.0
    %5344 = vmatpush.msra.mxu0 0.0
    %5345 = vmatpush.msra.mxu0 0.0
    %5346 = vmatpush.msra.mxu0 0.0
    %5347 = vmatpush.msra.mxu0 0.0
    %5348 = vmatpush.msra.mxu0 0.0
    %5349 = vmatpush.msra.mxu0 0.0
    %5350 = vmatpush.msra.mxu0 0.0
    %5351 = vmatpush.msra.mxu0 0.0
    %5352 = vmatpush.msra.mxu0 %v5336
    %5353 = vmatpush.msra.mxu0 %v5221
    %5354 = vmatmul.f32.gmra.mxu0 %v835
    %v5355 = vpop.f32.mrf.mxu0
    %v5356 = vadd.f32 1e-08, %v5355
    %5357 = vdwg.mxu0
    %v5358 = vrcp.pop %v5356
    %v5359 = vmul.f32 %v5356, %v5358
    %v5360 = vsub.f32 2.0, %v5359
    %v5361 = vmul.f32 %v5358, %v5360
    %v5362 = vmul.f32 %v686, %v5361
    %v5364 = vsel %vm873, %v5362, 0
    %5366 = vmatpush.msra.mxu0 0.0
    %5367 = vmatpush.msra.mxu0 0.0
    %5368 = vmatpush.msra.mxu0 0.0
    %5369 = vmatpush.msra.mxu0 0.0
    %5370 = vmatpush.msra.mxu0 0.0
    %5371 = vmatpush.msra.mxu0 0.0
    %5372 = vmatpush.msra.mxu0 0.0
    %5373 = vmatpush.msra.mxu0 0.0
    %5374 = vmatpush.msra.mxu0 0.0
    %5375 = vmatpush.msra.mxu0 0.0
    %5376 = vmatpush.msra.mxu0 0.0
    %5377 = vmatpush.msra.mxu0 0.0
    %5378 = vmatpush.msra.mxu0 0.0
    %5379 = vmatpush.msra.mxu0 0.0
    %5380 = vmatpush.msra.mxu0 0.0
    %5381 = vmatpush.msra.mxu0 %v5364
    %5382 = vmatmul.f32.gmra.mxu0 %v868
    %v5383 = vpop.f32.mrf.mxu0
    %v5384 = vadd.f32 %v814, %v5383
    %5385 = vmatmul.f32.gmra.mxu0 %v871
    %v5386 = vpop.f32.mrf.mxu0
    %v5387 = vadd.f32 %v819, %v5386
    %5388 = vdwg.mxu0
    %v5389 = vmul.f32 %v5221, %v5384
    %v5390 = vmul.f32 %v5222, %v5387
    %v5392 = vsel %vm837, %v5390, 0
    %5394 = vmatpush.msra.mxu0 0.0
    %5395 = vmatpush.msra.mxu0 0.0
    %5396 = vmatpush.msra.mxu0 0.0
    %5397 = vmatpush.msra.mxu0 0.0
    %5398 = vmatpush.msra.mxu0 0.0
    %5399 = vmatpush.msra.mxu0 0.0
    %5400 = vmatpush.msra.mxu0 0.0
    %5401 = vmatpush.msra.mxu0 0.0
    %5402 = vmatpush.msra.mxu0 0.0
    %5403 = vmatpush.msra.mxu0 0.0
    %5404 = vmatpush.msra.mxu0 0.0
    %5405 = vmatpush.msra.mxu0 0.0
    %5406 = vmatpush.msra.mxu0 0.0
    %5407 = vmatpush.msra.mxu0 0.0
    %5408 = vmatpush.msra.mxu0 %v5392
    %5409 = vmatpush.msra.mxu0 %v5389
    %5410 = vmatmul.f32.gmra.mxu0 %v903
    %v5411 = vpop.f32.mrf.mxu0
    %v5412 = vadd.f32 1e-08, %v5411
    %5413 = vdwg.mxu0
    %v5414 = vrcp.pop %v5412
    %v5415 = vmul.f32 %v5412, %v5414
    %v5416 = vsub.f32 2.0, %v5415
    %v5417 = vmul.f32 %v5414, %v5416
    %v5418 = vmul.f32 %v737, %v5417
    %v5420 = vsel %vm873, %v5418, 0
    %5422 = vmatpush.msra.mxu0 0.0
    %5423 = vmatpush.msra.mxu0 0.0
    %5424 = vmatpush.msra.mxu0 0.0
    %5425 = vmatpush.msra.mxu0 0.0
    %5426 = vmatpush.msra.mxu0 0.0
    %5427 = vmatpush.msra.mxu0 0.0
    %5428 = vmatpush.msra.mxu0 0.0
    %5429 = vmatpush.msra.mxu0 0.0
    %5430 = vmatpush.msra.mxu0 0.0
    %5431 = vmatpush.msra.mxu0 0.0
    %5432 = vmatpush.msra.mxu0 0.0
    %5433 = vmatpush.msra.mxu0 0.0
    %5434 = vmatpush.msra.mxu0 0.0
    %5435 = vmatpush.msra.mxu0 0.0
    %5436 = vmatpush.msra.mxu0 0.0
    %5437 = vmatpush.msra.mxu0 %v5420
    %5438 = vmatmul.f32.gmra.mxu0 %v934
    %v5439 = vpop.f32.mrf.mxu0
    %v5440 = vadd.f32 %v826, %v5439
    %5441 = vmatmul.f32.gmra.mxu0 %v937
    %v5442 = vpop.f32.mrf.mxu0
    %v5443 = vadd.f32 %v831, %v5442
    %5444 = vdwg.mxu0
    %v5445 = vmul.f32 %v5389, %v5440
    %v5446 = vmul.f32 %v5390, %v5443
    %v5448 = vsel %vm837, %v5334, 0
    %5450 = vmatpush.msra.mxu0 0.0
    %5451 = vmatpush.msra.mxu0 0.0
    %5452 = vmatpush.msra.mxu0 0.0
    %5453 = vmatpush.msra.mxu0 0.0
    %5454 = vmatpush.msra.mxu0 0.0
    %5455 = vmatpush.msra.mxu0 0.0
    %5456 = vmatpush.msra.mxu0 0.0
    %5457 = vmatpush.msra.mxu0 0.0
    %5458 = vmatpush.msra.mxu0 0.0
    %5459 = vmatpush.msra.mxu0 0.0
    %5460 = vmatpush.msra.mxu0 0.0
    %5461 = vmatpush.msra.mxu0 0.0
    %5462 = vmatpush.msra.mxu0 0.0
    %5463 = vmatpush.msra.mxu0 0.0
    %5464 = vmatpush.msra.mxu0 %v5448
    %5465 = vmatpush.msra.mxu0 %v5333
    %5466 = vmatmul.f32.gmra.mxu0 %v835
    %v5467 = vpop.f32.mrf.mxu0
    %v5468 = vadd.f32 1e-08, %v5467
    %5469 = vdwg.mxu0
    %v5470 = vrcp.pop %v5468
    %v5471 = vmul.f32 %v5468, %v5470
    %v5472 = vsub.f32 2.0, %v5471
    %v5473 = vmul.f32 %v5470, %v5472
    %v5474 = vmul.f32 %v706, %v5473
    %v5476 = vsel %vm873, %v5474, 0
    %5478 = vmatpush.msra.mxu0 0.0
    %5479 = vmatpush.msra.mxu0 0.0
    %5480 = vmatpush.msra.mxu0 0.0
    %5481 = vmatpush.msra.mxu0 0.0
    %5482 = vmatpush.msra.mxu0 0.0
    %5483 = vmatpush.msra.mxu0 0.0
    %5484 = vmatpush.msra.mxu0 0.0
    %5485 = vmatpush.msra.mxu0 0.0
    %5486 = vmatpush.msra.mxu0 0.0
    %5487 = vmatpush.msra.mxu0 0.0
    %5488 = vmatpush.msra.mxu0 0.0
    %5489 = vmatpush.msra.mxu0 0.0
    %5490 = vmatpush.msra.mxu0 0.0
    %5491 = vmatpush.msra.mxu0 0.0
    %5492 = vmatpush.msra.mxu0 0.0
    %5493 = vmatpush.msra.mxu0 %v5476
    %5494 = vmatmul.f32.gmra.mxu0 %v868
    %v5495 = vpop.f32.mrf.mxu0
    %v5496 = vadd.f32 %v814, %v5495
    %5497 = vmatmul.f32.gmra.mxu0 %v871
    %v5498 = vpop.f32.mrf.mxu0
    %v5499 = vadd.f32 %v819, %v5498
    %5500 = vdwg.mxu0
    %v5501 = vmul.f32 %v5333, %v5496
    %v5502 = vmul.f32 %v5334, %v5499
    %v5504 = vsel %vm837, %v5502, 0
    %5506 = vmatpush.msra.mxu0 0.0
    %5507 = vmatpush.msra.mxu0 0.0
    %5508 = vmatpush.msra.mxu0 0.0
    %5509 = vmatpush.msra.mxu0 0.0
    %5510 = vmatpush.msra.mxu0 0.0
    %5511 = vmatpush.msra.mxu0 0.0
    %5512 = vmatpush.msra.mxu0 0.0
    %5513 = vmatpush.msra.mxu0 0.0
    %5514 = vmatpush.msra.mxu0 0.0
    %5515 = vmatpush.msra.mxu0 0.0
    %5516 = vmatpush.msra.mxu0 0.0
    %5517 = vmatpush.msra.mxu0 0.0
    %5518 = vmatpush.msra.mxu0 0.0
    %5519 = vmatpush.msra.mxu0 0.0
    %5520 = vmatpush.msra.mxu0 %v5504
    %5521 = vmatpush.msra.mxu0 %v5501
    %5522 = vmatmul.f32.gmra.mxu0 %v903
    %v5523 = vpop.f32.mrf.mxu0
    %v5524 = vadd.f32 1e-08, %v5523
    %5525 = vdwg.mxu0
    %v5526 = vrcp.pop %v5524
    %v5527 = vmul.f32 %v5524, %v5526
    %v5528 = vsub.f32 2.0, %v5527
    %v5529 = vmul.f32 %v5526, %v5528
    %v5530 = vmul.f32 %v757, %v5529
    %v5532 = vsel %vm873, %v5530, 0
    %5534 = vmatpush.msra.mxu0 0.0
    %5535 = vmatpush.msra.mxu0 0.0
    %5536 = vmatpush.msra.mxu0 0.0
    %5537 = vmatpush.msra.mxu0 0.0
    %5538 = vmatpush.msra.mxu0 0.0
    %5539 = vmatpush.msra.mxu0 0.0
    %5540 = vmatpush.msra.mxu0 0.0
    %5541 = vmatpush.msra.mxu0 0.0
    %5542 = vmatpush.msra.mxu0 0.0
    %5543 = vmatpush.msra.mxu0 0.0
    %5544 = vmatpush.msra.mxu0 0.0
    %5545 = vmatpush.msra.mxu0 0.0
    %5546 = vmatpush.msra.mxu0 0.0
    %5547 = vmatpush.msra.mxu0 0.0
    %5548 = vmatpush.msra.mxu0 0.0
    %5549 = vmatpush.msra.mxu0 %v5532
    %5550 = vmatmul.f32.gmra.mxu0 %v934
    %v5551 = vpop.f32.mrf.mxu0
    %v5552 = vadd.f32 %v826, %v5551
    %5553 = vmatmul.f32.gmra.mxu0 %v937
    %v5554 = vpop.f32.mrf.mxu0
    %v5555 = vadd.f32 %v831, %v5554
    %5556 = vdwg.mxu0
    %v5557 = vmul.f32 %v5501, %v5552
    %v5558 = vmul.f32 %v5502, %v5555
    %v5560 = vsel %vm837, %v5446, 0
    %5562 = vmatpush.msra.mxu0 0.0
    %5563 = vmatpush.msra.mxu0 0.0
    %5564 = vmatpush.msra.mxu0 0.0
    %5565 = vmatpush.msra.mxu0 0.0
    %5566 = vmatpush.msra.mxu0 0.0
    %5567 = vmatpush.msra.mxu0 0.0
    %5568 = vmatpush.msra.mxu0 0.0
    %5569 = vmatpush.msra.mxu0 0.0
    %5570 = vmatpush.msra.mxu0 0.0
    %5571 = vmatpush.msra.mxu0 0.0
    %5572 = vmatpush.msra.mxu0 0.0
    %5573 = vmatpush.msra.mxu0 0.0
    %5574 = vmatpush.msra.mxu0 0.0
    %5575 = vmatpush.msra.mxu0 0.0
    %5576 = vmatpush.msra.mxu0 %v5560
    %5577 = vmatpush.msra.mxu0 %v5445
    %5578 = vmatmul.f32.gmra.mxu0 %v835
    %v5579 = vpop.f32.mrf.mxu0
    %v5580 = vadd.f32 1e-08, %v5579
    %5581 = vdwg.mxu0
    %v5582 = vrcp.pop %v5580
    %v5583 = vmul.f32 %v5580, %v5582
    %v5584 = vsub.f32 2.0, %v5583
    %v5585 = vmul.f32 %v5582, %v5584
    %v5586 = vmul.f32 %v686, %v5585
    %v5588 = vsel %vm873, %v5586, 0
    %5590 = vmatpush.msra.mxu0 0.0
    %5591 = vmatpush.msra.mxu0 0.0
    %5592 = vmatpush.msra.mxu0 0.0
    %5593 = vmatpush.msra.mxu0 0.0
    %5594 = vmatpush.msra.mxu0 0.0
    %5595 = vmatpush.msra.mxu0 0.0
    %5596 = vmatpush.msra.mxu0 0.0
    %5597 = vmatpush.msra.mxu0 0.0
    %5598 = vmatpush.msra.mxu0 0.0
    %5599 = vmatpush.msra.mxu0 0.0
    %5600 = vmatpush.msra.mxu0 0.0
    %5601 = vmatpush.msra.mxu0 0.0
    %5602 = vmatpush.msra.mxu0 0.0
    %5603 = vmatpush.msra.mxu0 0.0
    %5604 = vmatpush.msra.mxu0 0.0
    %5605 = vmatpush.msra.mxu0 %v5588
    %5606 = vmatmul.f32.gmra.mxu0 %v868
    %v5607 = vpop.f32.mrf.mxu0
    %v5608 = vadd.f32 %v814, %v5607
    %5609 = vmatmul.f32.gmra.mxu0 %v871
    %v5610 = vpop.f32.mrf.mxu0
    %v5611 = vadd.f32 %v819, %v5610
    %5612 = vdwg.mxu0
    %v5613 = vmul.f32 %v5445, %v5608
    %v5614 = vmul.f32 %v5446, %v5611
    %v5616 = vsel %vm837, %v5614, 0
    %5618 = vmatpush.msra.mxu0 0.0
    %5619 = vmatpush.msra.mxu0 0.0
    %5620 = vmatpush.msra.mxu0 0.0
    %5621 = vmatpush.msra.mxu0 0.0
    %5622 = vmatpush.msra.mxu0 0.0
    %5623 = vmatpush.msra.mxu0 0.0
    %5624 = vmatpush.msra.mxu0 0.0
    %5625 = vmatpush.msra.mxu0 0.0
    %5626 = vmatpush.msra.mxu0 0.0
    %5627 = vmatpush.msra.mxu0 0.0
    %5628 = vmatpush.msra.mxu0 0.0
    %5629 = vmatpush.msra.mxu0 0.0
    %5630 = vmatpush.msra.mxu0 0.0
    %5631 = vmatpush.msra.mxu0 0.0
    %5632 = vmatpush.msra.mxu0 %v5616
    %5633 = vmatpush.msra.mxu0 %v5613
    %5634 = vmatmul.f32.gmra.mxu0 %v903
    %v5635 = vpop.f32.mrf.mxu0
    %v5636 = vadd.f32 1e-08, %v5635
    %5637 = vdwg.mxu0
    %v5638 = vrcp.pop %v5636
    %v5639 = vmul.f32 %v5636, %v5638
    %v5640 = vsub.f32 2.0, %v5639
    %v5641 = vmul.f32 %v5638, %v5640
    %v5642 = vmul.f32 %v737, %v5641
    %v5644 = vsel %vm873, %v5642, 0
    %5646 = vmatpush.msra.mxu0 0.0
    %5647 = vmatpush.msra.mxu0 0.0
    %5648 = vmatpush.msra.mxu0 0.0
    %5649 = vmatpush.msra.mxu0 0.0
    %5650 = vmatpush.msra.mxu0 0.0
    %5651 = vmatpush.msra.mxu0 0.0
    %5652 = vmatpush.msra.mxu0 0.0
    %5653 = vmatpush.msra.mxu0 0.0
    %5654 = vmatpush.msra.mxu0 0.0
    %5655 = vmatpush.msra.mxu0 0.0
    %5656 = vmatpush.msra.mxu0 0.0
    %5657 = vmatpush.msra.mxu0 0.0
    %5658 = vmatpush.msra.mxu0 0.0
    %5659 = vmatpush.msra.mxu0 0.0
    %5660 = vmatpush.msra.mxu0 0.0
    %5661 = vmatpush.msra.mxu0 %v5644
    %5662 = vmatmul.f32.gmra.mxu0 %v934
    %v5663 = vpop.f32.mrf.mxu0
    %v5664 = vadd.f32 %v826, %v5663
    %5665 = vmatmul.f32.gmra.mxu0 %v937
    %v5666 = vpop.f32.mrf.mxu0
    %v5667 = vadd.f32 %v831, %v5666
    %5668 = vdwg.mxu0
    %v5669 = vmul.f32 %v5613, %v5664
    %v5670 = vmul.f32 %v5614, %v5667
    %v5672 = vsel %vm837, %v5558, 0
    %5674 = vmatpush.msra.mxu0 0.0
    %5675 = vmatpush.msra.mxu0 0.0
    %5676 = vmatpush.msra.mxu0 0.0
    %5677 = vmatpush.msra.mxu0 0.0
    %5678 = vmatpush.msra.mxu0 0.0
    %5679 = vmatpush.msra.mxu0 0.0
    %5680 = vmatpush.msra.mxu0 0.0
    %5681 = vmatpush.msra.mxu0 0.0
    %5682 = vmatpush.msra.mxu0 0.0
    %5683 = vmatpush.msra.mxu0 0.0
    %5684 = vmatpush.msra.mxu0 0.0
    %5685 = vmatpush.msra.mxu0 0.0
    %5686 = vmatpush.msra.mxu0 0.0
    %5687 = vmatpush.msra.mxu0 0.0
    %5688 = vmatpush.msra.mxu0 %v5672
    %5689 = vmatpush.msra.mxu0 %v5557
    %5690 = vmatmul.f32.gmra.mxu0 %v835
    %v5691 = vpop.f32.mrf.mxu0
    %v5692 = vadd.f32 1e-08, %v5691
    %5693 = vdwg.mxu0
    %v5694 = vrcp.pop %v5692
    %v5695 = vmul.f32 %v5692, %v5694
    %v5696 = vsub.f32 2.0, %v5695
    %v5697 = vmul.f32 %v5694, %v5696
    %v5698 = vmul.f32 %v706, %v5697
    %v5700 = vsel %vm873, %v5698, 0
    %5702 = vmatpush.msra.mxu0 0.0
    %5703 = vmatpush.msra.mxu0 0.0
    %5704 = vmatpush.msra.mxu0 0.0
    %5705 = vmatpush.msra.mxu0 0.0
    %5706 = vmatpush.msra.mxu0 0.0
    %5707 = vmatpush.msra.mxu0 0.0
    %5708 = vmatpush.msra.mxu0 0.0
    %5709 = vmatpush.msra.mxu0 0.0
    %5710 = vmatpush.msra.mxu0 0.0
    %5711 = vmatpush.msra.mxu0 0.0
    %5712 = vmatpush.msra.mxu0 0.0
    %5713 = vmatpush.msra.mxu0 0.0
    %5714 = vmatpush.msra.mxu0 0.0
    %5715 = vmatpush.msra.mxu0 0.0
    %5716 = vmatpush.msra.mxu0 0.0
    %5717 = vmatpush.msra.mxu0 %v5700
    %5718 = vmatmul.f32.gmra.mxu0 %v868
    %v5719 = vpop.f32.mrf.mxu0
    %v5720 = vadd.f32 %v814, %v5719
    %5721 = vmatmul.f32.gmra.mxu0 %v871
    %v5722 = vpop.f32.mrf.mxu0
    %v5723 = vadd.f32 %v819, %v5722
    %5724 = vdwg.mxu0
    %v5725 = vmul.f32 %v5557, %v5720
    %v5726 = vmul.f32 %v5558, %v5723
    %v5728 = vsel %vm837, %v5726, 0
    %5730 = vmatpush.msra.mxu0 0.0
    %5731 = vmatpush.msra.mxu0 0.0
    %5732 = vmatpush.msra.mxu0 0.0
    %5733 = vmatpush.msra.mxu0 0.0
    %5734 = vmatpush.msra.mxu0 0.0
    %5735 = vmatpush.msra.mxu0 0.0
    %5736 = vmatpush.msra.mxu0 0.0
    %5737 = vmatpush.msra.mxu0 0.0
    %5738 = vmatpush.msra.mxu0 0.0
    %5739 = vmatpush.msra.mxu0 0.0
    %5740 = vmatpush.msra.mxu0 0.0
    %5741 = vmatpush.msra.mxu0 0.0
    %5742 = vmatpush.msra.mxu0 0.0
    %5743 = vmatpush.msra.mxu0 0.0
    %5744 = vmatpush.msra.mxu0 %v5728
    %5745 = vmatpush.msra.mxu0 %v5725
    %5746 = vmatmul.f32.gmra.mxu0 %v903
    %v5747 = vpop.f32.mrf.mxu0
    %v5748 = vadd.f32 1e-08, %v5747
    %5749 = vdwg.mxu0
    %v5750 = vrcp.pop %v5748
    %v5751 = vmul.f32 %v5748, %v5750
    %v5752 = vsub.f32 2.0, %v5751
    %v5753 = vmul.f32 %v5750, %v5752
    %v5754 = vmul.f32 %v757, %v5753
    %v5756 = vsel %vm873, %v5754, 0
    %5758 = vmatpush.msra.mxu0 0.0
    %5759 = vmatpush.msra.mxu0 0.0
    %5760 = vmatpush.msra.mxu0 0.0
    %5761 = vmatpush.msra.mxu0 0.0
    %5762 = vmatpush.msra.mxu0 0.0
    %5763 = vmatpush.msra.mxu0 0.0
    %5764 = vmatpush.msra.mxu0 0.0
    %5765 = vmatpush.msra.mxu0 0.0
    %5766 = vmatpush.msra.mxu0 0.0
    %5767 = vmatpush.msra.mxu0 0.0
    %5768 = vmatpush.msra.mxu0 0.0
    %5769 = vmatpush.msra.mxu0 0.0
    %5770 = vmatpush.msra.mxu0 0.0
    %5771 = vmatpush.msra.mxu0 0.0
    %5772 = vmatpush.msra.mxu0 0.0
    %5773 = vmatpush.msra.mxu0 %v5756
    %5774 = vmatmul.f32.gmra.mxu0 %v934
    %v5775 = vpop.f32.mrf.mxu0
    %v5776 = vadd.f32 %v826, %v5775
    %5777 = vmatmul.f32.gmra.mxu0 %v937
    %v5778 = vpop.f32.mrf.mxu0
    %v5779 = vadd.f32 %v831, %v5778
    %5780 = vdwg.mxu0
    %v5781 = vmul.f32 %v5725, %v5776
    %v5782 = vmul.f32 %v5726, %v5779
    %v5784 = vsel %vm837, %v5670, 0
    %5786 = vmatpush.msra.mxu0 0.0
    %5787 = vmatpush.msra.mxu0 0.0
    %5788 = vmatpush.msra.mxu0 0.0
    %5789 = vmatpush.msra.mxu0 0.0
    %5790 = vmatpush.msra.mxu0 0.0
    %5791 = vmatpush.msra.mxu0 0.0
    %5792 = vmatpush.msra.mxu0 0.0
    %5793 = vmatpush.msra.mxu0 0.0
    %5794 = vmatpush.msra.mxu0 0.0
    %5795 = vmatpush.msra.mxu0 0.0
    %5796 = vmatpush.msra.mxu0 0.0
    %5797 = vmatpush.msra.mxu0 0.0
    %5798 = vmatpush.msra.mxu0 0.0
    %5799 = vmatpush.msra.mxu0 0.0
    %5800 = vmatpush.msra.mxu0 %v5784
    %5801 = vmatpush.msra.mxu0 %v5669
    %5802 = vmatmul.f32.gmra.mxu0 %v835
    %v5803 = vpop.f32.mrf.mxu0
    %v5804 = vadd.f32 1e-08, %v5803
    %5805 = vdwg.mxu0
    %v5806 = vrcp.pop %v5804
    %v5807 = vmul.f32 %v5804, %v5806
    %v5808 = vsub.f32 2.0, %v5807
    %v5809 = vmul.f32 %v5806, %v5808
    %v5810 = vmul.f32 %v686, %v5809
    %v5812 = vsel %vm873, %v5810, 0
    %5814 = vmatpush.msra.mxu0 0.0
    %5815 = vmatpush.msra.mxu0 0.0
    %5816 = vmatpush.msra.mxu0 0.0
    %5817 = vmatpush.msra.mxu0 0.0
    %5818 = vmatpush.msra.mxu0 0.0
    %5819 = vmatpush.msra.mxu0 0.0
    %5820 = vmatpush.msra.mxu0 0.0
    %5821 = vmatpush.msra.mxu0 0.0
    %5822 = vmatpush.msra.mxu0 0.0
    %5823 = vmatpush.msra.mxu0 0.0
    %5824 = vmatpush.msra.mxu0 0.0
    %5825 = vmatpush.msra.mxu0 0.0
    %5826 = vmatpush.msra.mxu0 0.0
    %5827 = vmatpush.msra.mxu0 0.0
    %5828 = vmatpush.msra.mxu0 0.0
    %5829 = vmatpush.msra.mxu0 %v5812
    %5830 = vmatmul.f32.gmra.mxu0 %v868
    %v5831 = vpop.f32.mrf.mxu0
    %v5832 = vadd.f32 %v814, %v5831
    %5833 = vmatmul.f32.gmra.mxu0 %v871
    %v5834 = vpop.f32.mrf.mxu0
    %v5835 = vadd.f32 %v819, %v5834
    %5836 = vdwg.mxu0
    %v5837 = vmul.f32 %v5669, %v5832
    %v5838 = vmul.f32 %v5670, %v5835
    %v5840 = vsel %vm837, %v5838, 0
    %5842 = vmatpush.msra.mxu0 0.0
    %5843 = vmatpush.msra.mxu0 0.0
    %5844 = vmatpush.msra.mxu0 0.0
    %5845 = vmatpush.msra.mxu0 0.0
    %5846 = vmatpush.msra.mxu0 0.0
    %5847 = vmatpush.msra.mxu0 0.0
    %5848 = vmatpush.msra.mxu0 0.0
    %5849 = vmatpush.msra.mxu0 0.0
    %5850 = vmatpush.msra.mxu0 0.0
    %5851 = vmatpush.msra.mxu0 0.0
    %5852 = vmatpush.msra.mxu0 0.0
    %5853 = vmatpush.msra.mxu0 0.0
    %5854 = vmatpush.msra.mxu0 0.0
    %5855 = vmatpush.msra.mxu0 0.0
    %5856 = vmatpush.msra.mxu0 %v5840
    %5857 = vmatpush.msra.mxu0 %v5837
    %5858 = vmatmul.f32.gmra.mxu0 %v903
    %v5859 = vpop.f32.mrf.mxu0
    %v5860 = vadd.f32 1e-08, %v5859
    %5861 = vdwg.mxu0
    %v5862 = vrcp.pop %v5860
    %v5863 = vmul.f32 %v5860, %v5862
    %v5864 = vsub.f32 2.0, %v5863
    %v5865 = vmul.f32 %v5862, %v5864
    %v5866 = vmul.f32 %v737, %v5865
    %v5868 = vsel %vm873, %v5866, 0
    %5870 = vmatpush.msra.mxu0 0.0
    %5871 = vmatpush.msra.mxu0 0.0
    %5872 = vmatpush.msra.mxu0 0.0
    %5873 = vmatpush.msra.mxu0 0.0
    %5874 = vmatpush.msra.mxu0 0.0
    %5875 = vmatpush.msra.mxu0 0.0
    %5876 = vmatpush.msra.mxu0 0.0
    %5877 = vmatpush.msra.mxu0 0.0
    %5878 = vmatpush.msra.mxu0 0.0
    %5879 = vmatpush.msra.mxu0 0.0
    %5880 = vmatpush.msra.mxu0 0.0
    %5881 = vmatpush.msra.mxu0 0.0
    %5882 = vmatpush.msra.mxu0 0.0
    %5883 = vmatpush.msra.mxu0 0.0
    %5884 = vmatpush.msra.mxu0 0.0
    %5885 = vmatpush.msra.mxu0 %v5868
    %5886 = vmatmul.f32.gmra.mxu0 %v934
    %v5887 = vpop.f32.mrf.mxu0
    %v5888 = vadd.f32 %v826, %v5887
    %5889 = vmatmul.f32.gmra.mxu0 %v937
    %v5890 = vpop.f32.mrf.mxu0
    %v5891 = vadd.f32 %v831, %v5890
    %5892 = vdwg.mxu0
    %v5893 = vmul.f32 %v5837, %v5888
    %v5894 = vmul.f32 %v5838, %v5891
    %v5896 = vsel %vm837, %v5782, 0
    %5898 = vmatpush.msra.mxu0 0.0
    %5899 = vmatpush.msra.mxu0 0.0
    %5900 = vmatpush.msra.mxu0 0.0
    %5901 = vmatpush.msra.mxu0 0.0
    %5902 = vmatpush.msra.mxu0 0.0
    %5903 = vmatpush.msra.mxu0 0.0
    %5904 = vmatpush.msra.mxu0 0.0
    %5905 = vmatpush.msra.mxu0 0.0
    %5906 = vmatpush.msra.mxu0 0.0
    %5907 = vmatpush.msra.mxu0 0.0
    %5908 = vmatpush.msra.mxu0 0.0
    %5909 = vmatpush.msra.mxu0 0.0
    %5910 = vmatpush.msra.mxu0 0.0
    %5911 = vmatpush.msra.mxu0 0.0
    %5912 = vmatpush.msra.mxu0 %v5896
    %5913 = vmatpush.msra.mxu0 %v5781
    %5914 = vmatmul.f32.gmra.mxu0 %v835
    %v5915 = vpop.f32.mrf.mxu0
    %v5916 = vadd.f32 1e-08, %v5915
    %5917 = vdwg.mxu0
    %v5918 = vrcp.pop %v5916
    %v5919 = vmul.f32 %v5916, %v5918
    %v5920 = vsub.f32 2.0, %v5919
    %v5921 = vmul.f32 %v5918, %v5920
    %v5922 = vmul.f32 %v706, %v5921
    %v5924 = vsel %vm873, %v5922, 0
    %5926 = vmatpush.msra.mxu0 0.0
    %5927 = vmatpush.msra.mxu0 0.0
    %5928 = vmatpush.msra.mxu0 0.0
    %5929 = vmatpush.msra.mxu0 0.0
    %5930 = vmatpush.msra.mxu0 0.0
    %5931 = vmatpush.msra.mxu0 0.0
    %5932 = vmatpush.msra.mxu0 0.0
    %5933 = vmatpush.msra.mxu0 0.0
    %5934 = vmatpush.msra.mxu0 0.0
    %5935 = vmatpush.msra.mxu0 0.0
    %5936 = vmatpush.msra.mxu0 0.0
    %5937 = vmatpush.msra.mxu0 0.0
    %5938 = vmatpush.msra.mxu0 0.0
    %5939 = vmatpush.msra.mxu0 0.0
    %5940 = vmatpush.msra.mxu0 0.0
    %5941 = vmatpush.msra.mxu0 %v5924
    %5942 = vmatmul.f32.gmra.mxu0 %v868
    %v5943 = vpop.f32.mrf.mxu0
    %v5944 = vadd.f32 %v814, %v5943
    %5945 = vmatmul.f32.gmra.mxu0 %v871
    %v5946 = vpop.f32.mrf.mxu0
    %v5947 = vadd.f32 %v819, %v5946
    %5948 = vdwg.mxu0
    %v5949 = vmul.f32 %v5781, %v5944
    %v5950 = vmul.f32 %v5782, %v5947
    %v5952 = vsel %vm837, %v5950, 0
    %5954 = vmatpush.msra.mxu0 0.0
    %5955 = vmatpush.msra.mxu0 0.0
    %5956 = vmatpush.msra.mxu0 0.0
    %5957 = vmatpush.msra.mxu0 0.0
    %5958 = vmatpush.msra.mxu0 0.0
    %5959 = vmatpush.msra.mxu0 0.0
    %5960 = vmatpush.msra.mxu0 0.0
    %5961 = vmatpush.msra.mxu0 0.0
    %5962 = vmatpush.msra.mxu0 0.0
    %5963 = vmatpush.msra.mxu0 0.0
    %5964 = vmatpush.msra.mxu0 0.0
    %5965 = vmatpush.msra.mxu0 0.0
    %5966 = vmatpush.msra.mxu0 0.0
    %5967 = vmatpush.msra.mxu0 0.0
    %5968 = vmatpush.msra.mxu0 %v5952
    %5969 = vmatpush.msra.mxu0 %v5949
    %5970 = vmatmul.f32.gmra.mxu0 %v903
    %v5971 = vpop.f32.mrf.mxu0
    %v5972 = vadd.f32 1e-08, %v5971
    %5973 = vdwg.mxu0
    %v5974 = vrcp.pop %v5972
    %v5975 = vmul.f32 %v5972, %v5974
    %v5976 = vsub.f32 2.0, %v5975
    %v5977 = vmul.f32 %v5974, %v5976
    %v5978 = vmul.f32 %v757, %v5977
    %v5980 = vsel %vm873, %v5978, 0
    %5982 = vmatpush.msra.mxu0 0.0
    %5983 = vmatpush.msra.mxu0 0.0
    %5984 = vmatpush.msra.mxu0 0.0
    %5985 = vmatpush.msra.mxu0 0.0
    %5986 = vmatpush.msra.mxu0 0.0
    %5987 = vmatpush.msra.mxu0 0.0
    %5988 = vmatpush.msra.mxu0 0.0
    %5989 = vmatpush.msra.mxu0 0.0
    %5990 = vmatpush.msra.mxu0 0.0
    %5991 = vmatpush.msra.mxu0 0.0
    %5992 = vmatpush.msra.mxu0 0.0
    %5993 = vmatpush.msra.mxu0 0.0
    %5994 = vmatpush.msra.mxu0 0.0
    %5995 = vmatpush.msra.mxu0 0.0
    %5996 = vmatpush.msra.mxu0 0.0
    %5997 = vmatpush.msra.mxu0 %v5980
    %5998 = vmatmul.f32.gmra.mxu0 %v934
    %v5999 = vpop.f32.mrf.mxu0
    %v6000 = vadd.f32 %v826, %v5999
    %6001 = vmatmul.f32.gmra.mxu0 %v937
    %v6002 = vpop.f32.mrf.mxu0
    %v6003 = vadd.f32 %v831, %v6002
    %6004 = vdwg.mxu0
    %v6005 = vmul.f32 %v5949, %v6000
    %v6006 = vmul.f32 %v5950, %v6003
    %v6008 = vsel %vm837, %v5894, 0
    %6010 = vmatpush.msra.mxu0 0.0
    %6011 = vmatpush.msra.mxu0 0.0
    %6012 = vmatpush.msra.mxu0 0.0
    %6013 = vmatpush.msra.mxu0 0.0
    %6014 = vmatpush.msra.mxu0 0.0
    %6015 = vmatpush.msra.mxu0 0.0
    %6016 = vmatpush.msra.mxu0 0.0
    %6017 = vmatpush.msra.mxu0 0.0
    %6018 = vmatpush.msra.mxu0 0.0
    %6019 = vmatpush.msra.mxu0 0.0
    %6020 = vmatpush.msra.mxu0 0.0
    %6021 = vmatpush.msra.mxu0 0.0
    %6022 = vmatpush.msra.mxu0 0.0
    %6023 = vmatpush.msra.mxu0 0.0
    %6024 = vmatpush.msra.mxu0 %v6008
    %6025 = vmatpush.msra.mxu0 %v5893
    %6026 = vmatmul.f32.gmra.mxu0 %v835
    %v6027 = vpop.f32.mrf.mxu0
    %v6028 = vadd.f32 1e-08, %v6027
    %6029 = vdwg.mxu0
    %v6030 = vrcp.pop %v6028
    %v6031 = vmul.f32 %v6028, %v6030
    %v6032 = vsub.f32 2.0, %v6031
    %v6033 = vmul.f32 %v6030, %v6032
    %v6034 = vmul.f32 %v686, %v6033
    %v6036 = vsel %vm873, %v6034, 0
    %6038 = vmatpush.msra.mxu0 0.0
    %6039 = vmatpush.msra.mxu0 0.0
    %6040 = vmatpush.msra.mxu0 0.0
    %6041 = vmatpush.msra.mxu0 0.0
    %6042 = vmatpush.msra.mxu0 0.0
    %6043 = vmatpush.msra.mxu0 0.0
    %6044 = vmatpush.msra.mxu0 0.0
    %6045 = vmatpush.msra.mxu0 0.0
    %6046 = vmatpush.msra.mxu0 0.0
    %6047 = vmatpush.msra.mxu0 0.0
    %6048 = vmatpush.msra.mxu0 0.0
    %6049 = vmatpush.msra.mxu0 0.0
    %6050 = vmatpush.msra.mxu0 0.0
    %6051 = vmatpush.msra.mxu0 0.0
    %6052 = vmatpush.msra.mxu0 0.0
    %6053 = vmatpush.msra.mxu0 %v6036
    %6054 = vmatmul.f32.gmra.mxu0 %v868
    %v6055 = vpop.f32.mrf.mxu0
    %v6056 = vadd.f32 %v814, %v6055
    %6057 = vmatmul.f32.gmra.mxu0 %v871
    %v6058 = vpop.f32.mrf.mxu0
    %v6059 = vadd.f32 %v819, %v6058
    %6060 = vdwg.mxu0
    %v6061 = vmul.f32 %v5893, %v6056
    %v6062 = vmul.f32 %v5894, %v6059
    %v6064 = vsel %vm837, %v6062, 0
    %6066 = vmatpush.msra.mxu0 0.0
    %6067 = vmatpush.msra.mxu0 0.0
    %6068 = vmatpush.msra.mxu0 0.0
    %6069 = vmatpush.msra.mxu0 0.0
    %6070 = vmatpush.msra.mxu0 0.0
    %6071 = vmatpush.msra.mxu0 0.0
    %6072 = vmatpush.msra.mxu0 0.0
    %6073 = vmatpush.msra.mxu0 0.0
    %6074 = vmatpush.msra.mxu0 0.0
    %6075 = vmatpush.msra.mxu0 0.0
    %6076 = vmatpush.msra.mxu0 0.0
    %6077 = vmatpush.msra.mxu0 0.0
    %6078 = vmatpush.msra.mxu0 0.0
    %6079 = vmatpush.msra.mxu0 0.0
    %6080 = vmatpush.msra.mxu0 %v6064
    %6081 = vmatpush.msra.mxu0 %v6061
    %6082 = vmatmul.f32.gmra.mxu0 %v903
    %v6083 = vpop.f32.mrf.mxu0
    %v6084 = vadd.f32 1e-08, %v6083
    %6085 = vdwg.mxu0
    %v6086 = vrcp.pop %v6084
    %v6087 = vmul.f32 %v6084, %v6086
    %v6088 = vsub.f32 2.0, %v6087
    %v6089 = vmul.f32 %v6086, %v6088
    %v6090 = vmul.f32 %v737, %v6089
    %v6092 = vsel %vm873, %v6090, 0
    %6094 = vmatpush.msra.mxu0 0.0
    %6095 = vmatpush.msra.mxu0 0.0
    %6096 = vmatpush.msra.mxu0 0.0
    %6097 = vmatpush.msra.mxu0 0.0
    %6098 = vmatpush.msra.mxu0 0.0
    %6099 = vmatpush.msra.mxu0 0.0
    %6100 = vmatpush.msra.mxu0 0.0
    %6101 = vmatpush.msra.mxu0 0.0
    %6102 = vmatpush.msra.mxu0 0.0
    %6103 = vmatpush.msra.mxu0 0.0
    %6104 = vmatpush.msra.mxu0 0.0
    %6105 = vmatpush.msra.mxu0 0.0
    %6106 = vmatpush.msra.mxu0 0.0
    %6107 = vmatpush.msra.mxu0 0.0
    %6108 = vmatpush.msra.mxu0 0.0
    %6109 = vmatpush.msra.mxu0 %v6092
    %6110 = vmatmul.f32.gmra.mxu0 %v934
    %v6111 = vpop.f32.mrf.mxu0
    %v6112 = vadd.f32 %v826, %v6111
    %6113 = vmatmul.f32.gmra.mxu0 %v937
    %v6114 = vpop.f32.mrf.mxu0
    %v6115 = vadd.f32 %v831, %v6114
    %6116 = vdwg.mxu0
    %v6117 = vmul.f32 %v6061, %v6112
    %v6118 = vmul.f32 %v6062, %v6115
    %v6120 = vsel %vm837, %v6006, 0
    %6122 = vmatpush.msra.mxu0 0.0
    %6123 = vmatpush.msra.mxu0 0.0
    %6124 = vmatpush.msra.mxu0 0.0
    %6125 = vmatpush.msra.mxu0 0.0
    %6126 = vmatpush.msra.mxu0 0.0
    %6127 = vmatpush.msra.mxu0 0.0
    %6128 = vmatpush.msra.mxu0 0.0
    %6129 = vmatpush.msra.mxu0 0.0
    %6130 = vmatpush.msra.mxu0 0.0
    %6131 = vmatpush.msra.mxu0 0.0
    %6132 = vmatpush.msra.mxu0 0.0
    %6133 = vmatpush.msra.mxu0 0.0
    %6134 = vmatpush.msra.mxu0 0.0
    %6135 = vmatpush.msra.mxu0 0.0
    %6136 = vmatpush.msra.mxu0 %v6120
    %6137 = vmatpush.msra.mxu0 %v6005
    %6138 = vmatmul.f32.gmra.mxu0 %v835
    %v6139 = vpop.f32.mrf.mxu0
    %v6140 = vadd.f32 1e-08, %v6139
    %6141 = vdwg.mxu0
    %v6142 = vrcp.pop %v6140
    %v6143 = vmul.f32 %v6140, %v6142
    %v6144 = vsub.f32 2.0, %v6143
    %v6145 = vmul.f32 %v6142, %v6144
    %v6146 = vmul.f32 %v706, %v6145
    %v6148 = vsel %vm873, %v6146, 0
    %6150 = vmatpush.msra.mxu0 0.0
    %6151 = vmatpush.msra.mxu0 0.0
    %6152 = vmatpush.msra.mxu0 0.0
    %6153 = vmatpush.msra.mxu0 0.0
    %6154 = vmatpush.msra.mxu0 0.0
    %6155 = vmatpush.msra.mxu0 0.0
    %6156 = vmatpush.msra.mxu0 0.0
    %6157 = vmatpush.msra.mxu0 0.0
    %6158 = vmatpush.msra.mxu0 0.0
    %6159 = vmatpush.msra.mxu0 0.0
    %6160 = vmatpush.msra.mxu0 0.0
    %6161 = vmatpush.msra.mxu0 0.0
    %6162 = vmatpush.msra.mxu0 0.0
    %6163 = vmatpush.msra.mxu0 0.0
    %6164 = vmatpush.msra.mxu0 0.0
    %6165 = vmatpush.msra.mxu0 %v6148
    %6166 = vmatmul.f32.gmra.mxu0 %v868
    %v6167 = vpop.f32.mrf.mxu0
    %v6168 = vadd.f32 %v814, %v6167
    %6169 = vmatmul.f32.gmra.mxu0 %v871
    %v6170 = vpop.f32.mrf.mxu0
    %v6171 = vadd.f32 %v819, %v6170
    %6172 = vdwg.mxu0
    %v6173 = vmul.f32 %v6005, %v6168
    %v6174 = vmul.f32 %v6006, %v6171
    %v6176 = vsel %vm837, %v6174, 0
    %6178 = vmatpush.msra.mxu0 0.0
    %6179 = vmatpush.msra.mxu0 0.0
    %6180 = vmatpush.msra.mxu0 0.0
    %6181 = vmatpush.msra.mxu0 0.0
    %6182 = vmatpush.msra.mxu0 0.0
    %6183 = vmatpush.msra.mxu0 0.0
    %6184 = vmatpush.msra.mxu0 0.0
    %6185 = vmatpush.msra.mxu0 0.0
    %6186 = vmatpush.msra.mxu0 0.0
    %6187 = vmatpush.msra.mxu0 0.0
    %6188 = vmatpush.msra.mxu0 0.0
    %6189 = vmatpush.msra.mxu0 0.0
    %6190 = vmatpush.msra.mxu0 0.0
    %6191 = vmatpush.msra.mxu0 0.0
    %6192 = vmatpush.msra.mxu0 %v6176
    %6193 = vmatpush.msra.mxu0 %v6173
    %6194 = vmatmul.f32.gmra.mxu0 %v903
    %v6195 = vpop.f32.mrf.mxu0
    %v6196 = vadd.f32 1e-08, %v6195
    %6197 = vdwg.mxu0
    %v6198 = vrcp.pop %v6196
    %v6199 = vmul.f32 %v6196, %v6198
    %v6200 = vsub.f32 2.0, %v6199
    %v6201 = vmul.f32 %v6198, %v6200
    %v6202 = vmul.f32 %v757, %v6201
    %v6204 = vsel %vm873, %v6202, 0
    %6206 = vmatpush.msra.mxu0 0.0
    %6207 = vmatpush.msra.mxu0 0.0
    %6208 = vmatpush.msra.mxu0 0.0
    %6209 = vmatpush.msra.mxu0 0.0
    %6210 = vmatpush.msra.mxu0 0.0
    %6211 = vmatpush.msra.mxu0 0.0
    %6212 = vmatpush.msra.mxu0 0.0
    %6213 = vmatpush.msra.mxu0 0.0
    %6214 = vmatpush.msra.mxu0 0.0
    %6215 = vmatpush.msra.mxu0 0.0
    %6216 = vmatpush.msra.mxu0 0.0
    %6217 = vmatpush.msra.mxu0 0.0
    %6218 = vmatpush.msra.mxu0 0.0
    %6219 = vmatpush.msra.mxu0 0.0
    %6220 = vmatpush.msra.mxu0 0.0
    %6221 = vmatpush.msra.mxu0 %v6204
    %6222 = vmatmul.f32.gmra.mxu0 %v934
    %v6223 = vpop.f32.mrf.mxu0
    %v6224 = vadd.f32 %v826, %v6223
    %6225 = vmatmul.f32.gmra.mxu0 %v937
    %v6226 = vpop.f32.mrf.mxu0
    %v6227 = vadd.f32 %v831, %v6226
    %6228 = vdwg.mxu0
    %v6229 = vmul.f32 %v6173, %v6224
    %v6230 = vmul.f32 %v6174, %v6227
    %v6232 = vsel %vm837, %v6118, 0
    %6234 = vmatpush.msra.mxu0 0.0
    %6235 = vmatpush.msra.mxu0 0.0
    %6236 = vmatpush.msra.mxu0 0.0
    %6237 = vmatpush.msra.mxu0 0.0
    %6238 = vmatpush.msra.mxu0 0.0
    %6239 = vmatpush.msra.mxu0 0.0
    %6240 = vmatpush.msra.mxu0 0.0
    %6241 = vmatpush.msra.mxu0 0.0
    %6242 = vmatpush.msra.mxu0 0.0
    %6243 = vmatpush.msra.mxu0 0.0
    %6244 = vmatpush.msra.mxu0 0.0
    %6245 = vmatpush.msra.mxu0 0.0
    %6246 = vmatpush.msra.mxu0 0.0
    %6247 = vmatpush.msra.mxu0 0.0
    %6248 = vmatpush.msra.mxu0 %v6232
    %6249 = vmatpush.msra.mxu0 %v6117
    %6250 = vmatmul.f32.gmra.mxu0 %v835
    %v6251 = vpop.f32.mrf.mxu0
    %v6252 = vadd.f32 1e-08, %v6251
    %6253 = vdwg.mxu0
    %v6254 = vrcp.pop %v6252
    %v6255 = vmul.f32 %v6252, %v6254
    %v6256 = vsub.f32 2.0, %v6255
    %v6257 = vmul.f32 %v6254, %v6256
    %v6258 = vmul.f32 %v686, %v6257
    %v6260 = vsel %vm873, %v6258, 0
    %6262 = vmatpush.msra.mxu0 0.0
    %6263 = vmatpush.msra.mxu0 0.0
    %6264 = vmatpush.msra.mxu0 0.0
    %6265 = vmatpush.msra.mxu0 0.0
    %6266 = vmatpush.msra.mxu0 0.0
    %6267 = vmatpush.msra.mxu0 0.0
    %6268 = vmatpush.msra.mxu0 0.0
    %6269 = vmatpush.msra.mxu0 0.0
    %6270 = vmatpush.msra.mxu0 0.0
    %6271 = vmatpush.msra.mxu0 0.0
    %6272 = vmatpush.msra.mxu0 0.0
    %6273 = vmatpush.msra.mxu0 0.0
    %6274 = vmatpush.msra.mxu0 0.0
    %6275 = vmatpush.msra.mxu0 0.0
    %6276 = vmatpush.msra.mxu0 0.0
    %6277 = vmatpush.msra.mxu0 %v6260
    %6278 = vmatmul.f32.gmra.mxu0 %v868
    %v6279 = vpop.f32.mrf.mxu0
    %v6280 = vadd.f32 %v814, %v6279
    %6281 = vmatmul.f32.gmra.mxu0 %v871
    %v6282 = vpop.f32.mrf.mxu0
    %v6283 = vadd.f32 %v819, %v6282
    %6284 = vdwg.mxu0
    %v6285 = vmul.f32 %v6117, %v6280
    %v6286 = vmul.f32 %v6118, %v6283
    %v6288 = vsel %vm837, %v6286, 0
    %6290 = vmatpush.msra.mxu0 0.0
    %6291 = vmatpush.msra.mxu0 0.0
    %6292 = vmatpush.msra.mxu0 0.0
    %6293 = vmatpush.msra.mxu0 0.0
    %6294 = vmatpush.msra.mxu0 0.0
    %6295 = vmatpush.msra.mxu0 0.0
    %6296 = vmatpush.msra.mxu0 0.0
    %6297 = vmatpush.msra.mxu0 0.0
    %6298 = vmatpush.msra.mxu0 0.0
    %6299 = vmatpush.msra.mxu0 0.0
    %6300 = vmatpush.msra.mxu0 0.0
    %6301 = vmatpush.msra.mxu0 0.0
    %6302 = vmatpush.msra.mxu0 0.0
    %6303 = vmatpush.msra.mxu0 0.0
    %6304 = vmatpush.msra.mxu0 %v6288
    %6305 = vmatpush.msra.mxu0 %v6285
    %6306 = vmatmul.f32.gmra.mxu0 %v903
    %v6307 = vpop.f32.mrf.mxu0
    %v6308 = vadd.f32 1e-08, %v6307
    %6309 = vdwg.mxu0
    %v6310 = vrcp.pop %v6308
    %v6311 = vmul.f32 %v6308, %v6310
    %v6312 = vsub.f32 2.0, %v6311
    %v6313 = vmul.f32 %v6310, %v6312
    %v6314 = vmul.f32 %v737, %v6313
    %v6316 = vsel %vm873, %v6314, 0
    %6318 = vmatpush.msra.mxu0 0.0
    %6319 = vmatpush.msra.mxu0 0.0
    %6320 = vmatpush.msra.mxu0 0.0
    %6321 = vmatpush.msra.mxu0 0.0
    %6322 = vmatpush.msra.mxu0 0.0
    %6323 = vmatpush.msra.mxu0 0.0
    %6324 = vmatpush.msra.mxu0 0.0
    %6325 = vmatpush.msra.mxu0 0.0
    %6326 = vmatpush.msra.mxu0 0.0
    %6327 = vmatpush.msra.mxu0 0.0
    %6328 = vmatpush.msra.mxu0 0.0
    %6329 = vmatpush.msra.mxu0 0.0
    %6330 = vmatpush.msra.mxu0 0.0
    %6331 = vmatpush.msra.mxu0 0.0
    %6332 = vmatpush.msra.mxu0 0.0
    %6333 = vmatpush.msra.mxu0 %v6316
    %6334 = vmatmul.f32.gmra.mxu0 %v934
    %v6335 = vpop.f32.mrf.mxu0
    %v6336 = vadd.f32 %v826, %v6335
    %6337 = vmatmul.f32.gmra.mxu0 %v937
    %v6338 = vpop.f32.mrf.mxu0
    %v6339 = vadd.f32 %v831, %v6338
    %6340 = vdwg.mxu0
    %v6341 = vmul.f32 %v6285, %v6336
    %v6342 = vmul.f32 %v6286, %v6339
    %v6344 = vsel %vm837, %v6230, 0
    %6346 = vmatpush.msra.mxu0 0.0
    %6347 = vmatpush.msra.mxu0 0.0
    %6348 = vmatpush.msra.mxu0 0.0
    %6349 = vmatpush.msra.mxu0 0.0
    %6350 = vmatpush.msra.mxu0 0.0
    %6351 = vmatpush.msra.mxu0 0.0
    %6352 = vmatpush.msra.mxu0 0.0
    %6353 = vmatpush.msra.mxu0 0.0
    %6354 = vmatpush.msra.mxu0 0.0
    %6355 = vmatpush.msra.mxu0 0.0
    %6356 = vmatpush.msra.mxu0 0.0
    %6357 = vmatpush.msra.mxu0 0.0
    %6358 = vmatpush.msra.mxu0 0.0
    %6359 = vmatpush.msra.mxu0 0.0
    %6360 = vmatpush.msra.mxu0 %v6344
    %6361 = vmatpush.msra.mxu0 %v6229
    %6362 = vmatmul.f32.gmra.mxu0 %v835
    %v6363 = vpop.f32.mrf.mxu0
    %v6364 = vadd.f32 1e-08, %v6363
    %6365 = vdwg.mxu0
    %v6366 = vrcp.pop %v6364
    %v6367 = vmul.f32 %v6364, %v6366
    %v6368 = vsub.f32 2.0, %v6367
    %v6369 = vmul.f32 %v6366, %v6368
    %v6370 = vmul.f32 %v706, %v6369
    %v6372 = vsel %vm873, %v6370, 0
    %6374 = vmatpush.msra.mxu0 0.0
    %6375 = vmatpush.msra.mxu0 0.0
    %6376 = vmatpush.msra.mxu0 0.0
    %6377 = vmatpush.msra.mxu0 0.0
    %6378 = vmatpush.msra.mxu0 0.0
    %6379 = vmatpush.msra.mxu0 0.0
    %6380 = vmatpush.msra.mxu0 0.0
    %6381 = vmatpush.msra.mxu0 0.0
    %6382 = vmatpush.msra.mxu0 0.0
    %6383 = vmatpush.msra.mxu0 0.0
    %6384 = vmatpush.msra.mxu0 0.0
    %6385 = vmatpush.msra.mxu0 0.0
    %6386 = vmatpush.msra.mxu0 0.0
    %6387 = vmatpush.msra.mxu0 0.0
    %6388 = vmatpush.msra.mxu0 0.0
    %6389 = vmatpush.msra.mxu0 %v6372
    %6390 = vmatmul.f32.gmra.mxu0 %v868
    %v6391 = vpop.f32.mrf.mxu0
    %v6392 = vadd.f32 %v814, %v6391
    %6393 = vmatmul.f32.gmra.mxu0 %v871
    %v6394 = vpop.f32.mrf.mxu0
    %v6395 = vadd.f32 %v819, %v6394
    %6396 = vdwg.mxu0
    %v6397 = vmul.f32 %v6229, %v6392
    %v6398 = vmul.f32 %v6230, %v6395
    %v6400 = vsel %vm837, %v6398, 0
    %6402 = vmatpush.msra.mxu0 0.0
    %6403 = vmatpush.msra.mxu0 0.0
    %6404 = vmatpush.msra.mxu0 0.0
    %6405 = vmatpush.msra.mxu0 0.0
    %6406 = vmatpush.msra.mxu0 0.0
    %6407 = vmatpush.msra.mxu0 0.0
    %6408 = vmatpush.msra.mxu0 0.0
    %6409 = vmatpush.msra.mxu0 0.0
    %6410 = vmatpush.msra.mxu0 0.0
    %6411 = vmatpush.msra.mxu0 0.0
    %6412 = vmatpush.msra.mxu0 0.0
    %6413 = vmatpush.msra.mxu0 0.0
    %6414 = vmatpush.msra.mxu0 0.0
    %6415 = vmatpush.msra.mxu0 0.0
    %6416 = vmatpush.msra.mxu0 %v6400
    %6417 = vmatpush.msra.mxu0 %v6397
    %6418 = vmatmul.f32.gmra.mxu0 %v903
    %v6419 = vpop.f32.mrf.mxu0
    %v6420 = vadd.f32 1e-08, %v6419
    %6421 = vdwg.mxu0
    %v6422 = vrcp.pop %v6420
    %v6423 = vmul.f32 %v6420, %v6422
    %v6424 = vsub.f32 2.0, %v6423
    %v6425 = vmul.f32 %v6422, %v6424
    %v6426 = vmul.f32 %v757, %v6425
    %v6428 = vsel %vm873, %v6426, 0
    %6430 = vmatpush.msra.mxu0 0.0
    %6431 = vmatpush.msra.mxu0 0.0
    %6432 = vmatpush.msra.mxu0 0.0
    %6433 = vmatpush.msra.mxu0 0.0
    %6434 = vmatpush.msra.mxu0 0.0
    %6435 = vmatpush.msra.mxu0 0.0
    %6436 = vmatpush.msra.mxu0 0.0
    %6437 = vmatpush.msra.mxu0 0.0
    %6438 = vmatpush.msra.mxu0 0.0
    %6439 = vmatpush.msra.mxu0 0.0
    %6440 = vmatpush.msra.mxu0 0.0
    %6441 = vmatpush.msra.mxu0 0.0
    %6442 = vmatpush.msra.mxu0 0.0
    %6443 = vmatpush.msra.mxu0 0.0
    %6444 = vmatpush.msra.mxu0 0.0
    %6445 = vmatpush.msra.mxu0 %v6428
    %6446 = vmatmul.f32.gmra.mxu0 %v934
    %v6447 = vpop.f32.mrf.mxu0
    %v6448 = vadd.f32 %v826, %v6447
    %6449 = vmatmul.f32.gmra.mxu0 %v937
    %v6450 = vpop.f32.mrf.mxu0
    %v6451 = vadd.f32 %v831, %v6450
    %6452 = vdwg.mxu0
    %v6453 = vmul.f32 %v6397, %v6448
    %v6454 = vmul.f32 %v6398, %v6451
    %6455 = vst [vmem:[#allocation2] sm:$0xff] %v6341
    %6456 = vst [vmem:[#allocation2 + $0x8] sm:$0xff] %v6453
    %6457 = vst [vmem:[#allocation2 + $0x10] sm:$0x1] %v6342
    %6458 = vst [vmem:[#allocation2 + $0x18] sm:$0x1] %v6454
    %v6461 = vrot.slane %v801, 7
    %v6462 = vsel %vm837, %v781, %v6461
    %v6464 = vlaneseq
    %vm6465 = vcmp.ge.s32.totalorder %v6464, 0
    %vm6466 = vcmp.lt.s32.totalorder %v6464, 256
    %vm6467 = vmand %vm6465, %vm6466
    %6468 = vst.msk [vmem:[#allocation4] sm:$0x3] %vm6467, %v6462
    // Predicated region
    $region78: #{tpu_custom_call.1} parent=1 // pred_check
      _
    $region79: #{tpu_custom_call.1} parent=1 // pred_check_branch
      %6470 = sbr.rel (0) target = $region81
    $region80: #{tpu_custom_call.1} parent=1 // pred_region
      %6472 = vsyncadd [#allocation3], 0
      %s6473 = sshll.u32 [#allocation2], 4
      %s6474 = int_to_ptr.vmem [resolvable:$true] %s6473
      %s6475 = sshll.u32 %s19, 4
      %s6476 = int_to_ptr.hbm [resolvable:$true] %s6475
      %6481 = dma.vmem_to_hbm [thread:$0]  %s6474, 512, %s6476, [#allocation3], 256, 256, 16
    $region81: #{tpu_custom_call.1} parent=1 // pred_fallthru
      _
    // Predicated region
    $region82: #{tpu_custom_call.1} parent=1 // pred_check
      _
    $region83: #{tpu_custom_call.1} parent=1 // pred_check_branch
      %6483 = sbr.rel (0) target = $region85
    $region84: #{tpu_custom_call.1} parent=1 // pred_region
      %6485 = vsyncadd [#allocation5], 0
      %s6487 = sshll.u32 [#allocation4], 4
      %s6488 = int_to_ptr.vmem [resolvable:$true] %s6487
      %s6489 = sshll.u32 %s20, 4
      %s6490 = int_to_ptr.hbm [resolvable:$true] %s6489
      %6492 = dma.vmem_to_hbm [thread:$0]  %s6488, 32, %s6490, [#allocation5]
    $region85: #{tpu_custom_call.1} parent=1 // pred_fallthru
      _
    // Predicated region
    $region86: #{tpu_custom_call.1} parent=1 // pred_check
      _
    $region87: #{tpu_custom_call.1} parent=1 // pred_check_branch
      %6494 = sbr.rel (0) target = $region89
    $region88: #{tpu_custom_call.1} parent=1 // pred_region
      %6496 = dma.done [#allocation3], 512
    $region89: #{tpu_custom_call.1} parent=1 // pred_fallthru
      _
    // Predicated region
    $region90: #{tpu_custom_call.1} parent=1 // pred_check
      _
    $region91: #{tpu_custom_call.1} parent=1 // pred_check_branch
      %6498 = sbr.rel (0) target = $region93
    $region92: #{tpu_custom_call.1} parent=1 // pred_region
      %6500 = dma.done [#allocation5], 32
    $region93: #{tpu_custom_call.1} parent=1 // pred_fallthru
      _
    %6501 = vsyncpa [#allocation3], 1
    %6502 = vsyncpa [#allocation5], 1

</llo_original>
